<compile_context>
chip_gen: v5e
topology: v5e:2x2
jax: 0.10.0
libtpu: 0.0.40
codegen_flags: <defaults>
</compile_context>

<pallas_src>
import functools

import jax
import jax.numpy as jnp
import numpy as np
from jax import lax
from jax.experimental import pallas as pl
from jax.experimental.pallas import tpu as pltpu


def _sine_layer_kernel(x_ref, w_ref, b_ref, o_ref, *, omega):
    # x_ref: (TB, IN), w_ref: (OUT, IN) -- PyTorch layout, transpose folded
    # into the MXU contraction -- b_ref: (1, OUT) broadcast over rows.
    z = lax.dot_general(
        x_ref[...],
        w_ref[...],
        dimension_numbers=(((1,), (1,)), ((), ())),   # contract x.in with w.in
        preferred_element_type=jnp.float32,
    )
    z = z + b_ref[...]
    o_ref[...] = jnp.sin(omega * z).astype(o_ref.dtype)


def _round_up(n, m):
    return ((n + m - 1) // m) * m


def _choose_batch_tile(batch, in_f, out_f, itemsize=4, vmem_budget=24 << 20):
    """Largest batch tile (multiple of 8, capped at 512) whose double-buffered
    x/y tiles plus the resident (double-buffered) weight/bias fit the budget."""
    resident = 2 * (out_f * in_f + out_f) * itemsize
    per_row = 2 * (in_f + out_f) * itemsize
    tb = max((vmem_budget - resident) // max(per_row, 1), 8)
    tb = int(min(tb, 512))            # >=512-row tiles sit near the HBM roofline
    tb = max((tb // 8) * 8, 8)        # sublane (8) aligned
    tb = min(tb, _round_up(batch, 8))  # never bigger than the padded batch
    return tb


def sine_layer(x, weight, bias, omega):
    """y = sin(omega * (x @ weight.T + bias))

    x:      (B, in_features)            float32
    weight: (out_features, in_features) float32 (PyTorch nn.Linear layout)
    bias:   (out_features,)             float32
    """
    B, in_f = x.shape
    out_f = weight.shape[0]

    # Lane-dense output: pad out dim to a multiple of 128 (matters for the
    # narrow final SIREN layer where out_features is 1 or 3).
    out_p = _round_up(out_f, 128)
    tb = _choose_batch_tile(B, in_f, out_p)
    b_p = _round_up(B, tb)

    if out_p != out_f:
        weight = jnp.pad(weight, ((0, out_p - out_f), (0, 0)))
        bias = jnp.pad(bias, (0, out_p - out_f))
    if b_p != B:
        x = jnp.pad(x, ((0, b_p - B), (0, 0)))
    b2 = bias.reshape(1, out_p)

    kernel = functools.partial(_sine_layer_kernel, omega=float(omega))

    flops = 2 * b_p * in_f * out_p
    bytes_accessed = 4 * (b_p * in_f + out_p * in_f + out_p + b_p * out_p)

    y = pl.pallas_call(
        kernel,
        out_shape=jax.ShapeDtypeStruct((b_p, out_p), x.dtype),
        grid=(b_p // tb,),
        in_specs=[
            pl.BlockSpec((tb, in_f), lambda i: (i, 0)),      # streamed x tiles
            pl.BlockSpec((out_p, in_f), lambda i: (0, 0)),   # weight: VMEM-resident
            pl.BlockSpec((1, out_p), lambda i: (0, 0)),      # bias:   VMEM-resident
        ],
        out_specs=pl.BlockSpec((tb, out_p), lambda i: (i, 0)),
        compiler_params=pltpu.CompilerParams(
            dimension_semantics=("parallel",),    # independent batch tiles
            vmem_limit_bytes=48 << 20,            # headroom under v7x's 64 MiB VMEM
        ),
        cost_estimate=pl.CostEstimate(
            flops=flops,
            transcendentals=b_p * out_p,          # EUP sin is the binding unit
            bytes_accessed=bytes_accessed,
        ),
    )(x, weight, b2)

    if b_p != B or out_p != out_f:
        y = y[:B, :out_f]
    return y


def paper_init_weight(key, out_features, in_features, first_layer=False, omega=1.0):
    # Mirrors paper_init(): uniform(-bound, bound)
    if first_layer:
        bound = 1.0 / in_features
    else:
        bound = np.sqrt(6.0 / in_features) / omega
    return jax.random.uniform(
        key, (out_features, in_features), minval=-bound, maxval=bound,
        dtype=jnp.float32,
    )


if __name__ == "__main__":
    # Deterministic example. Shapes chosen small but non-aligned so the
    # batch-tiling (grid > 1), batch padding and lane padding paths all run.
    batch = 1000            # pads to 1024 -> grid of 2 tiles of 512 rows
    in_features = 64
    out_features = 96       # pads to 128 lanes
    omega = 30.0

    key = jax.random.PRNGKey(0)
    kx, kw, kb = jax.random.split(key, 3)

    x = jax.random.normal(kx, (batch, in_features), dtype=jnp.float32)
    weight = paper_init_weight(kw, out_features, in_features,
                               first_layer=True, omega=omega)
    # nn.Linear default bias init: uniform(-1/sqrt(in), 1/sqrt(in))
    bias_bound = 1.0 / np.sqrt(in_features)
    bias = jax.random.uniform(kb, (out_features,), minval=-bias_bound,
                              maxval=bias_bound, dtype=jnp.float32)

    y = sine_layer(x, weight, bias, omega)
    y = jax.block_until_ready(y)

    # Correctness check against plain-JAX reference.
    y_ref = jnp.sin(omega * (x @ weight.T + bias))
    np.testing.assert_allclose(np.asarray(y), np.asarray(y_ref),
                               rtol=1e-5, atol=1e-5)

    print("KERNEL_OK")
</pallas_src>

<mosaic_0001>
module attributes {stable_mosaic.version = 11 : i64} {
  func.func @_sine_layer_kernel(%arg0: i32, %arg1: memref<512x64xf32, #tpu.memory_space<vmem>>, %arg2: memref<128x64xf32, #tpu.memory_space<vmem>>, %arg3: memref<1x128xf32, #tpu.memory_space<vmem>>, %arg4: memref<512x128xf32, #tpu.memory_space<vmem>>) attributes {dimension_semantics = [#tpu.dimension_semantics<parallel>], iteration_bounds = array<i64: 2>, scalar_prefetch = 0 : i64, scratch_operands = 0 : i64, tpu.core_type = #tpu.core_type<tc>, window_params = [{transform_indices = @transform_0, window_bounds = array<i64: 512, 64>}, {pipeline_mode = #tpu.pipeline_mode<synchronous>, transform_indices = @transform_1, window_bounds = array<i64: 128, 64>}, {pipeline_mode = #tpu.pipeline_mode<synchronous>, transform_indices = @transform_2, window_bounds = array<i64: 1, 128>}, {transform_indices = @transform_3, window_bounds = array<i64: 512, 128>}]} {
    %c0 = arith.constant 0 : index
    %c0_0 = arith.constant 0 : index
    %0 = vector.load %arg1[%c0, %c0_0] : memref<512x64xf32, #tpu.memory_space<vmem>>, vector<512x64xf32>
    %c0_1 = arith.constant 0 : index
    %c0_2 = arith.constant 0 : index
    %1 = vector.load %arg2[%c0_1, %c0_2] : memref<128x64xf32, #tpu.memory_space<vmem>>, vector<128x64xf32>
    %cst = arith.constant dense<0.000000e+00> : vector<512x128xf32>
    %2 = tpu.matmul %0, %1, %cst {dimension_numbers = #tpu.dot_dimension_numbers<[1], [1], [0], [0], [0, 0, 1, 0], [], []>} : vector<512x64xf32>, vector<128x64xf32>, vector<512x128xf32> -> vector<512x128xf32>
    %c0_3 = arith.constant 0 : index
    %c0_4 = arith.constant 0 : index
    %3 = vector.load %arg3[%c0_3, %c0_4] : memref<1x128xf32, #tpu.memory_space<vmem>>, vector<1x128xf32>
    %4 = vector.broadcast %3 : vector<1x128xf32> to vector<512x128xf32>
    %5 = arith.addf %2, %4 : vector<512x128xf32>
    %cst_5 = arith.constant 3.000000e+01 : f32
    %6 = vector.broadcast %cst_5 : f32 to vector<512x128xf32>
    %7 = arith.mulf %6, %5 : vector<512x128xf32>
    %8 = math.sin %7 : vector<512x128xf32>
    %c0_6 = arith.constant 0 : index
    %c0_7 = arith.constant 0 : index
    %9 = vector.load %arg4[%c0_6, %c0_7] : memref<512x128xf32, #tpu.memory_space<vmem>>, vector<512x128xf32>
    tpu.vector_store %arg4[%c0_6, %c0_7], %8 {strides = array<i32>} : memref<512x128xf32, #tpu.memory_space<vmem>>, vector<512x128xf32>,
    return
  }
  func.func @transform_0(%arg0: i32) -> (i32, i32) {
    %c0_i32 = arith.constant 0 : i32
    %c0_i32_0 = arith.constant 0 : i32
    return %arg0, %c0_i32 : i32, i32
  }
  func.func @transform_1(%arg0: i32) -> (i32, i32) {
    %c0_i32 = arith.constant 0 : i32
    %c0_i32_0 = arith.constant 0 : i32
    %c0_i32_1 = arith.constant 0 : i32
    return %c0_i32, %c0_i32_0 : i32, i32
  }
  func.func @transform_2(%arg0: i32) -> (i32, i32) {
    %c0_i32 = arith.constant 0 : i32
    %c0_i32_0 = arith.constant 0 : i32
    %c0_i32_1 = arith.constant 0 : i32
    return %c0_i32, %c0_i32_0 : i32, i32
  }
  func.func @transform_3(%arg0: i32) -> (i32, i32) {
    %c0_i32 = arith.constant 0 : i32
    %c0_i32_0 = arith.constant 0 : i32
    return %arg0, %c0_i32 : i32, i32
  }
}

</mosaic_0001>

<llo_original>
// kernel: tpu_custom_call.1
$region0: #{tpu_custom_call.1}
  #allocation0 [shape = 'u32[]', space=smem, size = 0x4, offset = 0x4, fixed_abs, tag = 'smem constant byte address 0x4 - core index']
  #allocation1 [shape = 'u32[72,128]{1,0:T(1,128)}', space=vmem, size = 0x9000, scoped, tag = 'internal scratch']
  %s0 = inlined_call_operand.vmem [shape: f32[1024,64], index: 0, kind: input, shape index: {}]
  %s1 = inlined_call_operand.vmem [shape: f32[128,64], index: 1, kind: input, shape index: {}]
  %s2 = inlined_call_operand.vmem [shape: f32[1,128], index: 2, kind: input, shape index: {}]
  %s3 = inlined_call_operand.hbm [shape: f32[1024,128], index: 3, kind: output, shape index: {}]
  %s4 = sld [smem:[#allocation0]]
  $region45: #{tpu_custom_call.1} parent=0
    _
  %s6 = ssub.s32 1, %s4
  %s7 = scalar_select 0, %s6, %s4
  $region1: #{tpu_custom_call.1} parent=0
    #allocation2 [shape = 'u8[524288]{0}', space=vmem, size = 0x80000, scoped, tag = 'output window, operand 0']
    #allocation3 [shape = 's32[2]{0}', space=sflag, size = 0x8, scoped, tag = 'scoped memory for tpu_custom_call.1']
    %8 = vsyncpa [#allocation3], 0
    %s9 = scalar_lea.sflag [#allocation3], 1
    %10 = vsyncpa %s9, 0
    loop: start=0, step=1, limit=4
    $region2: #{tpu_custom_call.1} parent=1 // loop_pre_header
      _
    $region3: #{tpu_custom_call.1} parent=1 // loop_header
      %s12 = sphi 0, %s16
      %p13 = scmp.ge.s32.totalorder %s12, 4
      %s22 = sphi 0, %s24
      %s25 = sphi 0, %s22
      %s26 = sphi 0, %s25
      %s42 = sphi 0, %s26
      %s46 = sphi 0, %s46
      %s48 = sphi 0, %s46
      %s49 = sphi 0, %s48
      %s63 = sphi 0, %s49
      %s67 = sphi 0, %s67
      %s69 = sphi 0, %s67
      %s70 = sphi 0, %s69
      %s84 = sphi 0, %s70
      %s90 = sphi 0, %s92
      %s93 = sphi 0, %s90
      %s94 = sphi 0, %s93
      %s110 = sphi 0, %s94
    $region4: #{tpu_custom_call.1} parent=1 // loop_header_branch
      %15 = sbr.rel (%p13) target = $region8
    $region5: #{tpu_custom_call.1} parent=1 // loop_body
      %s17 = ssub.s32 %s12, 1
      %s18 = ssub.s32 %s12, 2
      %s19 = sadd.s32 %s12, 1
      %s20 = ssub.s32 %s12, %s19
      %p21 = scmp.eq.s32.totalorder %s20, 0
      %s23 = sadd.s32 %s22, 1
      %s24 = scalar_select %p21, %s22, %s23
      %p27 = pneg %p21
      %p28 = scmp.eq.s32.totalorder %s12, 1
      %p29 = por %p27, %p28
      %p30 = scmp.ne.s32.totalorder %s22, %s25
      %p31 = scmp.eq.s32.totalorder %s12, 0
      %p32 = por %p30, %p31
      %p33 = scmp.ne.s32.totalorder %s22, %s25
      %p34 = scmp.eq.s32.totalorder %s17, 1
      %p35 = por %p33, %p34
      %p36 = scmp.ne.s32.totalorder %s25, %s26
      %p37 = scmp.eq.s32.totalorder %s17, 0
      %p38 = por %p36, %p37
      %p39 = scmp.ne.s32.totalorder %s25, %s26
      %p40 = scmp.eq.s32.totalorder %s18, 1
      %p41 = por %p39, %p40
      %p43 = scmp.ne.s32.totalorder %s26, %s42
      %p44 = scmp.eq.s32.totalorder %s18, 0
      %p45 = por %p43, %p44
      %s47 = sadd.s32 %s46, 1
      %p50 = scmp.eq.s32.totalorder %s12, 1
      %p51 = scmp.ne.s32.totalorder %s46, %s48
      %p52 = scmp.eq.s32.totalorder %s12, 0
      %p53 = por %p51, %p52
      %p54 = scmp.ne.s32.totalorder %s46, %s48
      %p55 = scmp.eq.s32.totalorder %s17, 1
      %p56 = por %p54, %p55
      %p57 = scmp.ne.s32.totalorder %s48, %s49
      %p58 = scmp.eq.s32.totalorder %s17, 0
      %p59 = por %p57, %p58
      %p60 = scmp.ne.s32.totalorder %s48, %s49
      %p61 = scmp.eq.s32.totalorder %s18, 1
      %p62 = por %p60, %p61
      %p64 = scmp.ne.s32.totalorder %s49, %s63
      %p65 = scmp.eq.s32.totalorder %s18, 0
      %p66 = por %p64, %p65
      %s68 = sadd.s32 %s67, 1
      %p71 = scmp.eq.s32.totalorder %s12, 1
      %p72 = scmp.ne.s32.totalorder %s67, %s69
      %p73 = scmp.eq.s32.totalorder %s12, 0
      %p74 = por %p72, %p73
      %p75 = scmp.ne.s32.totalorder %s67, %s69
      %p76 = scmp.eq.s32.totalorder %s17, 1
      %p77 = por %p75, %p76
      %p78 = scmp.ne.s32.totalorder %s69, %s70
      %p79 = scmp.eq.s32.totalorder %s17, 0
      %p80 = por %p78, %p79
      %p81 = scmp.ne.s32.totalorder %s69, %s70
      %p82 = scmp.eq.s32.totalorder %s18, 1
      %p83 = por %p81, %p82
      %p85 = scmp.ne.s32.totalorder %s70, %s84
      %p86 = scmp.eq.s32.totalorder %s18, 0
      %p87 = por %p85, %p86
      %s88 = ssub.s32 %s12, %s19
      %p89 = scmp.eq.s32.totalorder %s88, 0
      %s91 = sadd.s32 %s90, 1
      %s92 = scalar_select %p89, %s90, %s91
      %p95 = pneg %p89
      %p96 = scmp.eq.s32.totalorder %s12, 1
      %p97 = por %p95, %p96
      %p98 = scmp.ne.s32.totalorder %s90, %s93
      %p99 = scmp.eq.s32.totalorder %s12, 0
      %p100 = por %p98, %p99
      %p101 = scmp.ne.s32.totalorder %s90, %s93
      %p102 = scmp.eq.s32.totalorder %s17, 1
      %p103 = por %p101, %p102
      %p104 = scmp.ne.s32.totalorder %s93, %s94
      %p105 = scmp.eq.s32.totalorder %s17, 0
      %p106 = por %p104, %p105
      %p107 = scmp.ne.s32.totalorder %s93, %s94
      %p108 = scmp.eq.s32.totalorder %s18, 1
      %p109 = por %p107, %p108
      %p111 = scmp.ne.s32.totalorder %s94, %s110
      %p112 = scmp.eq.s32.totalorder %s18, 0
      %p113 = por %p111, %p112
      %p114 = scmp.le.s32.totalorder 1, %s12
      %p115 = scmp.lt.s32.totalorder %s12, 3
      %p116 = pnand %p114, %p115
      %p117 = pneg %p116
      // Predicated region
      $region9: #{tpu_custom_call.1} parent=5 // pred_check
        _
      $region10: #{tpu_custom_call.1} parent=5 // pred_check_branch
        %119 = sbr.rel (%p116) target = $region12
      $region11: #{tpu_custom_call.1} parent=5 // pred_region
        %s120 = ssub.s32 %s12, 1
        // Predicated region
        $region13: #{tpu_custom_call.1} parent=11 // pred_check
          %p121 = pneg %p59
        $region14: #{tpu_custom_call.1} parent=11 // pred_check_branch
          %123 = sbr.rel (%p121) target = $region16
        $region15: #{tpu_custom_call.1} parent=11 // pred_region
          _
        $region16: #{tpu_custom_call.1} parent=11 // pred_fallthru
          _
        // Predicated region
        $region17: #{tpu_custom_call.1} parent=11 // pred_check
          %p124 = pneg %p80
        $region18: #{tpu_custom_call.1} parent=11 // pred_check_branch
          %126 = sbr.rel (%p124) target = $region20
        $region19: #{tpu_custom_call.1} parent=11 // pred_region
          _
        $region20: #{tpu_custom_call.1} parent=11 // pred_fallthru
          _
      $region12: #{tpu_custom_call.1} parent=5 // pred_fallthru
        _
      %p127 = scmp.lt.s32.totalorder %s12, 2
      // Predicated region
      $region21: #{tpu_custom_call.1} parent=5 // pred_check
        %p128 = pneg %p127
      $region22: #{tpu_custom_call.1} parent=5 // pred_check_branch
        %130 = sbr.rel (%p128) target = $region24
      $region23: #{tpu_custom_call.1} parent=5 // pred_region
        // Predicated region
        $region25: #{tpu_custom_call.1} parent=23 // pred_check
          %p131 = pneg %p32
        $region26: #{tpu_custom_call.1} parent=23 // pred_check_branch
          %133 = sbr.rel (%p131) target = $region28
        $region27: #{tpu_custom_call.1} parent=23 // pred_region
          %s134 = smul.u32 64, %s12
          %p135 = scmp.lt.s32.totalorder %s134, 127
          %s136 = scalar_select %p135, %s134, 127
          %s137 = smul.addr %s136, 8
          %s138 = scalar_lea.vmem %s0, %s137
          %s139 = smul.u32 64, %s12
        $region28: #{tpu_custom_call.1} parent=23 // pred_fallthru
          _
      $region24: #{tpu_custom_call.1} parent=5 // pred_fallthru
        _
      %p140 = scmp.le.s32.totalorder 1, %s12
      %p141 = scmp.lt.s32.totalorder %s12, 3
      %p142 = pnand %p140, %p141
      %p143 = pneg %p142
      // Predicated region
      $region29: #{tpu_custom_call.1} parent=5 // pred_check
        _
      $region30: #{tpu_custom_call.1} parent=5 // pred_check_branch
        %145 = sbr.rel (%p142) target = $region32
      $region31: #{tpu_custom_call.1} parent=5 // pred_region
        %s146 = ssub.s32 %s12, 1
        %s147 = smul.u32 64, %s17
        %p148 = scmp.lt.s32.totalorder %s147, 127
        %s149 = scalar_select %p148, %s147, 127
        %s150 = smul.addr %s149, 8
        %s151 = scalar_lea.vmem %s0, %s150
        %p152 = pneg %p38
        %p153 = pneg %p35
        %p154 = pneg %p59
        %p155 = pneg %p56
        %p156 = pneg %p80
        %p157 = pneg %p77
        %p158 = pneg %p106
        %p159 = pneg %p103
        %s160 = sand.u32 %s93, 1
        %s161 = scalar_lea.sflag [#allocation3], %s160
        %s162 = sand.u32 %s93, 1
        %s163 = smul.addr %s162, 512
        %s164 = scalar_lea.vmem [#allocation2], %s163
        %s165 = smul.u32 64, %s17
        %p166 = scmp.lt.s32.totalorder %s165, 127
        %s167 = scalar_select %p166, %s165, 127
        %s168 = smul.addr %s167, 8
        %s169 = scalar_lea.vmem %s0, %s168
        %s170 = smul.u32 64, %s17
        %s171 = smul.u32 64, %s17
        %v172 = vld [vmem:[%s169] sm:$0xff]
        %v173 = vld [vmem:[%s169 + $0x8] sm:$0xff]
        %v174 = vld [vmem:[%s169 + $0x10] sm:$0xff]
        %v175 = vld [vmem:[%s169 + $0x18] sm:$0xff]
        %v176 = vld [vmem:[%s169 + $0x20] sm:$0xff]
        %v177 = vld [vmem:[%s169 + $0x28] sm:$0xff]
        %v178 = vld [vmem:[%s169 + $0x30] sm:$0xff]
        %v179 = vld [vmem:[%s169 + $0x38] sm:$0xff]
        %v180 = vld [vmem:[%s169 + $0x40] sm:$0xff]
        %v181 = vld [vmem:[%s169 + $0x48] sm:$0xff]
        %v182 = vld [vmem:[%s169 + $0x50] sm:$0xff]
        %v183 = vld [vmem:[%s169 + $0x58] sm:$0xff]
        %v184 = vld [vmem:[%s169 + $0x60] sm:$0xff]
        %v185 = vld [vmem:[%s169 + $0x68] sm:$0xff]
        %v186 = vld [vmem:[%s169 + $0x70] sm:$0xff]
        %v187 = vld [vmem:[%s169 + $0x78] sm:$0xff]
        %v188 = vld [vmem:[%s169 + $0x80] sm:$0xff]
        %v189 = vld [vmem:[%s169 + $0x88] sm:$0xff]
        %v190 = vld [vmem:[%s169 + $0x90] sm:$0xff]
        %v191 = vld [vmem:[%s169 + $0x98] sm:$0xff]
        %v192 = vld [vmem:[%s169 + $0xa0] sm:$0xff]
        %v193 = vld [vmem:[%s169 + $0xa8] sm:$0xff]
        %v194 = vld [vmem:[%s169 + $0xb0] sm:$0xff]
        %v195 = vld [vmem:[%s169 + $0xb8] sm:$0xff]
        %v196 = vld [vmem:[%s169 + $0xc0] sm:$0xff]
        %v197 = vld [vmem:[%s169 + $0xc8] sm:$0xff]
        %v198 = vld [vmem:[%s169 + $0xd0] sm:$0xff]
        %v199 = vld [vmem:[%s169 + $0xd8] sm:$0xff]
        %v200 = vld [vmem:[%s169 + $0xe0] sm:$0xff]
        %v201 = vld [vmem:[%s169 + $0xe8] sm:$0xff]
        %v202 = vld [vmem:[%s169 + $0xf0] sm:$0xff]
        %v203 = vld [vmem:[%s169 + $0xf8] sm:$0xff]
        %v204 = vld [vmem:[%s169 + $0x100] sm:$0xff]
        %v205 = vld [vmem:[%s169 + $0x108] sm:$0xff]
        %v206 = vld [vmem:[%s169 + $0x110] sm:$0xff]
        %v207 = vld [vmem:[%s169 + $0x118] sm:$0xff]
        %v208 = vld [vmem:[%s169 + $0x120] sm:$0xff]
        %v209 = vld [vmem:[%s169 + $0x128] sm:$0xff]
        %v210 = vld [vmem:[%s169 + $0x130] sm:$0xff]
        %v211 = vld [vmem:[%s169 + $0x138] sm:$0xff]
        %v212 = vld [vmem:[%s169 + $0x140] sm:$0xff]
        %v213 = vld [vmem:[%s169 + $0x148] sm:$0xff]
        %v214 = vld [vmem:[%s169 + $0x150] sm:$0xff]
        %v215 = vld [vmem:[%s169 + $0x158] sm:$0xff]
        %v216 = vld [vmem:[%s169 + $0x160] sm:$0xff]
        %v217 = vld [vmem:[%s169 + $0x168] sm:$0xff]
        %v218 = vld [vmem:[%s169 + $0x170] sm:$0xff]
        %v219 = vld [vmem:[%s169 + $0x178] sm:$0xff]
        %v220 = vld [vmem:[%s169 + $0x180] sm:$0xff]
        %v221 = vld [vmem:[%s169 + $0x188] sm:$0xff]
        %v222 = vld [vmem:[%s169 + $0x190] sm:$0xff]
        %v223 = vld [vmem:[%s169 + $0x198] sm:$0xff]
        %v224 = vld [vmem:[%s169 + $0x1a0] sm:$0xff]
        %v225 = vld [vmem:[%s169 + $0x1a8] sm:$0xff]
        %v226 = vld [vmem:[%s169 + $0x1b0] sm:$0xff]
        %v227 = vld [vmem:[%s169 + $0x1b8] sm:$0xff]
        %v228 = vld [vmem:[%s169 + $0x1c0] sm:$0xff]
        %v229 = vld [vmem:[%s169 + $0x1c8] sm:$0xff]
        %v230 = vld [vmem:[%s169 + $0x1d0] sm:$0xff]
        %v231 = vld [vmem:[%s169 + $0x1d8] sm:$0xff]
        %v232 = vld [vmem:[%s169 + $0x1e0] sm:$0xff]
        %v233 = vld [vmem:[%s169 + $0x1e8] sm:$0xff]
        %v234 = vld [vmem:[%s169 + $0x1f0] sm:$0xff]
        %v235 = vld [vmem:[%s169 + $0x1f8] sm:$0xff]
        %v236 = vld [vmem:[%s1] sm:$0xff]
        %v237 = vld [vmem:[%s1 + $0x8] sm:$0xff]
        %v238 = vld [vmem:[%s1 + $0x10] sm:$0xff]
        %v239 = vld [vmem:[%s1 + $0x18] sm:$0xff]
        %v240 = vld [vmem:[%s1 + $0x20] sm:$0xff]
        %v241 = vld [vmem:[%s1 + $0x28] sm:$0xff]
        %v242 = vld [vmem:[%s1 + $0x30] sm:$0xff]
        %v243 = vld [vmem:[%s1 + $0x38] sm:$0xff]
        %v244 = vld [vmem:[%s1 + $0x40] sm:$0xff]
        %v245 = vld [vmem:[%s1 + $0x48] sm:$0xff]
        %v246 = vld [vmem:[%s1 + $0x50] sm:$0xff]
        %v247 = vld [vmem:[%s1 + $0x58] sm:$0xff]
        %v248 = vld [vmem:[%s1 + $0x60] sm:$0xff]
        %v249 = vld [vmem:[%s1 + $0x68] sm:$0xff]
        %v250 = vld [vmem:[%s1 + $0x70] sm:$0xff]
        %v251 = vld [vmem:[%s1 + $0x78] sm:$0xff]
        %v252 = vld [vmem:[%s2] sm:$0x1]
        %v254 = vperm.slane %v252, 0
        %vm256 = vcmask 523264
        %v258 = vsel %vm256, %v172, 0
        %v261 = vsel %vm256, %v173, 0
        %v264 = vsel %vm256, %v174, 0
        %v267 = vsel %vm256, %v175, 0
        %v270 = vsel %vm256, %v176, 0
        %v273 = vsel %vm256, %v177, 0
        %v276 = vsel %vm256, %v178, 0
        %v279 = vsel %vm256, %v179, 0
        %v282 = vsel %vm256, %v180, 0
        %v285 = vsel %vm256, %v181, 0
        %v288 = vsel %vm256, %v182, 0
        %v291 = vsel %vm256, %v183, 0
        %v294 = vsel %vm256, %v184, 0
        %v297 = vsel %vm256, %v185, 0
        %v300 = vsel %vm256, %v186, 0
        %v303 = vsel %vm256, %v187, 0
        %v306 = vsel %vm256, %v188, 0
        %v309 = vsel %vm256, %v189, 0
        %v312 = vsel %vm256, %v190, 0
        %v315 = vsel %vm256, %v191, 0
        %v318 = vsel %vm256, %v192, 0
        %v321 = vsel %vm256, %v193, 0
        %v324 = vsel %vm256, %v194, 0
        %v327 = vsel %vm256, %v195, 0
        %v330 = vsel %vm256, %v196, 0
        %v333 = vsel %vm256, %v197, 0
        %v336 = vsel %vm256, %v198, 0
        %v339 = vsel %vm256, %v199, 0
        %v342 = vsel %vm256, %v200, 0
        %v345 = vsel %vm256, %v201, 0
        %v348 = vsel %vm256, %v202, 0
        %v351 = vsel %vm256, %v203, 0
        %v354 = vsel %vm256, %v204, 0
        %v357 = vsel %vm256, %v205, 0
        %v360 = vsel %vm256, %v206, 0
        %v363 = vsel %vm256, %v207, 0
        %v366 = vsel %vm256, %v208, 0
        %v369 = vsel %vm256, %v209, 0
        %v372 = vsel %vm256, %v210, 0
        %v375 = vsel %vm256, %v211, 0
        %v378 = vsel %vm256, %v212, 0
        %v381 = vsel %vm256, %v213, 0
        %v384 = vsel %vm256, %v214, 0
        %v387 = vsel %vm256, %v215, 0
        %v390 = vsel %vm256, %v216, 0
        %v393 = vsel %vm256, %v217, 0
        %v396 = vsel %vm256, %v218, 0
        %v399 = vsel %vm256, %v219, 0
        %v402 = vsel %vm256, %v220, 0
        %v405 = vsel %vm256, %v221, 0
        %v408 = vsel %vm256, %v222, 0
        %v411 = vsel %vm256, %v223, 0
        %v414 = vsel %vm256, %v224, 0
        %v417 = vsel %vm256, %v225, 0
        %v420 = vsel %vm256, %v226, 0
        %v423 = vsel %vm256, %v227, 0
        %v426 = vsel %vm256, %v228, 0
        %v429 = vsel %vm256, %v229, 0
        %v432 = vsel %vm256, %v230, 0
        %v435 = vsel %vm256, %v231, 0
        %v438 = vsel %vm256, %v232, 0
        %v441 = vsel %vm256, %v233, 0
        %v444 = vsel %vm256, %v234, 0
        %v447 = vsel %vm256, %v235, 0
        %v450 = vsel %vm256, %v236, 0
        %v453 = vsel %vm256, %v237, 0
        %v456 = vsel %vm256, %v238, 0
        %v459 = vsel %vm256, %v239, 0
        %v462 = vsel %vm256, %v240, 0
        %v465 = vsel %vm256, %v241, 0
        %v468 = vsel %vm256, %v242, 0
        %v471 = vsel %vm256, %v243, 0
        %v474 = vsel %vm256, %v244, 0
        %v477 = vsel %vm256, %v245, 0
        %v480 = vsel %vm256, %v246, 0
        %v483 = vsel %vm256, %v247, 0
        %v486 = vsel %vm256, %v248, 0
        %v489 = vsel %vm256, %v249, 0
        %v492 = vsel %vm256, %v250, 0
        %v495 = vsel %vm256, %v251, 0
        %497 = vmatpush.xpose.msra.mxu0 %v495
        %498 = vmatpush.xpose.msra.mxu0 %v492
        %499 = vmatpush.xpose.msra.mxu0 %v489
        %500 = vmatpush.xpose.msra.mxu0 %v486
        %501 = vmatpush.xpose.msra.mxu0 %v483
        %502 = vmatpush.xpose.msra.mxu0 %v480
        %503 = vmatpush.xpose.msra.mxu0 %v477
        %504 = vmatpush.xpose.msra.mxu0 %v474
        %505 = vmatpush.xpose.msra.mxu0 %v471
        %506 = vmatpush.xpose.msra.mxu0 %v468
        %507 = vmatpush.xpose.msra.mxu0 %v465
        %508 = vmatpush.xpose.msra.mxu0 %v462
        %509 = vmatpush.xpose.msra.mxu0 %v459
        %510 = vmatpush.xpose.msra.mxu0 %v456
        %511 = vmatpush.xpose.msra.mxu0 %v453
        %512 = vmatpush.xpose.msra.mxu0 %v450
        %513 = vmatmul.f32.gmra.mxu0 %v258
        %v514 = vpop.f32.mrf.mxu0
        %v515 = vadd.f32 %v254, %v514
        %516 = vmatmul.f32.gmra.mxu0 %v261
        %v517 = vpop.f32.mrf.mxu0
        %v518 = vadd.f32 %v254, %v517
        %519 = vmatmul.f32.gmra.mxu0 %v264
        %v520 = vpop.f32.mrf.mxu0
        %v521 = vadd.f32 %v254, %v520
        %522 = vmatmul.f32.gmra.mxu0 %v267
        %v523 = vpop.f32.mrf.mxu0
        %v524 = vadd.f32 %v254, %v523
        %525 = vmatmul.f32.gmra.mxu0 %v270
        %v526 = vpop.f32.mrf.mxu0
        %v527 = vadd.f32 %v254, %v526
        %528 = vmatmul.f32.gmra.mxu0 %v273
        %v529 = vpop.f32.mrf.mxu0
        %v530 = vadd.f32 %v254, %v529
        %531 = vmatmul.f32.gmra.mxu0 %v276
        %v532 = vpop.f32.mrf.mxu0
        %v533 = vadd.f32 %v254, %v532
        %534 = vmatmul.f32.gmra.mxu0 %v279
        %v535 = vpop.f32.mrf.mxu0
        %v536 = vadd.f32 %v254, %v535
        %537 = vmatmul.f32.gmra.mxu0 %v282
        %v538 = vpop.f32.mrf.mxu0
        %v539 = vadd.f32 %v254, %v538
        %540 = vmatmul.f32.gmra.mxu0 %v285
        %v541 = vpop.f32.mrf.mxu0
        %v542 = vadd.f32 %v254, %v541
        %543 = vmatmul.f32.gmra.mxu0 %v288
        %v544 = vpop.f32.mrf.mxu0
        %v545 = vadd.f32 %v254, %v544
        %546 = vmatmul.f32.gmra.mxu0 %v291
        %v547 = vpop.f32.mrf.mxu0
        %v548 = vadd.f32 %v254, %v547
        %549 = vmatmul.f32.gmra.mxu0 %v294
        %v550 = vpop.f32.mrf.mxu0
        %v551 = vadd.f32 %v254, %v550
        %552 = vmatmul.f32.gmra.mxu0 %v297
        %v553 = vpop.f32.mrf.mxu0
        %v554 = vadd.f32 %v254, %v553
        %555 = vmatmul.f32.gmra.mxu0 %v300
        %v556 = vpop.f32.mrf.mxu0
        %v557 = vadd.f32 %v254, %v556
        %558 = vmatmul.f32.gmra.mxu0 %v303
        %v559 = vpop.f32.mrf.mxu0
        %v560 = vadd.f32 %v254, %v559
        %561 = vmatmul.f32.gmra.mxu0 %v306
        %v562 = vpop.f32.mrf.mxu0
        %v563 = vadd.f32 %v254, %v562
        %564 = vmatmul.f32.gmra.mxu0 %v309
        %v565 = vpop.f32.mrf.mxu0
        %v566 = vadd.f32 %v254, %v565
        %567 = vmatmul.f32.gmra.mxu0 %v312
        %v568 = vpop.f32.mrf.mxu0
        %v569 = vadd.f32 %v254, %v568
        %570 = vmatmul.f32.gmra.mxu0 %v315
        %v571 = vpop.f32.mrf.mxu0
        %v572 = vadd.f32 %v254, %v571
        %573 = vmatmul.f32.gmra.mxu0 %v318
        %v574 = vpop.f32.mrf.mxu0
        %v575 = vadd.f32 %v254, %v574
        %576 = vmatmul.f32.gmra.mxu0 %v321
        %v577 = vpop.f32.mrf.mxu0
        %v578 = vadd.f32 %v254, %v577
        %579 = vmatmul.f32.gmra.mxu0 %v324
        %v580 = vpop.f32.mrf.mxu0
        %v581 = vadd.f32 %v254, %v580
        %582 = vmatmul.f32.gmra.mxu0 %v327
        %v583 = vpop.f32.mrf.mxu0
        %v584 = vadd.f32 %v254, %v583
        %585 = vmatmul.f32.gmra.mxu0 %v330
        %v586 = vpop.f32.mrf.mxu0
        %v587 = vadd.f32 %v254, %v586
        %588 = vmatmul.f32.gmra.mxu0 %v333
        %v589 = vpop.f32.mrf.mxu0
        %v590 = vadd.f32 %v254, %v589
        %591 = vmatmul.f32.gmra.mxu0 %v336
        %v592 = vpop.f32.mrf.mxu0
        %v593 = vadd.f32 %v254, %v592
        %594 = vmatmul.f32.gmra.mxu0 %v339
        %v595 = vpop.f32.mrf.mxu0
        %v596 = vadd.f32 %v254, %v595
        %597 = vmatmul.f32.gmra.mxu0 %v342
        %v598 = vpop.f32.mrf.mxu0
        %v599 = vadd.f32 %v254, %v598
        %600 = vmatmul.f32.gmra.mxu0 %v345
        %v601 = vpop.f32.mrf.mxu0
        %v602 = vadd.f32 %v254, %v601
        %603 = vmatmul.f32.gmra.mxu0 %v348
        %v604 = vpop.f32.mrf.mxu0
        %v605 = vadd.f32 %v254, %v604
        %606 = vmatmul.f32.gmra.mxu0 %v351
        %v607 = vpop.f32.mrf.mxu0
        %v608 = vadd.f32 %v254, %v607
        %609 = vmatmul.f32.gmra.mxu0 %v354
        %v610 = vpop.f32.mrf.mxu0
        %v611 = vadd.f32 %v254, %v610
        %612 = vmatmul.f32.gmra.mxu0 %v357
        %v613 = vpop.f32.mrf.mxu0
        %v614 = vadd.f32 %v254, %v613
        %615 = vmatmul.f32.gmra.mxu0 %v360
        %v616 = vpop.f32.mrf.mxu0
        %v617 = vadd.f32 %v254, %v616
        %618 = vmatmul.f32.gmra.mxu0 %v363
        %v619 = vpop.f32.mrf.mxu0
        %v620 = vadd.f32 %v254, %v619
        %621 = vmatmul.f32.gmra.mxu0 %v366
        %v622 = vpop.f32.mrf.mxu0
        %v623 = vadd.f32 %v254, %v622
        %624 = vmatmul.f32.gmra.mxu0 %v369
        %v625 = vpop.f32.mrf.mxu0
        %v626 = vadd.f32 %v254, %v625
        %627 = vmatmul.f32.gmra.mxu0 %v372
        %v628 = vpop.f32.mrf.mxu0
        %v629 = vadd.f32 %v254, %v628
        %630 = vmatmul.f32.gmra.mxu0 %v375
        %v631 = vpop.f32.mrf.mxu0
        %v632 = vadd.f32 %v254, %v631
        %633 = vmatmul.f32.gmra.mxu0 %v378
        %v634 = vpop.f32.mrf.mxu0
        %v635 = vadd.f32 %v254, %v634
        %636 = vmatmul.f32.gmra.mxu0 %v381
        %v637 = vpop.f32.mrf.mxu0
        %v638 = vadd.f32 %v254, %v637
        %639 = vmatmul.f32.gmra.mxu0 %v384
        %v640 = vpop.f32.mrf.mxu0
        %v641 = vadd.f32 %v254, %v640
        %642 = vmatmul.f32.gmra.mxu0 %v387
        %v643 = vpop.f32.mrf.mxu0
        %v644 = vadd.f32 %v254, %v643
        %645 = vmatmul.f32.gmra.mxu0 %v390
        %v646 = vpop.f32.mrf.mxu0
        %v647 = vadd.f32 %v254, %v646
        %648 = vmatmul.f32.gmra.mxu0 %v393
        %v649 = vpop.f32.mrf.mxu0
        %v650 = vadd.f32 %v254, %v649
        %651 = vmatmul.f32.gmra.mxu0 %v396
        %v652 = vpop.f32.mrf.mxu0
        %v653 = vadd.f32 %v254, %v652
        %654 = vmatmul.f32.gmra.mxu0 %v399
        %v655 = vpop.f32.mrf.mxu0
        %v656 = vadd.f32 %v254, %v655
        %657 = vmatmul.f32.gmra.mxu0 %v402
        %v658 = vpop.f32.mrf.mxu0
        %v659 = vadd.f32 %v254, %v658
        %660 = vmatmul.f32.gmra.mxu0 %v405
        %v661 = vpop.f32.mrf.mxu0
        %v662 = vadd.f32 %v254, %v661
        %663 = vmatmul.f32.gmra.mxu0 %v408
        %v664 = vpop.f32.mrf.mxu0
        %v665 = vadd.f32 %v254, %v664
        %666 = vmatmul.f32.gmra.mxu0 %v411
        %v667 = vpop.f32.mrf.mxu0
        %v668 = vadd.f32 %v254, %v667
        %669 = vmatmul.f32.gmra.mxu0 %v414
        %v670 = vpop.f32.mrf.mxu0
        %v671 = vadd.f32 %v254, %v670
        %672 = vmatmul.f32.gmra.mxu0 %v417
        %v673 = vpop.f32.mrf.mxu0
        %v674 = vadd.f32 %v254, %v673
        %675 = vmatmul.f32.gmra.mxu0 %v420
        %v676 = vpop.f32.mrf.mxu0
        %v677 = vadd.f32 %v254, %v676
        %678 = vmatmul.f32.gmra.mxu0 %v423
        %v679 = vpop.f32.mrf.mxu0
        %v680 = vadd.f32 %v254, %v679
        %681 = vmatmul.f32.gmra.mxu0 %v426
        %v682 = vpop.f32.mrf.mxu0
        %v683 = vadd.f32 %v254, %v682
        %684 = vmatmul.f32.gmra.mxu0 %v429
        %v685 = vpop.f32.mrf.mxu0
        %v686 = vadd.f32 %v254, %v685
        %687 = vmatmul.f32.gmra.mxu0 %v432
        %v688 = vpop.f32.mrf.mxu0
        %v689 = vadd.f32 %v254, %v688
        %690 = vmatmul.f32.gmra.mxu0 %v435
        %v691 = vpop.f32.mrf.mxu0
        %v692 = vadd.f32 %v254, %v691
        %693 = vmatmul.f32.gmra.mxu0 %v438
        %v694 = vpop.f32.mrf.mxu0
        %v695 = vadd.f32 %v254, %v694
        %696 = vmatmul.f32.gmra.mxu0 %v441
        %v697 = vpop.f32.mrf.mxu0
        %v698 = vadd.f32 %v254, %v697
        %699 = vmatmul.f32.gmra.mxu0 %v444
        %v700 = vpop.f32.mrf.mxu0
        %v701 = vadd.f32 %v254, %v700
        %702 = vmatmul.f32.gmra.mxu0 %v447
        %v703 = vpop.f32.mrf.mxu0
        %v704 = vadd.f32 %v254, %v703
        %705 = vdwg.mxu0
        %v706 = vmul.f32 %v515, 30.0
        %v707 = vmul.f32 %v518, 30.0
        %v708 = vmul.f32 %v521, 30.0
        %v709 = vmul.f32 %v524, 30.0
        %v710 = vmul.f32 %v527, 30.0
        %v711 = vmul.f32 %v530, 30.0
        %v712 = vmul.f32 %v533, 30.0
        %v713 = vmul.f32 %v536, 30.0
        %v714 = vmul.f32 %v539, 30.0
        %v715 = vmul.f32 %v542, 30.0
        %v716 = vmul.f32 %v545, 30.0
        %v717 = vmul.f32 %v548, 30.0
        %v718 = vmul.f32 %v551, 30.0
        %v719 = vmul.f32 %v554, 30.0
        %v720 = vmul.f32 %v557, 30.0
        %v721 = vmul.f32 %v560, 30.0
        %v722 = vmul.f32 %v563, 30.0
        %v723 = vmul.f32 %v566, 30.0
        %v724 = vmul.f32 %v569, 30.0
        %v725 = vmul.f32 %v572, 30.0
        %v726 = vmul.f32 %v575, 30.0
        %v727 = vmul.f32 %v578, 30.0
        %v728 = vmul.f32 %v581, 30.0
        %v729 = vmul.f32 %v584, 30.0
        %v730 = vmul.f32 %v587, 30.0
        %v731 = vmul.f32 %v590, 30.0
        %v732 = vmul.f32 %v593, 30.0
        %v733 = vmul.f32 %v596, 30.0
        %v734 = vmul.f32 %v599, 30.0
        %v735 = vmul.f32 %v602, 30.0
        %v736 = vmul.f32 %v605, 30.0
        %v737 = vmul.f32 %v608, 30.0
        %v738 = vmul.f32 %v611, 30.0
        %v739 = vmul.f32 %v614, 30.0
        %v740 = vmul.f32 %v617, 30.0
        %v741 = vmul.f32 %v620, 30.0
        %v742 = vmul.f32 %v623, 30.0
        %v743 = vmul.f32 %v626, 30.0
        %v744 = vmul.f32 %v629, 30.0
        %v745 = vmul.f32 %v632, 30.0
        %v746 = vmul.f32 %v635, 30.0
        %v747 = vmul.f32 %v638, 30.0
        %v748 = vmul.f32 %v641, 30.0
        %v749 = vmul.f32 %v644, 30.0
        %v750 = vmul.f32 %v647, 30.0
        %v751 = vmul.f32 %v650, 30.0
        %v752 = vmul.f32 %v653, 30.0
        %v753 = vmul.f32 %v656, 30.0
        %v754 = vmul.f32 %v659, 30.0
        %v755 = vmul.f32 %v662, 30.0
        %v756 = vmul.f32 %v665, 30.0
        %v757 = vmul.f32 %v668, 30.0
        %v758 = vmul.f32 %v671, 30.0
        %v759 = vmul.f32 %v674, 30.0
        %v760 = vmul.f32 %v677, 30.0
        %v761 = vmul.f32 %v680, 30.0
        %v762 = vmul.f32 %v683, 30.0
        %v763 = vmul.f32 %v686, 30.0
        %v764 = vmul.f32 %v689, 30.0
        %v765 = vmul.f32 %v692, 30.0
        %v766 = vmul.f32 %v695, 30.0
        %v767 = vmul.f32 %v698, 30.0
        %v768 = vmul.f32 %v701, 30.0
        %v769 = vmul.f32 %v704, 30.0
        %v770 = vand.u32 2147483647, %v706
        %vm771 = vcmp.le.f32.partialorder %v770, 0.7853982
        %vm772 = vcmp.lt.s32.totalorder %v706, 0
        %v773 = vand.u32 %v706, 2139095040
        %v774 = vshrl.u32 %v773, 23
        %v775 = vsub.s32 %v774, 127
        %v776 = vand.u32 2147483647, %v706
        %v777 = vand.u32 %v776, 8388607
        %v778 = vor.u32 %v777, 8388608
        %v779 = vsub.s32 0, %v778
        %v780 = vadd.s32 %v775, 1
        %vm781 = vcmp.gt.s32.totalorder %v780, 0
        %v782 = vsel %vm781, %v780, 0
        %v783 = vshrl.u32 %v782, 5
        %v784 = vand.u32 %v782, 31
        %v785 = vsub.s32 32, %v784
        %v786 = vshrl.u32 683565275, %v785
        %v787 = vshll.u32 683565275, %v784
        %v788 = vshrl.u32 2475754826, %v785
        %v789 = vor.u32 %v787, %v788
        %v790 = vshll.u32 2475754826, %v784
        %v791 = vshrl.u32 2131351028, %v785
        %v792 = vor.u32 %v790, %v791
        %v793 = vshll.u32 2131351028, %v784
        %v794 = vshrl.u32 2102212464, %v785
        %v795 = vor.u32 %v793, %v794
        %v796 = vshll.u32 2102212464, %v784
        %v797 = vshrl.u32 920167782, %v785
        %v798 = vor.u32 %v796, %v797
        %v799 = vshll.u32 920167782, %v784
        %v800 = vshrl.u32 1326507024, %v785
        %v801 = vor.u32 %v799, %v800
        %vm802 = vcmp.lt.s32.totalorder %v783, 1
        %vm803 = vcmp.lt.s32.totalorder %v783, 2
        %vm804 = vcmp.lt.s32.totalorder %v783, 3
        %vm805 = vcmp.lt.s32.totalorder %v783, 4
        %v806 = vsel %vm802, %v786, %v789
        %v807 = vsel %vm805, %v795, 2102212464
        %v808 = vsel %vm804, %v792, %v807
        %v809 = vsel %vm803, %v806, %v808
        %v810 = vsel %vm802, %v789, %v792
        %v811 = vsel %vm805, %v798, 920167782
        %v812 = vsel %vm804, %v795, %v811
        %v813 = vsel %vm803, %v810, %v812
        %v814 = vsel %vm802, %v792, %v795
        %v815 = vsel %vm805, %v801, 1326507024
        %v816 = vsel %vm804, %v798, %v815
        %v817 = vsel %vm803, %v814, %v816
        %v818 = vshll.u32 %v778, 8
        %v819 = vand.u32 %v818, 65535
        %v820 = vshrl.u32 %v818, 16
        %v821 = vand.u32 %v817, 65535
        %v822 = vshrl.u32 %v817, 16
        %v823 = vmul.u32 %v819, %v821
        %v824 = vmul.u32 %v819, %v822
        %v825 = vmul.u32 %v820, %v821
        %v826 = vmul.u32 %v820, %v822
        %v827 = vshll.u32 %v824, 16
        %v828 = vshrl.u32 %v824, 16
        %v829 = vshll.u32 %v825, 16
        %v830 = vshrl.u32 %v825, 16
        %vm831 = vc.u32 %v823, %v827
        %v832 = vsel %vm831, 1, 0
        %v833 = vadd.s32 %v823, %v827
        %v834 = vadd.s32 %v826, %v832
        %vm835 = vc.u32 %v833, %v829
        %v836 = vsel %vm835, 1, 0
        %v837 = vadd.s32 %v833, %v829
        %v838 = vadd.s32 %v834, %v836
        %v839 = vadd.s32 %v838, %v828
        %v840 = vadd.s32 %v839, %v830
        %v841 = vand.u32 %v818, 65535
        %v842 = vshrl.u32 %v818, 16
        %v843 = vand.u32 %v813, 65535
        %v844 = vshrl.u32 %v813, 16
        %v845 = vmul.u32 %v841, %v843
        %v846 = vmul.u32 %v841, %v844
        %v847 = vmul.u32 %v842, %v843
        %v848 = vmul.u32 %v842, %v844
        %v849 = vshll.u32 %v846, 16
        %v850 = vshrl.u32 %v846, 16
        %v851 = vshll.u32 %v847, 16
        %v852 = vshrl.u32 %v847, 16
        %vm853 = vc.u32 %v845, %v849
        %v854 = vsel %vm853, 1, 0
        %v855 = vadd.s32 %v845, %v849
        %v856 = vadd.s32 %v848, %v854
        %vm857 = vc.u32 %v855, %v851
        %v858 = vsel %vm857, 1, 0
        %v859 = vadd.s32 %v855, %v851
        %v860 = vadd.s32 %v856, %v858
        %v861 = vadd.s32 %v860, %v850
        %v862 = vadd.s32 %v861, %v852
        %v863 = vmul.u32 %v818, %v809
        %v864 = vadd.s32 %v840, %v859
        %vm865 = vc.u32 %v840, %v859
        %v866 = vadd.s32 %v862, 1
        %v867 = vsel %vm865, %v866, %v862
        %v868 = vadd.s32 %v863, %v867
        %v869 = vadd.s32 %v868, 536870912
        %v870 = vshrl.u32 %v869, 30
        %v871 = vshll.u32 %v870, 30
        %v872 = vsub.s32 %v868, %v871
        %vm873 = vcmp.lt.s32.totalorder %v872, 0
        %v874 = vsub.s32 0, %v872
        %v875 = vsel %vm873, %v874, %v872
        %v876 = vclz %v875
        %v877 = vsub.s32 %v876, 2
        %vm878 = vcmp.gt.s32.totalorder 0, %v877
        %v879 = vsel %vm878, 0, %v877
        %v880 = vsub.s32 32, %v879
        %v881 = vshll.u32 %v872, %v879
        %v882 = vshrl.u32 %v864, %v880
        %v883 = vor.u32 %v881, %v882
        %v884 = vsub.s32 4294967266, %v879
        %v885 = vadd.s32 %v884, 127
        %v886 = vshll.u32 %v885, 23
        %v887 = vor.u32 4788187, %v886
        %v888 = vand.u32 2147483647, %v887
        %v890 = vcvt.s32.f32 %v883
        %v891 = vmul.f32 %v890, %v888
        %v892 = vxor.u32 %v891, 2147483648
        %v893 = vsel %vm772, %v892, %v891
        %v894 = vsub.s32 4, %v870
        %v895 = vsel %vm772, %v894, %v870
        %v896 = vsel %vm771, %v706, %v893
        %v897 = vsel %vm771, 0, %v895
        %v898 = vmul.f32 %v896, %v896
        %v899 = vmul.f32 %v898, -0.001358992
        %v900 = vadd.f32 %v899, 0.041655596
        %v901 = vmul.f32 %v898, %v900
        %v902 = vadd.f32 %v901, -0.4999988
        %v903 = vmul.f32 %v898, %v902
        %v904 = vadd.f32 1.0, %v903
        %v905 = vmul.f32 %v896, %v896
        %v906 = vmul.f32 %v905, -0.00019511016
        %v907 = vadd.f32 %v906, 0.008332121
        %v908 = vmul.f32 %v905, %v907
        %v909 = vadd.f32 %v908, -0.16666654
        %v910 = vmul.f32 %v905, %v909
        %v911 = vadd.f32 %v910, 1.0
        %v912 = vmul.f32 %v911, %v896
        %vm913 = vweird.f32 %v706
        %v914 = vadd.s32 %v897, 3
        %v915 = vand.u32 %v914, 3
        %vm916 = vcmp.lt.s32.totalorder %v915, 2
        %vm917 = vcmp.eq.s32.totalorder %v915, 0
        %v918 = vxor.u32 %v912, 2147483648
        %v919 = vsel %vm917, %v904, %v918
        %vm920 = vcmp.eq.s32.totalorder %v915, 2
        %v921 = vxor.u32 %v904, 2147483648
        %v922 = vsel %vm920, %v921, %v912
        %v923 = vsel %vm916, %v919, %v922
        %v924 = vsel %vm913, nan, %v923
        %v925 = vand.u32 2147483647, %v707
        %vm926 = vcmp.le.f32.partialorder %v925, 0.7853982
        %vm927 = vcmp.lt.s32.totalorder %v707, 0
        %v928 = vand.u32 %v707, 2139095040
        %v929 = vshrl.u32 %v928, 23
        %v930 = vsub.s32 %v929, 127
        %v931 = vand.u32 2147483647, %v707
        %v932 = vand.u32 %v931, 8388607
        %v933 = vor.u32 %v932, 8388608
        %v934 = vsub.s32 0, %v933
        %v935 = vadd.s32 %v930, 1
        %vm936 = vcmp.gt.s32.totalorder %v935, 0
        %v937 = vsel %vm936, %v935, 0
        %v938 = vshrl.u32 %v937, 5
        %v939 = vand.u32 %v937, 31
        %v940 = vsub.s32 32, %v939
        %v941 = vshrl.u32 683565275, %v940
        %v942 = vshll.u32 683565275, %v939
        %v943 = vshrl.u32 2475754826, %v940
        %v944 = vor.u32 %v942, %v943
        %v945 = vshll.u32 2475754826, %v939
        %v946 = vshrl.u32 2131351028, %v940
        %v947 = vor.u32 %v945, %v946
        %v948 = vshll.u32 2131351028, %v939
        %v949 = vshrl.u32 2102212464, %v940
        %v950 = vor.u32 %v948, %v949
        %v951 = vshll.u32 2102212464, %v939
        %v952 = vshrl.u32 920167782, %v940
        %v953 = vor.u32 %v951, %v952
        %v954 = vshll.u32 920167782, %v939
        %v955 = vshrl.u32 1326507024, %v940
        %v956 = vor.u32 %v954, %v955
        %vm957 = vcmp.lt.s32.totalorder %v938, 1
        %vm958 = vcmp.lt.s32.totalorder %v938, 2
        %vm959 = vcmp.lt.s32.totalorder %v938, 3
        %vm960 = vcmp.lt.s32.totalorder %v938, 4
        %v961 = vsel %vm957, %v941, %v944
        %v962 = vsel %vm960, %v950, 2102212464
        %v963 = vsel %vm959, %v947, %v962
        %v964 = vsel %vm958, %v961, %v963
        %v965 = vsel %vm957, %v944, %v947
        %v966 = vsel %vm960, %v953, 920167782
        %v967 = vsel %vm959, %v950, %v966
        %v968 = vsel %vm958, %v965, %v967
        %v969 = vsel %vm957, %v947, %v950
        %v970 = vsel %vm960, %v956, 1326507024
        %v971 = vsel %vm959, %v953, %v970
        %v972 = vsel %vm958, %v969, %v971
        %v973 = vshll.u32 %v933, 8
        %v974 = vand.u32 %v973, 65535
        %v975 = vshrl.u32 %v973, 16
        %v976 = vand.u32 %v972, 65535
        %v977 = vshrl.u32 %v972, 16
        %v978 = vmul.u32 %v974, %v976
        %v979 = vmul.u32 %v974, %v977
        %v980 = vmul.u32 %v975, %v976
        %v981 = vmul.u32 %v975, %v977
        %v982 = vshll.u32 %v979, 16
        %v983 = vshrl.u32 %v979, 16
        %v984 = vshll.u32 %v980, 16
        %v985 = vshrl.u32 %v980, 16
        %vm986 = vc.u32 %v978, %v982
        %v987 = vsel %vm986, 1, 0
        %v988 = vadd.s32 %v978, %v982
        %v989 = vadd.s32 %v981, %v987
        %vm990 = vc.u32 %v988, %v984
        %v991 = vsel %vm990, 1, 0
        %v992 = vadd.s32 %v988, %v984
        %v993 = vadd.s32 %v989, %v991
        %v994 = vadd.s32 %v993, %v983
        %v995 = vadd.s32 %v994, %v985
        %v996 = vand.u32 %v973, 65535
        %v997 = vshrl.u32 %v973, 16
        %v998 = vand.u32 %v968, 65535
        %v999 = vshrl.u32 %v968, 16
        %v1000 = vmul.u32 %v996, %v998
        %v1001 = vmul.u32 %v996, %v999
        %v1002 = vmul.u32 %v997, %v998
        %v1003 = vmul.u32 %v997, %v999
        %v1004 = vshll.u32 %v1001, 16
        %v1005 = vshrl.u32 %v1001, 16
        %v1006 = vshll.u32 %v1002, 16
        %v1007 = vshrl.u32 %v1002, 16
        %vm1008 = vc.u32 %v1000, %v1004
        %v1009 = vsel %vm1008, 1, 0
        %v1010 = vadd.s32 %v1000, %v1004
        %v1011 = vadd.s32 %v1003, %v1009
        %vm1012 = vc.u32 %v1010, %v1006
        %v1013 = vsel %vm1012, 1, 0
        %v1014 = vadd.s32 %v1010, %v1006
        %v1015 = vadd.s32 %v1011, %v1013
        %v1016 = vadd.s32 %v1015, %v1005
        %v1017 = vadd.s32 %v1016, %v1007
        %v1018 = vmul.u32 %v973, %v964
        %v1019 = vadd.s32 %v995, %v1014
        %vm1020 = vc.u32 %v995, %v1014
        %v1021 = vadd.s32 %v1017, 1
        %v1022 = vsel %vm1020, %v1021, %v1017
        %v1023 = vadd.s32 %v1018, %v1022
        %v1024 = vadd.s32 %v1023, 536870912
        %v1025 = vshrl.u32 %v1024, 30
        %v1026 = vshll.u32 %v1025, 30
        %v1027 = vsub.s32 %v1023, %v1026
        %vm1028 = vcmp.lt.s32.totalorder %v1027, 0
        %v1029 = vsub.s32 0, %v1027
        %v1030 = vsel %vm1028, %v1029, %v1027
        %v1031 = vclz %v1030
        %v1032 = vsub.s32 %v1031, 2
        %vm1033 = vcmp.gt.s32.totalorder 0, %v1032
        %v1034 = vsel %vm1033, 0, %v1032
        %v1035 = vsub.s32 32, %v1034
        %v1036 = vshll.u32 %v1027, %v1034
        %v1037 = vshrl.u32 %v1019, %v1035
        %v1038 = vor.u32 %v1036, %v1037
        %v1039 = vsub.s32 4294967266, %v1034
        %v1040 = vadd.s32 %v1039, 127
        %v1041 = vshll.u32 %v1040, 23
        %v1042 = vor.u32 4788187, %v1041
        %v1043 = vand.u32 2147483647, %v1042
        %v1045 = vcvt.s32.f32 %v1038
        %v1046 = vmul.f32 %v1045, %v1043
        %v1047 = vxor.u32 %v1046, 2147483648
        %v1048 = vsel %vm927, %v1047, %v1046
        %v1049 = vsub.s32 4, %v1025
        %v1050 = vsel %vm927, %v1049, %v1025
        %v1051 = vsel %vm926, %v707, %v1048
        %v1052 = vsel %vm926, 0, %v1050
        %v1053 = vmul.f32 %v1051, %v1051
        %v1054 = vmul.f32 %v1053, -0.001358992
        %v1055 = vadd.f32 %v1054, 0.041655596
        %v1056 = vmul.f32 %v1053, %v1055
        %v1057 = vadd.f32 %v1056, -0.4999988
        %v1058 = vmul.f32 %v1053, %v1057
        %v1059 = vadd.f32 1.0, %v1058
        %v1060 = vmul.f32 %v1051, %v1051
        %v1061 = vmul.f32 %v1060, -0.00019511016
        %v1062 = vadd.f32 %v1061, 0.008332121
        %v1063 = vmul.f32 %v1060, %v1062
        %v1064 = vadd.f32 %v1063, -0.16666654
        %v1065 = vmul.f32 %v1060, %v1064
        %v1066 = vadd.f32 %v1065, 1.0
        %v1067 = vmul.f32 %v1066, %v1051
        %vm1068 = vweird.f32 %v707
        %v1069 = vadd.s32 %v1052, 3
        %v1070 = vand.u32 %v1069, 3
        %vm1071 = vcmp.lt.s32.totalorder %v1070, 2
        %vm1072 = vcmp.eq.s32.totalorder %v1070, 0
        %v1073 = vxor.u32 %v1067, 2147483648
        %v1074 = vsel %vm1072, %v1059, %v1073
        %vm1075 = vcmp.eq.s32.totalorder %v1070, 2
        %v1076 = vxor.u32 %v1059, 2147483648
        %v1077 = vsel %vm1075, %v1076, %v1067
        %v1078 = vsel %vm1071, %v1074, %v1077
        %v1079 = vsel %vm1068, nan, %v1078
        %v1080 = vand.u32 2147483647, %v708
        %vm1081 = vcmp.le.f32.partialorder %v1080, 0.7853982
        %vm1082 = vcmp.lt.s32.totalorder %v708, 0
        %v1083 = vand.u32 %v708, 2139095040
        %v1084 = vshrl.u32 %v1083, 23
        %v1085 = vsub.s32 %v1084, 127
        %v1086 = vand.u32 2147483647, %v708
        %v1087 = vand.u32 %v1086, 8388607
        %v1088 = vor.u32 %v1087, 8388608
        %v1089 = vsub.s32 0, %v1088
        %v1090 = vadd.s32 %v1085, 1
        %vm1091 = vcmp.gt.s32.totalorder %v1090, 0
        %v1092 = vsel %vm1091, %v1090, 0
        %v1093 = vshrl.u32 %v1092, 5
        %v1094 = vand.u32 %v1092, 31
        %v1095 = vsub.s32 32, %v1094
        %v1096 = vshrl.u32 683565275, %v1095
        %v1097 = vshll.u32 683565275, %v1094
        %v1098 = vshrl.u32 2475754826, %v1095
        %v1099 = vor.u32 %v1097, %v1098
        %v1100 = vshll.u32 2475754826, %v1094
        %v1101 = vshrl.u32 2131351028, %v1095
        %v1102 = vor.u32 %v1100, %v1101
        %v1103 = vshll.u32 2131351028, %v1094
        %v1104 = vshrl.u32 2102212464, %v1095
        %v1105 = vor.u32 %v1103, %v1104
        %v1106 = vshll.u32 2102212464, %v1094
        %v1107 = vshrl.u32 920167782, %v1095
        %v1108 = vor.u32 %v1106, %v1107
        %v1109 = vshll.u32 920167782, %v1094
        %v1110 = vshrl.u32 1326507024, %v1095
        %v1111 = vor.u32 %v1109, %v1110
        %vm1112 = vcmp.lt.s32.totalorder %v1093, 1
        %vm1113 = vcmp.lt.s32.totalorder %v1093, 2
        %vm1114 = vcmp.lt.s32.totalorder %v1093, 3
        %vm1115 = vcmp.lt.s32.totalorder %v1093, 4
        %v1116 = vsel %vm1112, %v1096, %v1099
        %v1117 = vsel %vm1115, %v1105, 2102212464
        %v1118 = vsel %vm1114, %v1102, %v1117
        %v1119 = vsel %vm1113, %v1116, %v1118
        %v1120 = vsel %vm1112, %v1099, %v1102
        %v1121 = vsel %vm1115, %v1108, 920167782
        %v1122 = vsel %vm1114, %v1105, %v1121
        %v1123 = vsel %vm1113, %v1120, %v1122
        %v1124 = vsel %vm1112, %v1102, %v1105
        %v1125 = vsel %vm1115, %v1111, 1326507024
        %v1126 = vsel %vm1114, %v1108, %v1125
        %v1127 = vsel %vm1113, %v1124, %v1126
        %v1128 = vshll.u32 %v1088, 8
        %v1129 = vand.u32 %v1128, 65535
        %v1130 = vshrl.u32 %v1128, 16
        %v1131 = vand.u32 %v1127, 65535
        %v1132 = vshrl.u32 %v1127, 16
        %v1133 = vmul.u32 %v1129, %v1131
        %v1134 = vmul.u32 %v1129, %v1132
        %v1135 = vmul.u32 %v1130, %v1131
        %v1136 = vmul.u32 %v1130, %v1132
        %v1137 = vshll.u32 %v1134, 16
        %v1138 = vshrl.u32 %v1134, 16
        %v1139 = vshll.u32 %v1135, 16
        %v1140 = vshrl.u32 %v1135, 16
        %vm1141 = vc.u32 %v1133, %v1137
        %v1142 = vsel %vm1141, 1, 0
        %v1143 = vadd.s32 %v1133, %v1137
        %v1144 = vadd.s32 %v1136, %v1142
        %vm1145 = vc.u32 %v1143, %v1139
        %v1146 = vsel %vm1145, 1, 0
        %v1147 = vadd.s32 %v1143, %v1139
        %v1148 = vadd.s32 %v1144, %v1146
        %v1149 = vadd.s32 %v1148, %v1138
        %v1150 = vadd.s32 %v1149, %v1140
        %v1151 = vand.u32 %v1128, 65535
        %v1152 = vshrl.u32 %v1128, 16
        %v1153 = vand.u32 %v1123, 65535
        %v1154 = vshrl.u32 %v1123, 16
        %v1155 = vmul.u32 %v1151, %v1153
        %v1156 = vmul.u32 %v1151, %v1154
        %v1157 = vmul.u32 %v1152, %v1153
        %v1158 = vmul.u32 %v1152, %v1154
        %v1159 = vshll.u32 %v1156, 16
        %v1160 = vshrl.u32 %v1156, 16
        %v1161 = vshll.u32 %v1157, 16
        %v1162 = vshrl.u32 %v1157, 16
        %vm1163 = vc.u32 %v1155, %v1159
        %v1164 = vsel %vm1163, 1, 0
        %v1165 = vadd.s32 %v1155, %v1159
        %v1166 = vadd.s32 %v1158, %v1164
        %vm1167 = vc.u32 %v1165, %v1161
        %v1168 = vsel %vm1167, 1, 0
        %v1169 = vadd.s32 %v1165, %v1161
        %v1170 = vadd.s32 %v1166, %v1168
        %v1171 = vadd.s32 %v1170, %v1160
        %v1172 = vadd.s32 %v1171, %v1162
        %v1173 = vmul.u32 %v1128, %v1119
        %v1174 = vadd.s32 %v1150, %v1169
        %vm1175 = vc.u32 %v1150, %v1169
        %v1176 = vadd.s32 %v1172, 1
        %v1177 = vsel %vm1175, %v1176, %v1172
        %v1178 = vadd.s32 %v1173, %v1177
        %v1179 = vadd.s32 %v1178, 536870912
        %v1180 = vshrl.u32 %v1179, 30
        %v1181 = vshll.u32 %v1180, 30
        %v1182 = vsub.s32 %v1178, %v1181
        %vm1183 = vcmp.lt.s32.totalorder %v1182, 0
        %v1184 = vsub.s32 0, %v1182
        %v1185 = vsel %vm1183, %v1184, %v1182
        %v1186 = vclz %v1185
        %v1187 = vsub.s32 %v1186, 2
        %vm1188 = vcmp.gt.s32.totalorder 0, %v1187
        %v1189 = vsel %vm1188, 0, %v1187
        %v1190 = vsub.s32 32, %v1189
        %v1191 = vshll.u32 %v1182, %v1189
        %v1192 = vshrl.u32 %v1174, %v1190
        %v1193 = vor.u32 %v1191, %v1192
        %v1194 = vsub.s32 4294967266, %v1189
        %v1195 = vadd.s32 %v1194, 127
        %v1196 = vshll.u32 %v1195, 23
        %v1197 = vor.u32 4788187, %v1196
        %v1198 = vand.u32 2147483647, %v1197
        %v1200 = vcvt.s32.f32 %v1193
        %v1201 = vmul.f32 %v1200, %v1198
        %v1202 = vxor.u32 %v1201, 2147483648
        %v1203 = vsel %vm1082, %v1202, %v1201
        %v1204 = vsub.s32 4, %v1180
        %v1205 = vsel %vm1082, %v1204, %v1180
        %v1206 = vsel %vm1081, %v708, %v1203
        %v1207 = vsel %vm1081, 0, %v1205
        %v1208 = vmul.f32 %v1206, %v1206
        %v1209 = vmul.f32 %v1208, -0.001358992
        %v1210 = vadd.f32 %v1209, 0.041655596
        %v1211 = vmul.f32 %v1208, %v1210
        %v1212 = vadd.f32 %v1211, -0.4999988
        %v1213 = vmul.f32 %v1208, %v1212
        %v1214 = vadd.f32 1.0, %v1213
        %v1215 = vmul.f32 %v1206, %v1206
        %v1216 = vmul.f32 %v1215, -0.00019511016
        %v1217 = vadd.f32 %v1216, 0.008332121
        %v1218 = vmul.f32 %v1215, %v1217
        %v1219 = vadd.f32 %v1218, -0.16666654
        %v1220 = vmul.f32 %v1215, %v1219
        %v1221 = vadd.f32 %v1220, 1.0
        %v1222 = vmul.f32 %v1221, %v1206
        %vm1223 = vweird.f32 %v708
        %v1224 = vadd.s32 %v1207, 3
        %v1225 = vand.u32 %v1224, 3
        %vm1226 = vcmp.lt.s32.totalorder %v1225, 2
        %vm1227 = vcmp.eq.s32.totalorder %v1225, 0
        %v1228 = vxor.u32 %v1222, 2147483648
        %v1229 = vsel %vm1227, %v1214, %v1228
        %vm1230 = vcmp.eq.s32.totalorder %v1225, 2
        %v1231 = vxor.u32 %v1214, 2147483648
        %v1232 = vsel %vm1230, %v1231, %v1222
        %v1233 = vsel %vm1226, %v1229, %v1232
        %v1234 = vsel %vm1223, nan, %v1233
        %v1235 = vand.u32 2147483647, %v709
        %vm1236 = vcmp.le.f32.partialorder %v1235, 0.7853982
        %vm1237 = vcmp.lt.s32.totalorder %v709, 0
        %v1238 = vand.u32 %v709, 2139095040
        %v1239 = vshrl.u32 %v1238, 23
        %v1240 = vsub.s32 %v1239, 127
        %v1241 = vand.u32 2147483647, %v709
        %v1242 = vand.u32 %v1241, 8388607
        %v1243 = vor.u32 %v1242, 8388608
        %v1244 = vsub.s32 0, %v1243
        %v1245 = vadd.s32 %v1240, 1
        %vm1246 = vcmp.gt.s32.totalorder %v1245, 0
        %v1247 = vsel %vm1246, %v1245, 0
        %v1248 = vshrl.u32 %v1247, 5
        %v1249 = vand.u32 %v1247, 31
        %v1250 = vsub.s32 32, %v1249
        %v1251 = vshrl.u32 683565275, %v1250
        %v1252 = vshll.u32 683565275, %v1249
        %v1253 = vshrl.u32 2475754826, %v1250
        %v1254 = vor.u32 %v1252, %v1253
        %v1255 = vshll.u32 2475754826, %v1249
        %v1256 = vshrl.u32 2131351028, %v1250
        %v1257 = vor.u32 %v1255, %v1256
        %v1258 = vshll.u32 2131351028, %v1249
        %v1259 = vshrl.u32 2102212464, %v1250
        %v1260 = vor.u32 %v1258, %v1259
        %v1261 = vshll.u32 2102212464, %v1249
        %v1262 = vshrl.u32 920167782, %v1250
        %v1263 = vor.u32 %v1261, %v1262
        %v1264 = vshll.u32 920167782, %v1249
        %v1265 = vshrl.u32 1326507024, %v1250
        %v1266 = vor.u32 %v1264, %v1265
        %vm1267 = vcmp.lt.s32.totalorder %v1248, 1
        %vm1268 = vcmp.lt.s32.totalorder %v1248, 2
        %vm1269 = vcmp.lt.s32.totalorder %v1248, 3
        %vm1270 = vcmp.lt.s32.totalorder %v1248, 4
        %v1271 = vsel %vm1267, %v1251, %v1254
        %v1272 = vsel %vm1270, %v1260, 2102212464
        %v1273 = vsel %vm1269, %v1257, %v1272
        %v1274 = vsel %vm1268, %v1271, %v1273
        %v1275 = vsel %vm1267, %v1254, %v1257
        %v1276 = vsel %vm1270, %v1263, 920167782
        %v1277 = vsel %vm1269, %v1260, %v1276
        %v1278 = vsel %vm1268, %v1275, %v1277
        %v1279 = vsel %vm1267, %v1257, %v1260
        %v1280 = vsel %vm1270, %v1266, 1326507024
        %v1281 = vsel %vm1269, %v1263, %v1280
        %v1282 = vsel %vm1268, %v1279, %v1281
        %v1283 = vshll.u32 %v1243, 8
        %v1284 = vand.u32 %v1283, 65535
        %v1285 = vshrl.u32 %v1283, 16
        %v1286 = vand.u32 %v1282, 65535
        %v1287 = vshrl.u32 %v1282, 16
        %v1288 = vmul.u32 %v1284, %v1286
        %v1289 = vmul.u32 %v1284, %v1287
        %v1290 = vmul.u32 %v1285, %v1286
        %v1291 = vmul.u32 %v1285, %v1287
        %v1292 = vshll.u32 %v1289, 16
        %v1293 = vshrl.u32 %v1289, 16
        %v1294 = vshll.u32 %v1290, 16
        %v1295 = vshrl.u32 %v1290, 16
        %vm1296 = vc.u32 %v1288, %v1292
        %v1297 = vsel %vm1296, 1, 0
        %v1298 = vadd.s32 %v1288, %v1292
        %v1299 = vadd.s32 %v1291, %v1297
        %vm1300 = vc.u32 %v1298, %v1294
        %v1301 = vsel %vm1300, 1, 0
        %v1302 = vadd.s32 %v1298, %v1294
        %v1303 = vadd.s32 %v1299, %v1301
        %v1304 = vadd.s32 %v1303, %v1293
        %v1305 = vadd.s32 %v1304, %v1295
        %v1306 = vand.u32 %v1283, 65535
        %v1307 = vshrl.u32 %v1283, 16
        %v1308 = vand.u32 %v1278, 65535
        %v1309 = vshrl.u32 %v1278, 16
        %v1310 = vmul.u32 %v1306, %v1308
        %v1311 = vmul.u32 %v1306, %v1309
        %v1312 = vmul.u32 %v1307, %v1308
        %v1313 = vmul.u32 %v1307, %v1309
        %v1314 = vshll.u32 %v1311, 16
        %v1315 = vshrl.u32 %v1311, 16
        %v1316 = vshll.u32 %v1312, 16
        %v1317 = vshrl.u32 %v1312, 16
        %vm1318 = vc.u32 %v1310, %v1314
        %v1319 = vsel %vm1318, 1, 0
        %v1320 = vadd.s32 %v1310, %v1314
        %v1321 = vadd.s32 %v1313, %v1319
        %vm1322 = vc.u32 %v1320, %v1316
        %v1323 = vsel %vm1322, 1, 0
        %v1324 = vadd.s32 %v1320, %v1316
        %v1325 = vadd.s32 %v1321, %v1323
        %v1326 = vadd.s32 %v1325, %v1315
        %v1327 = vadd.s32 %v1326, %v1317
        %v1328 = vmul.u32 %v1283, %v1274
        %v1329 = vadd.s32 %v1305, %v1324
        %vm1330 = vc.u32 %v1305, %v1324
        %v1331 = vadd.s32 %v1327, 1
        %v1332 = vsel %vm1330, %v1331, %v1327
        %v1333 = vadd.s32 %v1328, %v1332
        %v1334 = vadd.s32 %v1333, 536870912
        %v1335 = vshrl.u32 %v1334, 30
        %v1336 = vshll.u32 %v1335, 30
        %v1337 = vsub.s32 %v1333, %v1336
        %vm1338 = vcmp.lt.s32.totalorder %v1337, 0
        %v1339 = vsub.s32 0, %v1337
        %v1340 = vsel %vm1338, %v1339, %v1337
        %v1341 = vclz %v1340
        %v1342 = vsub.s32 %v1341, 2
        %vm1343 = vcmp.gt.s32.totalorder 0, %v1342
        %v1344 = vsel %vm1343, 0, %v1342
        %v1345 = vsub.s32 32, %v1344
        %v1346 = vshll.u32 %v1337, %v1344
        %v1347 = vshrl.u32 %v1329, %v1345
        %v1348 = vor.u32 %v1346, %v1347
        %v1349 = vsub.s32 4294967266, %v1344
        %v1350 = vadd.s32 %v1349, 127
        %v1351 = vshll.u32 %v1350, 23
        %v1352 = vor.u32 4788187, %v1351
        %v1353 = vand.u32 2147483647, %v1352
        %v1355 = vcvt.s32.f32 %v1348
        %v1356 = vmul.f32 %v1355, %v1353
        %v1357 = vxor.u32 %v1356, 2147483648
        %v1358 = vsel %vm1237, %v1357, %v1356
        %v1359 = vsub.s32 4, %v1335
        %v1360 = vsel %vm1237, %v1359, %v1335
        %v1361 = vsel %vm1236, %v709, %v1358
        %v1362 = vsel %vm1236, 0, %v1360
        %v1363 = vmul.f32 %v1361, %v1361
        %v1364 = vmul.f32 %v1363, -0.001358992
        %v1365 = vadd.f32 %v1364, 0.041655596
        %v1366 = vmul.f32 %v1363, %v1365
        %v1367 = vadd.f32 %v1366, -0.4999988
        %v1368 = vmul.f32 %v1363, %v1367
        %v1369 = vadd.f32 1.0, %v1368
        %v1370 = vmul.f32 %v1361, %v1361
        %v1371 = vmul.f32 %v1370, -0.00019511016
        %v1372 = vadd.f32 %v1371, 0.008332121
        %v1373 = vmul.f32 %v1370, %v1372
        %v1374 = vadd.f32 %v1373, -0.16666654
        %v1375 = vmul.f32 %v1370, %v1374
        %v1376 = vadd.f32 %v1375, 1.0
        %v1377 = vmul.f32 %v1376, %v1361
        %vm1378 = vweird.f32 %v709
        %v1379 = vadd.s32 %v1362, 3
        %v1380 = vand.u32 %v1379, 3
        %vm1381 = vcmp.lt.s32.totalorder %v1380, 2
        %vm1382 = vcmp.eq.s32.totalorder %v1380, 0
        %v1383 = vxor.u32 %v1377, 2147483648
        %v1384 = vsel %vm1382, %v1369, %v1383
        %vm1385 = vcmp.eq.s32.totalorder %v1380, 2
        %v1386 = vxor.u32 %v1369, 2147483648
        %v1387 = vsel %vm1385, %v1386, %v1377
        %v1388 = vsel %vm1381, %v1384, %v1387
        %v1389 = vsel %vm1378, nan, %v1388
        %v1390 = vand.u32 2147483647, %v710
        %vm1391 = vcmp.le.f32.partialorder %v1390, 0.7853982
        %vm1392 = vcmp.lt.s32.totalorder %v710, 0
        %v1393 = vand.u32 %v710, 2139095040
        %v1394 = vshrl.u32 %v1393, 23
        %v1395 = vsub.s32 %v1394, 127
        %v1396 = vand.u32 2147483647, %v710
        %v1397 = vand.u32 %v1396, 8388607
        %v1398 = vor.u32 %v1397, 8388608
        %v1399 = vsub.s32 0, %v1398
        %v1400 = vadd.s32 %v1395, 1
        %vm1401 = vcmp.gt.s32.totalorder %v1400, 0
        %v1402 = vsel %vm1401, %v1400, 0
        %v1403 = vshrl.u32 %v1402, 5
        %v1404 = vand.u32 %v1402, 31
        %v1405 = vsub.s32 32, %v1404
        %v1406 = vshrl.u32 683565275, %v1405
        %v1407 = vshll.u32 683565275, %v1404
        %v1408 = vshrl.u32 2475754826, %v1405
        %v1409 = vor.u32 %v1407, %v1408
        %v1410 = vshll.u32 2475754826, %v1404
        %v1411 = vshrl.u32 2131351028, %v1405
        %v1412 = vor.u32 %v1410, %v1411
        %v1413 = vshll.u32 2131351028, %v1404
        %v1414 = vshrl.u32 2102212464, %v1405
        %v1415 = vor.u32 %v1413, %v1414
        %v1416 = vshll.u32 2102212464, %v1404
        %v1417 = vshrl.u32 920167782, %v1405
        %v1418 = vor.u32 %v1416, %v1417
        %v1419 = vshll.u32 920167782, %v1404
        %v1420 = vshrl.u32 1326507024, %v1405
        %v1421 = vor.u32 %v1419, %v1420
        %vm1422 = vcmp.lt.s32.totalorder %v1403, 1
        %vm1423 = vcmp.lt.s32.totalorder %v1403, 2
        %vm1424 = vcmp.lt.s32.totalorder %v1403, 3
        %vm1425 = vcmp.lt.s32.totalorder %v1403, 4
        %v1426 = vsel %vm1422, %v1406, %v1409
        %v1427 = vsel %vm1425, %v1415, 2102212464
        %v1428 = vsel %vm1424, %v1412, %v1427
        %v1429 = vsel %vm1423, %v1426, %v1428
        %v1430 = vsel %vm1422, %v1409, %v1412
        %v1431 = vsel %vm1425, %v1418, 920167782
        %v1432 = vsel %vm1424, %v1415, %v1431
        %v1433 = vsel %vm1423, %v1430, %v1432
        %v1434 = vsel %vm1422, %v1412, %v1415
        %v1435 = vsel %vm1425, %v1421, 1326507024
        %v1436 = vsel %vm1424, %v1418, %v1435
        %v1437 = vsel %vm1423, %v1434, %v1436
        %v1438 = vshll.u32 %v1398, 8
        %v1439 = vand.u32 %v1438, 65535
        %v1440 = vshrl.u32 %v1438, 16
        %v1441 = vand.u32 %v1437, 65535
        %v1442 = vshrl.u32 %v1437, 16
        %v1443 = vmul.u32 %v1439, %v1441
        %v1444 = vmul.u32 %v1439, %v1442
        %v1445 = vmul.u32 %v1440, %v1441
        %v1446 = vmul.u32 %v1440, %v1442
        %v1447 = vshll.u32 %v1444, 16
        %v1448 = vshrl.u32 %v1444, 16
        %v1449 = vshll.u32 %v1445, 16
        %v1450 = vshrl.u32 %v1445, 16
        %vm1451 = vc.u32 %v1443, %v1447
        %v1452 = vsel %vm1451, 1, 0
        %v1453 = vadd.s32 %v1443, %v1447
        %v1454 = vadd.s32 %v1446, %v1452
        %vm1455 = vc.u32 %v1453, %v1449
        %v1456 = vsel %vm1455, 1, 0
        %v1457 = vadd.s32 %v1453, %v1449
        %v1458 = vadd.s32 %v1454, %v1456
        %v1459 = vadd.s32 %v1458, %v1448
        %v1460 = vadd.s32 %v1459, %v1450
        %v1461 = vand.u32 %v1438, 65535
        %v1462 = vshrl.u32 %v1438, 16
        %v1463 = vand.u32 %v1433, 65535
        %v1464 = vshrl.u32 %v1433, 16
        %v1465 = vmul.u32 %v1461, %v1463
        %v1466 = vmul.u32 %v1461, %v1464
        %v1467 = vmul.u32 %v1462, %v1463
        %v1468 = vmul.u32 %v1462, %v1464
        %v1469 = vshll.u32 %v1466, 16
        %v1470 = vshrl.u32 %v1466, 16
        %v1471 = vshll.u32 %v1467, 16
        %v1472 = vshrl.u32 %v1467, 16
        %vm1473 = vc.u32 %v1465, %v1469
        %v1474 = vsel %vm1473, 1, 0
        %v1475 = vadd.s32 %v1465, %v1469
        %v1476 = vadd.s32 %v1468, %v1474
        %vm1477 = vc.u32 %v1475, %v1471
        %v1478 = vsel %vm1477, 1, 0
        %v1479 = vadd.s32 %v1475, %v1471
        %v1480 = vadd.s32 %v1476, %v1478
        %v1481 = vadd.s32 %v1480, %v1470
        %v1482 = vadd.s32 %v1481, %v1472
        %v1483 = vmul.u32 %v1438, %v1429
        %v1484 = vadd.s32 %v1460, %v1479
        %vm1485 = vc.u32 %v1460, %v1479
        %v1486 = vadd.s32 %v1482, 1
        %v1487 = vsel %vm1485, %v1486, %v1482
        %v1488 = vadd.s32 %v1483, %v1487
        %v1489 = vadd.s32 %v1488, 536870912
        %v1490 = vshrl.u32 %v1489, 30
        %v1491 = vshll.u32 %v1490, 30
        %v1492 = vsub.s32 %v1488, %v1491
        %vm1493 = vcmp.lt.s32.totalorder %v1492, 0
        %v1494 = vsub.s32 0, %v1492
        %v1495 = vsel %vm1493, %v1494, %v1492
        %v1496 = vclz %v1495
        %v1497 = vsub.s32 %v1496, 2
        %vm1498 = vcmp.gt.s32.totalorder 0, %v1497
        %v1499 = vsel %vm1498, 0, %v1497
        %v1500 = vsub.s32 32, %v1499
        %v1501 = vshll.u32 %v1492, %v1499
        %v1502 = vshrl.u32 %v1484, %v1500
        %v1503 = vor.u32 %v1501, %v1502
        %v1504 = vsub.s32 4294967266, %v1499
        %v1505 = vadd.s32 %v1504, 127
        %v1506 = vshll.u32 %v1505, 23
        %v1507 = vor.u32 4788187, %v1506
        %v1508 = vand.u32 2147483647, %v1507
        %v1510 = vcvt.s32.f32 %v1503
        %v1511 = vmul.f32 %v1510, %v1508
        %v1512 = vxor.u32 %v1511, 2147483648
        %v1513 = vsel %vm1392, %v1512, %v1511
        %v1514 = vsub.s32 4, %v1490
        %v1515 = vsel %vm1392, %v1514, %v1490
        %v1516 = vsel %vm1391, %v710, %v1513
        %v1517 = vsel %vm1391, 0, %v1515
        %v1518 = vmul.f32 %v1516, %v1516
        %v1519 = vmul.f32 %v1518, -0.001358992
        %v1520 = vadd.f32 %v1519, 0.041655596
        %v1521 = vmul.f32 %v1518, %v1520
        %v1522 = vadd.f32 %v1521, -0.4999988
        %v1523 = vmul.f32 %v1518, %v1522
        %v1524 = vadd.f32 1.0, %v1523
        %v1525 = vmul.f32 %v1516, %v1516
        %v1526 = vmul.f32 %v1525, -0.00019511016
        %v1527 = vadd.f32 %v1526, 0.008332121
        %v1528 = vmul.f32 %v1525, %v1527
        %v1529 = vadd.f32 %v1528, -0.16666654
        %v1530 = vmul.f32 %v1525, %v1529
        %v1531 = vadd.f32 %v1530, 1.0
        %v1532 = vmul.f32 %v1531, %v1516
        %vm1533 = vweird.f32 %v710
        %v1534 = vadd.s32 %v1517, 3
        %v1535 = vand.u32 %v1534, 3
        %vm1536 = vcmp.lt.s32.totalorder %v1535, 2
        %vm1537 = vcmp.eq.s32.totalorder %v1535, 0
        %v1538 = vxor.u32 %v1532, 2147483648
        %v1539 = vsel %vm1537, %v1524, %v1538
        %vm1540 = vcmp.eq.s32.totalorder %v1535, 2
        %v1541 = vxor.u32 %v1524, 2147483648
        %v1542 = vsel %vm1540, %v1541, %v1532
        %v1543 = vsel %vm1536, %v1539, %v1542
        %v1544 = vsel %vm1533, nan, %v1543
        %v1545 = vand.u32 2147483647, %v711
        %vm1546 = vcmp.le.f32.partialorder %v1545, 0.7853982
        %vm1547 = vcmp.lt.s32.totalorder %v711, 0
        %v1548 = vand.u32 %v711, 2139095040
        %v1549 = vshrl.u32 %v1548, 23
        %v1550 = vsub.s32 %v1549, 127
        %v1551 = vand.u32 2147483647, %v711
        %v1552 = vand.u32 %v1551, 8388607
        %v1553 = vor.u32 %v1552, 8388608
        %v1554 = vsub.s32 0, %v1553
        %v1555 = vadd.s32 %v1550, 1
        %vm1556 = vcmp.gt.s32.totalorder %v1555, 0
        %v1557 = vsel %vm1556, %v1555, 0
        %v1558 = vshrl.u32 %v1557, 5
        %v1559 = vand.u32 %v1557, 31
        %v1560 = vsub.s32 32, %v1559
        %v1561 = vshrl.u32 683565275, %v1560
        %v1562 = vshll.u32 683565275, %v1559
        %v1563 = vshrl.u32 2475754826, %v1560
        %v1564 = vor.u32 %v1562, %v1563
        %v1565 = vshll.u32 2475754826, %v1559
        %v1566 = vshrl.u32 2131351028, %v1560
        %v1567 = vor.u32 %v1565, %v1566
        %v1568 = vshll.u32 2131351028, %v1559
        %v1569 = vshrl.u32 2102212464, %v1560
        %v1570 = vor.u32 %v1568, %v1569
        %v1571 = vshll.u32 2102212464, %v1559
        %v1572 = vshrl.u32 920167782, %v1560
        %v1573 = vor.u32 %v1571, %v1572
        %v1574 = vshll.u32 920167782, %v1559
        %v1575 = vshrl.u32 1326507024, %v1560
        %v1576 = vor.u32 %v1574, %v1575
        %vm1577 = vcmp.lt.s32.totalorder %v1558, 1
        %vm1578 = vcmp.lt.s32.totalorder %v1558, 2
        %vm1579 = vcmp.lt.s32.totalorder %v1558, 3
        %vm1580 = vcmp.lt.s32.totalorder %v1558, 4
        %v1581 = vsel %vm1577, %v1561, %v1564
        %v1582 = vsel %vm1580, %v1570, 2102212464
        %v1583 = vsel %vm1579, %v1567, %v1582
        %v1584 = vsel %vm1578, %v1581, %v1583
        %v1585 = vsel %vm1577, %v1564, %v1567
        %v1586 = vsel %vm1580, %v1573, 920167782
        %v1587 = vsel %vm1579, %v1570, %v1586
        %v1588 = vsel %vm1578, %v1585, %v1587
        %v1589 = vsel %vm1577, %v1567, %v1570
        %v1590 = vsel %vm1580, %v1576, 1326507024
        %v1591 = vsel %vm1579, %v1573, %v1590
        %v1592 = vsel %vm1578, %v1589, %v1591
        %v1593 = vshll.u32 %v1553, 8
        %v1594 = vand.u32 %v1593, 65535
        %v1595 = vshrl.u32 %v1593, 16
        %v1596 = vand.u32 %v1592, 65535
        %v1597 = vshrl.u32 %v1592, 16
        %v1598 = vmul.u32 %v1594, %v1596
        %v1599 = vmul.u32 %v1594, %v1597
        %v1600 = vmul.u32 %v1595, %v1596
        %v1601 = vmul.u32 %v1595, %v1597
        %v1602 = vshll.u32 %v1599, 16
        %v1603 = vshrl.u32 %v1599, 16
        %v1604 = vshll.u32 %v1600, 16
        %v1605 = vshrl.u32 %v1600, 16
        %vm1606 = vc.u32 %v1598, %v1602
        %v1607 = vsel %vm1606, 1, 0
        %v1608 = vadd.s32 %v1598, %v1602
        %v1609 = vadd.s32 %v1601, %v1607
        %vm1610 = vc.u32 %v1608, %v1604
        %v1611 = vsel %vm1610, 1, 0
        %v1612 = vadd.s32 %v1608, %v1604
        %v1613 = vadd.s32 %v1609, %v1611
        %v1614 = vadd.s32 %v1613, %v1603
        %v1615 = vadd.s32 %v1614, %v1605
        %v1616 = vand.u32 %v1593, 65535
        %v1617 = vshrl.u32 %v1593, 16
        %v1618 = vand.u32 %v1588, 65535
        %v1619 = vshrl.u32 %v1588, 16
        %v1620 = vmul.u32 %v1616, %v1618
        %v1621 = vmul.u32 %v1616, %v1619
        %v1622 = vmul.u32 %v1617, %v1618
        %v1623 = vmul.u32 %v1617, %v1619
        %v1624 = vshll.u32 %v1621, 16
        %v1625 = vshrl.u32 %v1621, 16
        %v1626 = vshll.u32 %v1622, 16
        %v1627 = vshrl.u32 %v1622, 16
        %vm1628 = vc.u32 %v1620, %v1624
        %v1629 = vsel %vm1628, 1, 0
        %v1630 = vadd.s32 %v1620, %v1624
        %v1631 = vadd.s32 %v1623, %v1629
        %vm1632 = vc.u32 %v1630, %v1626
        %v1633 = vsel %vm1632, 1, 0
        %v1634 = vadd.s32 %v1630, %v1626
        %v1635 = vadd.s32 %v1631, %v1633
        %v1636 = vadd.s32 %v1635, %v1625
        %v1637 = vadd.s32 %v1636, %v1627
        %v1638 = vmul.u32 %v1593, %v1584
        %v1639 = vadd.s32 %v1615, %v1634
        %vm1640 = vc.u32 %v1615, %v1634
        %v1641 = vadd.s32 %v1637, 1
        %v1642 = vsel %vm1640, %v1641, %v1637
        %v1643 = vadd.s32 %v1638, %v1642
        %v1644 = vadd.s32 %v1643, 536870912
        %v1645 = vshrl.u32 %v1644, 30
        %v1646 = vshll.u32 %v1645, 30
        %v1647 = vsub.s32 %v1643, %v1646
        %vm1648 = vcmp.lt.s32.totalorder %v1647, 0
        %v1649 = vsub.s32 0, %v1647
        %v1650 = vsel %vm1648, %v1649, %v1647
        %v1651 = vclz %v1650
        %v1652 = vsub.s32 %v1651, 2
        %vm1653 = vcmp.gt.s32.totalorder 0, %v1652
        %v1654 = vsel %vm1653, 0, %v1652
        %v1655 = vsub.s32 32, %v1654
        %v1656 = vshll.u32 %v1647, %v1654
        %v1657 = vshrl.u32 %v1639, %v1655
        %v1658 = vor.u32 %v1656, %v1657
        %v1659 = vsub.s32 4294967266, %v1654
        %v1660 = vadd.s32 %v1659, 127
        %v1661 = vshll.u32 %v1660, 23
        %v1662 = vor.u32 4788187, %v1661
        %v1663 = vand.u32 2147483647, %v1662
        %v1665 = vcvt.s32.f32 %v1658
        %v1666 = vmul.f32 %v1665, %v1663
        %v1667 = vxor.u32 %v1666, 2147483648
        %v1668 = vsel %vm1547, %v1667, %v1666
        %v1669 = vsub.s32 4, %v1645
        %v1670 = vsel %vm1547, %v1669, %v1645
        %v1671 = vsel %vm1546, %v711, %v1668
        %v1672 = vsel %vm1546, 0, %v1670
        %v1673 = vmul.f32 %v1671, %v1671
        %v1674 = vmul.f32 %v1673, -0.001358992
        %v1675 = vadd.f32 %v1674, 0.041655596
        %v1676 = vmul.f32 %v1673, %v1675
        %v1677 = vadd.f32 %v1676, -0.4999988
        %v1678 = vmul.f32 %v1673, %v1677
        %v1679 = vadd.f32 1.0, %v1678
        %v1680 = vmul.f32 %v1671, %v1671
        %v1681 = vmul.f32 %v1680, -0.00019511016
        %v1682 = vadd.f32 %v1681, 0.008332121
        %v1683 = vmul.f32 %v1680, %v1682
        %v1684 = vadd.f32 %v1683, -0.16666654
        %v1685 = vmul.f32 %v1680, %v1684
        %v1686 = vadd.f32 %v1685, 1.0
        %v1687 = vmul.f32 %v1686, %v1671
        %vm1688 = vweird.f32 %v711
        %v1689 = vadd.s32 %v1672, 3
        %v1690 = vand.u32 %v1689, 3
        %vm1691 = vcmp.lt.s32.totalorder %v1690, 2
        %vm1692 = vcmp.eq.s32.totalorder %v1690, 0
        %v1693 = vxor.u32 %v1687, 2147483648
        %v1694 = vsel %vm1692, %v1679, %v1693
        %vm1695 = vcmp.eq.s32.totalorder %v1690, 2
        %v1696 = vxor.u32 %v1679, 2147483648
        %v1697 = vsel %vm1695, %v1696, %v1687
        %v1698 = vsel %vm1691, %v1694, %v1697
        %v1699 = vsel %vm1688, nan, %v1698
        %v1700 = vand.u32 2147483647, %v712
        %vm1701 = vcmp.le.f32.partialorder %v1700, 0.7853982
        %vm1702 = vcmp.lt.s32.totalorder %v712, 0
        %v1703 = vand.u32 %v712, 2139095040
        %v1704 = vshrl.u32 %v1703, 23
        %v1705 = vsub.s32 %v1704, 127
        %v1706 = vand.u32 2147483647, %v712
        %v1707 = vand.u32 %v1706, 8388607
        %v1708 = vor.u32 %v1707, 8388608
        %v1709 = vsub.s32 0, %v1708
        %v1710 = vadd.s32 %v1705, 1
        %vm1711 = vcmp.gt.s32.totalorder %v1710, 0
        %v1712 = vsel %vm1711, %v1710, 0
        %v1713 = vshrl.u32 %v1712, 5
        %v1714 = vand.u32 %v1712, 31
        %v1715 = vsub.s32 32, %v1714
        %v1716 = vshrl.u32 683565275, %v1715
        %v1717 = vshll.u32 683565275, %v1714
        %v1718 = vshrl.u32 2475754826, %v1715
        %v1719 = vor.u32 %v1717, %v1718
        %v1720 = vshll.u32 2475754826, %v1714
        %v1721 = vshrl.u32 2131351028, %v1715
        %v1722 = vor.u32 %v1720, %v1721
        %v1723 = vshll.u32 2131351028, %v1714
        %v1724 = vshrl.u32 2102212464, %v1715
        %v1725 = vor.u32 %v1723, %v1724
        %v1726 = vshll.u32 2102212464, %v1714
        %v1727 = vshrl.u32 920167782, %v1715
        %v1728 = vor.u32 %v1726, %v1727
        %v1729 = vshll.u32 920167782, %v1714
        %v1730 = vshrl.u32 1326507024, %v1715
        %v1731 = vor.u32 %v1729, %v1730
        %vm1732 = vcmp.lt.s32.totalorder %v1713, 1
        %vm1733 = vcmp.lt.s32.totalorder %v1713, 2
        %vm1734 = vcmp.lt.s32.totalorder %v1713, 3
        %vm1735 = vcmp.lt.s32.totalorder %v1713, 4
        %v1736 = vsel %vm1732, %v1716, %v1719
        %v1737 = vsel %vm1735, %v1725, 2102212464
        %v1738 = vsel %vm1734, %v1722, %v1737
        %v1739 = vsel %vm1733, %v1736, %v1738
        %v1740 = vsel %vm1732, %v1719, %v1722
        %v1741 = vsel %vm1735, %v1728, 920167782
        %v1742 = vsel %vm1734, %v1725, %v1741
        %v1743 = vsel %vm1733, %v1740, %v1742
        %v1744 = vsel %vm1732, %v1722, %v1725
        %v1745 = vsel %vm1735, %v1731, 1326507024
        %v1746 = vsel %vm1734, %v1728, %v1745
        %v1747 = vsel %vm1733, %v1744, %v1746
        %v1748 = vshll.u32 %v1708, 8
        %v1749 = vand.u32 %v1748, 65535
        %v1750 = vshrl.u32 %v1748, 16
        %v1751 = vand.u32 %v1747, 65535
        %v1752 = vshrl.u32 %v1747, 16
        %v1753 = vmul.u32 %v1749, %v1751
        %v1754 = vmul.u32 %v1749, %v1752
        %v1755 = vmul.u32 %v1750, %v1751
        %v1756 = vmul.u32 %v1750, %v1752
        %v1757 = vshll.u32 %v1754, 16
        %v1758 = vshrl.u32 %v1754, 16
        %v1759 = vshll.u32 %v1755, 16
        %v1760 = vshrl.u32 %v1755, 16
        %vm1761 = vc.u32 %v1753, %v1757
        %v1762 = vsel %vm1761, 1, 0
        %v1763 = vadd.s32 %v1753, %v1757
        %v1764 = vadd.s32 %v1756, %v1762
        %vm1765 = vc.u32 %v1763, %v1759
        %v1766 = vsel %vm1765, 1, 0
        %v1767 = vadd.s32 %v1763, %v1759
        %v1768 = vadd.s32 %v1764, %v1766
        %v1769 = vadd.s32 %v1768, %v1758
        %v1770 = vadd.s32 %v1769, %v1760
        %v1771 = vand.u32 %v1748, 65535
        %v1772 = vshrl.u32 %v1748, 16
        %v1773 = vand.u32 %v1743, 65535
        %v1774 = vshrl.u32 %v1743, 16
        %v1775 = vmul.u32 %v1771, %v1773
        %v1776 = vmul.u32 %v1771, %v1774
        %v1777 = vmul.u32 %v1772, %v1773
        %v1778 = vmul.u32 %v1772, %v1774
        %v1779 = vshll.u32 %v1776, 16
        %v1780 = vshrl.u32 %v1776, 16
        %v1781 = vshll.u32 %v1777, 16
        %v1782 = vshrl.u32 %v1777, 16
        %vm1783 = vc.u32 %v1775, %v1779
        %v1784 = vsel %vm1783, 1, 0
        %v1785 = vadd.s32 %v1775, %v1779
        %v1786 = vadd.s32 %v1778, %v1784
        %vm1787 = vc.u32 %v1785, %v1781
        %v1788 = vsel %vm1787, 1, 0
        %v1789 = vadd.s32 %v1785, %v1781
        %v1790 = vadd.s32 %v1786, %v1788
        %v1791 = vadd.s32 %v1790, %v1780
        %v1792 = vadd.s32 %v1791, %v1782
        %v1793 = vmul.u32 %v1748, %v1739
        %v1794 = vadd.s32 %v1770, %v1789
        %vm1795 = vc.u32 %v1770, %v1789
        %v1796 = vadd.s32 %v1792, 1
        %v1797 = vsel %vm1795, %v1796, %v1792
        %v1798 = vadd.s32 %v1793, %v1797
        %v1799 = vadd.s32 %v1798, 536870912
        %v1800 = vshrl.u32 %v1799, 30
        %v1801 = vshll.u32 %v1800, 30
        %v1802 = vsub.s32 %v1798, %v1801
        %vm1803 = vcmp.lt.s32.totalorder %v1802, 0
        %v1804 = vsub.s32 0, %v1802
        %v1805 = vsel %vm1803, %v1804, %v1802
        %v1806 = vclz %v1805
        %v1807 = vsub.s32 %v1806, 2
        %vm1808 = vcmp.gt.s32.totalorder 0, %v1807
        %v1809 = vsel %vm1808, 0, %v1807
        %v1810 = vsub.s32 32, %v1809
        %v1811 = vshll.u32 %v1802, %v1809
        %v1812 = vshrl.u32 %v1794, %v1810
        %v1813 = vor.u32 %v1811, %v1812
        %v1814 = vsub.s32 4294967266, %v1809
        %v1815 = vadd.s32 %v1814, 127
        %v1816 = vshll.u32 %v1815, 23
        %v1817 = vor.u32 4788187, %v1816
        %v1818 = vand.u32 2147483647, %v1817
        %v1820 = vcvt.s32.f32 %v1813
        %v1821 = vmul.f32 %v1820, %v1818
        %v1822 = vxor.u32 %v1821, 2147483648
        %v1823 = vsel %vm1702, %v1822, %v1821
        %v1824 = vsub.s32 4, %v1800
        %v1825 = vsel %vm1702, %v1824, %v1800
        %v1826 = vsel %vm1701, %v712, %v1823
        %v1827 = vsel %vm1701, 0, %v1825
        %v1828 = vmul.f32 %v1826, %v1826
        %v1829 = vmul.f32 %v1828, -0.001358992
        %v1830 = vadd.f32 %v1829, 0.041655596
        %v1831 = vmul.f32 %v1828, %v1830
        %v1832 = vadd.f32 %v1831, -0.4999988
        %v1833 = vmul.f32 %v1828, %v1832
        %v1834 = vadd.f32 1.0, %v1833
        %v1835 = vmul.f32 %v1826, %v1826
        %v1836 = vmul.f32 %v1835, -0.00019511016
        %v1837 = vadd.f32 %v1836, 0.008332121
        %v1838 = vmul.f32 %v1835, %v1837
        %v1839 = vadd.f32 %v1838, -0.16666654
        %v1840 = vmul.f32 %v1835, %v1839
        %v1841 = vadd.f32 %v1840, 1.0
        %v1842 = vmul.f32 %v1841, %v1826
        %vm1843 = vweird.f32 %v712
        %v1844 = vadd.s32 %v1827, 3
        %v1845 = vand.u32 %v1844, 3
        %vm1846 = vcmp.lt.s32.totalorder %v1845, 2
        %vm1847 = vcmp.eq.s32.totalorder %v1845, 0
        %v1848 = vxor.u32 %v1842, 2147483648
        %v1849 = vsel %vm1847, %v1834, %v1848
        %vm1850 = vcmp.eq.s32.totalorder %v1845, 2
        %v1851 = vxor.u32 %v1834, 2147483648
        %v1852 = vsel %vm1850, %v1851, %v1842
        %v1853 = vsel %vm1846, %v1849, %v1852
        %v1854 = vsel %vm1843, nan, %v1853
        %v1855 = vand.u32 2147483647, %v713
        %vm1856 = vcmp.le.f32.partialorder %v1855, 0.7853982
        %vm1857 = vcmp.lt.s32.totalorder %v713, 0
        %v1858 = vand.u32 %v713, 2139095040
        %v1859 = vshrl.u32 %v1858, 23
        %v1860 = vsub.s32 %v1859, 127
        %v1861 = vand.u32 2147483647, %v713
        %v1862 = vand.u32 %v1861, 8388607
        %v1863 = vor.u32 %v1862, 8388608
        %v1864 = vsub.s32 0, %v1863
        %v1865 = vadd.s32 %v1860, 1
        %vm1866 = vcmp.gt.s32.totalorder %v1865, 0
        %v1867 = vsel %vm1866, %v1865, 0
        %v1868 = vshrl.u32 %v1867, 5
        %v1869 = vand.u32 %v1867, 31
        %v1870 = vsub.s32 32, %v1869
        %v1871 = vshrl.u32 683565275, %v1870
        %v1872 = vshll.u32 683565275, %v1869
        %v1873 = vshrl.u32 2475754826, %v1870
        %v1874 = vor.u32 %v1872, %v1873
        %v1875 = vshll.u32 2475754826, %v1869
        %v1876 = vshrl.u32 2131351028, %v1870
        %v1877 = vor.u32 %v1875, %v1876
        %v1878 = vshll.u32 2131351028, %v1869
        %v1879 = vshrl.u32 2102212464, %v1870
        %v1880 = vor.u32 %v1878, %v1879
        %v1881 = vshll.u32 2102212464, %v1869
        %v1882 = vshrl.u32 920167782, %v1870
        %v1883 = vor.u32 %v1881, %v1882
        %v1884 = vshll.u32 920167782, %v1869
        %v1885 = vshrl.u32 1326507024, %v1870
        %v1886 = vor.u32 %v1884, %v1885
        %vm1887 = vcmp.lt.s32.totalorder %v1868, 1
        %vm1888 = vcmp.lt.s32.totalorder %v1868, 2
        %vm1889 = vcmp.lt.s32.totalorder %v1868, 3
        %vm1890 = vcmp.lt.s32.totalorder %v1868, 4
        %v1891 = vsel %vm1887, %v1871, %v1874
        %v1892 = vsel %vm1890, %v1880, 2102212464
        %v1893 = vsel %vm1889, %v1877, %v1892
        %v1894 = vsel %vm1888, %v1891, %v1893
        %v1895 = vsel %vm1887, %v1874, %v1877
        %v1896 = vsel %vm1890, %v1883, 920167782
        %v1897 = vsel %vm1889, %v1880, %v1896
        %v1898 = vsel %vm1888, %v1895, %v1897
        %v1899 = vsel %vm1887, %v1877, %v1880
        %v1900 = vsel %vm1890, %v1886, 1326507024
        %v1901 = vsel %vm1889, %v1883, %v1900
        %v1902 = vsel %vm1888, %v1899, %v1901
        %v1903 = vshll.u32 %v1863, 8
        %v1904 = vand.u32 %v1903, 65535
        %v1905 = vshrl.u32 %v1903, 16
        %v1906 = vand.u32 %v1902, 65535
        %v1907 = vshrl.u32 %v1902, 16
        %v1908 = vmul.u32 %v1904, %v1906
        %v1909 = vmul.u32 %v1904, %v1907
        %v1910 = vmul.u32 %v1905, %v1906
        %v1911 = vmul.u32 %v1905, %v1907
        %v1912 = vshll.u32 %v1909, 16
        %v1913 = vshrl.u32 %v1909, 16
        %v1914 = vshll.u32 %v1910, 16
        %v1915 = vshrl.u32 %v1910, 16
        %vm1916 = vc.u32 %v1908, %v1912
        %v1917 = vsel %vm1916, 1, 0
        %v1918 = vadd.s32 %v1908, %v1912
        %v1919 = vadd.s32 %v1911, %v1917
        %vm1920 = vc.u32 %v1918, %v1914
        %v1921 = vsel %vm1920, 1, 0
        %v1922 = vadd.s32 %v1918, %v1914
        %v1923 = vadd.s32 %v1919, %v1921
        %v1924 = vadd.s32 %v1923, %v1913
        %v1925 = vadd.s32 %v1924, %v1915
        %v1926 = vand.u32 %v1903, 65535
        %v1927 = vshrl.u32 %v1903, 16
        %v1928 = vand.u32 %v1898, 65535
        %v1929 = vshrl.u32 %v1898, 16
        %v1930 = vmul.u32 %v1926, %v1928
        %v1931 = vmul.u32 %v1926, %v1929
        %v1932 = vmul.u32 %v1927, %v1928
        %v1933 = vmul.u32 %v1927, %v1929
        %v1934 = vshll.u32 %v1931, 16
        %v1935 = vshrl.u32 %v1931, 16
        %v1936 = vshll.u32 %v1932, 16
        %v1937 = vshrl.u32 %v1932, 16
        %vm1938 = vc.u32 %v1930, %v1934
        %v1939 = vsel %vm1938, 1, 0
        %v1940 = vadd.s32 %v1930, %v1934
        %v1941 = vadd.s32 %v1933, %v1939
        %vm1942 = vc.u32 %v1940, %v1936
        %v1943 = vsel %vm1942, 1, 0
        %v1944 = vadd.s32 %v1940, %v1936
        %v1945 = vadd.s32 %v1941, %v1943
        %v1946 = vadd.s32 %v1945, %v1935
        %v1947 = vadd.s32 %v1946, %v1937
        %v1948 = vmul.u32 %v1903, %v1894
        %v1949 = vadd.s32 %v1925, %v1944
        %vm1950 = vc.u32 %v1925, %v1944
        %v1951 = vadd.s32 %v1947, 1
        %v1952 = vsel %vm1950, %v1951, %v1947
        %v1953 = vadd.s32 %v1948, %v1952
        %v1954 = vadd.s32 %v1953, 536870912
        %v1955 = vshrl.u32 %v1954, 30
        %v1956 = vshll.u32 %v1955, 30
        %v1957 = vsub.s32 %v1953, %v1956
        %vm1958 = vcmp.lt.s32.totalorder %v1957, 0
        %v1959 = vsub.s32 0, %v1957
        %v1960 = vsel %vm1958, %v1959, %v1957
        %v1961 = vclz %v1960
        %v1962 = vsub.s32 %v1961, 2
        %vm1963 = vcmp.gt.s32.totalorder 0, %v1962
        %v1964 = vsel %vm1963, 0, %v1962
        %v1965 = vsub.s32 32, %v1964
        %v1966 = vshll.u32 %v1957, %v1964
        %v1967 = vshrl.u32 %v1949, %v1965
        %v1968 = vor.u32 %v1966, %v1967
        %v1969 = vsub.s32 4294967266, %v1964
        %v1970 = vadd.s32 %v1969, 127
        %v1971 = vshll.u32 %v1970, 23
        %v1972 = vor.u32 4788187, %v1971
        %v1973 = vand.u32 2147483647, %v1972
        %v1975 = vcvt.s32.f32 %v1968
        %v1976 = vmul.f32 %v1975, %v1973
        %v1977 = vxor.u32 %v1976, 2147483648
        %v1978 = vsel %vm1857, %v1977, %v1976
        %v1979 = vsub.s32 4, %v1955
        %v1980 = vsel %vm1857, %v1979, %v1955
        %v1981 = vsel %vm1856, %v713, %v1978
        %v1982 = vsel %vm1856, 0, %v1980
        %v1983 = vmul.f32 %v1981, %v1981
        %v1984 = vmul.f32 %v1983, -0.001358992
        %v1985 = vadd.f32 %v1984, 0.041655596
        %v1986 = vmul.f32 %v1983, %v1985
        %v1987 = vadd.f32 %v1986, -0.4999988
        %v1988 = vmul.f32 %v1983, %v1987
        %v1989 = vadd.f32 1.0, %v1988
        %v1990 = vmul.f32 %v1981, %v1981
        %v1991 = vmul.f32 %v1990, -0.00019511016
        %v1992 = vadd.f32 %v1991, 0.008332121
        %v1993 = vmul.f32 %v1990, %v1992
        %v1994 = vadd.f32 %v1993, -0.16666654
        %v1995 = vmul.f32 %v1990, %v1994
        %v1996 = vadd.f32 %v1995, 1.0
        %v1997 = vmul.f32 %v1996, %v1981
        %vm1998 = vweird.f32 %v713
        %v1999 = vadd.s32 %v1982, 3
        %v2000 = vand.u32 %v1999, 3
        %vm2001 = vcmp.lt.s32.totalorder %v2000, 2
        %vm2002 = vcmp.eq.s32.totalorder %v2000, 0
        %v2003 = vxor.u32 %v1997, 2147483648
        %v2004 = vsel %vm2002, %v1989, %v2003
        %vm2005 = vcmp.eq.s32.totalorder %v2000, 2
        %v2006 = vxor.u32 %v1989, 2147483648
        %v2007 = vsel %vm2005, %v2006, %v1997
        %v2008 = vsel %vm2001, %v2004, %v2007
        %v2009 = vsel %vm1998, nan, %v2008
        %v2010 = vand.u32 2147483647, %v714
        %vm2011 = vcmp.le.f32.partialorder %v2010, 0.7853982
        %vm2012 = vcmp.lt.s32.totalorder %v714, 0
        %v2013 = vand.u32 %v714, 2139095040
        %v2014 = vshrl.u32 %v2013, 23
        %v2015 = vsub.s32 %v2014, 127
        %v2016 = vand.u32 2147483647, %v714
        %v2017 = vand.u32 %v2016, 8388607
        %v2018 = vor.u32 %v2017, 8388608
        %v2019 = vsub.s32 0, %v2018
        %v2020 = vadd.s32 %v2015, 1
        %vm2021 = vcmp.gt.s32.totalorder %v2020, 0
        %v2022 = vsel %vm2021, %v2020, 0
        %v2023 = vshrl.u32 %v2022, 5
        %v2024 = vand.u32 %v2022, 31
        %v2025 = vsub.s32 32, %v2024
        %v2026 = vshrl.u32 683565275, %v2025
        %v2027 = vshll.u32 683565275, %v2024
        %v2028 = vshrl.u32 2475754826, %v2025
        %v2029 = vor.u32 %v2027, %v2028
        %v2030 = vshll.u32 2475754826, %v2024
        %v2031 = vshrl.u32 2131351028, %v2025
        %v2032 = vor.u32 %v2030, %v2031
        %v2033 = vshll.u32 2131351028, %v2024
        %v2034 = vshrl.u32 2102212464, %v2025
        %v2035 = vor.u32 %v2033, %v2034
        %v2036 = vshll.u32 2102212464, %v2024
        %v2037 = vshrl.u32 920167782, %v2025
        %v2038 = vor.u32 %v2036, %v2037
        %v2039 = vshll.u32 920167782, %v2024
        %v2040 = vshrl.u32 1326507024, %v2025
        %v2041 = vor.u32 %v2039, %v2040
        %vm2042 = vcmp.lt.s32.totalorder %v2023, 1
        %vm2043 = vcmp.lt.s32.totalorder %v2023, 2
        %vm2044 = vcmp.lt.s32.totalorder %v2023, 3
        %vm2045 = vcmp.lt.s32.totalorder %v2023, 4
        %v2046 = vsel %vm2042, %v2026, %v2029
        %v2047 = vsel %vm2045, %v2035, 2102212464
        %v2048 = vsel %vm2044, %v2032, %v2047
        %v2049 = vsel %vm2043, %v2046, %v2048
        %v2050 = vsel %vm2042, %v2029, %v2032
        %v2051 = vsel %vm2045, %v2038, 920167782
        %v2052 = vsel %vm2044, %v2035, %v2051
        %v2053 = vsel %vm2043, %v2050, %v2052
        %v2054 = vsel %vm2042, %v2032, %v2035
        %v2055 = vsel %vm2045, %v2041, 1326507024
        %v2056 = vsel %vm2044, %v2038, %v2055
        %v2057 = vsel %vm2043, %v2054, %v2056
        %v2058 = vshll.u32 %v2018, 8
        %v2059 = vand.u32 %v2058, 65535
        %v2060 = vshrl.u32 %v2058, 16
        %v2061 = vand.u32 %v2057, 65535
        %v2062 = vshrl.u32 %v2057, 16
        %v2063 = vmul.u32 %v2059, %v2061
        %v2064 = vmul.u32 %v2059, %v2062
        %v2065 = vmul.u32 %v2060, %v2061
        %v2066 = vmul.u32 %v2060, %v2062
        %v2067 = vshll.u32 %v2064, 16
        %v2068 = vshrl.u32 %v2064, 16
        %v2069 = vshll.u32 %v2065, 16
        %v2070 = vshrl.u32 %v2065, 16
        %vm2071 = vc.u32 %v2063, %v2067
        %v2072 = vsel %vm2071, 1, 0
        %v2073 = vadd.s32 %v2063, %v2067
        %v2074 = vadd.s32 %v2066, %v2072
        %vm2075 = vc.u32 %v2073, %v2069
        %v2076 = vsel %vm2075, 1, 0
        %v2077 = vadd.s32 %v2073, %v2069
        %v2078 = vadd.s32 %v2074, %v2076
        %v2079 = vadd.s32 %v2078, %v2068
        %v2080 = vadd.s32 %v2079, %v2070
        %v2081 = vand.u32 %v2058, 65535
        %v2082 = vshrl.u32 %v2058, 16
        %v2083 = vand.u32 %v2053, 65535
        %v2084 = vshrl.u32 %v2053, 16
        %v2085 = vmul.u32 %v2081, %v2083
        %v2086 = vmul.u32 %v2081, %v2084
        %v2087 = vmul.u32 %v2082, %v2083
        %v2088 = vmul.u32 %v2082, %v2084
        %v2089 = vshll.u32 %v2086, 16
        %v2090 = vshrl.u32 %v2086, 16
        %v2091 = vshll.u32 %v2087, 16
        %v2092 = vshrl.u32 %v2087, 16
        %vm2093 = vc.u32 %v2085, %v2089
        %v2094 = vsel %vm2093, 1, 0
        %v2095 = vadd.s32 %v2085, %v2089
        %v2096 = vadd.s32 %v2088, %v2094
        %vm2097 = vc.u32 %v2095, %v2091
        %v2098 = vsel %vm2097, 1, 0
        %v2099 = vadd.s32 %v2095, %v2091
        %v2100 = vadd.s32 %v2096, %v2098
        %v2101 = vadd.s32 %v2100, %v2090
        %v2102 = vadd.s32 %v2101, %v2092
        %v2103 = vmul.u32 %v2058, %v2049
        %v2104 = vadd.s32 %v2080, %v2099
        %vm2105 = vc.u32 %v2080, %v2099
        %v2106 = vadd.s32 %v2102, 1
        %v2107 = vsel %vm2105, %v2106, %v2102
        %v2108 = vadd.s32 %v2103, %v2107
        %v2109 = vadd.s32 %v2108, 536870912
        %v2110 = vshrl.u32 %v2109, 30
        %v2111 = vshll.u32 %v2110, 30
        %v2112 = vsub.s32 %v2108, %v2111
        %vm2113 = vcmp.lt.s32.totalorder %v2112, 0
        %v2114 = vsub.s32 0, %v2112
        %v2115 = vsel %vm2113, %v2114, %v2112
        %v2116 = vclz %v2115
        %v2117 = vsub.s32 %v2116, 2
        %vm2118 = vcmp.gt.s32.totalorder 0, %v2117
        %v2119 = vsel %vm2118, 0, %v2117
        %v2120 = vsub.s32 32, %v2119
        %v2121 = vshll.u32 %v2112, %v2119
        %v2122 = vshrl.u32 %v2104, %v2120
        %v2123 = vor.u32 %v2121, %v2122
        %v2124 = vsub.s32 4294967266, %v2119
        %v2125 = vadd.s32 %v2124, 127
        %v2126 = vshll.u32 %v2125, 23
        %v2127 = vor.u32 4788187, %v2126
        %v2128 = vand.u32 2147483647, %v2127
        %v2130 = vcvt.s32.f32 %v2123
        %v2131 = vmul.f32 %v2130, %v2128
        %v2132 = vxor.u32 %v2131, 2147483648
        %v2133 = vsel %vm2012, %v2132, %v2131
        %v2134 = vsub.s32 4, %v2110
        %v2135 = vsel %vm2012, %v2134, %v2110
        %v2136 = vsel %vm2011, %v714, %v2133
        %v2137 = vsel %vm2011, 0, %v2135
        %v2138 = vmul.f32 %v2136, %v2136
        %v2139 = vmul.f32 %v2138, -0.001358992
        %v2140 = vadd.f32 %v2139, 0.041655596
        %v2141 = vmul.f32 %v2138, %v2140
        %v2142 = vadd.f32 %v2141, -0.4999988
        %v2143 = vmul.f32 %v2138, %v2142
        %v2144 = vadd.f32 1.0, %v2143
        %v2145 = vmul.f32 %v2136, %v2136
        %v2146 = vmul.f32 %v2145, -0.00019511016
        %v2147 = vadd.f32 %v2146, 0.008332121
        %v2148 = vmul.f32 %v2145, %v2147
        %v2149 = vadd.f32 %v2148, -0.16666654
        %v2150 = vmul.f32 %v2145, %v2149
        %v2151 = vadd.f32 %v2150, 1.0
        %v2152 = vmul.f32 %v2151, %v2136
        %vm2153 = vweird.f32 %v714
        %v2154 = vadd.s32 %v2137, 3
        %v2155 = vand.u32 %v2154, 3
        %vm2156 = vcmp.lt.s32.totalorder %v2155, 2
        %vm2157 = vcmp.eq.s32.totalorder %v2155, 0
        %v2158 = vxor.u32 %v2152, 2147483648
        %v2159 = vsel %vm2157, %v2144, %v2158
        %vm2160 = vcmp.eq.s32.totalorder %v2155, 2
        %v2161 = vxor.u32 %v2144, 2147483648
        %v2162 = vsel %vm2160, %v2161, %v2152
        %v2163 = vsel %vm2156, %v2159, %v2162
        %v2164 = vsel %vm2153, nan, %v2163
        %v2165 = vand.u32 2147483647, %v715
        %vm2166 = vcmp.le.f32.partialorder %v2165, 0.7853982
        %vm2167 = vcmp.lt.s32.totalorder %v715, 0
        %v2168 = vand.u32 %v715, 2139095040
        %v2169 = vshrl.u32 %v2168, 23
        %v2170 = vsub.s32 %v2169, 127
        %v2171 = vand.u32 2147483647, %v715
        %v2172 = vand.u32 %v2171, 8388607
        %v2173 = vor.u32 %v2172, 8388608
        %v2174 = vsub.s32 0, %v2173
        %v2175 = vadd.s32 %v2170, 1
        %vm2176 = vcmp.gt.s32.totalorder %v2175, 0
        %v2177 = vsel %vm2176, %v2175, 0
        %v2178 = vshrl.u32 %v2177, 5
        %v2179 = vand.u32 %v2177, 31
        %v2180 = vsub.s32 32, %v2179
        %v2181 = vshrl.u32 683565275, %v2180
        %v2182 = vshll.u32 683565275, %v2179
        %v2183 = vshrl.u32 2475754826, %v2180
        %v2184 = vor.u32 %v2182, %v2183
        %v2185 = vshll.u32 2475754826, %v2179
        %v2186 = vshrl.u32 2131351028, %v2180
        %v2187 = vor.u32 %v2185, %v2186
        %v2188 = vshll.u32 2131351028, %v2179
        %v2189 = vshrl.u32 2102212464, %v2180
        %v2190 = vor.u32 %v2188, %v2189
        %v2191 = vshll.u32 2102212464, %v2179
        %v2192 = vshrl.u32 920167782, %v2180
        %v2193 = vor.u32 %v2191, %v2192
        %v2194 = vshll.u32 920167782, %v2179
        %v2195 = vshrl.u32 1326507024, %v2180
        %v2196 = vor.u32 %v2194, %v2195
        %vm2197 = vcmp.lt.s32.totalorder %v2178, 1
        %vm2198 = vcmp.lt.s32.totalorder %v2178, 2
        %vm2199 = vcmp.lt.s32.totalorder %v2178, 3
        %vm2200 = vcmp.lt.s32.totalorder %v2178, 4
        %v2201 = vsel %vm2197, %v2181, %v2184
        %v2202 = vsel %vm2200, %v2190, 2102212464
        %v2203 = vsel %vm2199, %v2187, %v2202
        %v2204 = vsel %vm2198, %v2201, %v2203
        %v2205 = vsel %vm2197, %v2184, %v2187
        %v2206 = vsel %vm2200, %v2193, 920167782
        %v2207 = vsel %vm2199, %v2190, %v2206
        %v2208 = vsel %vm2198, %v2205, %v2207
        %v2209 = vsel %vm2197, %v2187, %v2190
        %v2210 = vsel %vm2200, %v2196, 1326507024
        %v2211 = vsel %vm2199, %v2193, %v2210
        %v2212 = vsel %vm2198, %v2209, %v2211
        %v2213 = vshll.u32 %v2173, 8
        %v2214 = vand.u32 %v2213, 65535
        %v2215 = vshrl.u32 %v2213, 16
        %v2216 = vand.u32 %v2212, 65535
        %v2217 = vshrl.u32 %v2212, 16
        %v2218 = vmul.u32 %v2214, %v2216
        %v2219 = vmul.u32 %v2214, %v2217
        %v2220 = vmul.u32 %v2215, %v2216
        %v2221 = vmul.u32 %v2215, %v2217
        %v2222 = vshll.u32 %v2219, 16
        %v2223 = vshrl.u32 %v2219, 16
        %v2224 = vshll.u32 %v2220, 16
        %v2225 = vshrl.u32 %v2220, 16
        %vm2226 = vc.u32 %v2218, %v2222
        %v2227 = vsel %vm2226, 1, 0
        %v2228 = vadd.s32 %v2218, %v2222
        %v2229 = vadd.s32 %v2221, %v2227
        %vm2230 = vc.u32 %v2228, %v2224
        %v2231 = vsel %vm2230, 1, 0
        %v2232 = vadd.s32 %v2228, %v2224
        %v2233 = vadd.s32 %v2229, %v2231
        %v2234 = vadd.s32 %v2233, %v2223
        %v2235 = vadd.s32 %v2234, %v2225
        %v2236 = vand.u32 %v2213, 65535
        %v2237 = vshrl.u32 %v2213, 16
        %v2238 = vand.u32 %v2208, 65535
        %v2239 = vshrl.u32 %v2208, 16
        %v2240 = vmul.u32 %v2236, %v2238
        %v2241 = vmul.u32 %v2236, %v2239
        %v2242 = vmul.u32 %v2237, %v2238
        %v2243 = vmul.u32 %v2237, %v2239
        %v2244 = vshll.u32 %v2241, 16
        %v2245 = vshrl.u32 %v2241, 16
        %v2246 = vshll.u32 %v2242, 16
        %v2247 = vshrl.u32 %v2242, 16
        %vm2248 = vc.u32 %v2240, %v2244
        %v2249 = vsel %vm2248, 1, 0
        %v2250 = vadd.s32 %v2240, %v2244
        %v2251 = vadd.s32 %v2243, %v2249
        %vm2252 = vc.u32 %v2250, %v2246
        %v2253 = vsel %vm2252, 1, 0
        %v2254 = vadd.s32 %v2250, %v2246
        %v2255 = vadd.s32 %v2251, %v2253
        %v2256 = vadd.s32 %v2255, %v2245
        %v2257 = vadd.s32 %v2256, %v2247
        %v2258 = vmul.u32 %v2213, %v2204
        %v2259 = vadd.s32 %v2235, %v2254
        %vm2260 = vc.u32 %v2235, %v2254
        %v2261 = vadd.s32 %v2257, 1
        %v2262 = vsel %vm2260, %v2261, %v2257
        %v2263 = vadd.s32 %v2258, %v2262
        %v2264 = vadd.s32 %v2263, 536870912
        %v2265 = vshrl.u32 %v2264, 30
        %v2266 = vshll.u32 %v2265, 30
        %v2267 = vsub.s32 %v2263, %v2266
        %vm2268 = vcmp.lt.s32.totalorder %v2267, 0
        %v2269 = vsub.s32 0, %v2267
        %v2270 = vsel %vm2268, %v2269, %v2267
        %v2271 = vclz %v2270
        %v2272 = vsub.s32 %v2271, 2
        %vm2273 = vcmp.gt.s32.totalorder 0, %v2272
        %v2274 = vsel %vm2273, 0, %v2272
        %v2275 = vsub.s32 32, %v2274
        %v2276 = vshll.u32 %v2267, %v2274
        %v2277 = vshrl.u32 %v2259, %v2275
        %v2278 = vor.u32 %v2276, %v2277
        %v2279 = vsub.s32 4294967266, %v2274
        %v2280 = vadd.s32 %v2279, 127
        %v2281 = vshll.u32 %v2280, 23
        %v2282 = vor.u32 4788187, %v2281
        %v2283 = vand.u32 2147483647, %v2282
        %v2285 = vcvt.s32.f32 %v2278
        %v2286 = vmul.f32 %v2285, %v2283
        %v2287 = vxor.u32 %v2286, 2147483648
        %v2288 = vsel %vm2167, %v2287, %v2286
        %v2289 = vsub.s32 4, %v2265
        %v2290 = vsel %vm2167, %v2289, %v2265
        %v2291 = vsel %vm2166, %v715, %v2288
        %v2292 = vsel %vm2166, 0, %v2290
        %v2293 = vmul.f32 %v2291, %v2291
        %v2294 = vmul.f32 %v2293, -0.001358992
        %v2295 = vadd.f32 %v2294, 0.041655596
        %v2296 = vmul.f32 %v2293, %v2295
        %v2297 = vadd.f32 %v2296, -0.4999988
        %v2298 = vmul.f32 %v2293, %v2297
        %v2299 = vadd.f32 1.0, %v2298
        %v2300 = vmul.f32 %v2291, %v2291
        %v2301 = vmul.f32 %v2300, -0.00019511016
        %v2302 = vadd.f32 %v2301, 0.008332121
        %v2303 = vmul.f32 %v2300, %v2302
        %v2304 = vadd.f32 %v2303, -0.16666654
        %v2305 = vmul.f32 %v2300, %v2304
        %v2306 = vadd.f32 %v2305, 1.0
        %v2307 = vmul.f32 %v2306, %v2291
        %vm2308 = vweird.f32 %v715
        %v2309 = vadd.s32 %v2292, 3
        %v2310 = vand.u32 %v2309, 3
        %vm2311 = vcmp.lt.s32.totalorder %v2310, 2
        %vm2312 = vcmp.eq.s32.totalorder %v2310, 0
        %v2313 = vxor.u32 %v2307, 2147483648
        %v2314 = vsel %vm2312, %v2299, %v2313
        %vm2315 = vcmp.eq.s32.totalorder %v2310, 2
        %v2316 = vxor.u32 %v2299, 2147483648
        %v2317 = vsel %vm2315, %v2316, %v2307
        %v2318 = vsel %vm2311, %v2314, %v2317
        %v2319 = vsel %vm2308, nan, %v2318
        %v2320 = vand.u32 2147483647, %v716
        %vm2321 = vcmp.le.f32.partialorder %v2320, 0.7853982
        %vm2322 = vcmp.lt.s32.totalorder %v716, 0
        %v2323 = vand.u32 %v716, 2139095040
        %v2324 = vshrl.u32 %v2323, 23
        %v2325 = vsub.s32 %v2324, 127
        %v2326 = vand.u32 2147483647, %v716
        %v2327 = vand.u32 %v2326, 8388607
        %v2328 = vor.u32 %v2327, 8388608
        %v2329 = vsub.s32 0, %v2328
        %v2330 = vadd.s32 %v2325, 1
        %vm2331 = vcmp.gt.s32.totalorder %v2330, 0
        %v2332 = vsel %vm2331, %v2330, 0
        %v2333 = vshrl.u32 %v2332, 5
        %v2334 = vand.u32 %v2332, 31
        %v2335 = vsub.s32 32, %v2334
        %v2336 = vshrl.u32 683565275, %v2335
        %v2337 = vshll.u32 683565275, %v2334
        %v2338 = vshrl.u32 2475754826, %v2335
        %v2339 = vor.u32 %v2337, %v2338
        %v2340 = vshll.u32 2475754826, %v2334
        %v2341 = vshrl.u32 2131351028, %v2335
        %v2342 = vor.u32 %v2340, %v2341
        %v2343 = vshll.u32 2131351028, %v2334
        %v2344 = vshrl.u32 2102212464, %v2335
        %v2345 = vor.u32 %v2343, %v2344
        %v2346 = vshll.u32 2102212464, %v2334
        %v2347 = vshrl.u32 920167782, %v2335
        %v2348 = vor.u32 %v2346, %v2347
        %v2349 = vshll.u32 920167782, %v2334
        %v2350 = vshrl.u32 1326507024, %v2335
        %v2351 = vor.u32 %v2349, %v2350
        %vm2352 = vcmp.lt.s32.totalorder %v2333, 1
        %vm2353 = vcmp.lt.s32.totalorder %v2333, 2
        %vm2354 = vcmp.lt.s32.totalorder %v2333, 3
        %vm2355 = vcmp.lt.s32.totalorder %v2333, 4
        %v2356 = vsel %vm2352, %v2336, %v2339
        %v2357 = vsel %vm2355, %v2345, 2102212464
        %v2358 = vsel %vm2354, %v2342, %v2357
        %v2359 = vsel %vm2353, %v2356, %v2358
        %v2360 = vsel %vm2352, %v2339, %v2342
        %v2361 = vsel %vm2355, %v2348, 920167782
        %v2362 = vsel %vm2354, %v2345, %v2361
        %v2363 = vsel %vm2353, %v2360, %v2362
        %v2364 = vsel %vm2352, %v2342, %v2345
        %v2365 = vsel %vm2355, %v2351, 1326507024
        %v2366 = vsel %vm2354, %v2348, %v2365
        %v2367 = vsel %vm2353, %v2364, %v2366
        %v2368 = vshll.u32 %v2328, 8
        %v2369 = vand.u32 %v2368, 65535
        %v2370 = vshrl.u32 %v2368, 16
        %v2371 = vand.u32 %v2367, 65535
        %v2372 = vshrl.u32 %v2367, 16
        %v2373 = vmul.u32 %v2369, %v2371
        %v2374 = vmul.u32 %v2369, %v2372
        %v2375 = vmul.u32 %v2370, %v2371
        %v2376 = vmul.u32 %v2370, %v2372
        %v2377 = vshll.u32 %v2374, 16
        %v2378 = vshrl.u32 %v2374, 16
        %v2379 = vshll.u32 %v2375, 16
        %v2380 = vshrl.u32 %v2375, 16
        %vm2381 = vc.u32 %v2373, %v2377
        %v2382 = vsel %vm2381, 1, 0
        %v2383 = vadd.s32 %v2373, %v2377
        %v2384 = vadd.s32 %v2376, %v2382
        %vm2385 = vc.u32 %v2383, %v2379
        %v2386 = vsel %vm2385, 1, 0
        %v2387 = vadd.s32 %v2383, %v2379
        %v2388 = vadd.s32 %v2384, %v2386
        %v2389 = vadd.s32 %v2388, %v2378
        %v2390 = vadd.s32 %v2389, %v2380
        %v2391 = vand.u32 %v2368, 65535
        %v2392 = vshrl.u32 %v2368, 16
        %v2393 = vand.u32 %v2363, 65535
        %v2394 = vshrl.u32 %v2363, 16
        %v2395 = vmul.u32 %v2391, %v2393
        %v2396 = vmul.u32 %v2391, %v2394
        %v2397 = vmul.u32 %v2392, %v2393
        %v2398 = vmul.u32 %v2392, %v2394
        %v2399 = vshll.u32 %v2396, 16
        %v2400 = vshrl.u32 %v2396, 16
        %v2401 = vshll.u32 %v2397, 16
        %v2402 = vshrl.u32 %v2397, 16
        %vm2403 = vc.u32 %v2395, %v2399
        %v2404 = vsel %vm2403, 1, 0
        %v2405 = vadd.s32 %v2395, %v2399
        %v2406 = vadd.s32 %v2398, %v2404
        %vm2407 = vc.u32 %v2405, %v2401
        %v2408 = vsel %vm2407, 1, 0
        %v2409 = vadd.s32 %v2405, %v2401
        %v2410 = vadd.s32 %v2406, %v2408
        %v2411 = vadd.s32 %v2410, %v2400
        %v2412 = vadd.s32 %v2411, %v2402
        %v2413 = vmul.u32 %v2368, %v2359
        %v2414 = vadd.s32 %v2390, %v2409
        %vm2415 = vc.u32 %v2390, %v2409
        %v2416 = vadd.s32 %v2412, 1
        %v2417 = vsel %vm2415, %v2416, %v2412
        %v2418 = vadd.s32 %v2413, %v2417
        %v2419 = vadd.s32 %v2418, 536870912
        %v2420 = vshrl.u32 %v2419, 30
        %v2421 = vshll.u32 %v2420, 30
        %v2422 = vsub.s32 %v2418, %v2421
        %vm2423 = vcmp.lt.s32.totalorder %v2422, 0
        %v2424 = vsub.s32 0, %v2422
        %v2425 = vsel %vm2423, %v2424, %v2422
        %v2426 = vclz %v2425
        %v2427 = vsub.s32 %v2426, 2
        %vm2428 = vcmp.gt.s32.totalorder 0, %v2427
        %v2429 = vsel %vm2428, 0, %v2427
        %v2430 = vsub.s32 32, %v2429
        %v2431 = vshll.u32 %v2422, %v2429
        %v2432 = vshrl.u32 %v2414, %v2430
        %v2433 = vor.u32 %v2431, %v2432
        %v2434 = vsub.s32 4294967266, %v2429
        %v2435 = vadd.s32 %v2434, 127
        %v2436 = vshll.u32 %v2435, 23
        %v2437 = vor.u32 4788187, %v2436
        %v2438 = vand.u32 2147483647, %v2437
        %v2440 = vcvt.s32.f32 %v2433
        %v2441 = vmul.f32 %v2440, %v2438
        %v2442 = vxor.u32 %v2441, 2147483648
        %v2443 = vsel %vm2322, %v2442, %v2441
        %v2444 = vsub.s32 4, %v2420
        %v2445 = vsel %vm2322, %v2444, %v2420
        %v2446 = vsel %vm2321, %v716, %v2443
        %v2447 = vsel %vm2321, 0, %v2445
        %v2448 = vmul.f32 %v2446, %v2446
        %v2449 = vmul.f32 %v2448, -0.001358992
        %v2450 = vadd.f32 %v2449, 0.041655596
        %v2451 = vmul.f32 %v2448, %v2450
        %v2452 = vadd.f32 %v2451, -0.4999988
        %v2453 = vmul.f32 %v2448, %v2452
        %v2454 = vadd.f32 1.0, %v2453
        %v2455 = vmul.f32 %v2446, %v2446
        %v2456 = vmul.f32 %v2455, -0.00019511016
        %v2457 = vadd.f32 %v2456, 0.008332121
        %v2458 = vmul.f32 %v2455, %v2457
        %v2459 = vadd.f32 %v2458, -0.16666654
        %v2460 = vmul.f32 %v2455, %v2459
        %v2461 = vadd.f32 %v2460, 1.0
        %v2462 = vmul.f32 %v2461, %v2446
        %vm2463 = vweird.f32 %v716
        %v2464 = vadd.s32 %v2447, 3
        %v2465 = vand.u32 %v2464, 3
        %vm2466 = vcmp.lt.s32.totalorder %v2465, 2
        %vm2467 = vcmp.eq.s32.totalorder %v2465, 0
        %v2468 = vxor.u32 %v2462, 2147483648
        %v2469 = vsel %vm2467, %v2454, %v2468
        %vm2470 = vcmp.eq.s32.totalorder %v2465, 2
        %v2471 = vxor.u32 %v2454, 2147483648
        %v2472 = vsel %vm2470, %v2471, %v2462
        %v2473 = vsel %vm2466, %v2469, %v2472
        %v2474 = vsel %vm2463, nan, %v2473
        %v2475 = vand.u32 2147483647, %v717
        %vm2476 = vcmp.le.f32.partialorder %v2475, 0.7853982
        %vm2477 = vcmp.lt.s32.totalorder %v717, 0
        %v2478 = vand.u32 %v717, 2139095040
        %v2479 = vshrl.u32 %v2478, 23
        %v2480 = vsub.s32 %v2479, 127
        %v2481 = vand.u32 2147483647, %v717
        %v2482 = vand.u32 %v2481, 8388607
        %v2483 = vor.u32 %v2482, 8388608
        %v2484 = vsub.s32 0, %v2483
        %v2485 = vadd.s32 %v2480, 1
        %vm2486 = vcmp.gt.s32.totalorder %v2485, 0
        %v2487 = vsel %vm2486, %v2485, 0
        %v2488 = vshrl.u32 %v2487, 5
        %v2489 = vand.u32 %v2487, 31
        %v2490 = vsub.s32 32, %v2489
        %v2491 = vshrl.u32 683565275, %v2490
        %v2492 = vshll.u32 683565275, %v2489
        %v2493 = vshrl.u32 2475754826, %v2490
        %v2494 = vor.u32 %v2492, %v2493
        %v2495 = vshll.u32 2475754826, %v2489
        %v2496 = vshrl.u32 2131351028, %v2490
        %v2497 = vor.u32 %v2495, %v2496
        %v2498 = vshll.u32 2131351028, %v2489
        %v2499 = vshrl.u32 2102212464, %v2490
        %v2500 = vor.u32 %v2498, %v2499
        %v2501 = vshll.u32 2102212464, %v2489
        %v2502 = vshrl.u32 920167782, %v2490
        %v2503 = vor.u32 %v2501, %v2502
        %v2504 = vshll.u32 920167782, %v2489
        %v2505 = vshrl.u32 1326507024, %v2490
        %v2506 = vor.u32 %v2504, %v2505
        %vm2507 = vcmp.lt.s32.totalorder %v2488, 1
        %vm2508 = vcmp.lt.s32.totalorder %v2488, 2
        %vm2509 = vcmp.lt.s32.totalorder %v2488, 3
        %vm2510 = vcmp.lt.s32.totalorder %v2488, 4
        %v2511 = vsel %vm2507, %v2491, %v2494
        %v2512 = vsel %vm2510, %v2500, 2102212464
        %v2513 = vsel %vm2509, %v2497, %v2512
        %v2514 = vsel %vm2508, %v2511, %v2513
        %v2515 = vsel %vm2507, %v2494, %v2497
        %v2516 = vsel %vm2510, %v2503, 920167782
        %v2517 = vsel %vm2509, %v2500, %v2516
        %v2518 = vsel %vm2508, %v2515, %v2517
        %v2519 = vsel %vm2507, %v2497, %v2500
        %v2520 = vsel %vm2510, %v2506, 1326507024
        %v2521 = vsel %vm2509, %v2503, %v2520
        %v2522 = vsel %vm2508, %v2519, %v2521
        %v2523 = vshll.u32 %v2483, 8
        %v2524 = vand.u32 %v2523, 65535
        %v2525 = vshrl.u32 %v2523, 16
        %v2526 = vand.u32 %v2522, 65535
        %v2527 = vshrl.u32 %v2522, 16
        %v2528 = vmul.u32 %v2524, %v2526
        %v2529 = vmul.u32 %v2524, %v2527
        %v2530 = vmul.u32 %v2525, %v2526
        %v2531 = vmul.u32 %v2525, %v2527
        %v2532 = vshll.u32 %v2529, 16
        %v2533 = vshrl.u32 %v2529, 16
        %v2534 = vshll.u32 %v2530, 16
        %v2535 = vshrl.u32 %v2530, 16
        %vm2536 = vc.u32 %v2528, %v2532
        %v2537 = vsel %vm2536, 1, 0
        %v2538 = vadd.s32 %v2528, %v2532
        %v2539 = vadd.s32 %v2531, %v2537
        %vm2540 = vc.u32 %v2538, %v2534
        %v2541 = vsel %vm2540, 1, 0
        %v2542 = vadd.s32 %v2538, %v2534
        %v2543 = vadd.s32 %v2539, %v2541
        %v2544 = vadd.s32 %v2543, %v2533
        %v2545 = vadd.s32 %v2544, %v2535
        %v2546 = vand.u32 %v2523, 65535
        %v2547 = vshrl.u32 %v2523, 16
        %v2548 = vand.u32 %v2518, 65535
        %v2549 = vshrl.u32 %v2518, 16
        %v2550 = vmul.u32 %v2546, %v2548
        %v2551 = vmul.u32 %v2546, %v2549
        %v2552 = vmul.u32 %v2547, %v2548
        %v2553 = vmul.u32 %v2547, %v2549
        %v2554 = vshll.u32 %v2551, 16
        %v2555 = vshrl.u32 %v2551, 16
        %v2556 = vshll.u32 %v2552, 16
        %v2557 = vshrl.u32 %v2552, 16
        %vm2558 = vc.u32 %v2550, %v2554
        %v2559 = vsel %vm2558, 1, 0
        %v2560 = vadd.s32 %v2550, %v2554
        %v2561 = vadd.s32 %v2553, %v2559
        %vm2562 = vc.u32 %v2560, %v2556
        %v2563 = vsel %vm2562, 1, 0
        %v2564 = vadd.s32 %v2560, %v2556
        %v2565 = vadd.s32 %v2561, %v2563
        %v2566 = vadd.s32 %v2565, %v2555
        %v2567 = vadd.s32 %v2566, %v2557
        %v2568 = vmul.u32 %v2523, %v2514
        %v2569 = vadd.s32 %v2545, %v2564
        %vm2570 = vc.u32 %v2545, %v2564
        %v2571 = vadd.s32 %v2567, 1
        %v2572 = vsel %vm2570, %v2571, %v2567
        %v2573 = vadd.s32 %v2568, %v2572
        %v2574 = vadd.s32 %v2573, 536870912
        %v2575 = vshrl.u32 %v2574, 30
        %v2576 = vshll.u32 %v2575, 30
        %v2577 = vsub.s32 %v2573, %v2576
        %vm2578 = vcmp.lt.s32.totalorder %v2577, 0
        %v2579 = vsub.s32 0, %v2577
        %v2580 = vsel %vm2578, %v2579, %v2577
        %v2581 = vclz %v2580
        %v2582 = vsub.s32 %v2581, 2
        %vm2583 = vcmp.gt.s32.totalorder 0, %v2582
        %v2584 = vsel %vm2583, 0, %v2582
        %v2585 = vsub.s32 32, %v2584
        %v2586 = vshll.u32 %v2577, %v2584
        %v2587 = vshrl.u32 %v2569, %v2585
        %v2588 = vor.u32 %v2586, %v2587
        %v2589 = vsub.s32 4294967266, %v2584
        %v2590 = vadd.s32 %v2589, 127
        %v2591 = vshll.u32 %v2590, 23
        %v2592 = vor.u32 4788187, %v2591
        %v2593 = vand.u32 2147483647, %v2592
        %v2595 = vcvt.s32.f32 %v2588
        %v2596 = vmul.f32 %v2595, %v2593
        %v2597 = vxor.u32 %v2596, 2147483648
        %v2598 = vsel %vm2477, %v2597, %v2596
        %v2599 = vsub.s32 4, %v2575
        %v2600 = vsel %vm2477, %v2599, %v2575
        %v2601 = vsel %vm2476, %v717, %v2598
        %v2602 = vsel %vm2476, 0, %v2600
        %v2603 = vmul.f32 %v2601, %v2601
        %v2604 = vmul.f32 %v2603, -0.001358992
        %v2605 = vadd.f32 %v2604, 0.041655596
        %v2606 = vmul.f32 %v2603, %v2605
        %v2607 = vadd.f32 %v2606, -0.4999988
        %v2608 = vmul.f32 %v2603, %v2607
        %v2609 = vadd.f32 1.0, %v2608
        %v2610 = vmul.f32 %v2601, %v2601
        %v2611 = vmul.f32 %v2610, -0.00019511016
        %v2612 = vadd.f32 %v2611, 0.008332121
        %v2613 = vmul.f32 %v2610, %v2612
        %v2614 = vadd.f32 %v2613, -0.16666654
        %v2615 = vmul.f32 %v2610, %v2614
        %v2616 = vadd.f32 %v2615, 1.0
        %v2617 = vmul.f32 %v2616, %v2601
        %vm2618 = vweird.f32 %v717
        %v2619 = vadd.s32 %v2602, 3
        %v2620 = vand.u32 %v2619, 3
        %vm2621 = vcmp.lt.s32.totalorder %v2620, 2
        %vm2622 = vcmp.eq.s32.totalorder %v2620, 0
        %v2623 = vxor.u32 %v2617, 2147483648
        %v2624 = vsel %vm2622, %v2609, %v2623
        %vm2625 = vcmp.eq.s32.totalorder %v2620, 2
        %v2626 = vxor.u32 %v2609, 2147483648
        %v2627 = vsel %vm2625, %v2626, %v2617
        %v2628 = vsel %vm2621, %v2624, %v2627
        %v2629 = vsel %vm2618, nan, %v2628
        %v2630 = vand.u32 2147483647, %v718
        %vm2631 = vcmp.le.f32.partialorder %v2630, 0.7853982
        %vm2632 = vcmp.lt.s32.totalorder %v718, 0
        %v2633 = vand.u32 %v718, 2139095040
        %v2634 = vshrl.u32 %v2633, 23
        %v2635 = vsub.s32 %v2634, 127
        %v2636 = vand.u32 2147483647, %v718
        %v2637 = vand.u32 %v2636, 8388607
        %v2638 = vor.u32 %v2637, 8388608
        %v2639 = vsub.s32 0, %v2638
        %v2640 = vadd.s32 %v2635, 1
        %vm2641 = vcmp.gt.s32.totalorder %v2640, 0
        %v2642 = vsel %vm2641, %v2640, 0
        %v2643 = vshrl.u32 %v2642, 5
        %v2644 = vand.u32 %v2642, 31
        %v2645 = vsub.s32 32, %v2644
        %v2646 = vshrl.u32 683565275, %v2645
        %v2647 = vshll.u32 683565275, %v2644
        %v2648 = vshrl.u32 2475754826, %v2645
        %v2649 = vor.u32 %v2647, %v2648
        %v2650 = vshll.u32 2475754826, %v2644
        %v2651 = vshrl.u32 2131351028, %v2645
        %v2652 = vor.u32 %v2650, %v2651
        %v2653 = vshll.u32 2131351028, %v2644
        %v2654 = vshrl.u32 2102212464, %v2645
        %v2655 = vor.u32 %v2653, %v2654
        %v2656 = vshll.u32 2102212464, %v2644
        %v2657 = vshrl.u32 920167782, %v2645
        %v2658 = vor.u32 %v2656, %v2657
        %v2659 = vshll.u32 920167782, %v2644
        %v2660 = vshrl.u32 1326507024, %v2645
        %v2661 = vor.u32 %v2659, %v2660
        %vm2662 = vcmp.lt.s32.totalorder %v2643, 1
        %vm2663 = vcmp.lt.s32.totalorder %v2643, 2
        %vm2664 = vcmp.lt.s32.totalorder %v2643, 3
        %vm2665 = vcmp.lt.s32.totalorder %v2643, 4
        %v2666 = vsel %vm2662, %v2646, %v2649
        %v2667 = vsel %vm2665, %v2655, 2102212464
        %v2668 = vsel %vm2664, %v2652, %v2667
        %v2669 = vsel %vm2663, %v2666, %v2668
        %v2670 = vsel %vm2662, %v2649, %v2652
        %v2671 = vsel %vm2665, %v2658, 920167782
        %v2672 = vsel %vm2664, %v2655, %v2671
        %v2673 = vsel %vm2663, %v2670, %v2672
        %v2674 = vsel %vm2662, %v2652, %v2655
        %v2675 = vsel %vm2665, %v2661, 1326507024
        %v2676 = vsel %vm2664, %v2658, %v2675
        %v2677 = vsel %vm2663, %v2674, %v2676
        %v2678 = vshll.u32 %v2638, 8
        %v2679 = vand.u32 %v2678, 65535
        %v2680 = vshrl.u32 %v2678, 16
        %v2681 = vand.u32 %v2677, 65535
        %v2682 = vshrl.u32 %v2677, 16
        %v2683 = vmul.u32 %v2679, %v2681
        %v2684 = vmul.u32 %v2679, %v2682
        %v2685 = vmul.u32 %v2680, %v2681
        %v2686 = vmul.u32 %v2680, %v2682
        %v2687 = vshll.u32 %v2684, 16
        %v2688 = vshrl.u32 %v2684, 16
        %v2689 = vshll.u32 %v2685, 16
        %v2690 = vshrl.u32 %v2685, 16
        %vm2691 = vc.u32 %v2683, %v2687
        %v2692 = vsel %vm2691, 1, 0
        %v2693 = vadd.s32 %v2683, %v2687
        %v2694 = vadd.s32 %v2686, %v2692
        %vm2695 = vc.u32 %v2693, %v2689
        %v2696 = vsel %vm2695, 1, 0
        %v2697 = vadd.s32 %v2693, %v2689
        %v2698 = vadd.s32 %v2694, %v2696
        %v2699 = vadd.s32 %v2698, %v2688
        %v2700 = vadd.s32 %v2699, %v2690
        %v2701 = vand.u32 %v2678, 65535
        %v2702 = vshrl.u32 %v2678, 16
        %v2703 = vand.u32 %v2673, 65535
        %v2704 = vshrl.u32 %v2673, 16
        %v2705 = vmul.u32 %v2701, %v2703
        %v2706 = vmul.u32 %v2701, %v2704
        %v2707 = vmul.u32 %v2702, %v2703
        %v2708 = vmul.u32 %v2702, %v2704
        %v2709 = vshll.u32 %v2706, 16
        %v2710 = vshrl.u32 %v2706, 16
        %v2711 = vshll.u32 %v2707, 16
        %v2712 = vshrl.u32 %v2707, 16
        %vm2713 = vc.u32 %v2705, %v2709
        %v2714 = vsel %vm2713, 1, 0
        %v2715 = vadd.s32 %v2705, %v2709
        %v2716 = vadd.s32 %v2708, %v2714
        %vm2717 = vc.u32 %v2715, %v2711
        %v2718 = vsel %vm2717, 1, 0
        %v2719 = vadd.s32 %v2715, %v2711
        %v2720 = vadd.s32 %v2716, %v2718
        %v2721 = vadd.s32 %v2720, %v2710
        %v2722 = vadd.s32 %v2721, %v2712
        %v2723 = vmul.u32 %v2678, %v2669
        %v2724 = vadd.s32 %v2700, %v2719
        %vm2725 = vc.u32 %v2700, %v2719
        %v2726 = vadd.s32 %v2722, 1
        %v2727 = vsel %vm2725, %v2726, %v2722
        %v2728 = vadd.s32 %v2723, %v2727
        %v2729 = vadd.s32 %v2728, 536870912
        %v2730 = vshrl.u32 %v2729, 30
        %v2731 = vshll.u32 %v2730, 30
        %v2732 = vsub.s32 %v2728, %v2731
        %vm2733 = vcmp.lt.s32.totalorder %v2732, 0
        %v2734 = vsub.s32 0, %v2732
        %v2735 = vsel %vm2733, %v2734, %v2732
        %v2736 = vclz %v2735
        %v2737 = vsub.s32 %v2736, 2
        %vm2738 = vcmp.gt.s32.totalorder 0, %v2737
        %v2739 = vsel %vm2738, 0, %v2737
        %v2740 = vsub.s32 32, %v2739
        %v2741 = vshll.u32 %v2732, %v2739
        %v2742 = vshrl.u32 %v2724, %v2740
        %v2743 = vor.u32 %v2741, %v2742
        %v2744 = vsub.s32 4294967266, %v2739
        %v2745 = vadd.s32 %v2744, 127
        %v2746 = vshll.u32 %v2745, 23
        %v2747 = vor.u32 4788187, %v2746
        %v2748 = vand.u32 2147483647, %v2747
        %v2750 = vcvt.s32.f32 %v2743
        %v2751 = vmul.f32 %v2750, %v2748
        %v2752 = vxor.u32 %v2751, 2147483648
        %v2753 = vsel %vm2632, %v2752, %v2751
        %v2754 = vsub.s32 4, %v2730
        %v2755 = vsel %vm2632, %v2754, %v2730
        %v2756 = vsel %vm2631, %v718, %v2753
        %v2757 = vsel %vm2631, 0, %v2755
        %v2758 = vmul.f32 %v2756, %v2756
        %v2759 = vmul.f32 %v2758, -0.001358992
        %v2760 = vadd.f32 %v2759, 0.041655596
        %v2761 = vmul.f32 %v2758, %v2760
        %v2762 = vadd.f32 %v2761, -0.4999988
        %v2763 = vmul.f32 %v2758, %v2762
        %v2764 = vadd.f32 1.0, %v2763
        %v2765 = vmul.f32 %v2756, %v2756
        %v2766 = vmul.f32 %v2765, -0.00019511016
        %v2767 = vadd.f32 %v2766, 0.008332121
        %v2768 = vmul.f32 %v2765, %v2767
        %v2769 = vadd.f32 %v2768, -0.16666654
        %v2770 = vmul.f32 %v2765, %v2769
        %v2771 = vadd.f32 %v2770, 1.0
        %v2772 = vmul.f32 %v2771, %v2756
        %vm2773 = vweird.f32 %v718
        %v2774 = vadd.s32 %v2757, 3
        %v2775 = vand.u32 %v2774, 3
        %vm2776 = vcmp.lt.s32.totalorder %v2775, 2
        %vm2777 = vcmp.eq.s32.totalorder %v2775, 0
        %v2778 = vxor.u32 %v2772, 2147483648
        %v2779 = vsel %vm2777, %v2764, %v2778
        %vm2780 = vcmp.eq.s32.totalorder %v2775, 2
        %v2781 = vxor.u32 %v2764, 2147483648
        %v2782 = vsel %vm2780, %v2781, %v2772
        %v2783 = vsel %vm2776, %v2779, %v2782
        %v2784 = vsel %vm2773, nan, %v2783
        %v2785 = vand.u32 2147483647, %v719
        %vm2786 = vcmp.le.f32.partialorder %v2785, 0.7853982
        %vm2787 = vcmp.lt.s32.totalorder %v719, 0
        %v2788 = vand.u32 %v719, 2139095040
        %v2789 = vshrl.u32 %v2788, 23
        %v2790 = vsub.s32 %v2789, 127
        %v2791 = vand.u32 2147483647, %v719
        %v2792 = vand.u32 %v2791, 8388607
        %v2793 = vor.u32 %v2792, 8388608
        %v2794 = vsub.s32 0, %v2793
        %v2795 = vadd.s32 %v2790, 1
        %vm2796 = vcmp.gt.s32.totalorder %v2795, 0
        %v2797 = vsel %vm2796, %v2795, 0
        %v2798 = vshrl.u32 %v2797, 5
        %v2799 = vand.u32 %v2797, 31
        %v2800 = vsub.s32 32, %v2799
        %v2801 = vshrl.u32 683565275, %v2800
        %v2802 = vshll.u32 683565275, %v2799
        %v2803 = vshrl.u32 2475754826, %v2800
        %v2804 = vor.u32 %v2802, %v2803
        %v2805 = vshll.u32 2475754826, %v2799
        %v2806 = vshrl.u32 2131351028, %v2800
        %v2807 = vor.u32 %v2805, %v2806
        %v2808 = vshll.u32 2131351028, %v2799
        %v2809 = vshrl.u32 2102212464, %v2800
        %v2810 = vor.u32 %v2808, %v2809
        %v2811 = vshll.u32 2102212464, %v2799
        %v2812 = vshrl.u32 920167782, %v2800
        %v2813 = vor.u32 %v2811, %v2812
        %v2814 = vshll.u32 920167782, %v2799
        %v2815 = vshrl.u32 1326507024, %v2800
        %v2816 = vor.u32 %v2814, %v2815
        %vm2817 = vcmp.lt.s32.totalorder %v2798, 1
        %vm2818 = vcmp.lt.s32.totalorder %v2798, 2
        %vm2819 = vcmp.lt.s32.totalorder %v2798, 3
        %vm2820 = vcmp.lt.s32.totalorder %v2798, 4
        %v2821 = vsel %vm2817, %v2801, %v2804
        %v2822 = vsel %vm2820, %v2810, 2102212464
        %v2823 = vsel %vm2819, %v2807, %v2822
        %v2824 = vsel %vm2818, %v2821, %v2823
        %v2825 = vsel %vm2817, %v2804, %v2807
        %v2826 = vsel %vm2820, %v2813, 920167782
        %v2827 = vsel %vm2819, %v2810, %v2826
        %v2828 = vsel %vm2818, %v2825, %v2827
        %v2829 = vsel %vm2817, %v2807, %v2810
        %v2830 = vsel %vm2820, %v2816, 1326507024
        %v2831 = vsel %vm2819, %v2813, %v2830
        %v2832 = vsel %vm2818, %v2829, %v2831
        %v2833 = vshll.u32 %v2793, 8
        %v2834 = vand.u32 %v2833, 65535
        %v2835 = vshrl.u32 %v2833, 16
        %v2836 = vand.u32 %v2832, 65535
        %v2837 = vshrl.u32 %v2832, 16
        %v2838 = vmul.u32 %v2834, %v2836
        %v2839 = vmul.u32 %v2834, %v2837
        %v2840 = vmul.u32 %v2835, %v2836
        %v2841 = vmul.u32 %v2835, %v2837
        %v2842 = vshll.u32 %v2839, 16
        %v2843 = vshrl.u32 %v2839, 16
        %v2844 = vshll.u32 %v2840, 16
        %v2845 = vshrl.u32 %v2840, 16
        %vm2846 = vc.u32 %v2838, %v2842
        %v2847 = vsel %vm2846, 1, 0
        %v2848 = vadd.s32 %v2838, %v2842
        %v2849 = vadd.s32 %v2841, %v2847
        %vm2850 = vc.u32 %v2848, %v2844
        %v2851 = vsel %vm2850, 1, 0
        %v2852 = vadd.s32 %v2848, %v2844
        %v2853 = vadd.s32 %v2849, %v2851
        %v2854 = vadd.s32 %v2853, %v2843
        %v2855 = vadd.s32 %v2854, %v2845
        %v2856 = vand.u32 %v2833, 65535
        %v2857 = vshrl.u32 %v2833, 16
        %v2858 = vand.u32 %v2828, 65535
        %v2859 = vshrl.u32 %v2828, 16
        %v2860 = vmul.u32 %v2856, %v2858
        %v2861 = vmul.u32 %v2856, %v2859
        %v2862 = vmul.u32 %v2857, %v2858
        %v2863 = vmul.u32 %v2857, %v2859
        %v2864 = vshll.u32 %v2861, 16
        %v2865 = vshrl.u32 %v2861, 16
        %v2866 = vshll.u32 %v2862, 16
        %v2867 = vshrl.u32 %v2862, 16
        %vm2868 = vc.u32 %v2860, %v2864
        %v2869 = vsel %vm2868, 1, 0
        %v2870 = vadd.s32 %v2860, %v2864
        %v2871 = vadd.s32 %v2863, %v2869
        %vm2872 = vc.u32 %v2870, %v2866
        %v2873 = vsel %vm2872, 1, 0
        %v2874 = vadd.s32 %v2870, %v2866
        %v2875 = vadd.s32 %v2871, %v2873
        %v2876 = vadd.s32 %v2875, %v2865
        %v2877 = vadd.s32 %v2876, %v2867
        %v2878 = vmul.u32 %v2833, %v2824
        %v2879 = vadd.s32 %v2855, %v2874
        %vm2880 = vc.u32 %v2855, %v2874
        %v2881 = vadd.s32 %v2877, 1
        %v2882 = vsel %vm2880, %v2881, %v2877
        %v2883 = vadd.s32 %v2878, %v2882
        %v2884 = vadd.s32 %v2883, 536870912
        %v2885 = vshrl.u32 %v2884, 30
        %v2886 = vshll.u32 %v2885, 30
        %v2887 = vsub.s32 %v2883, %v2886
        %vm2888 = vcmp.lt.s32.totalorder %v2887, 0
        %v2889 = vsub.s32 0, %v2887
        %v2890 = vsel %vm2888, %v2889, %v2887
        %v2891 = vclz %v2890
        %v2892 = vsub.s32 %v2891, 2
        %vm2893 = vcmp.gt.s32.totalorder 0, %v2892
        %v2894 = vsel %vm2893, 0, %v2892
        %v2895 = vsub.s32 32, %v2894
        %v2896 = vshll.u32 %v2887, %v2894
        %v2897 = vshrl.u32 %v2879, %v2895
        %v2898 = vor.u32 %v2896, %v2897
        %v2899 = vsub.s32 4294967266, %v2894
        %v2900 = vadd.s32 %v2899, 127
        %v2901 = vshll.u32 %v2900, 23
        %v2902 = vor.u32 4788187, %v2901
        %v2903 = vand.u32 2147483647, %v2902
        %v2905 = vcvt.s32.f32 %v2898
        %v2906 = vmul.f32 %v2905, %v2903
        %v2907 = vxor.u32 %v2906, 2147483648
        %v2908 = vsel %vm2787, %v2907, %v2906
        %v2909 = vsub.s32 4, %v2885
        %v2910 = vsel %vm2787, %v2909, %v2885
        %v2911 = vsel %vm2786, %v719, %v2908
        %v2912 = vsel %vm2786, 0, %v2910
        %v2913 = vmul.f32 %v2911, %v2911
        %v2914 = vmul.f32 %v2913, -0.001358992
        %v2915 = vadd.f32 %v2914, 0.041655596
        %v2916 = vmul.f32 %v2913, %v2915
        %v2917 = vadd.f32 %v2916, -0.4999988
        %v2918 = vmul.f32 %v2913, %v2917
        %v2919 = vadd.f32 1.0, %v2918
        %v2920 = vmul.f32 %v2911, %v2911
        %v2921 = vmul.f32 %v2920, -0.00019511016
        %v2922 = vadd.f32 %v2921, 0.008332121
        %v2923 = vmul.f32 %v2920, %v2922
        %v2924 = vadd.f32 %v2923, -0.16666654
        %v2925 = vmul.f32 %v2920, %v2924
        %v2926 = vadd.f32 %v2925, 1.0
        %v2927 = vmul.f32 %v2926, %v2911
        %vm2928 = vweird.f32 %v719
        %v2929 = vadd.s32 %v2912, 3
        %v2930 = vand.u32 %v2929, 3
        %vm2931 = vcmp.lt.s32.totalorder %v2930, 2
        %vm2932 = vcmp.eq.s32.totalorder %v2930, 0
        %v2933 = vxor.u32 %v2927, 2147483648
        %v2934 = vsel %vm2932, %v2919, %v2933
        %vm2935 = vcmp.eq.s32.totalorder %v2930, 2
        %v2936 = vxor.u32 %v2919, 2147483648
        %v2937 = vsel %vm2935, %v2936, %v2927
        %v2938 = vsel %vm2931, %v2934, %v2937
        %v2939 = vsel %vm2928, nan, %v2938
        %v2940 = vand.u32 2147483647, %v720
        %vm2941 = vcmp.le.f32.partialorder %v2940, 0.7853982
        %vm2942 = vcmp.lt.s32.totalorder %v720, 0
        %v2943 = vand.u32 %v720, 2139095040
        %v2944 = vshrl.u32 %v2943, 23
        %v2945 = vsub.s32 %v2944, 127
        %v2946 = vand.u32 2147483647, %v720
        %v2947 = vand.u32 %v2946, 8388607
        %v2948 = vor.u32 %v2947, 8388608
        %v2949 = vsub.s32 0, %v2948
        %v2950 = vadd.s32 %v2945, 1
        %vm2951 = vcmp.gt.s32.totalorder %v2950, 0
        %v2952 = vsel %vm2951, %v2950, 0
        %v2953 = vshrl.u32 %v2952, 5
        %v2954 = vand.u32 %v2952, 31
        %v2955 = vsub.s32 32, %v2954
        %v2956 = vshrl.u32 683565275, %v2955
        %v2957 = vshll.u32 683565275, %v2954
        %v2958 = vshrl.u32 2475754826, %v2955
        %v2959 = vor.u32 %v2957, %v2958
        %v2960 = vshll.u32 2475754826, %v2954
        %v2961 = vshrl.u32 2131351028, %v2955
        %v2962 = vor.u32 %v2960, %v2961
        %v2963 = vshll.u32 2131351028, %v2954
        %v2964 = vshrl.u32 2102212464, %v2955
        %v2965 = vor.u32 %v2963, %v2964
        %v2966 = vshll.u32 2102212464, %v2954
        %v2967 = vshrl.u32 920167782, %v2955
        %v2968 = vor.u32 %v2966, %v2967
        %v2969 = vshll.u32 920167782, %v2954
        %v2970 = vshrl.u32 1326507024, %v2955
        %v2971 = vor.u32 %v2969, %v2970
        %vm2972 = vcmp.lt.s32.totalorder %v2953, 1
        %vm2973 = vcmp.lt.s32.totalorder %v2953, 2
        %vm2974 = vcmp.lt.s32.totalorder %v2953, 3
        %vm2975 = vcmp.lt.s32.totalorder %v2953, 4
        %v2976 = vsel %vm2972, %v2956, %v2959
        %v2977 = vsel %vm2975, %v2965, 2102212464
        %v2978 = vsel %vm2974, %v2962, %v2977
        %v2979 = vsel %vm2973, %v2976, %v2978
        %v2980 = vsel %vm2972, %v2959, %v2962
        %v2981 = vsel %vm2975, %v2968, 920167782
        %v2982 = vsel %vm2974, %v2965, %v2981
        %v2983 = vsel %vm2973, %v2980, %v2982
        %v2984 = vsel %vm2972, %v2962, %v2965
        %v2985 = vsel %vm2975, %v2971, 1326507024
        %v2986 = vsel %vm2974, %v2968, %v2985
        %v2987 = vsel %vm2973, %v2984, %v2986
        %v2988 = vshll.u32 %v2948, 8
        %v2989 = vand.u32 %v2988, 65535
        %v2990 = vshrl.u32 %v2988, 16
        %v2991 = vand.u32 %v2987, 65535
        %v2992 = vshrl.u32 %v2987, 16
        %v2993 = vmul.u32 %v2989, %v2991
        %v2994 = vmul.u32 %v2989, %v2992
        %v2995 = vmul.u32 %v2990, %v2991
        %v2996 = vmul.u32 %v2990, %v2992
        %v2997 = vshll.u32 %v2994, 16
        %v2998 = vshrl.u32 %v2994, 16
        %v2999 = vshll.u32 %v2995, 16
        %v3000 = vshrl.u32 %v2995, 16
        %vm3001 = vc.u32 %v2993, %v2997
        %v3002 = vsel %vm3001, 1, 0
        %v3003 = vadd.s32 %v2993, %v2997
        %v3004 = vadd.s32 %v2996, %v3002
        %vm3005 = vc.u32 %v3003, %v2999
        %v3006 = vsel %vm3005, 1, 0
        %v3007 = vadd.s32 %v3003, %v2999
        %v3008 = vadd.s32 %v3004, %v3006
        %v3009 = vadd.s32 %v3008, %v2998
        %v3010 = vadd.s32 %v3009, %v3000
        %v3011 = vand.u32 %v2988, 65535
        %v3012 = vshrl.u32 %v2988, 16
        %v3013 = vand.u32 %v2983, 65535
        %v3014 = vshrl.u32 %v2983, 16
        %v3015 = vmul.u32 %v3011, %v3013
        %v3016 = vmul.u32 %v3011, %v3014
        %v3017 = vmul.u32 %v3012, %v3013
        %v3018 = vmul.u32 %v3012, %v3014
        %v3019 = vshll.u32 %v3016, 16
        %v3020 = vshrl.u32 %v3016, 16
        %v3021 = vshll.u32 %v3017, 16
        %v3022 = vshrl.u32 %v3017, 16
        %vm3023 = vc.u32 %v3015, %v3019
        %v3024 = vsel %vm3023, 1, 0
        %v3025 = vadd.s32 %v3015, %v3019
        %v3026 = vadd.s32 %v3018, %v3024
        %vm3027 = vc.u32 %v3025, %v3021
        %v3028 = vsel %vm3027, 1, 0
        %v3029 = vadd.s32 %v3025, %v3021
        %v3030 = vadd.s32 %v3026, %v3028
        %v3031 = vadd.s32 %v3030, %v3020
        %v3032 = vadd.s32 %v3031, %v3022
        %v3033 = vmul.u32 %v2988, %v2979
        %v3034 = vadd.s32 %v3010, %v3029
        %vm3035 = vc.u32 %v3010, %v3029
        %v3036 = vadd.s32 %v3032, 1
        %v3037 = vsel %vm3035, %v3036, %v3032
        %v3038 = vadd.s32 %v3033, %v3037
        %v3039 = vadd.s32 %v3038, 536870912
        %v3040 = vshrl.u32 %v3039, 30
        %v3041 = vshll.u32 %v3040, 30
        %v3042 = vsub.s32 %v3038, %v3041
        %vm3043 = vcmp.lt.s32.totalorder %v3042, 0
        %v3044 = vsub.s32 0, %v3042
        %v3045 = vsel %vm3043, %v3044, %v3042
        %v3046 = vclz %v3045
        %v3047 = vsub.s32 %v3046, 2
        %vm3048 = vcmp.gt.s32.totalorder 0, %v3047
        %v3049 = vsel %vm3048, 0, %v3047
        %v3050 = vsub.s32 32, %v3049
        %v3051 = vshll.u32 %v3042, %v3049
        %v3052 = vshrl.u32 %v3034, %v3050
        %v3053 = vor.u32 %v3051, %v3052
        %v3054 = vsub.s32 4294967266, %v3049
        %v3055 = vadd.s32 %v3054, 127
        %v3056 = vshll.u32 %v3055, 23
        %v3057 = vor.u32 4788187, %v3056
        %v3058 = vand.u32 2147483647, %v3057
        %v3060 = vcvt.s32.f32 %v3053
        %v3061 = vmul.f32 %v3060, %v3058
        %v3062 = vxor.u32 %v3061, 2147483648
        %v3063 = vsel %vm2942, %v3062, %v3061
        %v3064 = vsub.s32 4, %v3040
        %v3065 = vsel %vm2942, %v3064, %v3040
        %v3066 = vsel %vm2941, %v720, %v3063
        %v3067 = vsel %vm2941, 0, %v3065
        %v3068 = vmul.f32 %v3066, %v3066
        %v3069 = vmul.f32 %v3068, -0.001358992
        %v3070 = vadd.f32 %v3069, 0.041655596
        %v3071 = vmul.f32 %v3068, %v3070
        %v3072 = vadd.f32 %v3071, -0.4999988
        %v3073 = vmul.f32 %v3068, %v3072
        %v3074 = vadd.f32 1.0, %v3073
        %v3075 = vmul.f32 %v3066, %v3066
        %v3076 = vmul.f32 %v3075, -0.00019511016
        %v3077 = vadd.f32 %v3076, 0.008332121
        %v3078 = vmul.f32 %v3075, %v3077
        %v3079 = vadd.f32 %v3078, -0.16666654
        %v3080 = vmul.f32 %v3075, %v3079
        %v3081 = vadd.f32 %v3080, 1.0
        %v3082 = vmul.f32 %v3081, %v3066
        %vm3083 = vweird.f32 %v720
        %v3084 = vadd.s32 %v3067, 3
        %v3085 = vand.u32 %v3084, 3
        %vm3086 = vcmp.lt.s32.totalorder %v3085, 2
        %vm3087 = vcmp.eq.s32.totalorder %v3085, 0
        %v3088 = vxor.u32 %v3082, 2147483648
        %v3089 = vsel %vm3087, %v3074, %v3088
        %vm3090 = vcmp.eq.s32.totalorder %v3085, 2
        %v3091 = vxor.u32 %v3074, 2147483648
        %v3092 = vsel %vm3090, %v3091, %v3082
        %v3093 = vsel %vm3086, %v3089, %v3092
        %v3094 = vsel %vm3083, nan, %v3093
        %v3095 = vand.u32 2147483647, %v721
        %vm3096 = vcmp.le.f32.partialorder %v3095, 0.7853982
        %vm3097 = vcmp.lt.s32.totalorder %v721, 0
        %v3098 = vand.u32 %v721, 2139095040
        %v3099 = vshrl.u32 %v3098, 23
        %v3100 = vsub.s32 %v3099, 127
        %v3101 = vand.u32 2147483647, %v721
        %v3102 = vand.u32 %v3101, 8388607
        %v3103 = vor.u32 %v3102, 8388608
        %v3104 = vsub.s32 0, %v3103
        %v3105 = vadd.s32 %v3100, 1
        %vm3106 = vcmp.gt.s32.totalorder %v3105, 0
        %v3107 = vsel %vm3106, %v3105, 0
        %v3108 = vshrl.u32 %v3107, 5
        %v3109 = vand.u32 %v3107, 31
        %v3110 = vsub.s32 32, %v3109
        %v3111 = vshrl.u32 683565275, %v3110
        %v3112 = vshll.u32 683565275, %v3109
        %v3113 = vshrl.u32 2475754826, %v3110
        %v3114 = vor.u32 %v3112, %v3113
        %v3115 = vshll.u32 2475754826, %v3109
        %v3116 = vshrl.u32 2131351028, %v3110
        %v3117 = vor.u32 %v3115, %v3116
        %v3118 = vshll.u32 2131351028, %v3109
        %v3119 = vshrl.u32 2102212464, %v3110
        %v3120 = vor.u32 %v3118, %v3119
        %v3121 = vshll.u32 2102212464, %v3109
        %v3122 = vshrl.u32 920167782, %v3110
        %v3123 = vor.u32 %v3121, %v3122
        %v3124 = vshll.u32 920167782, %v3109
        %v3125 = vshrl.u32 1326507024, %v3110
        %v3126 = vor.u32 %v3124, %v3125
        %vm3127 = vcmp.lt.s32.totalorder %v3108, 1
        %vm3128 = vcmp.lt.s32.totalorder %v3108, 2
        %vm3129 = vcmp.lt.s32.totalorder %v3108, 3
        %vm3130 = vcmp.lt.s32.totalorder %v3108, 4
        %v3131 = vsel %vm3127, %v3111, %v3114
        %v3132 = vsel %vm3130, %v3120, 2102212464
        %v3133 = vsel %vm3129, %v3117, %v3132
        %v3134 = vsel %vm3128, %v3131, %v3133
        %v3135 = vsel %vm3127, %v3114, %v3117
        %v3136 = vsel %vm3130, %v3123, 920167782
        %v3137 = vsel %vm3129, %v3120, %v3136
        %v3138 = vsel %vm3128, %v3135, %v3137
        %v3139 = vsel %vm3127, %v3117, %v3120
        %v3140 = vsel %vm3130, %v3126, 1326507024
        %v3141 = vsel %vm3129, %v3123, %v3140
        %v3142 = vsel %vm3128, %v3139, %v3141
        %v3143 = vshll.u32 %v3103, 8
        %v3144 = vand.u32 %v3143, 65535
        %v3145 = vshrl.u32 %v3143, 16
        %v3146 = vand.u32 %v3142, 65535
        %v3147 = vshrl.u32 %v3142, 16
        %v3148 = vmul.u32 %v3144, %v3146
        %v3149 = vmul.u32 %v3144, %v3147
        %v3150 = vmul.u32 %v3145, %v3146
        %v3151 = vmul.u32 %v3145, %v3147
        %v3152 = vshll.u32 %v3149, 16
        %v3153 = vshrl.u32 %v3149, 16
        %v3154 = vshll.u32 %v3150, 16
        %v3155 = vshrl.u32 %v3150, 16
        %vm3156 = vc.u32 %v3148, %v3152
        %v3157 = vsel %vm3156, 1, 0
        %v3158 = vadd.s32 %v3148, %v3152
        %v3159 = vadd.s32 %v3151, %v3157
        %vm3160 = vc.u32 %v3158, %v3154
        %v3161 = vsel %vm3160, 1, 0
        %v3162 = vadd.s32 %v3158, %v3154
        %v3163 = vadd.s32 %v3159, %v3161
        %v3164 = vadd.s32 %v3163, %v3153
        %v3165 = vadd.s32 %v3164, %v3155
        %v3166 = vand.u32 %v3143, 65535
        %v3167 = vshrl.u32 %v3143, 16
        %v3168 = vand.u32 %v3138, 65535
        %v3169 = vshrl.u32 %v3138, 16
        %v3170 = vmul.u32 %v3166, %v3168
        %v3171 = vmul.u32 %v3166, %v3169
        %v3172 = vmul.u32 %v3167, %v3168
        %v3173 = vmul.u32 %v3167, %v3169
        %v3174 = vshll.u32 %v3171, 16
        %v3175 = vshrl.u32 %v3171, 16
        %v3176 = vshll.u32 %v3172, 16
        %v3177 = vshrl.u32 %v3172, 16
        %vm3178 = vc.u32 %v3170, %v3174
        %v3179 = vsel %vm3178, 1, 0
        %v3180 = vadd.s32 %v3170, %v3174
        %v3181 = vadd.s32 %v3173, %v3179
        %vm3182 = vc.u32 %v3180, %v3176
        %v3183 = vsel %vm3182, 1, 0
        %v3184 = vadd.s32 %v3180, %v3176
        %v3185 = vadd.s32 %v3181, %v3183
        %v3186 = vadd.s32 %v3185, %v3175
        %v3187 = vadd.s32 %v3186, %v3177
        %v3188 = vmul.u32 %v3143, %v3134
        %v3189 = vadd.s32 %v3165, %v3184
        %vm3190 = vc.u32 %v3165, %v3184
        %v3191 = vadd.s32 %v3187, 1
        %v3192 = vsel %vm3190, %v3191, %v3187
        %v3193 = vadd.s32 %v3188, %v3192
        %v3194 = vadd.s32 %v3193, 536870912
        %v3195 = vshrl.u32 %v3194, 30
        %v3196 = vshll.u32 %v3195, 30
        %v3197 = vsub.s32 %v3193, %v3196
        %vm3198 = vcmp.lt.s32.totalorder %v3197, 0
        %v3199 = vsub.s32 0, %v3197
        %v3200 = vsel %vm3198, %v3199, %v3197
        %v3201 = vclz %v3200
        %v3202 = vsub.s32 %v3201, 2
        %vm3203 = vcmp.gt.s32.totalorder 0, %v3202
        %v3204 = vsel %vm3203, 0, %v3202
        %v3205 = vsub.s32 32, %v3204
        %v3206 = vshll.u32 %v3197, %v3204
        %v3207 = vshrl.u32 %v3189, %v3205
        %v3208 = vor.u32 %v3206, %v3207
        %v3209 = vsub.s32 4294967266, %v3204
        %v3210 = vadd.s32 %v3209, 127
        %v3211 = vshll.u32 %v3210, 23
        %v3212 = vor.u32 4788187, %v3211
        %v3213 = vand.u32 2147483647, %v3212
        %v3215 = vcvt.s32.f32 %v3208
        %v3216 = vmul.f32 %v3215, %v3213
        %v3217 = vxor.u32 %v3216, 2147483648
        %v3218 = vsel %vm3097, %v3217, %v3216
        %v3219 = vsub.s32 4, %v3195
        %v3220 = vsel %vm3097, %v3219, %v3195
        %v3221 = vsel %vm3096, %v721, %v3218
        %v3222 = vsel %vm3096, 0, %v3220
        %v3223 = vmul.f32 %v3221, %v3221
        %v3224 = vmul.f32 %v3223, -0.001358992
        %v3225 = vadd.f32 %v3224, 0.041655596
        %v3226 = vmul.f32 %v3223, %v3225
        %v3227 = vadd.f32 %v3226, -0.4999988
        %v3228 = vmul.f32 %v3223, %v3227
        %v3229 = vadd.f32 1.0, %v3228
        %v3230 = vmul.f32 %v3221, %v3221
        %v3231 = vmul.f32 %v3230, -0.00019511016
        %v3232 = vadd.f32 %v3231, 0.008332121
        %v3233 = vmul.f32 %v3230, %v3232
        %v3234 = vadd.f32 %v3233, -0.16666654
        %v3235 = vmul.f32 %v3230, %v3234
        %v3236 = vadd.f32 %v3235, 1.0
        %v3237 = vmul.f32 %v3236, %v3221
        %vm3238 = vweird.f32 %v721
        %v3239 = vadd.s32 %v3222, 3
        %v3240 = vand.u32 %v3239, 3
        %vm3241 = vcmp.lt.s32.totalorder %v3240, 2
        %vm3242 = vcmp.eq.s32.totalorder %v3240, 0
        %v3243 = vxor.u32 %v3237, 2147483648
        %v3244 = vsel %vm3242, %v3229, %v3243
        %vm3245 = vcmp.eq.s32.totalorder %v3240, 2
        %v3246 = vxor.u32 %v3229, 2147483648
        %v3247 = vsel %vm3245, %v3246, %v3237
        %v3248 = vsel %vm3241, %v3244, %v3247
        %v3249 = vsel %vm3238, nan, %v3248
        %v3250 = vand.u32 2147483647, %v722
        %vm3251 = vcmp.le.f32.partialorder %v3250, 0.7853982
        %vm3252 = vcmp.lt.s32.totalorder %v722, 0
        %v3253 = vand.u32 %v722, 2139095040
        %v3254 = vshrl.u32 %v3253, 23
        %v3255 = vsub.s32 %v3254, 127
        %v3256 = vand.u32 2147483647, %v722
        %v3257 = vand.u32 %v3256, 8388607
        %v3258 = vor.u32 %v3257, 8388608
        %v3259 = vsub.s32 0, %v3258
        %v3260 = vadd.s32 %v3255, 1
        %vm3261 = vcmp.gt.s32.totalorder %v3260, 0
        %v3262 = vsel %vm3261, %v3260, 0
        %v3263 = vshrl.u32 %v3262, 5
        %v3264 = vand.u32 %v3262, 31
        %v3265 = vsub.s32 32, %v3264
        %v3266 = vshrl.u32 683565275, %v3265
        %v3267 = vshll.u32 683565275, %v3264
        %v3268 = vshrl.u32 2475754826, %v3265
        %v3269 = vor.u32 %v3267, %v3268
        %v3270 = vshll.u32 2475754826, %v3264
        %v3271 = vshrl.u32 2131351028, %v3265
        %v3272 = vor.u32 %v3270, %v3271
        %v3273 = vshll.u32 2131351028, %v3264
        %v3274 = vshrl.u32 2102212464, %v3265
        %v3275 = vor.u32 %v3273, %v3274
        %v3276 = vshll.u32 2102212464, %v3264
        %v3277 = vshrl.u32 920167782, %v3265
        %v3278 = vor.u32 %v3276, %v3277
        %v3279 = vshll.u32 920167782, %v3264
        %v3280 = vshrl.u32 1326507024, %v3265
        %v3281 = vor.u32 %v3279, %v3280
        %vm3282 = vcmp.lt.s32.totalorder %v3263, 1
        %vm3283 = vcmp.lt.s32.totalorder %v3263, 2
        %vm3284 = vcmp.lt.s32.totalorder %v3263, 3
        %vm3285 = vcmp.lt.s32.totalorder %v3263, 4
        %v3286 = vsel %vm3282, %v3266, %v3269
        %v3287 = vsel %vm3285, %v3275, 2102212464
        %v3288 = vsel %vm3284, %v3272, %v3287
        %v3289 = vsel %vm3283, %v3286, %v3288
        %v3290 = vsel %vm3282, %v3269, %v3272
        %v3291 = vsel %vm3285, %v3278, 920167782
        %v3292 = vsel %vm3284, %v3275, %v3291
        %v3293 = vsel %vm3283, %v3290, %v3292
        %v3294 = vsel %vm3282, %v3272, %v3275
        %v3295 = vsel %vm3285, %v3281, 1326507024
        %v3296 = vsel %vm3284, %v3278, %v3295
        %v3297 = vsel %vm3283, %v3294, %v3296
        %v3298 = vshll.u32 %v3258, 8
        %v3299 = vand.u32 %v3298, 65535
        %v3300 = vshrl.u32 %v3298, 16
        %v3301 = vand.u32 %v3297, 65535
        %v3302 = vshrl.u32 %v3297, 16
        %v3303 = vmul.u32 %v3299, %v3301
        %v3304 = vmul.u32 %v3299, %v3302
        %v3305 = vmul.u32 %v3300, %v3301
        %v3306 = vmul.u32 %v3300, %v3302
        %v3307 = vshll.u32 %v3304, 16
        %v3308 = vshrl.u32 %v3304, 16
        %v3309 = vshll.u32 %v3305, 16
        %v3310 = vshrl.u32 %v3305, 16
        %vm3311 = vc.u32 %v3303, %v3307
        %v3312 = vsel %vm3311, 1, 0
        %v3313 = vadd.s32 %v3303, %v3307
        %v3314 = vadd.s32 %v3306, %v3312
        %vm3315 = vc.u32 %v3313, %v3309
        %v3316 = vsel %vm3315, 1, 0
        %v3317 = vadd.s32 %v3313, %v3309
        %v3318 = vadd.s32 %v3314, %v3316
        %v3319 = vadd.s32 %v3318, %v3308
        %v3320 = vadd.s32 %v3319, %v3310
        %v3321 = vand.u32 %v3298, 65535
        %v3322 = vshrl.u32 %v3298, 16
        %v3323 = vand.u32 %v3293, 65535
        %v3324 = vshrl.u32 %v3293, 16
        %v3325 = vmul.u32 %v3321, %v3323
        %v3326 = vmul.u32 %v3321, %v3324
        %v3327 = vmul.u32 %v3322, %v3323
        %v3328 = vmul.u32 %v3322, %v3324
        %v3329 = vshll.u32 %v3326, 16
        %v3330 = vshrl.u32 %v3326, 16
        %v3331 = vshll.u32 %v3327, 16
        %v3332 = vshrl.u32 %v3327, 16
        %vm3333 = vc.u32 %v3325, %v3329
        %v3334 = vsel %vm3333, 1, 0
        %v3335 = vadd.s32 %v3325, %v3329
        %v3336 = vadd.s32 %v3328, %v3334
        %vm3337 = vc.u32 %v3335, %v3331
        %v3338 = vsel %vm3337, 1, 0
        %v3339 = vadd.s32 %v3335, %v3331
        %v3340 = vadd.s32 %v3336, %v3338
        %v3341 = vadd.s32 %v3340, %v3330
        %v3342 = vadd.s32 %v3341, %v3332
        %v3343 = vmul.u32 %v3298, %v3289
        %v3344 = vadd.s32 %v3320, %v3339
        %vm3345 = vc.u32 %v3320, %v3339
        %v3346 = vadd.s32 %v3342, 1
        %v3347 = vsel %vm3345, %v3346, %v3342
        %v3348 = vadd.s32 %v3343, %v3347
        %v3349 = vadd.s32 %v3348, 536870912
        %v3350 = vshrl.u32 %v3349, 30
        %v3351 = vshll.u32 %v3350, 30
        %v3352 = vsub.s32 %v3348, %v3351
        %vm3353 = vcmp.lt.s32.totalorder %v3352, 0
        %v3354 = vsub.s32 0, %v3352
        %v3355 = vsel %vm3353, %v3354, %v3352
        %v3356 = vclz %v3355
        %v3357 = vsub.s32 %v3356, 2
        %vm3358 = vcmp.gt.s32.totalorder 0, %v3357
        %v3359 = vsel %vm3358, 0, %v3357
        %v3360 = vsub.s32 32, %v3359
        %v3361 = vshll.u32 %v3352, %v3359
        %v3362 = vshrl.u32 %v3344, %v3360
        %v3363 = vor.u32 %v3361, %v3362
        %v3364 = vsub.s32 4294967266, %v3359
        %v3365 = vadd.s32 %v3364, 127
        %v3366 = vshll.u32 %v3365, 23
        %v3367 = vor.u32 4788187, %v3366
        %v3368 = vand.u32 2147483647, %v3367
        %v3370 = vcvt.s32.f32 %v3363
        %v3371 = vmul.f32 %v3370, %v3368
        %v3372 = vxor.u32 %v3371, 2147483648
        %v3373 = vsel %vm3252, %v3372, %v3371
        %v3374 = vsub.s32 4, %v3350
        %v3375 = vsel %vm3252, %v3374, %v3350
        %v3376 = vsel %vm3251, %v722, %v3373
        %v3377 = vsel %vm3251, 0, %v3375
        %v3378 = vmul.f32 %v3376, %v3376
        %v3379 = vmul.f32 %v3378, -0.001358992
        %v3380 = vadd.f32 %v3379, 0.041655596
        %v3381 = vmul.f32 %v3378, %v3380
        %v3382 = vadd.f32 %v3381, -0.4999988
        %v3383 = vmul.f32 %v3378, %v3382
        %v3384 = vadd.f32 1.0, %v3383
        %v3385 = vmul.f32 %v3376, %v3376
        %v3386 = vmul.f32 %v3385, -0.00019511016
        %v3387 = vadd.f32 %v3386, 0.008332121
        %v3388 = vmul.f32 %v3385, %v3387
        %v3389 = vadd.f32 %v3388, -0.16666654
        %v3390 = vmul.f32 %v3385, %v3389
        %v3391 = vadd.f32 %v3390, 1.0
        %v3392 = vmul.f32 %v3391, %v3376
        %vm3393 = vweird.f32 %v722
        %v3394 = vadd.s32 %v3377, 3
        %v3395 = vand.u32 %v3394, 3
        %vm3396 = vcmp.lt.s32.totalorder %v3395, 2
        %vm3397 = vcmp.eq.s32.totalorder %v3395, 0
        %v3398 = vxor.u32 %v3392, 2147483648
        %v3399 = vsel %vm3397, %v3384, %v3398
        %vm3400 = vcmp.eq.s32.totalorder %v3395, 2
        %v3401 = vxor.u32 %v3384, 2147483648
        %v3402 = vsel %vm3400, %v3401, %v3392
        %v3403 = vsel %vm3396, %v3399, %v3402
        %v3404 = vsel %vm3393, nan, %v3403
        %v3405 = vand.u32 2147483647, %v723
        %vm3406 = vcmp.le.f32.partialorder %v3405, 0.7853982
        %vm3407 = vcmp.lt.s32.totalorder %v723, 0
        %v3408 = vand.u32 %v723, 2139095040
        %v3409 = vshrl.u32 %v3408, 23
        %v3410 = vsub.s32 %v3409, 127
        %v3411 = vand.u32 2147483647, %v723
        %v3412 = vand.u32 %v3411, 8388607
        %v3413 = vor.u32 %v3412, 8388608
        %v3414 = vsub.s32 0, %v3413
        %v3415 = vadd.s32 %v3410, 1
        %vm3416 = vcmp.gt.s32.totalorder %v3415, 0
        %v3417 = vsel %vm3416, %v3415, 0
        %v3418 = vshrl.u32 %v3417, 5
        %v3419 = vand.u32 %v3417, 31
        %v3420 = vsub.s32 32, %v3419
        %v3421 = vshrl.u32 683565275, %v3420
        %v3422 = vshll.u32 683565275, %v3419
        %v3423 = vshrl.u32 2475754826, %v3420
        %v3424 = vor.u32 %v3422, %v3423
        %v3425 = vshll.u32 2475754826, %v3419
        %v3426 = vshrl.u32 2131351028, %v3420
        %v3427 = vor.u32 %v3425, %v3426
        %v3428 = vshll.u32 2131351028, %v3419
        %v3429 = vshrl.u32 2102212464, %v3420
        %v3430 = vor.u32 %v3428, %v3429
        %v3431 = vshll.u32 2102212464, %v3419
        %v3432 = vshrl.u32 920167782, %v3420
        %v3433 = vor.u32 %v3431, %v3432
        %v3434 = vshll.u32 920167782, %v3419
        %v3435 = vshrl.u32 1326507024, %v3420
        %v3436 = vor.u32 %v3434, %v3435
        %vm3437 = vcmp.lt.s32.totalorder %v3418, 1
        %vm3438 = vcmp.lt.s32.totalorder %v3418, 2
        %vm3439 = vcmp.lt.s32.totalorder %v3418, 3
        %vm3440 = vcmp.lt.s32.totalorder %v3418, 4
        %v3441 = vsel %vm3437, %v3421, %v3424
        %v3442 = vsel %vm3440, %v3430, 2102212464
        %v3443 = vsel %vm3439, %v3427, %v3442
        %v3444 = vsel %vm3438, %v3441, %v3443
        %v3445 = vsel %vm3437, %v3424, %v3427
        %v3446 = vsel %vm3440, %v3433, 920167782
        %v3447 = vsel %vm3439, %v3430, %v3446
        %v3448 = vsel %vm3438, %v3445, %v3447
        %v3449 = vsel %vm3437, %v3427, %v3430
        %v3450 = vsel %vm3440, %v3436, 1326507024
        %v3451 = vsel %vm3439, %v3433, %v3450
        %v3452 = vsel %vm3438, %v3449, %v3451
        %v3453 = vshll.u32 %v3413, 8
        %v3454 = vand.u32 %v3453, 65535
        %v3455 = vshrl.u32 %v3453, 16
        %v3456 = vand.u32 %v3452, 65535
        %v3457 = vshrl.u32 %v3452, 16
        %v3458 = vmul.u32 %v3454, %v3456
        %v3459 = vmul.u32 %v3454, %v3457
        %v3460 = vmul.u32 %v3455, %v3456
        %v3461 = vmul.u32 %v3455, %v3457
        %v3462 = vshll.u32 %v3459, 16
        %v3463 = vshrl.u32 %v3459, 16
        %v3464 = vshll.u32 %v3460, 16
        %v3465 = vshrl.u32 %v3460, 16
        %vm3466 = vc.u32 %v3458, %v3462
        %v3467 = vsel %vm3466, 1, 0
        %v3468 = vadd.s32 %v3458, %v3462
        %v3469 = vadd.s32 %v3461, %v3467
        %vm3470 = vc.u32 %v3468, %v3464
        %v3471 = vsel %vm3470, 1, 0
        %v3472 = vadd.s32 %v3468, %v3464
        %v3473 = vadd.s32 %v3469, %v3471
        %v3474 = vadd.s32 %v3473, %v3463
        %v3475 = vadd.s32 %v3474, %v3465
        %v3476 = vand.u32 %v3453, 65535
        %v3477 = vshrl.u32 %v3453, 16
        %v3478 = vand.u32 %v3448, 65535
        %v3479 = vshrl.u32 %v3448, 16
        %v3480 = vmul.u32 %v3476, %v3478
        %v3481 = vmul.u32 %v3476, %v3479
        %v3482 = vmul.u32 %v3477, %v3478
        %v3483 = vmul.u32 %v3477, %v3479
        %v3484 = vshll.u32 %v3481, 16
        %v3485 = vshrl.u32 %v3481, 16
        %v3486 = vshll.u32 %v3482, 16
        %v3487 = vshrl.u32 %v3482, 16
        %vm3488 = vc.u32 %v3480, %v3484
        %v3489 = vsel %vm3488, 1, 0
        %v3490 = vadd.s32 %v3480, %v3484
        %v3491 = vadd.s32 %v3483, %v3489
        %vm3492 = vc.u32 %v3490, %v3486
        %v3493 = vsel %vm3492, 1, 0
        %v3494 = vadd.s32 %v3490, %v3486
        %v3495 = vadd.s32 %v3491, %v3493
        %v3496 = vadd.s32 %v3495, %v3485
        %v3497 = vadd.s32 %v3496, %v3487
        %v3498 = vmul.u32 %v3453, %v3444
        %v3499 = vadd.s32 %v3475, %v3494
        %vm3500 = vc.u32 %v3475, %v3494
        %v3501 = vadd.s32 %v3497, 1
        %v3502 = vsel %vm3500, %v3501, %v3497
        %v3503 = vadd.s32 %v3498, %v3502
        %v3504 = vadd.s32 %v3503, 536870912
        %v3505 = vshrl.u32 %v3504, 30
        %v3506 = vshll.u32 %v3505, 30
        %v3507 = vsub.s32 %v3503, %v3506
        %vm3508 = vcmp.lt.s32.totalorder %v3507, 0
        %v3509 = vsub.s32 0, %v3507
        %v3510 = vsel %vm3508, %v3509, %v3507
        %v3511 = vclz %v3510
        %v3512 = vsub.s32 %v3511, 2
        %vm3513 = vcmp.gt.s32.totalorder 0, %v3512
        %v3514 = vsel %vm3513, 0, %v3512
        %v3515 = vsub.s32 32, %v3514
        %v3516 = vshll.u32 %v3507, %v3514
        %v3517 = vshrl.u32 %v3499, %v3515
        %v3518 = vor.u32 %v3516, %v3517
        %v3519 = vsub.s32 4294967266, %v3514
        %v3520 = vadd.s32 %v3519, 127
        %v3521 = vshll.u32 %v3520, 23
        %v3522 = vor.u32 4788187, %v3521
        %v3523 = vand.u32 2147483647, %v3522
        %v3525 = vcvt.s32.f32 %v3518
        %v3526 = vmul.f32 %v3525, %v3523
        %v3527 = vxor.u32 %v3526, 2147483648
        %v3528 = vsel %vm3407, %v3527, %v3526
        %v3529 = vsub.s32 4, %v3505
        %v3530 = vsel %vm3407, %v3529, %v3505
        %v3531 = vsel %vm3406, %v723, %v3528
        %v3532 = vsel %vm3406, 0, %v3530
        %v3533 = vmul.f32 %v3531, %v3531
        %v3534 = vmul.f32 %v3533, -0.001358992
        %v3535 = vadd.f32 %v3534, 0.041655596
        %v3536 = vmul.f32 %v3533, %v3535
        %v3537 = vadd.f32 %v3536, -0.4999988
        %v3538 = vmul.f32 %v3533, %v3537
        %v3539 = vadd.f32 1.0, %v3538
        %v3540 = vmul.f32 %v3531, %v3531
        %v3541 = vmul.f32 %v3540, -0.00019511016
        %v3542 = vadd.f32 %v3541, 0.008332121
        %v3543 = vmul.f32 %v3540, %v3542
        %v3544 = vadd.f32 %v3543, -0.16666654
        %v3545 = vmul.f32 %v3540, %v3544
        %v3546 = vadd.f32 %v3545, 1.0
        %v3547 = vmul.f32 %v3546, %v3531
        %vm3548 = vweird.f32 %v723
        %v3549 = vadd.s32 %v3532, 3
        %v3550 = vand.u32 %v3549, 3
        %vm3551 = vcmp.lt.s32.totalorder %v3550, 2
        %vm3552 = vcmp.eq.s32.totalorder %v3550, 0
        %v3553 = vxor.u32 %v3547, 2147483648
        %v3554 = vsel %vm3552, %v3539, %v3553
        %vm3555 = vcmp.eq.s32.totalorder %v3550, 2
        %v3556 = vxor.u32 %v3539, 2147483648
        %v3557 = vsel %vm3555, %v3556, %v3547
        %v3558 = vsel %vm3551, %v3554, %v3557
        %v3559 = vsel %vm3548, nan, %v3558
        %v3560 = vand.u32 2147483647, %v724
        %vm3561 = vcmp.le.f32.partialorder %v3560, 0.7853982
        %vm3562 = vcmp.lt.s32.totalorder %v724, 0
        %v3563 = vand.u32 %v724, 2139095040
        %v3564 = vshrl.u32 %v3563, 23
        %v3565 = vsub.s32 %v3564, 127
        %v3566 = vand.u32 2147483647, %v724
        %v3567 = vand.u32 %v3566, 8388607
        %v3568 = vor.u32 %v3567, 8388608
        %v3569 = vsub.s32 0, %v3568
        %v3570 = vadd.s32 %v3565, 1
        %vm3571 = vcmp.gt.s32.totalorder %v3570, 0
        %v3572 = vsel %vm3571, %v3570, 0
        %v3573 = vshrl.u32 %v3572, 5
        %v3574 = vand.u32 %v3572, 31
        %v3575 = vsub.s32 32, %v3574
        %v3576 = vshrl.u32 683565275, %v3575
        %v3577 = vshll.u32 683565275, %v3574
        %v3578 = vshrl.u32 2475754826, %v3575
        %v3579 = vor.u32 %v3577, %v3578
        %v3580 = vshll.u32 2475754826, %v3574
        %v3581 = vshrl.u32 2131351028, %v3575
        %v3582 = vor.u32 %v3580, %v3581
        %v3583 = vshll.u32 2131351028, %v3574
        %v3584 = vshrl.u32 2102212464, %v3575
        %v3585 = vor.u32 %v3583, %v3584
        %v3586 = vshll.u32 2102212464, %v3574
        %v3587 = vshrl.u32 920167782, %v3575
        %v3588 = vor.u32 %v3586, %v3587
        %v3589 = vshll.u32 920167782, %v3574
        %v3590 = vshrl.u32 1326507024, %v3575
        %v3591 = vor.u32 %v3589, %v3590
        %vm3592 = vcmp.lt.s32.totalorder %v3573, 1
        %vm3593 = vcmp.lt.s32.totalorder %v3573, 2
        %vm3594 = vcmp.lt.s32.totalorder %v3573, 3
        %vm3595 = vcmp.lt.s32.totalorder %v3573, 4
        %v3596 = vsel %vm3592, %v3576, %v3579
        %v3597 = vsel %vm3595, %v3585, 2102212464
        %v3598 = vsel %vm3594, %v3582, %v3597
        %v3599 = vsel %vm3593, %v3596, %v3598
        %v3600 = vsel %vm3592, %v3579, %v3582
        %v3601 = vsel %vm3595, %v3588, 920167782
        %v3602 = vsel %vm3594, %v3585, %v3601
        %v3603 = vsel %vm3593, %v3600, %v3602
        %v3604 = vsel %vm3592, %v3582, %v3585
        %v3605 = vsel %vm3595, %v3591, 1326507024
        %v3606 = vsel %vm3594, %v3588, %v3605
        %v3607 = vsel %vm3593, %v3604, %v3606
        %v3608 = vshll.u32 %v3568, 8
        %v3609 = vand.u32 %v3608, 65535
        %v3610 = vshrl.u32 %v3608, 16
        %v3611 = vand.u32 %v3607, 65535
        %v3612 = vshrl.u32 %v3607, 16
        %v3613 = vmul.u32 %v3609, %v3611
        %v3614 = vmul.u32 %v3609, %v3612
        %v3615 = vmul.u32 %v3610, %v3611
        %v3616 = vmul.u32 %v3610, %v3612
        %v3617 = vshll.u32 %v3614, 16
        %v3618 = vshrl.u32 %v3614, 16
        %v3619 = vshll.u32 %v3615, 16
        %v3620 = vshrl.u32 %v3615, 16
        %vm3621 = vc.u32 %v3613, %v3617
        %v3622 = vsel %vm3621, 1, 0
        %v3623 = vadd.s32 %v3613, %v3617
        %v3624 = vadd.s32 %v3616, %v3622
        %vm3625 = vc.u32 %v3623, %v3619
        %v3626 = vsel %vm3625, 1, 0
        %v3627 = vadd.s32 %v3623, %v3619
        %v3628 = vadd.s32 %v3624, %v3626
        %v3629 = vadd.s32 %v3628, %v3618
        %v3630 = vadd.s32 %v3629, %v3620
        %v3631 = vand.u32 %v3608, 65535
        %v3632 = vshrl.u32 %v3608, 16
        %v3633 = vand.u32 %v3603, 65535
        %v3634 = vshrl.u32 %v3603, 16
        %v3635 = vmul.u32 %v3631, %v3633
        %v3636 = vmul.u32 %v3631, %v3634
        %v3637 = vmul.u32 %v3632, %v3633
        %v3638 = vmul.u32 %v3632, %v3634
        %v3639 = vshll.u32 %v3636, 16
        %v3640 = vshrl.u32 %v3636, 16
        %v3641 = vshll.u32 %v3637, 16
        %v3642 = vshrl.u32 %v3637, 16
        %vm3643 = vc.u32 %v3635, %v3639
        %v3644 = vsel %vm3643, 1, 0
        %v3645 = vadd.s32 %v3635, %v3639
        %v3646 = vadd.s32 %v3638, %v3644
        %vm3647 = vc.u32 %v3645, %v3641
        %v3648 = vsel %vm3647, 1, 0
        %v3649 = vadd.s32 %v3645, %v3641
        %v3650 = vadd.s32 %v3646, %v3648
        %v3651 = vadd.s32 %v3650, %v3640
        %v3652 = vadd.s32 %v3651, %v3642
        %v3653 = vmul.u32 %v3608, %v3599
        %v3654 = vadd.s32 %v3630, %v3649
        %vm3655 = vc.u32 %v3630, %v3649
        %v3656 = vadd.s32 %v3652, 1
        %v3657 = vsel %vm3655, %v3656, %v3652
        %v3658 = vadd.s32 %v3653, %v3657
        %v3659 = vadd.s32 %v3658, 536870912
        %v3660 = vshrl.u32 %v3659, 30
        %v3661 = vshll.u32 %v3660, 30
        %v3662 = vsub.s32 %v3658, %v3661
        %vm3663 = vcmp.lt.s32.totalorder %v3662, 0
        %v3664 = vsub.s32 0, %v3662
        %v3665 = vsel %vm3663, %v3664, %v3662
        %v3666 = vclz %v3665
        %v3667 = vsub.s32 %v3666, 2
        %vm3668 = vcmp.gt.s32.totalorder 0, %v3667
        %v3669 = vsel %vm3668, 0, %v3667
        %v3670 = vsub.s32 32, %v3669
        %v3671 = vshll.u32 %v3662, %v3669
        %v3672 = vshrl.u32 %v3654, %v3670
        %v3673 = vor.u32 %v3671, %v3672
        %v3674 = vsub.s32 4294967266, %v3669
        %v3675 = vadd.s32 %v3674, 127
        %v3676 = vshll.u32 %v3675, 23
        %v3677 = vor.u32 4788187, %v3676
        %v3678 = vand.u32 2147483647, %v3677
        %v3680 = vcvt.s32.f32 %v3673
        %v3681 = vmul.f32 %v3680, %v3678
        %v3682 = vxor.u32 %v3681, 2147483648
        %v3683 = vsel %vm3562, %v3682, %v3681
        %v3684 = vsub.s32 4, %v3660
        %v3685 = vsel %vm3562, %v3684, %v3660
        %v3686 = vsel %vm3561, %v724, %v3683
        %v3687 = vsel %vm3561, 0, %v3685
        %v3688 = vmul.f32 %v3686, %v3686
        %v3689 = vmul.f32 %v3688, -0.001358992
        %v3690 = vadd.f32 %v3689, 0.041655596
        %v3691 = vmul.f32 %v3688, %v3690
        %v3692 = vadd.f32 %v3691, -0.4999988
        %v3693 = vmul.f32 %v3688, %v3692
        %v3694 = vadd.f32 1.0, %v3693
        %v3695 = vmul.f32 %v3686, %v3686
        %v3696 = vmul.f32 %v3695, -0.00019511016
        %v3697 = vadd.f32 %v3696, 0.008332121
        %v3698 = vmul.f32 %v3695, %v3697
        %v3699 = vadd.f32 %v3698, -0.16666654
        %v3700 = vmul.f32 %v3695, %v3699
        %v3701 = vadd.f32 %v3700, 1.0
        %v3702 = vmul.f32 %v3701, %v3686
        %vm3703 = vweird.f32 %v724
        %v3704 = vadd.s32 %v3687, 3
        %v3705 = vand.u32 %v3704, 3
        %vm3706 = vcmp.lt.s32.totalorder %v3705, 2
        %vm3707 = vcmp.eq.s32.totalorder %v3705, 0
        %v3708 = vxor.u32 %v3702, 2147483648
        %v3709 = vsel %vm3707, %v3694, %v3708
        %vm3710 = vcmp.eq.s32.totalorder %v3705, 2
        %v3711 = vxor.u32 %v3694, 2147483648
        %v3712 = vsel %vm3710, %v3711, %v3702
        %v3713 = vsel %vm3706, %v3709, %v3712
        %v3714 = vsel %vm3703, nan, %v3713
        %v3715 = vand.u32 2147483647, %v725
        %vm3716 = vcmp.le.f32.partialorder %v3715, 0.7853982
        %vm3717 = vcmp.lt.s32.totalorder %v725, 0
        %v3718 = vand.u32 %v725, 2139095040
        %v3719 = vshrl.u32 %v3718, 23
        %v3720 = vsub.s32 %v3719, 127
        %v3721 = vand.u32 2147483647, %v725
        %v3722 = vand.u32 %v3721, 8388607
        %v3723 = vor.u32 %v3722, 8388608
        %v3724 = vsub.s32 0, %v3723
        %v3725 = vadd.s32 %v3720, 1
        %vm3726 = vcmp.gt.s32.totalorder %v3725, 0
        %v3727 = vsel %vm3726, %v3725, 0
        %v3728 = vshrl.u32 %v3727, 5
        %v3729 = vand.u32 %v3727, 31
        %v3730 = vsub.s32 32, %v3729
        %v3731 = vshrl.u32 683565275, %v3730
        %v3732 = vshll.u32 683565275, %v3729
        %v3733 = vshrl.u32 2475754826, %v3730
        %v3734 = vor.u32 %v3732, %v3733
        %v3735 = vshll.u32 2475754826, %v3729
        %v3736 = vshrl.u32 2131351028, %v3730
        %v3737 = vor.u32 %v3735, %v3736
        %v3738 = vshll.u32 2131351028, %v3729
        %v3739 = vshrl.u32 2102212464, %v3730
        %v3740 = vor.u32 %v3738, %v3739
        %v3741 = vshll.u32 2102212464, %v3729
        %v3742 = vshrl.u32 920167782, %v3730
        %v3743 = vor.u32 %v3741, %v3742
        %v3744 = vshll.u32 920167782, %v3729
        %v3745 = vshrl.u32 1326507024, %v3730
        %v3746 = vor.u32 %v3744, %v3745
        %vm3747 = vcmp.lt.s32.totalorder %v3728, 1
        %vm3748 = vcmp.lt.s32.totalorder %v3728, 2
        %vm3749 = vcmp.lt.s32.totalorder %v3728, 3
        %vm3750 = vcmp.lt.s32.totalorder %v3728, 4
        %v3751 = vsel %vm3747, %v3731, %v3734
        %v3752 = vsel %vm3750, %v3740, 2102212464
        %v3753 = vsel %vm3749, %v3737, %v3752
        %v3754 = vsel %vm3748, %v3751, %v3753
        %v3755 = vsel %vm3747, %v3734, %v3737
        %v3756 = vsel %vm3750, %v3743, 920167782
        %v3757 = vsel %vm3749, %v3740, %v3756
        %v3758 = vsel %vm3748, %v3755, %v3757
        %v3759 = vsel %vm3747, %v3737, %v3740
        %v3760 = vsel %vm3750, %v3746, 1326507024
        %v3761 = vsel %vm3749, %v3743, %v3760
        %v3762 = vsel %vm3748, %v3759, %v3761
        %v3763 = vshll.u32 %v3723, 8
        %v3764 = vand.u32 %v3763, 65535
        %v3765 = vshrl.u32 %v3763, 16
        %v3766 = vand.u32 %v3762, 65535
        %v3767 = vshrl.u32 %v3762, 16
        %v3768 = vmul.u32 %v3764, %v3766
        %v3769 = vmul.u32 %v3764, %v3767
        %v3770 = vmul.u32 %v3765, %v3766
        %v3771 = vmul.u32 %v3765, %v3767
        %v3772 = vshll.u32 %v3769, 16
        %v3773 = vshrl.u32 %v3769, 16
        %v3774 = vshll.u32 %v3770, 16
        %v3775 = vshrl.u32 %v3770, 16
        %vm3776 = vc.u32 %v3768, %v3772
        %v3777 = vsel %vm3776, 1, 0
        %v3778 = vadd.s32 %v3768, %v3772
        %v3779 = vadd.s32 %v3771, %v3777
        %vm3780 = vc.u32 %v3778, %v3774
        %v3781 = vsel %vm3780, 1, 0
        %v3782 = vadd.s32 %v3778, %v3774
        %v3783 = vadd.s32 %v3779, %v3781
        %v3784 = vadd.s32 %v3783, %v3773
        %v3785 = vadd.s32 %v3784, %v3775
        %v3786 = vand.u32 %v3763, 65535
        %v3787 = vshrl.u32 %v3763, 16
        %v3788 = vand.u32 %v3758, 65535
        %v3789 = vshrl.u32 %v3758, 16
        %v3790 = vmul.u32 %v3786, %v3788
        %v3791 = vmul.u32 %v3786, %v3789
        %v3792 = vmul.u32 %v3787, %v3788
        %v3793 = vmul.u32 %v3787, %v3789
        %v3794 = vshll.u32 %v3791, 16
        %v3795 = vshrl.u32 %v3791, 16
        %v3796 = vshll.u32 %v3792, 16
        %v3797 = vshrl.u32 %v3792, 16
        %vm3798 = vc.u32 %v3790, %v3794
        %v3799 = vsel %vm3798, 1, 0
        %v3800 = vadd.s32 %v3790, %v3794
        %v3801 = vadd.s32 %v3793, %v3799
        %vm3802 = vc.u32 %v3800, %v3796
        %v3803 = vsel %vm3802, 1, 0
        %v3804 = vadd.s32 %v3800, %v3796
        %v3805 = vadd.s32 %v3801, %v3803
        %v3806 = vadd.s32 %v3805, %v3795
        %v3807 = vadd.s32 %v3806, %v3797
        %v3808 = vmul.u32 %v3763, %v3754
        %v3809 = vadd.s32 %v3785, %v3804
        %vm3810 = vc.u32 %v3785, %v3804
        %v3811 = vadd.s32 %v3807, 1
        %v3812 = vsel %vm3810, %v3811, %v3807
        %v3813 = vadd.s32 %v3808, %v3812
        %v3814 = vadd.s32 %v3813, 536870912
        %v3815 = vshrl.u32 %v3814, 30
        %v3816 = vshll.u32 %v3815, 30
        %v3817 = vsub.s32 %v3813, %v3816
        %vm3818 = vcmp.lt.s32.totalorder %v3817, 0
        %v3819 = vsub.s32 0, %v3817
        %v3820 = vsel %vm3818, %v3819, %v3817
        %v3821 = vclz %v3820
        %v3822 = vsub.s32 %v3821, 2
        %vm3823 = vcmp.gt.s32.totalorder 0, %v3822
        %v3824 = vsel %vm3823, 0, %v3822
        %v3825 = vsub.s32 32, %v3824
        %v3826 = vshll.u32 %v3817, %v3824
        %v3827 = vshrl.u32 %v3809, %v3825
        %v3828 = vor.u32 %v3826, %v3827
        %v3829 = vsub.s32 4294967266, %v3824
        %v3830 = vadd.s32 %v3829, 127
        %v3831 = vshll.u32 %v3830, 23
        %v3832 = vor.u32 4788187, %v3831
        %v3833 = vand.u32 2147483647, %v3832
        %v3835 = vcvt.s32.f32 %v3828
        %v3836 = vmul.f32 %v3835, %v3833
        %v3837 = vxor.u32 %v3836, 2147483648
        %v3838 = vsel %vm3717, %v3837, %v3836
        %v3839 = vsub.s32 4, %v3815
        %v3840 = vsel %vm3717, %v3839, %v3815
        %v3841 = vsel %vm3716, %v725, %v3838
        %v3842 = vsel %vm3716, 0, %v3840
        %v3843 = vmul.f32 %v3841, %v3841
        %v3844 = vmul.f32 %v3843, -0.001358992
        %v3845 = vadd.f32 %v3844, 0.041655596
        %v3846 = vmul.f32 %v3843, %v3845
        %v3847 = vadd.f32 %v3846, -0.4999988
        %v3848 = vmul.f32 %v3843, %v3847
        %v3849 = vadd.f32 1.0, %v3848
        %v3850 = vmul.f32 %v3841, %v3841
        %v3851 = vmul.f32 %v3850, -0.00019511016
        %v3852 = vadd.f32 %v3851, 0.008332121
        %v3853 = vmul.f32 %v3850, %v3852
        %v3854 = vadd.f32 %v3853, -0.16666654
        %v3855 = vmul.f32 %v3850, %v3854
        %v3856 = vadd.f32 %v3855, 1.0
        %v3857 = vmul.f32 %v3856, %v3841
        %vm3858 = vweird.f32 %v725
        %v3859 = vadd.s32 %v3842, 3
        %v3860 = vand.u32 %v3859, 3
        %vm3861 = vcmp.lt.s32.totalorder %v3860, 2
        %vm3862 = vcmp.eq.s32.totalorder %v3860, 0
        %v3863 = vxor.u32 %v3857, 2147483648
        %v3864 = vsel %vm3862, %v3849, %v3863
        %vm3865 = vcmp.eq.s32.totalorder %v3860, 2
        %v3866 = vxor.u32 %v3849, 2147483648
        %v3867 = vsel %vm3865, %v3866, %v3857
        %v3868 = vsel %vm3861, %v3864, %v3867
        %v3869 = vsel %vm3858, nan, %v3868
        %v3870 = vand.u32 2147483647, %v726
        %vm3871 = vcmp.le.f32.partialorder %v3870, 0.7853982
        %vm3872 = vcmp.lt.s32.totalorder %v726, 0
        %v3873 = vand.u32 %v726, 2139095040
        %v3874 = vshrl.u32 %v3873, 23
        %v3875 = vsub.s32 %v3874, 127
        %v3876 = vand.u32 2147483647, %v726
        %v3877 = vand.u32 %v3876, 8388607
        %v3878 = vor.u32 %v3877, 8388608
        %v3879 = vsub.s32 0, %v3878
        %v3880 = vadd.s32 %v3875, 1
        %vm3881 = vcmp.gt.s32.totalorder %v3880, 0
        %v3882 = vsel %vm3881, %v3880, 0
        %v3883 = vshrl.u32 %v3882, 5
        %v3884 = vand.u32 %v3882, 31
        %v3885 = vsub.s32 32, %v3884
        %v3886 = vshrl.u32 683565275, %v3885
        %v3887 = vshll.u32 683565275, %v3884
        %v3888 = vshrl.u32 2475754826, %v3885
        %v3889 = vor.u32 %v3887, %v3888
        %v3890 = vshll.u32 2475754826, %v3884
        %v3891 = vshrl.u32 2131351028, %v3885
        %v3892 = vor.u32 %v3890, %v3891
        %v3893 = vshll.u32 2131351028, %v3884
        %v3894 = vshrl.u32 2102212464, %v3885
        %v3895 = vor.u32 %v3893, %v3894
        %v3896 = vshll.u32 2102212464, %v3884
        %v3897 = vshrl.u32 920167782, %v3885
        %v3898 = vor.u32 %v3896, %v3897
        %v3899 = vshll.u32 920167782, %v3884
        %v3900 = vshrl.u32 1326507024, %v3885
        %v3901 = vor.u32 %v3899, %v3900
        %vm3902 = vcmp.lt.s32.totalorder %v3883, 1
        %vm3903 = vcmp.lt.s32.totalorder %v3883, 2
        %vm3904 = vcmp.lt.s32.totalorder %v3883, 3
        %vm3905 = vcmp.lt.s32.totalorder %v3883, 4
        %v3906 = vsel %vm3902, %v3886, %v3889
        %v3907 = vsel %vm3905, %v3895, 2102212464
        %v3908 = vsel %vm3904, %v3892, %v3907
        %v3909 = vsel %vm3903, %v3906, %v3908
        %v3910 = vsel %vm3902, %v3889, %v3892
        %v3911 = vsel %vm3905, %v3898, 920167782
        %v3912 = vsel %vm3904, %v3895, %v3911
        %v3913 = vsel %vm3903, %v3910, %v3912
        %v3914 = vsel %vm3902, %v3892, %v3895
        %v3915 = vsel %vm3905, %v3901, 1326507024
        %v3916 = vsel %vm3904, %v3898, %v3915
        %v3917 = vsel %vm3903, %v3914, %v3916
        %v3918 = vshll.u32 %v3878, 8
        %v3919 = vand.u32 %v3918, 65535
        %v3920 = vshrl.u32 %v3918, 16
        %v3921 = vand.u32 %v3917, 65535
        %v3922 = vshrl.u32 %v3917, 16
        %v3923 = vmul.u32 %v3919, %v3921
        %v3924 = vmul.u32 %v3919, %v3922
        %v3925 = vmul.u32 %v3920, %v3921
        %v3926 = vmul.u32 %v3920, %v3922
        %v3927 = vshll.u32 %v3924, 16
        %v3928 = vshrl.u32 %v3924, 16
        %v3929 = vshll.u32 %v3925, 16
        %v3930 = vshrl.u32 %v3925, 16
        %vm3931 = vc.u32 %v3923, %v3927
        %v3932 = vsel %vm3931, 1, 0
        %v3933 = vadd.s32 %v3923, %v3927
        %v3934 = vadd.s32 %v3926, %v3932
        %vm3935 = vc.u32 %v3933, %v3929
        %v3936 = vsel %vm3935, 1, 0
        %v3937 = vadd.s32 %v3933, %v3929
        %v3938 = vadd.s32 %v3934, %v3936
        %v3939 = vadd.s32 %v3938, %v3928
        %v3940 = vadd.s32 %v3939, %v3930
        %v3941 = vand.u32 %v3918, 65535
        %v3942 = vshrl.u32 %v3918, 16
        %v3943 = vand.u32 %v3913, 65535
        %v3944 = vshrl.u32 %v3913, 16
        %v3945 = vmul.u32 %v3941, %v3943
        %v3946 = vmul.u32 %v3941, %v3944
        %v3947 = vmul.u32 %v3942, %v3943
        %v3948 = vmul.u32 %v3942, %v3944
        %v3949 = vshll.u32 %v3946, 16
        %v3950 = vshrl.u32 %v3946, 16
        %v3951 = vshll.u32 %v3947, 16
        %v3952 = vshrl.u32 %v3947, 16
        %vm3953 = vc.u32 %v3945, %v3949
        %v3954 = vsel %vm3953, 1, 0
        %v3955 = vadd.s32 %v3945, %v3949
        %v3956 = vadd.s32 %v3948, %v3954
        %vm3957 = vc.u32 %v3955, %v3951
        %v3958 = vsel %vm3957, 1, 0
        %v3959 = vadd.s32 %v3955, %v3951
        %v3960 = vadd.s32 %v3956, %v3958
        %v3961 = vadd.s32 %v3960, %v3950
        %v3962 = vadd.s32 %v3961, %v3952
        %v3963 = vmul.u32 %v3918, %v3909
        %v3964 = vadd.s32 %v3940, %v3959
        %vm3965 = vc.u32 %v3940, %v3959
        %v3966 = vadd.s32 %v3962, 1
        %v3967 = vsel %vm3965, %v3966, %v3962
        %v3968 = vadd.s32 %v3963, %v3967
        %v3969 = vadd.s32 %v3968, 536870912
        %v3970 = vshrl.u32 %v3969, 30
        %v3971 = vshll.u32 %v3970, 30
        %v3972 = vsub.s32 %v3968, %v3971
        %vm3973 = vcmp.lt.s32.totalorder %v3972, 0
        %v3974 = vsub.s32 0, %v3972
        %v3975 = vsel %vm3973, %v3974, %v3972
        %v3976 = vclz %v3975
        %v3977 = vsub.s32 %v3976, 2
        %vm3978 = vcmp.gt.s32.totalorder 0, %v3977
        %v3979 = vsel %vm3978, 0, %v3977
        %v3980 = vsub.s32 32, %v3979
        %v3981 = vshll.u32 %v3972, %v3979
        %v3982 = vshrl.u32 %v3964, %v3980
        %v3983 = vor.u32 %v3981, %v3982
        %v3984 = vsub.s32 4294967266, %v3979
        %v3985 = vadd.s32 %v3984, 127
        %v3986 = vshll.u32 %v3985, 23
        %v3987 = vor.u32 4788187, %v3986
        %v3988 = vand.u32 2147483647, %v3987
        %v3990 = vcvt.s32.f32 %v3983
        %v3991 = vmul.f32 %v3990, %v3988
        %v3992 = vxor.u32 %v3991, 2147483648
        %v3993 = vsel %vm3872, %v3992, %v3991
        %v3994 = vsub.s32 4, %v3970
        %v3995 = vsel %vm3872, %v3994, %v3970
        %v3996 = vsel %vm3871, %v726, %v3993
        %v3997 = vsel %vm3871, 0, %v3995
        %v3998 = vmul.f32 %v3996, %v3996
        %v3999 = vmul.f32 %v3998, -0.001358992
        %v4000 = vadd.f32 %v3999, 0.041655596
        %v4001 = vmul.f32 %v3998, %v4000
        %v4002 = vadd.f32 %v4001, -0.4999988
        %v4003 = vmul.f32 %v3998, %v4002
        %v4004 = vadd.f32 1.0, %v4003
        %v4005 = vmul.f32 %v3996, %v3996
        %v4006 = vmul.f32 %v4005, -0.00019511016
        %v4007 = vadd.f32 %v4006, 0.008332121
        %v4008 = vmul.f32 %v4005, %v4007
        %v4009 = vadd.f32 %v4008, -0.16666654
        %v4010 = vmul.f32 %v4005, %v4009
        %v4011 = vadd.f32 %v4010, 1.0
        %v4012 = vmul.f32 %v4011, %v3996
        %vm4013 = vweird.f32 %v726
        %v4014 = vadd.s32 %v3997, 3
        %v4015 = vand.u32 %v4014, 3
        %vm4016 = vcmp.lt.s32.totalorder %v4015, 2
        %vm4017 = vcmp.eq.s32.totalorder %v4015, 0
        %v4018 = vxor.u32 %v4012, 2147483648
        %v4019 = vsel %vm4017, %v4004, %v4018
        %vm4020 = vcmp.eq.s32.totalorder %v4015, 2
        %v4021 = vxor.u32 %v4004, 2147483648
        %v4022 = vsel %vm4020, %v4021, %v4012
        %v4023 = vsel %vm4016, %v4019, %v4022
        %v4024 = vsel %vm4013, nan, %v4023
        %v4025 = vand.u32 2147483647, %v727
        %vm4026 = vcmp.le.f32.partialorder %v4025, 0.7853982
        %vm4027 = vcmp.lt.s32.totalorder %v727, 0
        %v4028 = vand.u32 %v727, 2139095040
        %v4029 = vshrl.u32 %v4028, 23
        %v4030 = vsub.s32 %v4029, 127
        %v4031 = vand.u32 2147483647, %v727
        %v4032 = vand.u32 %v4031, 8388607
        %v4033 = vor.u32 %v4032, 8388608
        %v4034 = vsub.s32 0, %v4033
        %v4035 = vadd.s32 %v4030, 1
        %vm4036 = vcmp.gt.s32.totalorder %v4035, 0
        %v4037 = vsel %vm4036, %v4035, 0
        %v4038 = vshrl.u32 %v4037, 5
        %v4039 = vand.u32 %v4037, 31
        %v4040 = vsub.s32 32, %v4039
        %v4041 = vshrl.u32 683565275, %v4040
        %v4042 = vshll.u32 683565275, %v4039
        %v4043 = vshrl.u32 2475754826, %v4040
        %v4044 = vor.u32 %v4042, %v4043
        %v4045 = vshll.u32 2475754826, %v4039
        %v4046 = vshrl.u32 2131351028, %v4040
        %v4047 = vor.u32 %v4045, %v4046
        %v4048 = vshll.u32 2131351028, %v4039
        %v4049 = vshrl.u32 2102212464, %v4040
        %v4050 = vor.u32 %v4048, %v4049
        %v4051 = vshll.u32 2102212464, %v4039
        %v4052 = vshrl.u32 920167782, %v4040
        %v4053 = vor.u32 %v4051, %v4052
        %v4054 = vshll.u32 920167782, %v4039
        %v4055 = vshrl.u32 1326507024, %v4040
        %v4056 = vor.u32 %v4054, %v4055
        %vm4057 = vcmp.lt.s32.totalorder %v4038, 1
        %vm4058 = vcmp.lt.s32.totalorder %v4038, 2
        %vm4059 = vcmp.lt.s32.totalorder %v4038, 3
        %vm4060 = vcmp.lt.s32.totalorder %v4038, 4
        %v4061 = vsel %vm4057, %v4041, %v4044
        %v4062 = vsel %vm4060, %v4050, 2102212464
        %v4063 = vsel %vm4059, %v4047, %v4062
        %v4064 = vsel %vm4058, %v4061, %v4063
        %v4065 = vsel %vm4057, %v4044, %v4047
        %v4066 = vsel %vm4060, %v4053, 920167782
        %v4067 = vsel %vm4059, %v4050, %v4066
        %v4068 = vsel %vm4058, %v4065, %v4067
        %v4069 = vsel %vm4057, %v4047, %v4050
        %v4070 = vsel %vm4060, %v4056, 1326507024
        %v4071 = vsel %vm4059, %v4053, %v4070
        %v4072 = vsel %vm4058, %v4069, %v4071
        %v4073 = vshll.u32 %v4033, 8
        %v4074 = vand.u32 %v4073, 65535
        %v4075 = vshrl.u32 %v4073, 16
        %v4076 = vand.u32 %v4072, 65535
        %v4077 = vshrl.u32 %v4072, 16
        %v4078 = vmul.u32 %v4074, %v4076
        %v4079 = vmul.u32 %v4074, %v4077
        %v4080 = vmul.u32 %v4075, %v4076
        %v4081 = vmul.u32 %v4075, %v4077
        %v4082 = vshll.u32 %v4079, 16
        %v4083 = vshrl.u32 %v4079, 16
        %v4084 = vshll.u32 %v4080, 16
        %v4085 = vshrl.u32 %v4080, 16
        %vm4086 = vc.u32 %v4078, %v4082
        %v4087 = vsel %vm4086, 1, 0
        %v4088 = vadd.s32 %v4078, %v4082
        %v4089 = vadd.s32 %v4081, %v4087
        %vm4090 = vc.u32 %v4088, %v4084
        %v4091 = vsel %vm4090, 1, 0
        %v4092 = vadd.s32 %v4088, %v4084
        %v4093 = vadd.s32 %v4089, %v4091
        %v4094 = vadd.s32 %v4093, %v4083
        %v4095 = vadd.s32 %v4094, %v4085
        %v4096 = vand.u32 %v4073, 65535
        %v4097 = vshrl.u32 %v4073, 16
        %v4098 = vand.u32 %v4068, 65535
        %v4099 = vshrl.u32 %v4068, 16
        %v4100 = vmul.u32 %v4096, %v4098
        %v4101 = vmul.u32 %v4096, %v4099
        %v4102 = vmul.u32 %v4097, %v4098
        %v4103 = vmul.u32 %v4097, %v4099
        %v4104 = vshll.u32 %v4101, 16
        %v4105 = vshrl.u32 %v4101, 16
        %v4106 = vshll.u32 %v4102, 16
        %v4107 = vshrl.u32 %v4102, 16
        %vm4108 = vc.u32 %v4100, %v4104
        %v4109 = vsel %vm4108, 1, 0
        %v4110 = vadd.s32 %v4100, %v4104
        %v4111 = vadd.s32 %v4103, %v4109
        %vm4112 = vc.u32 %v4110, %v4106
        %v4113 = vsel %vm4112, 1, 0
        %v4114 = vadd.s32 %v4110, %v4106
        %v4115 = vadd.s32 %v4111, %v4113
        %v4116 = vadd.s32 %v4115, %v4105
        %v4117 = vadd.s32 %v4116, %v4107
        %v4118 = vmul.u32 %v4073, %v4064
        %v4119 = vadd.s32 %v4095, %v4114
        %vm4120 = vc.u32 %v4095, %v4114
        %v4121 = vadd.s32 %v4117, 1
        %v4122 = vsel %vm4120, %v4121, %v4117
        %v4123 = vadd.s32 %v4118, %v4122
        %v4124 = vadd.s32 %v4123, 536870912
        %v4125 = vshrl.u32 %v4124, 30
        %v4126 = vshll.u32 %v4125, 30
        %v4127 = vsub.s32 %v4123, %v4126
        %vm4128 = vcmp.lt.s32.totalorder %v4127, 0
        %v4129 = vsub.s32 0, %v4127
        %v4130 = vsel %vm4128, %v4129, %v4127
        %v4131 = vclz %v4130
        %v4132 = vsub.s32 %v4131, 2
        %vm4133 = vcmp.gt.s32.totalorder 0, %v4132
        %v4134 = vsel %vm4133, 0, %v4132
        %v4135 = vsub.s32 32, %v4134
        %v4136 = vshll.u32 %v4127, %v4134
        %v4137 = vshrl.u32 %v4119, %v4135
        %v4138 = vor.u32 %v4136, %v4137
        %v4139 = vsub.s32 4294967266, %v4134
        %v4140 = vadd.s32 %v4139, 127
        %v4141 = vshll.u32 %v4140, 23
        %v4142 = vor.u32 4788187, %v4141
        %v4143 = vand.u32 2147483647, %v4142
        %v4145 = vcvt.s32.f32 %v4138
        %v4146 = vmul.f32 %v4145, %v4143
        %v4147 = vxor.u32 %v4146, 2147483648
        %v4148 = vsel %vm4027, %v4147, %v4146
        %v4149 = vsub.s32 4, %v4125
        %v4150 = vsel %vm4027, %v4149, %v4125
        %v4151 = vsel %vm4026, %v727, %v4148
        %v4152 = vsel %vm4026, 0, %v4150
        %v4153 = vmul.f32 %v4151, %v4151
        %v4154 = vmul.f32 %v4153, -0.001358992
        %v4155 = vadd.f32 %v4154, 0.041655596
        %v4156 = vmul.f32 %v4153, %v4155
        %v4157 = vadd.f32 %v4156, -0.4999988
        %v4158 = vmul.f32 %v4153, %v4157
        %v4159 = vadd.f32 1.0, %v4158
        %v4160 = vmul.f32 %v4151, %v4151
        %v4161 = vmul.f32 %v4160, -0.00019511016
        %v4162 = vadd.f32 %v4161, 0.008332121
        %v4163 = vmul.f32 %v4160, %v4162
        %v4164 = vadd.f32 %v4163, -0.16666654
        %v4165 = vmul.f32 %v4160, %v4164
        %v4166 = vadd.f32 %v4165, 1.0
        %v4167 = vmul.f32 %v4166, %v4151
        %vm4168 = vweird.f32 %v727
        %v4169 = vadd.s32 %v4152, 3
        %v4170 = vand.u32 %v4169, 3
        %vm4171 = vcmp.lt.s32.totalorder %v4170, 2
        %vm4172 = vcmp.eq.s32.totalorder %v4170, 0
        %v4173 = vxor.u32 %v4167, 2147483648
        %v4174 = vsel %vm4172, %v4159, %v4173
        %vm4175 = vcmp.eq.s32.totalorder %v4170, 2
        %v4176 = vxor.u32 %v4159, 2147483648
        %v4177 = vsel %vm4175, %v4176, %v4167
        %v4178 = vsel %vm4171, %v4174, %v4177
        %v4179 = vsel %vm4168, nan, %v4178
        %v4180 = vand.u32 2147483647, %v728
        %vm4181 = vcmp.le.f32.partialorder %v4180, 0.7853982
        %vm4182 = vcmp.lt.s32.totalorder %v728, 0
        %v4183 = vand.u32 %v728, 2139095040
        %v4184 = vshrl.u32 %v4183, 23
        %v4185 = vsub.s32 %v4184, 127
        %v4186 = vand.u32 2147483647, %v728
        %v4187 = vand.u32 %v4186, 8388607
        %v4188 = vor.u32 %v4187, 8388608
        %v4189 = vsub.s32 0, %v4188
        %v4190 = vadd.s32 %v4185, 1
        %vm4191 = vcmp.gt.s32.totalorder %v4190, 0
        %v4192 = vsel %vm4191, %v4190, 0
        %v4193 = vshrl.u32 %v4192, 5
        %v4194 = vand.u32 %v4192, 31
        %v4195 = vsub.s32 32, %v4194
        %v4196 = vshrl.u32 683565275, %v4195
        %v4197 = vshll.u32 683565275, %v4194
        %v4198 = vshrl.u32 2475754826, %v4195
        %v4199 = vor.u32 %v4197, %v4198
        %v4200 = vshll.u32 2475754826, %v4194
        %v4201 = vshrl.u32 2131351028, %v4195
        %v4202 = vor.u32 %v4200, %v4201
        %v4203 = vshll.u32 2131351028, %v4194
        %v4204 = vshrl.u32 2102212464, %v4195
        %v4205 = vor.u32 %v4203, %v4204
        %v4206 = vshll.u32 2102212464, %v4194
        %v4207 = vshrl.u32 920167782, %v4195
        %v4208 = vor.u32 %v4206, %v4207
        %v4209 = vshll.u32 920167782, %v4194
        %v4210 = vshrl.u32 1326507024, %v4195
        %v4211 = vor.u32 %v4209, %v4210
        %vm4212 = vcmp.lt.s32.totalorder %v4193, 1
        %vm4213 = vcmp.lt.s32.totalorder %v4193, 2
        %vm4214 = vcmp.lt.s32.totalorder %v4193, 3
        %vm4215 = vcmp.lt.s32.totalorder %v4193, 4
        %v4216 = vsel %vm4212, %v4196, %v4199
        %v4217 = vsel %vm4215, %v4205, 2102212464
        %v4218 = vsel %vm4214, %v4202, %v4217
        %v4219 = vsel %vm4213, %v4216, %v4218
        %v4220 = vsel %vm4212, %v4199, %v4202
        %v4221 = vsel %vm4215, %v4208, 920167782
        %v4222 = vsel %vm4214, %v4205, %v4221
        %v4223 = vsel %vm4213, %v4220, %v4222
        %v4224 = vsel %vm4212, %v4202, %v4205
        %v4225 = vsel %vm4215, %v4211, 1326507024
        %v4226 = vsel %vm4214, %v4208, %v4225
        %v4227 = vsel %vm4213, %v4224, %v4226
        %v4228 = vshll.u32 %v4188, 8
        %v4229 = vand.u32 %v4228, 65535
        %v4230 = vshrl.u32 %v4228, 16
        %v4231 = vand.u32 %v4227, 65535
        %v4232 = vshrl.u32 %v4227, 16
        %v4233 = vmul.u32 %v4229, %v4231
        %v4234 = vmul.u32 %v4229, %v4232
        %v4235 = vmul.u32 %v4230, %v4231
        %v4236 = vmul.u32 %v4230, %v4232
        %v4237 = vshll.u32 %v4234, 16
        %v4238 = vshrl.u32 %v4234, 16
        %v4239 = vshll.u32 %v4235, 16
        %v4240 = vshrl.u32 %v4235, 16
        %vm4241 = vc.u32 %v4233, %v4237
        %v4242 = vsel %vm4241, 1, 0
        %v4243 = vadd.s32 %v4233, %v4237
        %v4244 = vadd.s32 %v4236, %v4242
        %vm4245 = vc.u32 %v4243, %v4239
        %v4246 = vsel %vm4245, 1, 0
        %v4247 = vadd.s32 %v4243, %v4239
        %v4248 = vadd.s32 %v4244, %v4246
        %v4249 = vadd.s32 %v4248, %v4238
        %v4250 = vadd.s32 %v4249, %v4240
        %v4251 = vand.u32 %v4228, 65535
        %v4252 = vshrl.u32 %v4228, 16
        %v4253 = vand.u32 %v4223, 65535
        %v4254 = vshrl.u32 %v4223, 16
        %v4255 = vmul.u32 %v4251, %v4253
        %v4256 = vmul.u32 %v4251, %v4254
        %v4257 = vmul.u32 %v4252, %v4253
        %v4258 = vmul.u32 %v4252, %v4254
        %v4259 = vshll.u32 %v4256, 16
        %v4260 = vshrl.u32 %v4256, 16
        %v4261 = vshll.u32 %v4257, 16
        %v4262 = vshrl.u32 %v4257, 16
        %vm4263 = vc.u32 %v4255, %v4259
        %v4264 = vsel %vm4263, 1, 0
        %v4265 = vadd.s32 %v4255, %v4259
        %v4266 = vadd.s32 %v4258, %v4264
        %vm4267 = vc.u32 %v4265, %v4261
        %v4268 = vsel %vm4267, 1, 0
        %v4269 = vadd.s32 %v4265, %v4261
        %v4270 = vadd.s32 %v4266, %v4268
        %v4271 = vadd.s32 %v4270, %v4260
        %v4272 = vadd.s32 %v4271, %v4262
        %v4273 = vmul.u32 %v4228, %v4219
        %v4274 = vadd.s32 %v4250, %v4269
        %vm4275 = vc.u32 %v4250, %v4269
        %v4276 = vadd.s32 %v4272, 1
        %v4277 = vsel %vm4275, %v4276, %v4272
        %v4278 = vadd.s32 %v4273, %v4277
        %v4279 = vadd.s32 %v4278, 536870912
        %v4280 = vshrl.u32 %v4279, 30
        %v4281 = vshll.u32 %v4280, 30
        %v4282 = vsub.s32 %v4278, %v4281
        %vm4283 = vcmp.lt.s32.totalorder %v4282, 0
        %v4284 = vsub.s32 0, %v4282
        %v4285 = vsel %vm4283, %v4284, %v4282
        %v4286 = vclz %v4285
        %v4287 = vsub.s32 %v4286, 2
        %vm4288 = vcmp.gt.s32.totalorder 0, %v4287
        %v4289 = vsel %vm4288, 0, %v4287
        %v4290 = vsub.s32 32, %v4289
        %v4291 = vshll.u32 %v4282, %v4289
        %v4292 = vshrl.u32 %v4274, %v4290
        %v4293 = vor.u32 %v4291, %v4292
        %v4294 = vsub.s32 4294967266, %v4289
        %v4295 = vadd.s32 %v4294, 127
        %v4296 = vshll.u32 %v4295, 23
        %v4297 = vor.u32 4788187, %v4296
        %v4298 = vand.u32 2147483647, %v4297
        %v4300 = vcvt.s32.f32 %v4293
        %v4301 = vmul.f32 %v4300, %v4298
        %v4302 = vxor.u32 %v4301, 2147483648
        %v4303 = vsel %vm4182, %v4302, %v4301
        %v4304 = vsub.s32 4, %v4280
        %v4305 = vsel %vm4182, %v4304, %v4280
        %v4306 = vsel %vm4181, %v728, %v4303
        %v4307 = vsel %vm4181, 0, %v4305
        %v4308 = vmul.f32 %v4306, %v4306
        %v4309 = vmul.f32 %v4308, -0.001358992
        %v4310 = vadd.f32 %v4309, 0.041655596
        %v4311 = vmul.f32 %v4308, %v4310
        %v4312 = vadd.f32 %v4311, -0.4999988
        %v4313 = vmul.f32 %v4308, %v4312
        %v4314 = vadd.f32 1.0, %v4313
        %v4315 = vmul.f32 %v4306, %v4306
        %v4316 = vmul.f32 %v4315, -0.00019511016
        %v4317 = vadd.f32 %v4316, 0.008332121
        %v4318 = vmul.f32 %v4315, %v4317
        %v4319 = vadd.f32 %v4318, -0.16666654
        %v4320 = vmul.f32 %v4315, %v4319
        %v4321 = vadd.f32 %v4320, 1.0
        %v4322 = vmul.f32 %v4321, %v4306
        %vm4323 = vweird.f32 %v728
        %v4324 = vadd.s32 %v4307, 3
        %v4325 = vand.u32 %v4324, 3
        %vm4326 = vcmp.lt.s32.totalorder %v4325, 2
        %vm4327 = vcmp.eq.s32.totalorder %v4325, 0
        %v4328 = vxor.u32 %v4322, 2147483648
        %v4329 = vsel %vm4327, %v4314, %v4328
        %vm4330 = vcmp.eq.s32.totalorder %v4325, 2
        %v4331 = vxor.u32 %v4314, 2147483648
        %v4332 = vsel %vm4330, %v4331, %v4322
        %v4333 = vsel %vm4326, %v4329, %v4332
        %v4334 = vsel %vm4323, nan, %v4333
        %v4335 = vand.u32 2147483647, %v729
        %vm4336 = vcmp.le.f32.partialorder %v4335, 0.7853982
        %vm4337 = vcmp.lt.s32.totalorder %v729, 0
        %v4338 = vand.u32 %v729, 2139095040
        %v4339 = vshrl.u32 %v4338, 23
        %v4340 = vsub.s32 %v4339, 127
        %v4341 = vand.u32 2147483647, %v729
        %v4342 = vand.u32 %v4341, 8388607
        %v4343 = vor.u32 %v4342, 8388608
        %v4344 = vsub.s32 0, %v4343
        %v4345 = vadd.s32 %v4340, 1
        %vm4346 = vcmp.gt.s32.totalorder %v4345, 0
        %v4347 = vsel %vm4346, %v4345, 0
        %v4348 = vshrl.u32 %v4347, 5
        %v4349 = vand.u32 %v4347, 31
        %v4350 = vsub.s32 32, %v4349
        %v4351 = vshrl.u32 683565275, %v4350
        %v4352 = vshll.u32 683565275, %v4349
        %v4353 = vshrl.u32 2475754826, %v4350
        %v4354 = vor.u32 %v4352, %v4353
        %v4355 = vshll.u32 2475754826, %v4349
        %v4356 = vshrl.u32 2131351028, %v4350
        %v4357 = vor.u32 %v4355, %v4356
        %v4358 = vshll.u32 2131351028, %v4349
        %v4359 = vshrl.u32 2102212464, %v4350
        %v4360 = vor.u32 %v4358, %v4359
        %v4361 = vshll.u32 2102212464, %v4349
        %v4362 = vshrl.u32 920167782, %v4350
        %v4363 = vor.u32 %v4361, %v4362
        %v4364 = vshll.u32 920167782, %v4349
        %v4365 = vshrl.u32 1326507024, %v4350
        %v4366 = vor.u32 %v4364, %v4365
        %vm4367 = vcmp.lt.s32.totalorder %v4348, 1
        %vm4368 = vcmp.lt.s32.totalorder %v4348, 2
        %vm4369 = vcmp.lt.s32.totalorder %v4348, 3
        %vm4370 = vcmp.lt.s32.totalorder %v4348, 4
        %v4371 = vsel %vm4367, %v4351, %v4354
        %v4372 = vsel %vm4370, %v4360, 2102212464
        %v4373 = vsel %vm4369, %v4357, %v4372
        %v4374 = vsel %vm4368, %v4371, %v4373
        %v4375 = vsel %vm4367, %v4354, %v4357
        %v4376 = vsel %vm4370, %v4363, 920167782
        %v4377 = vsel %vm4369, %v4360, %v4376
        %v4378 = vsel %vm4368, %v4375, %v4377
        %v4379 = vsel %vm4367, %v4357, %v4360
        %v4380 = vsel %vm4370, %v4366, 1326507024
        %v4381 = vsel %vm4369, %v4363, %v4380
        %v4382 = vsel %vm4368, %v4379, %v4381
        %v4383 = vshll.u32 %v4343, 8
        %v4384 = vand.u32 %v4383, 65535
        %v4385 = vshrl.u32 %v4383, 16
        %v4386 = vand.u32 %v4382, 65535
        %v4387 = vshrl.u32 %v4382, 16
        %v4388 = vmul.u32 %v4384, %v4386
        %v4389 = vmul.u32 %v4384, %v4387
        %v4390 = vmul.u32 %v4385, %v4386
        %v4391 = vmul.u32 %v4385, %v4387
        %v4392 = vshll.u32 %v4389, 16
        %v4393 = vshrl.u32 %v4389, 16
        %v4394 = vshll.u32 %v4390, 16
        %v4395 = vshrl.u32 %v4390, 16
        %vm4396 = vc.u32 %v4388, %v4392
        %v4397 = vsel %vm4396, 1, 0
        %v4398 = vadd.s32 %v4388, %v4392
        %v4399 = vadd.s32 %v4391, %v4397
        %vm4400 = vc.u32 %v4398, %v4394
        %v4401 = vsel %vm4400, 1, 0
        %v4402 = vadd.s32 %v4398, %v4394
        %v4403 = vadd.s32 %v4399, %v4401
        %v4404 = vadd.s32 %v4403, %v4393
        %v4405 = vadd.s32 %v4404, %v4395
        %v4406 = vand.u32 %v4383, 65535
        %v4407 = vshrl.u32 %v4383, 16
        %v4408 = vand.u32 %v4378, 65535
        %v4409 = vshrl.u32 %v4378, 16
        %v4410 = vmul.u32 %v4406, %v4408
        %v4411 = vmul.u32 %v4406, %v4409
        %v4412 = vmul.u32 %v4407, %v4408
        %v4413 = vmul.u32 %v4407, %v4409
        %v4414 = vshll.u32 %v4411, 16
        %v4415 = vshrl.u32 %v4411, 16
        %v4416 = vshll.u32 %v4412, 16
        %v4417 = vshrl.u32 %v4412, 16
        %vm4418 = vc.u32 %v4410, %v4414
        %v4419 = vsel %vm4418, 1, 0
        %v4420 = vadd.s32 %v4410, %v4414
        %v4421 = vadd.s32 %v4413, %v4419
        %vm4422 = vc.u32 %v4420, %v4416
        %v4423 = vsel %vm4422, 1, 0
        %v4424 = vadd.s32 %v4420, %v4416
        %v4425 = vadd.s32 %v4421, %v4423
        %v4426 = vadd.s32 %v4425, %v4415
        %v4427 = vadd.s32 %v4426, %v4417
        %v4428 = vmul.u32 %v4383, %v4374
        %v4429 = vadd.s32 %v4405, %v4424
        %vm4430 = vc.u32 %v4405, %v4424
        %v4431 = vadd.s32 %v4427, 1
        %v4432 = vsel %vm4430, %v4431, %v4427
        %v4433 = vadd.s32 %v4428, %v4432
        %v4434 = vadd.s32 %v4433, 536870912
        %v4435 = vshrl.u32 %v4434, 30
        %v4436 = vshll.u32 %v4435, 30
        %v4437 = vsub.s32 %v4433, %v4436
        %vm4438 = vcmp.lt.s32.totalorder %v4437, 0
        %v4439 = vsub.s32 0, %v4437
        %v4440 = vsel %vm4438, %v4439, %v4437
        %v4441 = vclz %v4440
        %v4442 = vsub.s32 %v4441, 2
        %vm4443 = vcmp.gt.s32.totalorder 0, %v4442
        %v4444 = vsel %vm4443, 0, %v4442
        %v4445 = vsub.s32 32, %v4444
        %v4446 = vshll.u32 %v4437, %v4444
        %v4447 = vshrl.u32 %v4429, %v4445
        %v4448 = vor.u32 %v4446, %v4447
        %v4449 = vsub.s32 4294967266, %v4444
        %v4450 = vadd.s32 %v4449, 127
        %v4451 = vshll.u32 %v4450, 23
        %v4452 = vor.u32 4788187, %v4451
        %v4453 = vand.u32 2147483647, %v4452
        %v4455 = vcvt.s32.f32 %v4448
        %v4456 = vmul.f32 %v4455, %v4453
        %v4457 = vxor.u32 %v4456, 2147483648
        %v4458 = vsel %vm4337, %v4457, %v4456
        %v4459 = vsub.s32 4, %v4435
        %v4460 = vsel %vm4337, %v4459, %v4435
        %v4461 = vsel %vm4336, %v729, %v4458
        %v4462 = vsel %vm4336, 0, %v4460
        %v4463 = vmul.f32 %v4461, %v4461
        %v4464 = vmul.f32 %v4463, -0.001358992
        %v4465 = vadd.f32 %v4464, 0.041655596
        %v4466 = vmul.f32 %v4463, %v4465
        %v4467 = vadd.f32 %v4466, -0.4999988
        %v4468 = vmul.f32 %v4463, %v4467
        %v4469 = vadd.f32 1.0, %v4468
        %v4470 = vmul.f32 %v4461, %v4461
        %v4471 = vmul.f32 %v4470, -0.00019511016
        %v4472 = vadd.f32 %v4471, 0.008332121
        %v4473 = vmul.f32 %v4470, %v4472
        %v4474 = vadd.f32 %v4473, -0.16666654
        %v4475 = vmul.f32 %v4470, %v4474
        %v4476 = vadd.f32 %v4475, 1.0
        %v4477 = vmul.f32 %v4476, %v4461
        %vm4478 = vweird.f32 %v729
        %v4479 = vadd.s32 %v4462, 3
        %v4480 = vand.u32 %v4479, 3
        %vm4481 = vcmp.lt.s32.totalorder %v4480, 2
        %vm4482 = vcmp.eq.s32.totalorder %v4480, 0
        %v4483 = vxor.u32 %v4477, 2147483648
        %v4484 = vsel %vm4482, %v4469, %v4483
        %vm4485 = vcmp.eq.s32.totalorder %v4480, 2
        %v4486 = vxor.u32 %v4469, 2147483648
        %v4487 = vsel %vm4485, %v4486, %v4477
        %v4488 = vsel %vm4481, %v4484, %v4487
        %v4489 = vsel %vm4478, nan, %v4488
        %v4490 = vand.u32 2147483647, %v730
        %vm4491 = vcmp.le.f32.partialorder %v4490, 0.7853982
        %vm4492 = vcmp.lt.s32.totalorder %v730, 0
        %v4493 = vand.u32 %v730, 2139095040
        %v4494 = vshrl.u32 %v4493, 23
        %v4495 = vsub.s32 %v4494, 127
        %v4496 = vand.u32 2147483647, %v730
        %v4497 = vand.u32 %v4496, 8388607
        %v4498 = vor.u32 %v4497, 8388608
        %v4499 = vsub.s32 0, %v4498
        %v4500 = vadd.s32 %v4495, 1
        %vm4501 = vcmp.gt.s32.totalorder %v4500, 0
        %v4502 = vsel %vm4501, %v4500, 0
        %v4503 = vshrl.u32 %v4502, 5
        %v4504 = vand.u32 %v4502, 31
        %v4505 = vsub.s32 32, %v4504
        %v4506 = vshrl.u32 683565275, %v4505
        %v4507 = vshll.u32 683565275, %v4504
        %v4508 = vshrl.u32 2475754826, %v4505
        %v4509 = vor.u32 %v4507, %v4508
        %v4510 = vshll.u32 2475754826, %v4504
        %v4511 = vshrl.u32 2131351028, %v4505
        %v4512 = vor.u32 %v4510, %v4511
        %v4513 = vshll.u32 2131351028, %v4504
        %v4514 = vshrl.u32 2102212464, %v4505
        %v4515 = vor.u32 %v4513, %v4514
        %v4516 = vshll.u32 2102212464, %v4504
        %v4517 = vshrl.u32 920167782, %v4505
        %v4518 = vor.u32 %v4516, %v4517
        %v4519 = vshll.u32 920167782, %v4504
        %v4520 = vshrl.u32 1326507024, %v4505
        %v4521 = vor.u32 %v4519, %v4520
        %vm4522 = vcmp.lt.s32.totalorder %v4503, 1
        %vm4523 = vcmp.lt.s32.totalorder %v4503, 2
        %vm4524 = vcmp.lt.s32.totalorder %v4503, 3
        %vm4525 = vcmp.lt.s32.totalorder %v4503, 4
        %v4526 = vsel %vm4522, %v4506, %v4509
        %v4527 = vsel %vm4525, %v4515, 2102212464
        %v4528 = vsel %vm4524, %v4512, %v4527
        %v4529 = vsel %vm4523, %v4526, %v4528
        %v4530 = vsel %vm4522, %v4509, %v4512
        %v4531 = vsel %vm4525, %v4518, 920167782
        %v4532 = vsel %vm4524, %v4515, %v4531
        %v4533 = vsel %vm4523, %v4530, %v4532
        %v4534 = vsel %vm4522, %v4512, %v4515
        %v4535 = vsel %vm4525, %v4521, 1326507024
        %v4536 = vsel %vm4524, %v4518, %v4535
        %v4537 = vsel %vm4523, %v4534, %v4536
        %v4538 = vshll.u32 %v4498, 8
        %v4539 = vand.u32 %v4538, 65535
        %v4540 = vshrl.u32 %v4538, 16
        %v4541 = vand.u32 %v4537, 65535
        %v4542 = vshrl.u32 %v4537, 16
        %v4543 = vmul.u32 %v4539, %v4541
        %v4544 = vmul.u32 %v4539, %v4542
        %v4545 = vmul.u32 %v4540, %v4541
        %v4546 = vmul.u32 %v4540, %v4542
        %v4547 = vshll.u32 %v4544, 16
        %v4548 = vshrl.u32 %v4544, 16
        %v4549 = vshll.u32 %v4545, 16
        %v4550 = vshrl.u32 %v4545, 16
        %vm4551 = vc.u32 %v4543, %v4547
        %v4552 = vsel %vm4551, 1, 0
        %v4553 = vadd.s32 %v4543, %v4547
        %v4554 = vadd.s32 %v4546, %v4552
        %vm4555 = vc.u32 %v4553, %v4549
        %v4556 = vsel %vm4555, 1, 0
        %v4557 = vadd.s32 %v4553, %v4549
        %v4558 = vadd.s32 %v4554, %v4556
        %v4559 = vadd.s32 %v4558, %v4548
        %v4560 = vadd.s32 %v4559, %v4550
        %v4561 = vand.u32 %v4538, 65535
        %v4562 = vshrl.u32 %v4538, 16
        %v4563 = vand.u32 %v4533, 65535
        %v4564 = vshrl.u32 %v4533, 16
        %v4565 = vmul.u32 %v4561, %v4563
        %v4566 = vmul.u32 %v4561, %v4564
        %v4567 = vmul.u32 %v4562, %v4563
        %v4568 = vmul.u32 %v4562, %v4564
        %v4569 = vshll.u32 %v4566, 16
        %v4570 = vshrl.u32 %v4566, 16
        %v4571 = vshll.u32 %v4567, 16
        %v4572 = vshrl.u32 %v4567, 16
        %vm4573 = vc.u32 %v4565, %v4569
        %v4574 = vsel %vm4573, 1, 0
        %v4575 = vadd.s32 %v4565, %v4569
        %v4576 = vadd.s32 %v4568, %v4574
        %vm4577 = vc.u32 %v4575, %v4571
        %v4578 = vsel %vm4577, 1, 0
        %v4579 = vadd.s32 %v4575, %v4571
        %v4580 = vadd.s32 %v4576, %v4578
        %v4581 = vadd.s32 %v4580, %v4570
        %v4582 = vadd.s32 %v4581, %v4572
        %v4583 = vmul.u32 %v4538, %v4529
        %v4584 = vadd.s32 %v4560, %v4579
        %vm4585 = vc.u32 %v4560, %v4579
        %v4586 = vadd.s32 %v4582, 1
        %v4587 = vsel %vm4585, %v4586, %v4582
        %v4588 = vadd.s32 %v4583, %v4587
        %v4589 = vadd.s32 %v4588, 536870912
        %v4590 = vshrl.u32 %v4589, 30
        %v4591 = vshll.u32 %v4590, 30
        %v4592 = vsub.s32 %v4588, %v4591
        %vm4593 = vcmp.lt.s32.totalorder %v4592, 0
        %v4594 = vsub.s32 0, %v4592
        %v4595 = vsel %vm4593, %v4594, %v4592
        %v4596 = vclz %v4595
        %v4597 = vsub.s32 %v4596, 2
        %vm4598 = vcmp.gt.s32.totalorder 0, %v4597
        %v4599 = vsel %vm4598, 0, %v4597
        %v4600 = vsub.s32 32, %v4599
        %v4601 = vshll.u32 %v4592, %v4599
        %v4602 = vshrl.u32 %v4584, %v4600
        %v4603 = vor.u32 %v4601, %v4602
        %v4604 = vsub.s32 4294967266, %v4599
        %v4605 = vadd.s32 %v4604, 127
        %v4606 = vshll.u32 %v4605, 23
        %v4607 = vor.u32 4788187, %v4606
        %v4608 = vand.u32 2147483647, %v4607
        %v4610 = vcvt.s32.f32 %v4603
        %v4611 = vmul.f32 %v4610, %v4608
        %v4612 = vxor.u32 %v4611, 2147483648
        %v4613 = vsel %vm4492, %v4612, %v4611
        %v4614 = vsub.s32 4, %v4590
        %v4615 = vsel %vm4492, %v4614, %v4590
        %v4616 = vsel %vm4491, %v730, %v4613
        %v4617 = vsel %vm4491, 0, %v4615
        %v4618 = vmul.f32 %v4616, %v4616
        %v4619 = vmul.f32 %v4618, -0.001358992
        %v4620 = vadd.f32 %v4619, 0.041655596
        %v4621 = vmul.f32 %v4618, %v4620
        %v4622 = vadd.f32 %v4621, -0.4999988
        %v4623 = vmul.f32 %v4618, %v4622
        %v4624 = vadd.f32 1.0, %v4623
        %v4625 = vmul.f32 %v4616, %v4616
        %v4626 = vmul.f32 %v4625, -0.00019511016
        %v4627 = vadd.f32 %v4626, 0.008332121
        %v4628 = vmul.f32 %v4625, %v4627
        %v4629 = vadd.f32 %v4628, -0.16666654
        %v4630 = vmul.f32 %v4625, %v4629
        %v4631 = vadd.f32 %v4630, 1.0
        %v4632 = vmul.f32 %v4631, %v4616
        %vm4633 = vweird.f32 %v730
        %v4634 = vadd.s32 %v4617, 3
        %v4635 = vand.u32 %v4634, 3
        %vm4636 = vcmp.lt.s32.totalorder %v4635, 2
        %vm4637 = vcmp.eq.s32.totalorder %v4635, 0
        %v4638 = vxor.u32 %v4632, 2147483648
        %v4639 = vsel %vm4637, %v4624, %v4638
        %vm4640 = vcmp.eq.s32.totalorder %v4635, 2
        %v4641 = vxor.u32 %v4624, 2147483648
        %v4642 = vsel %vm4640, %v4641, %v4632
        %v4643 = vsel %vm4636, %v4639, %v4642
        %v4644 = vsel %vm4633, nan, %v4643
        %v4645 = vand.u32 2147483647, %v731
        %vm4646 = vcmp.le.f32.partialorder %v4645, 0.7853982
        %vm4647 = vcmp.lt.s32.totalorder %v731, 0
        %v4648 = vand.u32 %v731, 2139095040
        %v4649 = vshrl.u32 %v4648, 23
        %v4650 = vsub.s32 %v4649, 127
        %v4651 = vand.u32 2147483647, %v731
        %v4652 = vand.u32 %v4651, 8388607
        %v4653 = vor.u32 %v4652, 8388608
        %v4654 = vsub.s32 0, %v4653
        %v4655 = vadd.s32 %v4650, 1
        %vm4656 = vcmp.gt.s32.totalorder %v4655, 0
        %v4657 = vsel %vm4656, %v4655, 0
        %v4658 = vshrl.u32 %v4657, 5
        %v4659 = vand.u32 %v4657, 31
        %v4660 = vsub.s32 32, %v4659
        %v4661 = vshrl.u32 683565275, %v4660
        %v4662 = vshll.u32 683565275, %v4659
        %v4663 = vshrl.u32 2475754826, %v4660
        %v4664 = vor.u32 %v4662, %v4663
        %v4665 = vshll.u32 2475754826, %v4659
        %v4666 = vshrl.u32 2131351028, %v4660
        %v4667 = vor.u32 %v4665, %v4666
        %v4668 = vshll.u32 2131351028, %v4659
        %v4669 = vshrl.u32 2102212464, %v4660
        %v4670 = vor.u32 %v4668, %v4669
        %v4671 = vshll.u32 2102212464, %v4659
        %v4672 = vshrl.u32 920167782, %v4660
        %v4673 = vor.u32 %v4671, %v4672
        %v4674 = vshll.u32 920167782, %v4659
        %v4675 = vshrl.u32 1326507024, %v4660
        %v4676 = vor.u32 %v4674, %v4675
        %vm4677 = vcmp.lt.s32.totalorder %v4658, 1
        %vm4678 = vcmp.lt.s32.totalorder %v4658, 2
        %vm4679 = vcmp.lt.s32.totalorder %v4658, 3
        %vm4680 = vcmp.lt.s32.totalorder %v4658, 4
        %v4681 = vsel %vm4677, %v4661, %v4664
        %v4682 = vsel %vm4680, %v4670, 2102212464
        %v4683 = vsel %vm4679, %v4667, %v4682
        %v4684 = vsel %vm4678, %v4681, %v4683
        %v4685 = vsel %vm4677, %v4664, %v4667
        %v4686 = vsel %vm4680, %v4673, 920167782
        %v4687 = vsel %vm4679, %v4670, %v4686
        %v4688 = vsel %vm4678, %v4685, %v4687
        %v4689 = vsel %vm4677, %v4667, %v4670
        %v4690 = vsel %vm4680, %v4676, 1326507024
        %v4691 = vsel %vm4679, %v4673, %v4690
        %v4692 = vsel %vm4678, %v4689, %v4691
        %v4693 = vshll.u32 %v4653, 8
        %v4694 = vand.u32 %v4693, 65535
        %v4695 = vshrl.u32 %v4693, 16
        %v4696 = vand.u32 %v4692, 65535
        %v4697 = vshrl.u32 %v4692, 16
        %v4698 = vmul.u32 %v4694, %v4696
        %v4699 = vmul.u32 %v4694, %v4697
        %v4700 = vmul.u32 %v4695, %v4696
        %v4701 = vmul.u32 %v4695, %v4697
        %v4702 = vshll.u32 %v4699, 16
        %v4703 = vshrl.u32 %v4699, 16
        %v4704 = vshll.u32 %v4700, 16
        %v4705 = vshrl.u32 %v4700, 16
        %vm4706 = vc.u32 %v4698, %v4702
        %v4707 = vsel %vm4706, 1, 0
        %v4708 = vadd.s32 %v4698, %v4702
        %v4709 = vadd.s32 %v4701, %v4707
        %vm4710 = vc.u32 %v4708, %v4704
        %v4711 = vsel %vm4710, 1, 0
        %v4712 = vadd.s32 %v4708, %v4704
        %v4713 = vadd.s32 %v4709, %v4711
        %v4714 = vadd.s32 %v4713, %v4703
        %v4715 = vadd.s32 %v4714, %v4705
        %v4716 = vand.u32 %v4693, 65535
        %v4717 = vshrl.u32 %v4693, 16
        %v4718 = vand.u32 %v4688, 65535
        %v4719 = vshrl.u32 %v4688, 16
        %v4720 = vmul.u32 %v4716, %v4718
        %v4721 = vmul.u32 %v4716, %v4719
        %v4722 = vmul.u32 %v4717, %v4718
        %v4723 = vmul.u32 %v4717, %v4719
        %v4724 = vshll.u32 %v4721, 16
        %v4725 = vshrl.u32 %v4721, 16
        %v4726 = vshll.u32 %v4722, 16
        %v4727 = vshrl.u32 %v4722, 16
        %vm4728 = vc.u32 %v4720, %v4724
        %v4729 = vsel %vm4728, 1, 0
        %v4730 = vadd.s32 %v4720, %v4724
        %v4731 = vadd.s32 %v4723, %v4729
        %vm4732 = vc.u32 %v4730, %v4726
        %v4733 = vsel %vm4732, 1, 0
        %v4734 = vadd.s32 %v4730, %v4726
        %v4735 = vadd.s32 %v4731, %v4733
        %v4736 = vadd.s32 %v4735, %v4725
        %v4737 = vadd.s32 %v4736, %v4727
        %v4738 = vmul.u32 %v4693, %v4684
        %v4739 = vadd.s32 %v4715, %v4734
        %vm4740 = vc.u32 %v4715, %v4734
        %v4741 = vadd.s32 %v4737, 1
        %v4742 = vsel %vm4740, %v4741, %v4737
        %v4743 = vadd.s32 %v4738, %v4742
        %v4744 = vadd.s32 %v4743, 536870912
        %v4745 = vshrl.u32 %v4744, 30
        %v4746 = vshll.u32 %v4745, 30
        %v4747 = vsub.s32 %v4743, %v4746
        %vm4748 = vcmp.lt.s32.totalorder %v4747, 0
        %v4749 = vsub.s32 0, %v4747
        %v4750 = vsel %vm4748, %v4749, %v4747
        %v4751 = vclz %v4750
        %v4752 = vsub.s32 %v4751, 2
        %vm4753 = vcmp.gt.s32.totalorder 0, %v4752
        %v4754 = vsel %vm4753, 0, %v4752
        %v4755 = vsub.s32 32, %v4754
        %v4756 = vshll.u32 %v4747, %v4754
        %v4757 = vshrl.u32 %v4739, %v4755
        %v4758 = vor.u32 %v4756, %v4757
        %v4759 = vsub.s32 4294967266, %v4754
        %v4760 = vadd.s32 %v4759, 127
        %v4761 = vshll.u32 %v4760, 23
        %v4762 = vor.u32 4788187, %v4761
        %v4763 = vand.u32 2147483647, %v4762
        %v4765 = vcvt.s32.f32 %v4758
        %v4766 = vmul.f32 %v4765, %v4763
        %v4767 = vxor.u32 %v4766, 2147483648
        %v4768 = vsel %vm4647, %v4767, %v4766
        %v4769 = vsub.s32 4, %v4745
        %v4770 = vsel %vm4647, %v4769, %v4745
        %v4771 = vsel %vm4646, %v731, %v4768
        %v4772 = vsel %vm4646, 0, %v4770
        %v4773 = vmul.f32 %v4771, %v4771
        %v4774 = vmul.f32 %v4773, -0.001358992
        %v4775 = vadd.f32 %v4774, 0.041655596
        %v4776 = vmul.f32 %v4773, %v4775
        %v4777 = vadd.f32 %v4776, -0.4999988
        %v4778 = vmul.f32 %v4773, %v4777
        %v4779 = vadd.f32 1.0, %v4778
        %v4780 = vmul.f32 %v4771, %v4771
        %v4781 = vmul.f32 %v4780, -0.00019511016
        %v4782 = vadd.f32 %v4781, 0.008332121
        %v4783 = vmul.f32 %v4780, %v4782
        %v4784 = vadd.f32 %v4783, -0.16666654
        %v4785 = vmul.f32 %v4780, %v4784
        %v4786 = vadd.f32 %v4785, 1.0
        %v4787 = vmul.f32 %v4786, %v4771
        %vm4788 = vweird.f32 %v731
        %v4789 = vadd.s32 %v4772, 3
        %v4790 = vand.u32 %v4789, 3
        %vm4791 = vcmp.lt.s32.totalorder %v4790, 2
        %vm4792 = vcmp.eq.s32.totalorder %v4790, 0
        %v4793 = vxor.u32 %v4787, 2147483648
        %v4794 = vsel %vm4792, %v4779, %v4793
        %vm4795 = vcmp.eq.s32.totalorder %v4790, 2
        %v4796 = vxor.u32 %v4779, 2147483648
        %v4797 = vsel %vm4795, %v4796, %v4787
        %v4798 = vsel %vm4791, %v4794, %v4797
        %v4799 = vsel %vm4788, nan, %v4798
        %v4800 = vand.u32 2147483647, %v732
        %vm4801 = vcmp.le.f32.partialorder %v4800, 0.7853982
        %vm4802 = vcmp.lt.s32.totalorder %v732, 0
        %v4803 = vand.u32 %v732, 2139095040
        %v4804 = vshrl.u32 %v4803, 23
        %v4805 = vsub.s32 %v4804, 127
        %v4806 = vand.u32 2147483647, %v732
        %v4807 = vand.u32 %v4806, 8388607
        %v4808 = vor.u32 %v4807, 8388608
        %v4809 = vsub.s32 0, %v4808
        %v4810 = vadd.s32 %v4805, 1
        %vm4811 = vcmp.gt.s32.totalorder %v4810, 0
        %v4812 = vsel %vm4811, %v4810, 0
        %v4813 = vshrl.u32 %v4812, 5
        %v4814 = vand.u32 %v4812, 31
        %v4815 = vsub.s32 32, %v4814
        %v4816 = vshrl.u32 683565275, %v4815
        %v4817 = vshll.u32 683565275, %v4814
        %v4818 = vshrl.u32 2475754826, %v4815
        %v4819 = vor.u32 %v4817, %v4818
        %v4820 = vshll.u32 2475754826, %v4814
        %v4821 = vshrl.u32 2131351028, %v4815
        %v4822 = vor.u32 %v4820, %v4821
        %v4823 = vshll.u32 2131351028, %v4814
        %v4824 = vshrl.u32 2102212464, %v4815
        %v4825 = vor.u32 %v4823, %v4824
        %v4826 = vshll.u32 2102212464, %v4814
        %v4827 = vshrl.u32 920167782, %v4815
        %v4828 = vor.u32 %v4826, %v4827
        %v4829 = vshll.u32 920167782, %v4814
        %v4830 = vshrl.u32 1326507024, %v4815
        %v4831 = vor.u32 %v4829, %v4830
        %vm4832 = vcmp.lt.s32.totalorder %v4813, 1
        %vm4833 = vcmp.lt.s32.totalorder %v4813, 2
        %vm4834 = vcmp.lt.s32.totalorder %v4813, 3
        %vm4835 = vcmp.lt.s32.totalorder %v4813, 4
        %v4836 = vsel %vm4832, %v4816, %v4819
        %v4837 = vsel %vm4835, %v4825, 2102212464
        %v4838 = vsel %vm4834, %v4822, %v4837
        %v4839 = vsel %vm4833, %v4836, %v4838
        %v4840 = vsel %vm4832, %v4819, %v4822
        %v4841 = vsel %vm4835, %v4828, 920167782
        %v4842 = vsel %vm4834, %v4825, %v4841
        %v4843 = vsel %vm4833, %v4840, %v4842
        %v4844 = vsel %vm4832, %v4822, %v4825
        %v4845 = vsel %vm4835, %v4831, 1326507024
        %v4846 = vsel %vm4834, %v4828, %v4845
        %v4847 = vsel %vm4833, %v4844, %v4846
        %v4848 = vshll.u32 %v4808, 8
        %v4849 = vand.u32 %v4848, 65535
        %v4850 = vshrl.u32 %v4848, 16
        %v4851 = vand.u32 %v4847, 65535
        %v4852 = vshrl.u32 %v4847, 16
        %v4853 = vmul.u32 %v4849, %v4851
        %v4854 = vmul.u32 %v4849, %v4852
        %v4855 = vmul.u32 %v4850, %v4851
        %v4856 = vmul.u32 %v4850, %v4852
        %v4857 = vshll.u32 %v4854, 16
        %v4858 = vshrl.u32 %v4854, 16
        %v4859 = vshll.u32 %v4855, 16
        %v4860 = vshrl.u32 %v4855, 16
        %vm4861 = vc.u32 %v4853, %v4857
        %v4862 = vsel %vm4861, 1, 0
        %v4863 = vadd.s32 %v4853, %v4857
        %v4864 = vadd.s32 %v4856, %v4862
        %vm4865 = vc.u32 %v4863, %v4859
        %v4866 = vsel %vm4865, 1, 0
        %v4867 = vadd.s32 %v4863, %v4859
        %v4868 = vadd.s32 %v4864, %v4866
        %v4869 = vadd.s32 %v4868, %v4858
        %v4870 = vadd.s32 %v4869, %v4860
        %v4871 = vand.u32 %v4848, 65535
        %v4872 = vshrl.u32 %v4848, 16
        %v4873 = vand.u32 %v4843, 65535
        %v4874 = vshrl.u32 %v4843, 16
        %v4875 = vmul.u32 %v4871, %v4873
        %v4876 = vmul.u32 %v4871, %v4874
        %v4877 = vmul.u32 %v4872, %v4873
        %v4878 = vmul.u32 %v4872, %v4874
        %v4879 = vshll.u32 %v4876, 16
        %v4880 = vshrl.u32 %v4876, 16
        %v4881 = vshll.u32 %v4877, 16
        %v4882 = vshrl.u32 %v4877, 16
        %vm4883 = vc.u32 %v4875, %v4879
        %v4884 = vsel %vm4883, 1, 0
        %v4885 = vadd.s32 %v4875, %v4879
        %v4886 = vadd.s32 %v4878, %v4884
        %vm4887 = vc.u32 %v4885, %v4881
        %v4888 = vsel %vm4887, 1, 0
        %v4889 = vadd.s32 %v4885, %v4881
        %v4890 = vadd.s32 %v4886, %v4888
        %v4891 = vadd.s32 %v4890, %v4880
        %v4892 = vadd.s32 %v4891, %v4882
        %v4893 = vmul.u32 %v4848, %v4839
        %v4894 = vadd.s32 %v4870, %v4889
        %vm4895 = vc.u32 %v4870, %v4889
        %v4896 = vadd.s32 %v4892, 1
        %v4897 = vsel %vm4895, %v4896, %v4892
        %v4898 = vadd.s32 %v4893, %v4897
        %v4899 = vadd.s32 %v4898, 536870912
        %v4900 = vshrl.u32 %v4899, 30
        %v4901 = vshll.u32 %v4900, 30
        %v4902 = vsub.s32 %v4898, %v4901
        %vm4903 = vcmp.lt.s32.totalorder %v4902, 0
        %v4904 = vsub.s32 0, %v4902
        %v4905 = vsel %vm4903, %v4904, %v4902
        %v4906 = vclz %v4905
        %v4907 = vsub.s32 %v4906, 2
        %vm4908 = vcmp.gt.s32.totalorder 0, %v4907
        %v4909 = vsel %vm4908, 0, %v4907
        %v4910 = vsub.s32 32, %v4909
        %v4911 = vshll.u32 %v4902, %v4909
        %v4912 = vshrl.u32 %v4894, %v4910
        %v4913 = vor.u32 %v4911, %v4912
        %v4914 = vsub.s32 4294967266, %v4909
        %v4915 = vadd.s32 %v4914, 127
        %v4916 = vshll.u32 %v4915, 23
        %v4917 = vor.u32 4788187, %v4916
        %v4918 = vand.u32 2147483647, %v4917
        %v4920 = vcvt.s32.f32 %v4913
        %v4921 = vmul.f32 %v4920, %v4918
        %v4922 = vxor.u32 %v4921, 2147483648
        %v4923 = vsel %vm4802, %v4922, %v4921
        %v4924 = vsub.s32 4, %v4900
        %v4925 = vsel %vm4802, %v4924, %v4900
        %v4926 = vsel %vm4801, %v732, %v4923
        %v4927 = vsel %vm4801, 0, %v4925
        %v4928 = vmul.f32 %v4926, %v4926
        %v4929 = vmul.f32 %v4928, -0.001358992
        %v4930 = vadd.f32 %v4929, 0.041655596
        %v4931 = vmul.f32 %v4928, %v4930
        %v4932 = vadd.f32 %v4931, -0.4999988
        %v4933 = vmul.f32 %v4928, %v4932
        %v4934 = vadd.f32 1.0, %v4933
        %v4935 = vmul.f32 %v4926, %v4926
        %v4936 = vmul.f32 %v4935, -0.00019511016
        %v4937 = vadd.f32 %v4936, 0.008332121
        %v4938 = vmul.f32 %v4935, %v4937
        %v4939 = vadd.f32 %v4938, -0.16666654
        %v4940 = vmul.f32 %v4935, %v4939
        %v4941 = vadd.f32 %v4940, 1.0
        %v4942 = vmul.f32 %v4941, %v4926
        %vm4943 = vweird.f32 %v732
        %v4944 = vadd.s32 %v4927, 3
        %v4945 = vand.u32 %v4944, 3
        %vm4946 = vcmp.lt.s32.totalorder %v4945, 2
        %vm4947 = vcmp.eq.s32.totalorder %v4945, 0
        %v4948 = vxor.u32 %v4942, 2147483648
        %v4949 = vsel %vm4947, %v4934, %v4948
        %vm4950 = vcmp.eq.s32.totalorder %v4945, 2
        %v4951 = vxor.u32 %v4934, 2147483648
        %v4952 = vsel %vm4950, %v4951, %v4942
        %v4953 = vsel %vm4946, %v4949, %v4952
        %v4954 = vsel %vm4943, nan, %v4953
        %v4955 = vand.u32 2147483647, %v733
        %vm4956 = vcmp.le.f32.partialorder %v4955, 0.7853982
        %vm4957 = vcmp.lt.s32.totalorder %v733, 0
        %v4958 = vand.u32 %v733, 2139095040
        %v4959 = vshrl.u32 %v4958, 23
        %v4960 = vsub.s32 %v4959, 127
        %v4961 = vand.u32 2147483647, %v733
        %v4962 = vand.u32 %v4961, 8388607
        %v4963 = vor.u32 %v4962, 8388608
        %v4964 = vsub.s32 0, %v4963
        %v4965 = vadd.s32 %v4960, 1
        %vm4966 = vcmp.gt.s32.totalorder %v4965, 0
        %v4967 = vsel %vm4966, %v4965, 0
        %v4968 = vshrl.u32 %v4967, 5
        %v4969 = vand.u32 %v4967, 31
        %v4970 = vsub.s32 32, %v4969
        %v4971 = vshrl.u32 683565275, %v4970
        %v4972 = vshll.u32 683565275, %v4969
        %v4973 = vshrl.u32 2475754826, %v4970
        %v4974 = vor.u32 %v4972, %v4973
        %v4975 = vshll.u32 2475754826, %v4969
        %v4976 = vshrl.u32 2131351028, %v4970
        %v4977 = vor.u32 %v4975, %v4976
        %v4978 = vshll.u32 2131351028, %v4969
        %v4979 = vshrl.u32 2102212464, %v4970
        %v4980 = vor.u32 %v4978, %v4979
        %v4981 = vshll.u32 2102212464, %v4969
        %v4982 = vshrl.u32 920167782, %v4970
        %v4983 = vor.u32 %v4981, %v4982
        %v4984 = vshll.u32 920167782, %v4969
        %v4985 = vshrl.u32 1326507024, %v4970
        %v4986 = vor.u32 %v4984, %v4985
        %vm4987 = vcmp.lt.s32.totalorder %v4968, 1
        %vm4988 = vcmp.lt.s32.totalorder %v4968, 2
        %vm4989 = vcmp.lt.s32.totalorder %v4968, 3
        %vm4990 = vcmp.lt.s32.totalorder %v4968, 4
        %v4991 = vsel %vm4987, %v4971, %v4974
        %v4992 = vsel %vm4990, %v4980, 2102212464
        %v4993 = vsel %vm4989, %v4977, %v4992
        %v4994 = vsel %vm4988, %v4991, %v4993
        %v4995 = vsel %vm4987, %v4974, %v4977
        %v4996 = vsel %vm4990, %v4983, 920167782
        %v4997 = vsel %vm4989, %v4980, %v4996
        %v4998 = vsel %vm4988, %v4995, %v4997
        %v4999 = vsel %vm4987, %v4977, %v4980
        %v5000 = vsel %vm4990, %v4986, 1326507024
        %v5001 = vsel %vm4989, %v4983, %v5000
        %v5002 = vsel %vm4988, %v4999, %v5001
        %v5003 = vshll.u32 %v4963, 8
        %v5004 = vand.u32 %v5003, 65535
        %v5005 = vshrl.u32 %v5003, 16
        %v5006 = vand.u32 %v5002, 65535
        %v5007 = vshrl.u32 %v5002, 16
        %v5008 = vmul.u32 %v5004, %v5006
        %v5009 = vmul.u32 %v5004, %v5007
        %v5010 = vmul.u32 %v5005, %v5006
        %v5011 = vmul.u32 %v5005, %v5007
        %v5012 = vshll.u32 %v5009, 16
        %v5013 = vshrl.u32 %v5009, 16
        %v5014 = vshll.u32 %v5010, 16
        %v5015 = vshrl.u32 %v5010, 16
        %vm5016 = vc.u32 %v5008, %v5012
        %v5017 = vsel %vm5016, 1, 0
        %v5018 = vadd.s32 %v5008, %v5012
        %v5019 = vadd.s32 %v5011, %v5017
        %vm5020 = vc.u32 %v5018, %v5014
        %v5021 = vsel %vm5020, 1, 0
        %v5022 = vadd.s32 %v5018, %v5014
        %v5023 = vadd.s32 %v5019, %v5021
        %v5024 = vadd.s32 %v5023, %v5013
        %v5025 = vadd.s32 %v5024, %v5015
        %v5026 = vand.u32 %v5003, 65535
        %v5027 = vshrl.u32 %v5003, 16
        %v5028 = vand.u32 %v4998, 65535
        %v5029 = vshrl.u32 %v4998, 16
        %v5030 = vmul.u32 %v5026, %v5028
        %v5031 = vmul.u32 %v5026, %v5029
        %v5032 = vmul.u32 %v5027, %v5028
        %v5033 = vmul.u32 %v5027, %v5029
        %v5034 = vshll.u32 %v5031, 16
        %v5035 = vshrl.u32 %v5031, 16
        %v5036 = vshll.u32 %v5032, 16
        %v5037 = vshrl.u32 %v5032, 16
        %vm5038 = vc.u32 %v5030, %v5034
        %v5039 = vsel %vm5038, 1, 0
        %v5040 = vadd.s32 %v5030, %v5034
        %v5041 = vadd.s32 %v5033, %v5039
        %vm5042 = vc.u32 %v5040, %v5036
        %v5043 = vsel %vm5042, 1, 0
        %v5044 = vadd.s32 %v5040, %v5036
        %v5045 = vadd.s32 %v5041, %v5043
        %v5046 = vadd.s32 %v5045, %v5035
        %v5047 = vadd.s32 %v5046, %v5037
        %v5048 = vmul.u32 %v5003, %v4994
        %v5049 = vadd.s32 %v5025, %v5044
        %vm5050 = vc.u32 %v5025, %v5044
        %v5051 = vadd.s32 %v5047, 1
        %v5052 = vsel %vm5050, %v5051, %v5047
        %v5053 = vadd.s32 %v5048, %v5052
        %v5054 = vadd.s32 %v5053, 536870912
        %v5055 = vshrl.u32 %v5054, 30
        %v5056 = vshll.u32 %v5055, 30
        %v5057 = vsub.s32 %v5053, %v5056
        %vm5058 = vcmp.lt.s32.totalorder %v5057, 0
        %v5059 = vsub.s32 0, %v5057
        %v5060 = vsel %vm5058, %v5059, %v5057
        %v5061 = vclz %v5060
        %v5062 = vsub.s32 %v5061, 2
        %vm5063 = vcmp.gt.s32.totalorder 0, %v5062
        %v5064 = vsel %vm5063, 0, %v5062
        %v5065 = vsub.s32 32, %v5064
        %v5066 = vshll.u32 %v5057, %v5064
        %v5067 = vshrl.u32 %v5049, %v5065
        %v5068 = vor.u32 %v5066, %v5067
        %v5069 = vsub.s32 4294967266, %v5064
        %v5070 = vadd.s32 %v5069, 127
        %v5071 = vshll.u32 %v5070, 23
        %v5072 = vor.u32 4788187, %v5071
        %v5073 = vand.u32 2147483647, %v5072
        %v5075 = vcvt.s32.f32 %v5068
        %v5076 = vmul.f32 %v5075, %v5073
        %v5077 = vxor.u32 %v5076, 2147483648
        %v5078 = vsel %vm4957, %v5077, %v5076
        %v5079 = vsub.s32 4, %v5055
        %v5080 = vsel %vm4957, %v5079, %v5055
        %v5081 = vsel %vm4956, %v733, %v5078
        %v5082 = vsel %vm4956, 0, %v5080
        %v5083 = vmul.f32 %v5081, %v5081
        %v5084 = vmul.f32 %v5083, -0.001358992
        %v5085 = vadd.f32 %v5084, 0.041655596
        %v5086 = vmul.f32 %v5083, %v5085
        %v5087 = vadd.f32 %v5086, -0.4999988
        %v5088 = vmul.f32 %v5083, %v5087
        %v5089 = vadd.f32 1.0, %v5088
        %v5090 = vmul.f32 %v5081, %v5081
        %v5091 = vmul.f32 %v5090, -0.00019511016
        %v5092 = vadd.f32 %v5091, 0.008332121
        %v5093 = vmul.f32 %v5090, %v5092
        %v5094 = vadd.f32 %v5093, -0.16666654
        %v5095 = vmul.f32 %v5090, %v5094
        %v5096 = vadd.f32 %v5095, 1.0
        %v5097 = vmul.f32 %v5096, %v5081
        %vm5098 = vweird.f32 %v733
        %v5099 = vadd.s32 %v5082, 3
        %v5100 = vand.u32 %v5099, 3
        %vm5101 = vcmp.lt.s32.totalorder %v5100, 2
        %vm5102 = vcmp.eq.s32.totalorder %v5100, 0
        %v5103 = vxor.u32 %v5097, 2147483648
        %v5104 = vsel %vm5102, %v5089, %v5103
        %vm5105 = vcmp.eq.s32.totalorder %v5100, 2
        %v5106 = vxor.u32 %v5089, 2147483648
        %v5107 = vsel %vm5105, %v5106, %v5097
        %v5108 = vsel %vm5101, %v5104, %v5107
        %v5109 = vsel %vm5098, nan, %v5108
        %v5110 = vand.u32 2147483647, %v734
        %vm5111 = vcmp.le.f32.partialorder %v5110, 0.7853982
        %vm5112 = vcmp.lt.s32.totalorder %v734, 0
        %v5113 = vand.u32 %v734, 2139095040
        %v5114 = vshrl.u32 %v5113, 23
        %v5115 = vsub.s32 %v5114, 127
        %v5116 = vand.u32 2147483647, %v734
        %v5117 = vand.u32 %v5116, 8388607
        %v5118 = vor.u32 %v5117, 8388608
        %v5119 = vsub.s32 0, %v5118
        %v5120 = vadd.s32 %v5115, 1
        %vm5121 = vcmp.gt.s32.totalorder %v5120, 0
        %v5122 = vsel %vm5121, %v5120, 0
        %v5123 = vshrl.u32 %v5122, 5
        %v5124 = vand.u32 %v5122, 31
        %v5125 = vsub.s32 32, %v5124
        %v5126 = vshrl.u32 683565275, %v5125
        %v5127 = vshll.u32 683565275, %v5124
        %v5128 = vshrl.u32 2475754826, %v5125
        %v5129 = vor.u32 %v5127, %v5128
        %v5130 = vshll.u32 2475754826, %v5124
        %v5131 = vshrl.u32 2131351028, %v5125
        %v5132 = vor.u32 %v5130, %v5131
        %v5133 = vshll.u32 2131351028, %v5124
        %v5134 = vshrl.u32 2102212464, %v5125
        %v5135 = vor.u32 %v5133, %v5134
        %v5136 = vshll.u32 2102212464, %v5124
        %v5137 = vshrl.u32 920167782, %v5125
        %v5138 = vor.u32 %v5136, %v5137
        %v5139 = vshll.u32 920167782, %v5124
        %v5140 = vshrl.u32 1326507024, %v5125
        %v5141 = vor.u32 %v5139, %v5140
        %vm5142 = vcmp.lt.s32.totalorder %v5123, 1
        %vm5143 = vcmp.lt.s32.totalorder %v5123, 2
        %vm5144 = vcmp.lt.s32.totalorder %v5123, 3
        %vm5145 = vcmp.lt.s32.totalorder %v5123, 4
        %v5146 = vsel %vm5142, %v5126, %v5129
        %v5147 = vsel %vm5145, %v5135, 2102212464
        %v5148 = vsel %vm5144, %v5132, %v5147
        %v5149 = vsel %vm5143, %v5146, %v5148
        %v5150 = vsel %vm5142, %v5129, %v5132
        %v5151 = vsel %vm5145, %v5138, 920167782
        %v5152 = vsel %vm5144, %v5135, %v5151
        %v5153 = vsel %vm5143, %v5150, %v5152
        %v5154 = vsel %vm5142, %v5132, %v5135
        %v5155 = vsel %vm5145, %v5141, 1326507024
        %v5156 = vsel %vm5144, %v5138, %v5155
        %v5157 = vsel %vm5143, %v5154, %v5156
        %v5158 = vshll.u32 %v5118, 8
        %v5159 = vand.u32 %v5158, 65535
        %v5160 = vshrl.u32 %v5158, 16
        %v5161 = vand.u32 %v5157, 65535
        %v5162 = vshrl.u32 %v5157, 16
        %v5163 = vmul.u32 %v5159, %v5161
        %v5164 = vmul.u32 %v5159, %v5162
        %v5165 = vmul.u32 %v5160, %v5161
        %v5166 = vmul.u32 %v5160, %v5162
        %v5167 = vshll.u32 %v5164, 16
        %v5168 = vshrl.u32 %v5164, 16
        %v5169 = vshll.u32 %v5165, 16
        %v5170 = vshrl.u32 %v5165, 16
        %vm5171 = vc.u32 %v5163, %v5167
        %v5172 = vsel %vm5171, 1, 0
        %v5173 = vadd.s32 %v5163, %v5167
        %v5174 = vadd.s32 %v5166, %v5172
        %vm5175 = vc.u32 %v5173, %v5169
        %v5176 = vsel %vm5175, 1, 0
        %v5177 = vadd.s32 %v5173, %v5169
        %v5178 = vadd.s32 %v5174, %v5176
        %v5179 = vadd.s32 %v5178, %v5168
        %v5180 = vadd.s32 %v5179, %v5170
        %v5181 = vand.u32 %v5158, 65535
        %v5182 = vshrl.u32 %v5158, 16
        %v5183 = vand.u32 %v5153, 65535
        %v5184 = vshrl.u32 %v5153, 16
        %v5185 = vmul.u32 %v5181, %v5183
        %v5186 = vmul.u32 %v5181, %v5184
        %v5187 = vmul.u32 %v5182, %v5183
        %v5188 = vmul.u32 %v5182, %v5184
        %v5189 = vshll.u32 %v5186, 16
        %v5190 = vshrl.u32 %v5186, 16
        %v5191 = vshll.u32 %v5187, 16
        %v5192 = vshrl.u32 %v5187, 16
        %vm5193 = vc.u32 %v5185, %v5189
        %v5194 = vsel %vm5193, 1, 0
        %v5195 = vadd.s32 %v5185, %v5189
        %v5196 = vadd.s32 %v5188, %v5194
        %vm5197 = vc.u32 %v5195, %v5191
        %v5198 = vsel %vm5197, 1, 0
        %v5199 = vadd.s32 %v5195, %v5191
        %v5200 = vadd.s32 %v5196, %v5198
        %v5201 = vadd.s32 %v5200, %v5190
        %v5202 = vadd.s32 %v5201, %v5192
        %v5203 = vmul.u32 %v5158, %v5149
        %v5204 = vadd.s32 %v5180, %v5199
        %vm5205 = vc.u32 %v5180, %v5199
        %v5206 = vadd.s32 %v5202, 1
        %v5207 = vsel %vm5205, %v5206, %v5202
        %v5208 = vadd.s32 %v5203, %v5207
        %v5209 = vadd.s32 %v5208, 536870912
        %v5210 = vshrl.u32 %v5209, 30
        %v5211 = vshll.u32 %v5210, 30
        %v5212 = vsub.s32 %v5208, %v5211
        %vm5213 = vcmp.lt.s32.totalorder %v5212, 0
        %v5214 = vsub.s32 0, %v5212
        %v5215 = vsel %vm5213, %v5214, %v5212
        %v5216 = vclz %v5215
        %v5217 = vsub.s32 %v5216, 2
        %vm5218 = vcmp.gt.s32.totalorder 0, %v5217
        %v5219 = vsel %vm5218, 0, %v5217
        %v5220 = vsub.s32 32, %v5219
        %v5221 = vshll.u32 %v5212, %v5219
        %v5222 = vshrl.u32 %v5204, %v5220
        %v5223 = vor.u32 %v5221, %v5222
        %v5224 = vsub.s32 4294967266, %v5219
        %v5225 = vadd.s32 %v5224, 127
        %v5226 = vshll.u32 %v5225, 23
        %v5227 = vor.u32 4788187, %v5226
        %v5228 = vand.u32 2147483647, %v5227
        %v5230 = vcvt.s32.f32 %v5223
        %v5231 = vmul.f32 %v5230, %v5228
        %v5232 = vxor.u32 %v5231, 2147483648
        %v5233 = vsel %vm5112, %v5232, %v5231
        %v5234 = vsub.s32 4, %v5210
        %v5235 = vsel %vm5112, %v5234, %v5210
        %v5236 = vsel %vm5111, %v734, %v5233
        %v5237 = vsel %vm5111, 0, %v5235
        %v5238 = vmul.f32 %v5236, %v5236
        %v5239 = vmul.f32 %v5238, -0.001358992
        %v5240 = vadd.f32 %v5239, 0.041655596
        %v5241 = vmul.f32 %v5238, %v5240
        %v5242 = vadd.f32 %v5241, -0.4999988
        %v5243 = vmul.f32 %v5238, %v5242
        %v5244 = vadd.f32 1.0, %v5243
        %v5245 = vmul.f32 %v5236, %v5236
        %v5246 = vmul.f32 %v5245, -0.00019511016
        %v5247 = vadd.f32 %v5246, 0.008332121
        %v5248 = vmul.f32 %v5245, %v5247
        %v5249 = vadd.f32 %v5248, -0.16666654
        %v5250 = vmul.f32 %v5245, %v5249
        %v5251 = vadd.f32 %v5250, 1.0
        %v5252 = vmul.f32 %v5251, %v5236
        %vm5253 = vweird.f32 %v734
        %v5254 = vadd.s32 %v5237, 3
        %v5255 = vand.u32 %v5254, 3
        %vm5256 = vcmp.lt.s32.totalorder %v5255, 2
        %vm5257 = vcmp.eq.s32.totalorder %v5255, 0
        %v5258 = vxor.u32 %v5252, 2147483648
        %v5259 = vsel %vm5257, %v5244, %v5258
        %vm5260 = vcmp.eq.s32.totalorder %v5255, 2
        %v5261 = vxor.u32 %v5244, 2147483648
        %v5262 = vsel %vm5260, %v5261, %v5252
        %v5263 = vsel %vm5256, %v5259, %v5262
        %v5264 = vsel %vm5253, nan, %v5263
        %v5265 = vand.u32 2147483647, %v735
        %vm5266 = vcmp.le.f32.partialorder %v5265, 0.7853982
        %vm5267 = vcmp.lt.s32.totalorder %v735, 0
        %v5268 = vand.u32 %v735, 2139095040
        %v5269 = vshrl.u32 %v5268, 23
        %v5270 = vsub.s32 %v5269, 127
        %v5271 = vand.u32 2147483647, %v735
        %v5272 = vand.u32 %v5271, 8388607
        %v5273 = vor.u32 %v5272, 8388608
        %v5274 = vsub.s32 0, %v5273
        %v5275 = vadd.s32 %v5270, 1
        %vm5276 = vcmp.gt.s32.totalorder %v5275, 0
        %v5277 = vsel %vm5276, %v5275, 0
        %v5278 = vshrl.u32 %v5277, 5
        %v5279 = vand.u32 %v5277, 31
        %v5280 = vsub.s32 32, %v5279
        %v5281 = vshrl.u32 683565275, %v5280
        %v5282 = vshll.u32 683565275, %v5279
        %v5283 = vshrl.u32 2475754826, %v5280
        %v5284 = vor.u32 %v5282, %v5283
        %v5285 = vshll.u32 2475754826, %v5279
        %v5286 = vshrl.u32 2131351028, %v5280
        %v5287 = vor.u32 %v5285, %v5286
        %v5288 = vshll.u32 2131351028, %v5279
        %v5289 = vshrl.u32 2102212464, %v5280
        %v5290 = vor.u32 %v5288, %v5289
        %v5291 = vshll.u32 2102212464, %v5279
        %v5292 = vshrl.u32 920167782, %v5280
        %v5293 = vor.u32 %v5291, %v5292
        %v5294 = vshll.u32 920167782, %v5279
        %v5295 = vshrl.u32 1326507024, %v5280
        %v5296 = vor.u32 %v5294, %v5295
        %vm5297 = vcmp.lt.s32.totalorder %v5278, 1
        %vm5298 = vcmp.lt.s32.totalorder %v5278, 2
        %vm5299 = vcmp.lt.s32.totalorder %v5278, 3
        %vm5300 = vcmp.lt.s32.totalorder %v5278, 4
        %v5301 = vsel %vm5297, %v5281, %v5284
        %v5302 = vsel %vm5300, %v5290, 2102212464
        %v5303 = vsel %vm5299, %v5287, %v5302
        %v5304 = vsel %vm5298, %v5301, %v5303
        %v5305 = vsel %vm5297, %v5284, %v5287
        %v5306 = vsel %vm5300, %v5293, 920167782
        %v5307 = vsel %vm5299, %v5290, %v5306
        %v5308 = vsel %vm5298, %v5305, %v5307
        %v5309 = vsel %vm5297, %v5287, %v5290
        %v5310 = vsel %vm5300, %v5296, 1326507024
        %v5311 = vsel %vm5299, %v5293, %v5310
        %v5312 = vsel %vm5298, %v5309, %v5311
        %v5313 = vshll.u32 %v5273, 8
        %v5314 = vand.u32 %v5313, 65535
        %v5315 = vshrl.u32 %v5313, 16
        %v5316 = vand.u32 %v5312, 65535
        %v5317 = vshrl.u32 %v5312, 16
        %v5318 = vmul.u32 %v5314, %v5316
        %v5319 = vmul.u32 %v5314, %v5317
        %v5320 = vmul.u32 %v5315, %v5316
        %v5321 = vmul.u32 %v5315, %v5317
        %v5322 = vshll.u32 %v5319, 16
        %v5323 = vshrl.u32 %v5319, 16
        %v5324 = vshll.u32 %v5320, 16
        %v5325 = vshrl.u32 %v5320, 16
        %vm5326 = vc.u32 %v5318, %v5322
        %v5327 = vsel %vm5326, 1, 0
        %v5328 = vadd.s32 %v5318, %v5322
        %v5329 = vadd.s32 %v5321, %v5327
        %vm5330 = vc.u32 %v5328, %v5324
        %v5331 = vsel %vm5330, 1, 0
        %v5332 = vadd.s32 %v5328, %v5324
        %v5333 = vadd.s32 %v5329, %v5331
        %v5334 = vadd.s32 %v5333, %v5323
        %v5335 = vadd.s32 %v5334, %v5325
        %v5336 = vand.u32 %v5313, 65535
        %v5337 = vshrl.u32 %v5313, 16
        %v5338 = vand.u32 %v5308, 65535
        %v5339 = vshrl.u32 %v5308, 16
        %v5340 = vmul.u32 %v5336, %v5338
        %v5341 = vmul.u32 %v5336, %v5339
        %v5342 = vmul.u32 %v5337, %v5338
        %v5343 = vmul.u32 %v5337, %v5339
        %v5344 = vshll.u32 %v5341, 16
        %v5345 = vshrl.u32 %v5341, 16
        %v5346 = vshll.u32 %v5342, 16
        %v5347 = vshrl.u32 %v5342, 16
        %vm5348 = vc.u32 %v5340, %v5344
        %v5349 = vsel %vm5348, 1, 0
        %v5350 = vadd.s32 %v5340, %v5344
        %v5351 = vadd.s32 %v5343, %v5349
        %vm5352 = vc.u32 %v5350, %v5346
        %v5353 = vsel %vm5352, 1, 0
        %v5354 = vadd.s32 %v5350, %v5346
        %v5355 = vadd.s32 %v5351, %v5353
        %v5356 = vadd.s32 %v5355, %v5345
        %v5357 = vadd.s32 %v5356, %v5347
        %v5358 = vmul.u32 %v5313, %v5304
        %v5359 = vadd.s32 %v5335, %v5354
        %vm5360 = vc.u32 %v5335, %v5354
        %v5361 = vadd.s32 %v5357, 1
        %v5362 = vsel %vm5360, %v5361, %v5357
        %v5363 = vadd.s32 %v5358, %v5362
        %v5364 = vadd.s32 %v5363, 536870912
        %v5365 = vshrl.u32 %v5364, 30
        %v5366 = vshll.u32 %v5365, 30
        %v5367 = vsub.s32 %v5363, %v5366
        %vm5368 = vcmp.lt.s32.totalorder %v5367, 0
        %v5369 = vsub.s32 0, %v5367
        %v5370 = vsel %vm5368, %v5369, %v5367
        %v5371 = vclz %v5370
        %v5372 = vsub.s32 %v5371, 2
        %vm5373 = vcmp.gt.s32.totalorder 0, %v5372
        %v5374 = vsel %vm5373, 0, %v5372
        %v5375 = vsub.s32 32, %v5374
        %v5376 = vshll.u32 %v5367, %v5374
        %v5377 = vshrl.u32 %v5359, %v5375
        %v5378 = vor.u32 %v5376, %v5377
        %v5379 = vsub.s32 4294967266, %v5374
        %v5380 = vadd.s32 %v5379, 127
        %v5381 = vshll.u32 %v5380, 23
        %v5382 = vor.u32 4788187, %v5381
        %v5383 = vand.u32 2147483647, %v5382
        %v5385 = vcvt.s32.f32 %v5378
        %v5386 = vmul.f32 %v5385, %v5383
        %v5387 = vxor.u32 %v5386, 2147483648
        %v5388 = vsel %vm5267, %v5387, %v5386
        %v5389 = vsub.s32 4, %v5365
        %v5390 = vsel %vm5267, %v5389, %v5365
        %v5391 = vsel %vm5266, %v735, %v5388
        %v5392 = vsel %vm5266, 0, %v5390
        %v5393 = vmul.f32 %v5391, %v5391
        %v5394 = vmul.f32 %v5393, -0.001358992
        %v5395 = vadd.f32 %v5394, 0.041655596
        %v5396 = vmul.f32 %v5393, %v5395
        %v5397 = vadd.f32 %v5396, -0.4999988
        %v5398 = vmul.f32 %v5393, %v5397
        %v5399 = vadd.f32 1.0, %v5398
        %v5400 = vmul.f32 %v5391, %v5391
        %v5401 = vmul.f32 %v5400, -0.00019511016
        %v5402 = vadd.f32 %v5401, 0.008332121
        %v5403 = vmul.f32 %v5400, %v5402
        %v5404 = vadd.f32 %v5403, -0.16666654
        %v5405 = vmul.f32 %v5400, %v5404
        %v5406 = vadd.f32 %v5405, 1.0
        %v5407 = vmul.f32 %v5406, %v5391
        %vm5408 = vweird.f32 %v735
        %v5409 = vadd.s32 %v5392, 3
        %v5410 = vand.u32 %v5409, 3
        %vm5411 = vcmp.lt.s32.totalorder %v5410, 2
        %vm5412 = vcmp.eq.s32.totalorder %v5410, 0
        %v5413 = vxor.u32 %v5407, 2147483648
        %v5414 = vsel %vm5412, %v5399, %v5413
        %vm5415 = vcmp.eq.s32.totalorder %v5410, 2
        %v5416 = vxor.u32 %v5399, 2147483648
        %v5417 = vsel %vm5415, %v5416, %v5407
        %v5418 = vsel %vm5411, %v5414, %v5417
        %v5419 = vsel %vm5408, nan, %v5418
        %v5420 = vand.u32 2147483647, %v736
        %vm5421 = vcmp.le.f32.partialorder %v5420, 0.7853982
        %vm5422 = vcmp.lt.s32.totalorder %v736, 0
        %v5423 = vand.u32 %v736, 2139095040
        %v5424 = vshrl.u32 %v5423, 23
        %v5425 = vsub.s32 %v5424, 127
        %v5426 = vand.u32 2147483647, %v736
        %v5427 = vand.u32 %v5426, 8388607
        %v5428 = vor.u32 %v5427, 8388608
        %v5429 = vsub.s32 0, %v5428
        %v5430 = vadd.s32 %v5425, 1
        %vm5431 = vcmp.gt.s32.totalorder %v5430, 0
        %v5432 = vsel %vm5431, %v5430, 0
        %v5433 = vshrl.u32 %v5432, 5
        %v5434 = vand.u32 %v5432, 31
        %v5435 = vsub.s32 32, %v5434
        %v5436 = vshrl.u32 683565275, %v5435
        %v5437 = vshll.u32 683565275, %v5434
        %v5438 = vshrl.u32 2475754826, %v5435
        %v5439 = vor.u32 %v5437, %v5438
        %v5440 = vshll.u32 2475754826, %v5434
        %v5441 = vshrl.u32 2131351028, %v5435
        %v5442 = vor.u32 %v5440, %v5441
        %v5443 = vshll.u32 2131351028, %v5434
        %v5444 = vshrl.u32 2102212464, %v5435
        %v5445 = vor.u32 %v5443, %v5444
        %v5446 = vshll.u32 2102212464, %v5434
        %v5447 = vshrl.u32 920167782, %v5435
        %v5448 = vor.u32 %v5446, %v5447
        %v5449 = vshll.u32 920167782, %v5434
        %v5450 = vshrl.u32 1326507024, %v5435
        %v5451 = vor.u32 %v5449, %v5450
        %vm5452 = vcmp.lt.s32.totalorder %v5433, 1
        %vm5453 = vcmp.lt.s32.totalorder %v5433, 2
        %vm5454 = vcmp.lt.s32.totalorder %v5433, 3
        %vm5455 = vcmp.lt.s32.totalorder %v5433, 4
        %v5456 = vsel %vm5452, %v5436, %v5439
        %v5457 = vsel %vm5455, %v5445, 2102212464
        %v5458 = vsel %vm5454, %v5442, %v5457
        %v5459 = vsel %vm5453, %v5456, %v5458
        %v5460 = vsel %vm5452, %v5439, %v5442
        %v5461 = vsel %vm5455, %v5448, 920167782
        %v5462 = vsel %vm5454, %v5445, %v5461
        %v5463 = vsel %vm5453, %v5460, %v5462
        %v5464 = vsel %vm5452, %v5442, %v5445
        %v5465 = vsel %vm5455, %v5451, 1326507024
        %v5466 = vsel %vm5454, %v5448, %v5465
        %v5467 = vsel %vm5453, %v5464, %v5466
        %v5468 = vshll.u32 %v5428, 8
        %v5469 = vand.u32 %v5468, 65535
        %v5470 = vshrl.u32 %v5468, 16
        %v5471 = vand.u32 %v5467, 65535
        %v5472 = vshrl.u32 %v5467, 16
        %v5473 = vmul.u32 %v5469, %v5471
        %v5474 = vmul.u32 %v5469, %v5472
        %v5475 = vmul.u32 %v5470, %v5471
        %v5476 = vmul.u32 %v5470, %v5472
        %v5477 = vshll.u32 %v5474, 16
        %v5478 = vshrl.u32 %v5474, 16
        %v5479 = vshll.u32 %v5475, 16
        %v5480 = vshrl.u32 %v5475, 16
        %vm5481 = vc.u32 %v5473, %v5477
        %v5482 = vsel %vm5481, 1, 0
        %v5483 = vadd.s32 %v5473, %v5477
        %v5484 = vadd.s32 %v5476, %v5482
        %vm5485 = vc.u32 %v5483, %v5479
        %v5486 = vsel %vm5485, 1, 0
        %v5487 = vadd.s32 %v5483, %v5479
        %v5488 = vadd.s32 %v5484, %v5486
        %v5489 = vadd.s32 %v5488, %v5478
        %v5490 = vadd.s32 %v5489, %v5480
        %v5491 = vand.u32 %v5468, 65535
        %v5492 = vshrl.u32 %v5468, 16
        %v5493 = vand.u32 %v5463, 65535
        %v5494 = vshrl.u32 %v5463, 16
        %v5495 = vmul.u32 %v5491, %v5493
        %v5496 = vmul.u32 %v5491, %v5494
        %v5497 = vmul.u32 %v5492, %v5493
        %v5498 = vmul.u32 %v5492, %v5494
        %v5499 = vshll.u32 %v5496, 16
        %v5500 = vshrl.u32 %v5496, 16
        %v5501 = vshll.u32 %v5497, 16
        %v5502 = vshrl.u32 %v5497, 16
        %vm5503 = vc.u32 %v5495, %v5499
        %v5504 = vsel %vm5503, 1, 0
        %v5505 = vadd.s32 %v5495, %v5499
        %v5506 = vadd.s32 %v5498, %v5504
        %vm5507 = vc.u32 %v5505, %v5501
        %v5508 = vsel %vm5507, 1, 0
        %v5509 = vadd.s32 %v5505, %v5501
        %v5510 = vadd.s32 %v5506, %v5508
        %v5511 = vadd.s32 %v5510, %v5500
        %v5512 = vadd.s32 %v5511, %v5502
        %v5513 = vmul.u32 %v5468, %v5459
        %v5514 = vadd.s32 %v5490, %v5509
        %vm5515 = vc.u32 %v5490, %v5509
        %v5516 = vadd.s32 %v5512, 1
        %v5517 = vsel %vm5515, %v5516, %v5512
        %v5518 = vadd.s32 %v5513, %v5517
        %v5519 = vadd.s32 %v5518, 536870912
        %v5520 = vshrl.u32 %v5519, 30
        %v5521 = vshll.u32 %v5520, 30
        %v5522 = vsub.s32 %v5518, %v5521
        %vm5523 = vcmp.lt.s32.totalorder %v5522, 0
        %v5524 = vsub.s32 0, %v5522
        %v5525 = vsel %vm5523, %v5524, %v5522
        %v5526 = vclz %v5525
        %v5527 = vsub.s32 %v5526, 2
        %vm5528 = vcmp.gt.s32.totalorder 0, %v5527
        %v5529 = vsel %vm5528, 0, %v5527
        %v5530 = vsub.s32 32, %v5529
        %v5531 = vshll.u32 %v5522, %v5529
        %v5532 = vshrl.u32 %v5514, %v5530
        %v5533 = vor.u32 %v5531, %v5532
        %v5534 = vsub.s32 4294967266, %v5529
        %v5535 = vadd.s32 %v5534, 127
        %v5536 = vshll.u32 %v5535, 23
        %v5537 = vor.u32 4788187, %v5536
        %v5538 = vand.u32 2147483647, %v5537
        %v5540 = vcvt.s32.f32 %v5533
        %v5541 = vmul.f32 %v5540, %v5538
        %v5542 = vxor.u32 %v5541, 2147483648
        %v5543 = vsel %vm5422, %v5542, %v5541
        %v5544 = vsub.s32 4, %v5520
        %v5545 = vsel %vm5422, %v5544, %v5520
        %v5546 = vsel %vm5421, %v736, %v5543
        %v5547 = vsel %vm5421, 0, %v5545
        %v5548 = vmul.f32 %v5546, %v5546
        %v5549 = vmul.f32 %v5548, -0.001358992
        %v5550 = vadd.f32 %v5549, 0.041655596
        %v5551 = vmul.f32 %v5548, %v5550
        %v5552 = vadd.f32 %v5551, -0.4999988
        %v5553 = vmul.f32 %v5548, %v5552
        %v5554 = vadd.f32 1.0, %v5553
        %v5555 = vmul.f32 %v5546, %v5546
        %v5556 = vmul.f32 %v5555, -0.00019511016
        %v5557 = vadd.f32 %v5556, 0.008332121
        %v5558 = vmul.f32 %v5555, %v5557
        %v5559 = vadd.f32 %v5558, -0.16666654
        %v5560 = vmul.f32 %v5555, %v5559
        %v5561 = vadd.f32 %v5560, 1.0
        %v5562 = vmul.f32 %v5561, %v5546
        %vm5563 = vweird.f32 %v736
        %v5564 = vadd.s32 %v5547, 3
        %v5565 = vand.u32 %v5564, 3
        %vm5566 = vcmp.lt.s32.totalorder %v5565, 2
        %vm5567 = vcmp.eq.s32.totalorder %v5565, 0
        %v5568 = vxor.u32 %v5562, 2147483648
        %v5569 = vsel %vm5567, %v5554, %v5568
        %vm5570 = vcmp.eq.s32.totalorder %v5565, 2
        %v5571 = vxor.u32 %v5554, 2147483648
        %v5572 = vsel %vm5570, %v5571, %v5562
        %v5573 = vsel %vm5566, %v5569, %v5572
        %v5574 = vsel %vm5563, nan, %v5573
        %v5575 = vand.u32 2147483647, %v737
        %vm5576 = vcmp.le.f32.partialorder %v5575, 0.7853982
        %vm5577 = vcmp.lt.s32.totalorder %v737, 0
        %v5578 = vand.u32 %v737, 2139095040
        %v5579 = vshrl.u32 %v5578, 23
        %v5580 = vsub.s32 %v5579, 127
        %v5581 = vand.u32 2147483647, %v737
        %v5582 = vand.u32 %v5581, 8388607
        %v5583 = vor.u32 %v5582, 8388608
        %v5584 = vsub.s32 0, %v5583
        %v5585 = vadd.s32 %v5580, 1
        %vm5586 = vcmp.gt.s32.totalorder %v5585, 0
        %v5587 = vsel %vm5586, %v5585, 0
        %v5588 = vshrl.u32 %v5587, 5
        %v5589 = vand.u32 %v5587, 31
        %v5590 = vsub.s32 32, %v5589
        %v5591 = vshrl.u32 683565275, %v5590
        %v5592 = vshll.u32 683565275, %v5589
        %v5593 = vshrl.u32 2475754826, %v5590
        %v5594 = vor.u32 %v5592, %v5593
        %v5595 = vshll.u32 2475754826, %v5589
        %v5596 = vshrl.u32 2131351028, %v5590
        %v5597 = vor.u32 %v5595, %v5596
        %v5598 = vshll.u32 2131351028, %v5589
        %v5599 = vshrl.u32 2102212464, %v5590
        %v5600 = vor.u32 %v5598, %v5599
        %v5601 = vshll.u32 2102212464, %v5589
        %v5602 = vshrl.u32 920167782, %v5590
        %v5603 = vor.u32 %v5601, %v5602
        %v5604 = vshll.u32 920167782, %v5589
        %v5605 = vshrl.u32 1326507024, %v5590
        %v5606 = vor.u32 %v5604, %v5605
        %vm5607 = vcmp.lt.s32.totalorder %v5588, 1
        %vm5608 = vcmp.lt.s32.totalorder %v5588, 2
        %vm5609 = vcmp.lt.s32.totalorder %v5588, 3
        %vm5610 = vcmp.lt.s32.totalorder %v5588, 4
        %v5611 = vsel %vm5607, %v5591, %v5594
        %v5612 = vsel %vm5610, %v5600, 2102212464
        %v5613 = vsel %vm5609, %v5597, %v5612
        %v5614 = vsel %vm5608, %v5611, %v5613
        %v5615 = vsel %vm5607, %v5594, %v5597
        %v5616 = vsel %vm5610, %v5603, 920167782
        %v5617 = vsel %vm5609, %v5600, %v5616
        %v5618 = vsel %vm5608, %v5615, %v5617
        %v5619 = vsel %vm5607, %v5597, %v5600
        %v5620 = vsel %vm5610, %v5606, 1326507024
        %v5621 = vsel %vm5609, %v5603, %v5620
        %v5622 = vsel %vm5608, %v5619, %v5621
        %v5623 = vshll.u32 %v5583, 8
        %v5624 = vand.u32 %v5623, 65535
        %v5625 = vshrl.u32 %v5623, 16
        %v5626 = vand.u32 %v5622, 65535
        %v5627 = vshrl.u32 %v5622, 16
        %v5628 = vmul.u32 %v5624, %v5626
        %v5629 = vmul.u32 %v5624, %v5627
        %v5630 = vmul.u32 %v5625, %v5626
        %v5631 = vmul.u32 %v5625, %v5627
        %v5632 = vshll.u32 %v5629, 16
        %v5633 = vshrl.u32 %v5629, 16
        %v5634 = vshll.u32 %v5630, 16
        %v5635 = vshrl.u32 %v5630, 16
        %vm5636 = vc.u32 %v5628, %v5632
        %v5637 = vsel %vm5636, 1, 0
        %v5638 = vadd.s32 %v5628, %v5632
        %v5639 = vadd.s32 %v5631, %v5637
        %vm5640 = vc.u32 %v5638, %v5634
        %v5641 = vsel %vm5640, 1, 0
        %v5642 = vadd.s32 %v5638, %v5634
        %v5643 = vadd.s32 %v5639, %v5641
        %v5644 = vadd.s32 %v5643, %v5633
        %v5645 = vadd.s32 %v5644, %v5635
        %v5646 = vand.u32 %v5623, 65535
        %v5647 = vshrl.u32 %v5623, 16
        %v5648 = vand.u32 %v5618, 65535
        %v5649 = vshrl.u32 %v5618, 16
        %v5650 = vmul.u32 %v5646, %v5648
        %v5651 = vmul.u32 %v5646, %v5649
        %v5652 = vmul.u32 %v5647, %v5648
        %v5653 = vmul.u32 %v5647, %v5649
        %v5654 = vshll.u32 %v5651, 16
        %v5655 = vshrl.u32 %v5651, 16
        %v5656 = vshll.u32 %v5652, 16
        %v5657 = vshrl.u32 %v5652, 16
        %vm5658 = vc.u32 %v5650, %v5654
        %v5659 = vsel %vm5658, 1, 0
        %v5660 = vadd.s32 %v5650, %v5654
        %v5661 = vadd.s32 %v5653, %v5659
        %vm5662 = vc.u32 %v5660, %v5656
        %v5663 = vsel %vm5662, 1, 0
        %v5664 = vadd.s32 %v5660, %v5656
        %v5665 = vadd.s32 %v5661, %v5663
        %v5666 = vadd.s32 %v5665, %v5655
        %v5667 = vadd.s32 %v5666, %v5657
        %v5668 = vmul.u32 %v5623, %v5614
        %v5669 = vadd.s32 %v5645, %v5664
        %vm5670 = vc.u32 %v5645, %v5664
        %v5671 = vadd.s32 %v5667, 1
        %v5672 = vsel %vm5670, %v5671, %v5667
        %v5673 = vadd.s32 %v5668, %v5672
        %v5674 = vadd.s32 %v5673, 536870912
        %v5675 = vshrl.u32 %v5674, 30
        %v5676 = vshll.u32 %v5675, 30
        %v5677 = vsub.s32 %v5673, %v5676
        %vm5678 = vcmp.lt.s32.totalorder %v5677, 0
        %v5679 = vsub.s32 0, %v5677
        %v5680 = vsel %vm5678, %v5679, %v5677
        %v5681 = vclz %v5680
        %v5682 = vsub.s32 %v5681, 2
        %vm5683 = vcmp.gt.s32.totalorder 0, %v5682
        %v5684 = vsel %vm5683, 0, %v5682
        %v5685 = vsub.s32 32, %v5684
        %v5686 = vshll.u32 %v5677, %v5684
        %v5687 = vshrl.u32 %v5669, %v5685
        %v5688 = vor.u32 %v5686, %v5687
        %v5689 = vsub.s32 4294967266, %v5684
        %v5690 = vadd.s32 %v5689, 127
        %v5691 = vshll.u32 %v5690, 23
        %v5692 = vor.u32 4788187, %v5691
        %v5693 = vand.u32 2147483647, %v5692
        %v5695 = vcvt.s32.f32 %v5688
        %v5696 = vmul.f32 %v5695, %v5693
        %v5697 = vxor.u32 %v5696, 2147483648
        %v5698 = vsel %vm5577, %v5697, %v5696
        %v5699 = vsub.s32 4, %v5675
        %v5700 = vsel %vm5577, %v5699, %v5675
        %v5701 = vsel %vm5576, %v737, %v5698
        %v5702 = vsel %vm5576, 0, %v5700
        %v5703 = vmul.f32 %v5701, %v5701
        %v5704 = vmul.f32 %v5703, -0.001358992
        %v5705 = vadd.f32 %v5704, 0.041655596
        %v5706 = vmul.f32 %v5703, %v5705
        %v5707 = vadd.f32 %v5706, -0.4999988
        %v5708 = vmul.f32 %v5703, %v5707
        %v5709 = vadd.f32 1.0, %v5708
        %v5710 = vmul.f32 %v5701, %v5701
        %v5711 = vmul.f32 %v5710, -0.00019511016
        %v5712 = vadd.f32 %v5711, 0.008332121
        %v5713 = vmul.f32 %v5710, %v5712
        %v5714 = vadd.f32 %v5713, -0.16666654
        %v5715 = vmul.f32 %v5710, %v5714
        %v5716 = vadd.f32 %v5715, 1.0
        %v5717 = vmul.f32 %v5716, %v5701
        %vm5718 = vweird.f32 %v737
        %v5719 = vadd.s32 %v5702, 3
        %v5720 = vand.u32 %v5719, 3
        %vm5721 = vcmp.lt.s32.totalorder %v5720, 2
        %vm5722 = vcmp.eq.s32.totalorder %v5720, 0
        %v5723 = vxor.u32 %v5717, 2147483648
        %v5724 = vsel %vm5722, %v5709, %v5723
        %vm5725 = vcmp.eq.s32.totalorder %v5720, 2
        %v5726 = vxor.u32 %v5709, 2147483648
        %v5727 = vsel %vm5725, %v5726, %v5717
        %v5728 = vsel %vm5721, %v5724, %v5727
        %v5729 = vsel %vm5718, nan, %v5728
        %v5730 = vand.u32 2147483647, %v738
        %vm5731 = vcmp.le.f32.partialorder %v5730, 0.7853982
        %vm5732 = vcmp.lt.s32.totalorder %v738, 0
        %v5733 = vand.u32 %v738, 2139095040
        %v5734 = vshrl.u32 %v5733, 23
        %v5735 = vsub.s32 %v5734, 127
        %v5736 = vand.u32 2147483647, %v738
        %v5737 = vand.u32 %v5736, 8388607
        %v5738 = vor.u32 %v5737, 8388608
        %v5739 = vsub.s32 0, %v5738
        %v5740 = vadd.s32 %v5735, 1
        %vm5741 = vcmp.gt.s32.totalorder %v5740, 0
        %v5742 = vsel %vm5741, %v5740, 0
        %v5743 = vshrl.u32 %v5742, 5
        %v5744 = vand.u32 %v5742, 31
        %v5745 = vsub.s32 32, %v5744
        %v5746 = vshrl.u32 683565275, %v5745
        %v5747 = vshll.u32 683565275, %v5744
        %v5748 = vshrl.u32 2475754826, %v5745
        %v5749 = vor.u32 %v5747, %v5748
        %v5750 = vshll.u32 2475754826, %v5744
        %v5751 = vshrl.u32 2131351028, %v5745
        %v5752 = vor.u32 %v5750, %v5751
        %v5753 = vshll.u32 2131351028, %v5744
        %v5754 = vshrl.u32 2102212464, %v5745
        %v5755 = vor.u32 %v5753, %v5754
        %v5756 = vshll.u32 2102212464, %v5744
        %v5757 = vshrl.u32 920167782, %v5745
        %v5758 = vor.u32 %v5756, %v5757
        %v5759 = vshll.u32 920167782, %v5744
        %v5760 = vshrl.u32 1326507024, %v5745
        %v5761 = vor.u32 %v5759, %v5760
        %vm5762 = vcmp.lt.s32.totalorder %v5743, 1
        %vm5763 = vcmp.lt.s32.totalorder %v5743, 2
        %vm5764 = vcmp.lt.s32.totalorder %v5743, 3
        %vm5765 = vcmp.lt.s32.totalorder %v5743, 4
        %v5766 = vsel %vm5762, %v5746, %v5749
        %v5767 = vsel %vm5765, %v5755, 2102212464
        %v5768 = vsel %vm5764, %v5752, %v5767
        %v5769 = vsel %vm5763, %v5766, %v5768
        %v5770 = vsel %vm5762, %v5749, %v5752
        %v5771 = vsel %vm5765, %v5758, 920167782
        %v5772 = vsel %vm5764, %v5755, %v5771
        %v5773 = vsel %vm5763, %v5770, %v5772
        %v5774 = vsel %vm5762, %v5752, %v5755
        %v5775 = vsel %vm5765, %v5761, 1326507024
        %v5776 = vsel %vm5764, %v5758, %v5775
        %v5777 = vsel %vm5763, %v5774, %v5776
        %v5778 = vshll.u32 %v5738, 8
        %v5779 = vand.u32 %v5778, 65535
        %v5780 = vshrl.u32 %v5778, 16
        %v5781 = vand.u32 %v5777, 65535
        %v5782 = vshrl.u32 %v5777, 16
        %v5783 = vmul.u32 %v5779, %v5781
        %v5784 = vmul.u32 %v5779, %v5782
        %v5785 = vmul.u32 %v5780, %v5781
        %v5786 = vmul.u32 %v5780, %v5782
        %v5787 = vshll.u32 %v5784, 16
        %v5788 = vshrl.u32 %v5784, 16
        %v5789 = vshll.u32 %v5785, 16
        %v5790 = vshrl.u32 %v5785, 16
        %vm5791 = vc.u32 %v5783, %v5787
        %v5792 = vsel %vm5791, 1, 0
        %v5793 = vadd.s32 %v5783, %v5787
        %v5794 = vadd.s32 %v5786, %v5792
        %vm5795 = vc.u32 %v5793, %v5789
        %v5796 = vsel %vm5795, 1, 0
        %v5797 = vadd.s32 %v5793, %v5789
        %v5798 = vadd.s32 %v5794, %v5796
        %v5799 = vadd.s32 %v5798, %v5788
        %v5800 = vadd.s32 %v5799, %v5790
        %v5801 = vand.u32 %v5778, 65535
        %v5802 = vshrl.u32 %v5778, 16
        %v5803 = vand.u32 %v5773, 65535
        %v5804 = vshrl.u32 %v5773, 16
        %v5805 = vmul.u32 %v5801, %v5803
        %v5806 = vmul.u32 %v5801, %v5804
        %v5807 = vmul.u32 %v5802, %v5803
        %v5808 = vmul.u32 %v5802, %v5804
        %v5809 = vshll.u32 %v5806, 16
        %v5810 = vshrl.u32 %v5806, 16
        %v5811 = vshll.u32 %v5807, 16
        %v5812 = vshrl.u32 %v5807, 16
        %vm5813 = vc.u32 %v5805, %v5809
        %v5814 = vsel %vm5813, 1, 0
        %v5815 = vadd.s32 %v5805, %v5809
        %v5816 = vadd.s32 %v5808, %v5814
        %vm5817 = vc.u32 %v5815, %v5811
        %v5818 = vsel %vm5817, 1, 0
        %v5819 = vadd.s32 %v5815, %v5811
        %v5820 = vadd.s32 %v5816, %v5818
        %v5821 = vadd.s32 %v5820, %v5810
        %v5822 = vadd.s32 %v5821, %v5812
        %v5823 = vmul.u32 %v5778, %v5769
        %v5824 = vadd.s32 %v5800, %v5819
        %vm5825 = vc.u32 %v5800, %v5819
        %v5826 = vadd.s32 %v5822, 1
        %v5827 = vsel %vm5825, %v5826, %v5822
        %v5828 = vadd.s32 %v5823, %v5827
        %v5829 = vadd.s32 %v5828, 536870912
        %v5830 = vshrl.u32 %v5829, 30
        %v5831 = vshll.u32 %v5830, 30
        %v5832 = vsub.s32 %v5828, %v5831
        %vm5833 = vcmp.lt.s32.totalorder %v5832, 0
        %v5834 = vsub.s32 0, %v5832
        %v5835 = vsel %vm5833, %v5834, %v5832
        %v5836 = vclz %v5835
        %v5837 = vsub.s32 %v5836, 2
        %vm5838 = vcmp.gt.s32.totalorder 0, %v5837
        %v5839 = vsel %vm5838, 0, %v5837
        %v5840 = vsub.s32 32, %v5839
        %v5841 = vshll.u32 %v5832, %v5839
        %v5842 = vshrl.u32 %v5824, %v5840
        %v5843 = vor.u32 %v5841, %v5842
        %v5844 = vsub.s32 4294967266, %v5839
        %v5845 = vadd.s32 %v5844, 127
        %v5846 = vshll.u32 %v5845, 23
        %v5847 = vor.u32 4788187, %v5846
        %v5848 = vand.u32 2147483647, %v5847
        %v5850 = vcvt.s32.f32 %v5843
        %v5851 = vmul.f32 %v5850, %v5848
        %v5852 = vxor.u32 %v5851, 2147483648
        %v5853 = vsel %vm5732, %v5852, %v5851
        %v5854 = vsub.s32 4, %v5830
        %v5855 = vsel %vm5732, %v5854, %v5830
        %v5856 = vsel %vm5731, %v738, %v5853
        %v5857 = vsel %vm5731, 0, %v5855
        %v5858 = vmul.f32 %v5856, %v5856
        %v5859 = vmul.f32 %v5858, -0.001358992
        %v5860 = vadd.f32 %v5859, 0.041655596
        %v5861 = vmul.f32 %v5858, %v5860
        %v5862 = vadd.f32 %v5861, -0.4999988
        %v5863 = vmul.f32 %v5858, %v5862
        %v5864 = vadd.f32 1.0, %v5863
        %v5865 = vmul.f32 %v5856, %v5856
        %v5866 = vmul.f32 %v5865, -0.00019511016
        %v5867 = vadd.f32 %v5866, 0.008332121
        %v5868 = vmul.f32 %v5865, %v5867
        %v5869 = vadd.f32 %v5868, -0.16666654
        %v5870 = vmul.f32 %v5865, %v5869
        %v5871 = vadd.f32 %v5870, 1.0
        %v5872 = vmul.f32 %v5871, %v5856
        %vm5873 = vweird.f32 %v738
        %v5874 = vadd.s32 %v5857, 3
        %v5875 = vand.u32 %v5874, 3
        %vm5876 = vcmp.lt.s32.totalorder %v5875, 2
        %vm5877 = vcmp.eq.s32.totalorder %v5875, 0
        %v5878 = vxor.u32 %v5872, 2147483648
        %v5879 = vsel %vm5877, %v5864, %v5878
        %vm5880 = vcmp.eq.s32.totalorder %v5875, 2
        %v5881 = vxor.u32 %v5864, 2147483648
        %v5882 = vsel %vm5880, %v5881, %v5872
        %v5883 = vsel %vm5876, %v5879, %v5882
        %v5884 = vsel %vm5873, nan, %v5883
        %v5885 = vand.u32 2147483647, %v739
        %vm5886 = vcmp.le.f32.partialorder %v5885, 0.7853982
        %vm5887 = vcmp.lt.s32.totalorder %v739, 0
        %v5888 = vand.u32 %v739, 2139095040
        %v5889 = vshrl.u32 %v5888, 23
        %v5890 = vsub.s32 %v5889, 127
        %v5891 = vand.u32 2147483647, %v739
        %v5892 = vand.u32 %v5891, 8388607
        %v5893 = vor.u32 %v5892, 8388608
        %v5894 = vsub.s32 0, %v5893
        %v5895 = vadd.s32 %v5890, 1
        %vm5896 = vcmp.gt.s32.totalorder %v5895, 0
        %v5897 = vsel %vm5896, %v5895, 0
        %v5898 = vshrl.u32 %v5897, 5
        %v5899 = vand.u32 %v5897, 31
        %v5900 = vsub.s32 32, %v5899
        %v5901 = vshrl.u32 683565275, %v5900
        %v5902 = vshll.u32 683565275, %v5899
        %v5903 = vshrl.u32 2475754826, %v5900
        %v5904 = vor.u32 %v5902, %v5903
        %v5905 = vshll.u32 2475754826, %v5899
        %v5906 = vshrl.u32 2131351028, %v5900
        %v5907 = vor.u32 %v5905, %v5906
        %v5908 = vshll.u32 2131351028, %v5899
        %v5909 = vshrl.u32 2102212464, %v5900
        %v5910 = vor.u32 %v5908, %v5909
        %v5911 = vshll.u32 2102212464, %v5899
        %v5912 = vshrl.u32 920167782, %v5900
        %v5913 = vor.u32 %v5911, %v5912
        %v5914 = vshll.u32 920167782, %v5899
        %v5915 = vshrl.u32 1326507024, %v5900
        %v5916 = vor.u32 %v5914, %v5915
        %vm5917 = vcmp.lt.s32.totalorder %v5898, 1
        %vm5918 = vcmp.lt.s32.totalorder %v5898, 2
        %vm5919 = vcmp.lt.s32.totalorder %v5898, 3
        %vm5920 = vcmp.lt.s32.totalorder %v5898, 4
        %v5921 = vsel %vm5917, %v5901, %v5904
        %v5922 = vsel %vm5920, %v5910, 2102212464
        %v5923 = vsel %vm5919, %v5907, %v5922
        %v5924 = vsel %vm5918, %v5921, %v5923
        %v5925 = vsel %vm5917, %v5904, %v5907
        %v5926 = vsel %vm5920, %v5913, 920167782
        %v5927 = vsel %vm5919, %v5910, %v5926
        %v5928 = vsel %vm5918, %v5925, %v5927
        %v5929 = vsel %vm5917, %v5907, %v5910
        %v5930 = vsel %vm5920, %v5916, 1326507024
        %v5931 = vsel %vm5919, %v5913, %v5930
        %v5932 = vsel %vm5918, %v5929, %v5931
        %v5933 = vshll.u32 %v5893, 8
        %v5934 = vand.u32 %v5933, 65535
        %v5935 = vshrl.u32 %v5933, 16
        %v5936 = vand.u32 %v5932, 65535
        %v5937 = vshrl.u32 %v5932, 16
        %v5938 = vmul.u32 %v5934, %v5936
        %v5939 = vmul.u32 %v5934, %v5937
        %v5940 = vmul.u32 %v5935, %v5936
        %v5941 = vmul.u32 %v5935, %v5937
        %v5942 = vshll.u32 %v5939, 16
        %v5943 = vshrl.u32 %v5939, 16
        %v5944 = vshll.u32 %v5940, 16
        %v5945 = vshrl.u32 %v5940, 16
        %vm5946 = vc.u32 %v5938, %v5942
        %v5947 = vsel %vm5946, 1, 0
        %v5948 = vadd.s32 %v5938, %v5942
        %v5949 = vadd.s32 %v5941, %v5947
        %vm5950 = vc.u32 %v5948, %v5944
        %v5951 = vsel %vm5950, 1, 0
        %v5952 = vadd.s32 %v5948, %v5944
        %v5953 = vadd.s32 %v5949, %v5951
        %v5954 = vadd.s32 %v5953, %v5943
        %v5955 = vadd.s32 %v5954, %v5945
        %v5956 = vand.u32 %v5933, 65535
        %v5957 = vshrl.u32 %v5933, 16
        %v5958 = vand.u32 %v5928, 65535
        %v5959 = vshrl.u32 %v5928, 16
        %v5960 = vmul.u32 %v5956, %v5958
        %v5961 = vmul.u32 %v5956, %v5959
        %v5962 = vmul.u32 %v5957, %v5958
        %v5963 = vmul.u32 %v5957, %v5959
        %v5964 = vshll.u32 %v5961, 16
        %v5965 = vshrl.u32 %v5961, 16
        %v5966 = vshll.u32 %v5962, 16
        %v5967 = vshrl.u32 %v5962, 16
        %vm5968 = vc.u32 %v5960, %v5964
        %v5969 = vsel %vm5968, 1, 0
        %v5970 = vadd.s32 %v5960, %v5964
        %v5971 = vadd.s32 %v5963, %v5969
        %vm5972 = vc.u32 %v5970, %v5966
        %v5973 = vsel %vm5972, 1, 0
        %v5974 = vadd.s32 %v5970, %v5966
        %v5975 = vadd.s32 %v5971, %v5973
        %v5976 = vadd.s32 %v5975, %v5965
        %v5977 = vadd.s32 %v5976, %v5967
        %v5978 = vmul.u32 %v5933, %v5924
        %v5979 = vadd.s32 %v5955, %v5974
        %vm5980 = vc.u32 %v5955, %v5974
        %v5981 = vadd.s32 %v5977, 1
        %v5982 = vsel %vm5980, %v5981, %v5977
        %v5983 = vadd.s32 %v5978, %v5982
        %v5984 = vadd.s32 %v5983, 536870912
        %v5985 = vshrl.u32 %v5984, 30
        %v5986 = vshll.u32 %v5985, 30
        %v5987 = vsub.s32 %v5983, %v5986
        %vm5988 = vcmp.lt.s32.totalorder %v5987, 0
        %v5989 = vsub.s32 0, %v5987
        %v5990 = vsel %vm5988, %v5989, %v5987
        %v5991 = vclz %v5990
        %v5992 = vsub.s32 %v5991, 2
        %vm5993 = vcmp.gt.s32.totalorder 0, %v5992
        %v5994 = vsel %vm5993, 0, %v5992
        %v5995 = vsub.s32 32, %v5994
        %v5996 = vshll.u32 %v5987, %v5994
        %v5997 = vshrl.u32 %v5979, %v5995
        %v5998 = vor.u32 %v5996, %v5997
        %v5999 = vsub.s32 4294967266, %v5994
        %v6000 = vadd.s32 %v5999, 127
        %v6001 = vshll.u32 %v6000, 23
        %v6002 = vor.u32 4788187, %v6001
        %v6003 = vand.u32 2147483647, %v6002
        %v6005 = vcvt.s32.f32 %v5998
        %v6006 = vmul.f32 %v6005, %v6003
        %v6007 = vxor.u32 %v6006, 2147483648
        %v6008 = vsel %vm5887, %v6007, %v6006
        %v6009 = vsub.s32 4, %v5985
        %v6010 = vsel %vm5887, %v6009, %v5985
        %v6011 = vsel %vm5886, %v739, %v6008
        %v6012 = vsel %vm5886, 0, %v6010
        %v6013 = vmul.f32 %v6011, %v6011
        %v6014 = vmul.f32 %v6013, -0.001358992
        %v6015 = vadd.f32 %v6014, 0.041655596
        %v6016 = vmul.f32 %v6013, %v6015
        %v6017 = vadd.f32 %v6016, -0.4999988
        %v6018 = vmul.f32 %v6013, %v6017
        %v6019 = vadd.f32 1.0, %v6018
        %v6020 = vmul.f32 %v6011, %v6011
        %v6021 = vmul.f32 %v6020, -0.00019511016
        %v6022 = vadd.f32 %v6021, 0.008332121
        %v6023 = vmul.f32 %v6020, %v6022
        %v6024 = vadd.f32 %v6023, -0.16666654
        %v6025 = vmul.f32 %v6020, %v6024
        %v6026 = vadd.f32 %v6025, 1.0
        %v6027 = vmul.f32 %v6026, %v6011
        %vm6028 = vweird.f32 %v739
        %v6029 = vadd.s32 %v6012, 3
        %v6030 = vand.u32 %v6029, 3
        %vm6031 = vcmp.lt.s32.totalorder %v6030, 2
        %vm6032 = vcmp.eq.s32.totalorder %v6030, 0
        %v6033 = vxor.u32 %v6027, 2147483648
        %v6034 = vsel %vm6032, %v6019, %v6033
        %vm6035 = vcmp.eq.s32.totalorder %v6030, 2
        %v6036 = vxor.u32 %v6019, 2147483648
        %v6037 = vsel %vm6035, %v6036, %v6027
        %v6038 = vsel %vm6031, %v6034, %v6037
        %v6039 = vsel %vm6028, nan, %v6038
        %v6040 = vand.u32 2147483647, %v740
        %vm6041 = vcmp.le.f32.partialorder %v6040, 0.7853982
        %vm6042 = vcmp.lt.s32.totalorder %v740, 0
        %v6043 = vand.u32 %v740, 2139095040
        %v6044 = vshrl.u32 %v6043, 23
        %v6045 = vsub.s32 %v6044, 127
        %v6046 = vand.u32 2147483647, %v740
        %v6047 = vand.u32 %v6046, 8388607
        %v6048 = vor.u32 %v6047, 8388608
        %v6049 = vsub.s32 0, %v6048
        %v6050 = vadd.s32 %v6045, 1
        %vm6051 = vcmp.gt.s32.totalorder %v6050, 0
        %v6052 = vsel %vm6051, %v6050, 0
        %v6053 = vshrl.u32 %v6052, 5
        %v6054 = vand.u32 %v6052, 31
        %v6055 = vsub.s32 32, %v6054
        %v6056 = vshrl.u32 683565275, %v6055
        %v6057 = vshll.u32 683565275, %v6054
        %v6058 = vshrl.u32 2475754826, %v6055
        %v6059 = vor.u32 %v6057, %v6058
        %v6060 = vshll.u32 2475754826, %v6054
        %v6061 = vshrl.u32 2131351028, %v6055
        %v6062 = vor.u32 %v6060, %v6061
        %v6063 = vshll.u32 2131351028, %v6054
        %v6064 = vshrl.u32 2102212464, %v6055
        %v6065 = vor.u32 %v6063, %v6064
        %v6066 = vshll.u32 2102212464, %v6054
        %v6067 = vshrl.u32 920167782, %v6055
        %v6068 = vor.u32 %v6066, %v6067
        %v6069 = vshll.u32 920167782, %v6054
        %v6070 = vshrl.u32 1326507024, %v6055
        %v6071 = vor.u32 %v6069, %v6070
        %vm6072 = vcmp.lt.s32.totalorder %v6053, 1
        %vm6073 = vcmp.lt.s32.totalorder %v6053, 2
        %vm6074 = vcmp.lt.s32.totalorder %v6053, 3
        %vm6075 = vcmp.lt.s32.totalorder %v6053, 4
        %v6076 = vsel %vm6072, %v6056, %v6059
        %v6077 = vsel %vm6075, %v6065, 2102212464
        %v6078 = vsel %vm6074, %v6062, %v6077
        %v6079 = vsel %vm6073, %v6076, %v6078
        %v6080 = vsel %vm6072, %v6059, %v6062
        %v6081 = vsel %vm6075, %v6068, 920167782
        %v6082 = vsel %vm6074, %v6065, %v6081
        %v6083 = vsel %vm6073, %v6080, %v6082
        %v6084 = vsel %vm6072, %v6062, %v6065
        %v6085 = vsel %vm6075, %v6071, 1326507024
        %v6086 = vsel %vm6074, %v6068, %v6085
        %v6087 = vsel %vm6073, %v6084, %v6086
        %v6088 = vshll.u32 %v6048, 8
        %v6089 = vand.u32 %v6088, 65535
        %v6090 = vshrl.u32 %v6088, 16
        %v6091 = vand.u32 %v6087, 65535
        %v6092 = vshrl.u32 %v6087, 16
        %v6093 = vmul.u32 %v6089, %v6091
        %v6094 = vmul.u32 %v6089, %v6092
        %v6095 = vmul.u32 %v6090, %v6091
        %v6096 = vmul.u32 %v6090, %v6092
        %v6097 = vshll.u32 %v6094, 16
        %v6098 = vshrl.u32 %v6094, 16
        %v6099 = vshll.u32 %v6095, 16
        %v6100 = vshrl.u32 %v6095, 16
        %vm6101 = vc.u32 %v6093, %v6097
        %v6102 = vsel %vm6101, 1, 0
        %v6103 = vadd.s32 %v6093, %v6097
        %v6104 = vadd.s32 %v6096, %v6102
        %vm6105 = vc.u32 %v6103, %v6099
        %v6106 = vsel %vm6105, 1, 0
        %v6107 = vadd.s32 %v6103, %v6099
        %v6108 = vadd.s32 %v6104, %v6106
        %v6109 = vadd.s32 %v6108, %v6098
        %v6110 = vadd.s32 %v6109, %v6100
        %v6111 = vand.u32 %v6088, 65535
        %v6112 = vshrl.u32 %v6088, 16
        %v6113 = vand.u32 %v6083, 65535
        %v6114 = vshrl.u32 %v6083, 16
        %v6115 = vmul.u32 %v6111, %v6113
        %v6116 = vmul.u32 %v6111, %v6114
        %v6117 = vmul.u32 %v6112, %v6113
        %v6118 = vmul.u32 %v6112, %v6114
        %v6119 = vshll.u32 %v6116, 16
        %v6120 = vshrl.u32 %v6116, 16
        %v6121 = vshll.u32 %v6117, 16
        %v6122 = vshrl.u32 %v6117, 16
        %vm6123 = vc.u32 %v6115, %v6119
        %v6124 = vsel %vm6123, 1, 0
        %v6125 = vadd.s32 %v6115, %v6119
        %v6126 = vadd.s32 %v6118, %v6124
        %vm6127 = vc.u32 %v6125, %v6121
        %v6128 = vsel %vm6127, 1, 0
        %v6129 = vadd.s32 %v6125, %v6121
        %v6130 = vadd.s32 %v6126, %v6128
        %v6131 = vadd.s32 %v6130, %v6120
        %v6132 = vadd.s32 %v6131, %v6122
        %v6133 = vmul.u32 %v6088, %v6079
        %v6134 = vadd.s32 %v6110, %v6129
        %vm6135 = vc.u32 %v6110, %v6129
        %v6136 = vadd.s32 %v6132, 1
        %v6137 = vsel %vm6135, %v6136, %v6132
        %v6138 = vadd.s32 %v6133, %v6137
        %v6139 = vadd.s32 %v6138, 536870912
        %v6140 = vshrl.u32 %v6139, 30
        %v6141 = vshll.u32 %v6140, 30
        %v6142 = vsub.s32 %v6138, %v6141
        %vm6143 = vcmp.lt.s32.totalorder %v6142, 0
        %v6144 = vsub.s32 0, %v6142
        %v6145 = vsel %vm6143, %v6144, %v6142
        %v6146 = vclz %v6145
        %v6147 = vsub.s32 %v6146, 2
        %vm6148 = vcmp.gt.s32.totalorder 0, %v6147
        %v6149 = vsel %vm6148, 0, %v6147
        %v6150 = vsub.s32 32, %v6149
        %v6151 = vshll.u32 %v6142, %v6149
        %v6152 = vshrl.u32 %v6134, %v6150
        %v6153 = vor.u32 %v6151, %v6152
        %v6154 = vsub.s32 4294967266, %v6149
        %v6155 = vadd.s32 %v6154, 127
        %v6156 = vshll.u32 %v6155, 23
        %v6157 = vor.u32 4788187, %v6156
        %v6158 = vand.u32 2147483647, %v6157
        %v6160 = vcvt.s32.f32 %v6153
        %v6161 = vmul.f32 %v6160, %v6158
        %v6162 = vxor.u32 %v6161, 2147483648
        %v6163 = vsel %vm6042, %v6162, %v6161
        %v6164 = vsub.s32 4, %v6140
        %v6165 = vsel %vm6042, %v6164, %v6140
        %v6166 = vsel %vm6041, %v740, %v6163
        %v6167 = vsel %vm6041, 0, %v6165
        %v6168 = vmul.f32 %v6166, %v6166
        %v6169 = vmul.f32 %v6168, -0.001358992
        %v6170 = vadd.f32 %v6169, 0.041655596
        %v6171 = vmul.f32 %v6168, %v6170
        %v6172 = vadd.f32 %v6171, -0.4999988
        %v6173 = vmul.f32 %v6168, %v6172
        %v6174 = vadd.f32 1.0, %v6173
        %v6175 = vmul.f32 %v6166, %v6166
        %v6176 = vmul.f32 %v6175, -0.00019511016
        %v6177 = vadd.f32 %v6176, 0.008332121
        %v6178 = vmul.f32 %v6175, %v6177
        %v6179 = vadd.f32 %v6178, -0.16666654
        %v6180 = vmul.f32 %v6175, %v6179
        %v6181 = vadd.f32 %v6180, 1.0
        %v6182 = vmul.f32 %v6181, %v6166
        %vm6183 = vweird.f32 %v740
        %v6184 = vadd.s32 %v6167, 3
        %v6185 = vand.u32 %v6184, 3
        %vm6186 = vcmp.lt.s32.totalorder %v6185, 2
        %vm6187 = vcmp.eq.s32.totalorder %v6185, 0
        %v6188 = vxor.u32 %v6182, 2147483648
        %v6189 = vsel %vm6187, %v6174, %v6188
        %vm6190 = vcmp.eq.s32.totalorder %v6185, 2
        %v6191 = vxor.u32 %v6174, 2147483648
        %v6192 = vsel %vm6190, %v6191, %v6182
        %v6193 = vsel %vm6186, %v6189, %v6192
        %v6194 = vsel %vm6183, nan, %v6193
        %v6195 = vand.u32 2147483647, %v741
        %vm6196 = vcmp.le.f32.partialorder %v6195, 0.7853982
        %vm6197 = vcmp.lt.s32.totalorder %v741, 0
        %v6198 = vand.u32 %v741, 2139095040
        %v6199 = vshrl.u32 %v6198, 23
        %v6200 = vsub.s32 %v6199, 127
        %v6201 = vand.u32 2147483647, %v741
        %v6202 = vand.u32 %v6201, 8388607
        %v6203 = vor.u32 %v6202, 8388608
        %v6204 = vsub.s32 0, %v6203
        %v6205 = vadd.s32 %v6200, 1
        %vm6206 = vcmp.gt.s32.totalorder %v6205, 0
        %v6207 = vsel %vm6206, %v6205, 0
        %v6208 = vshrl.u32 %v6207, 5
        %v6209 = vand.u32 %v6207, 31
        %v6210 = vsub.s32 32, %v6209
        %v6211 = vshrl.u32 683565275, %v6210
        %v6212 = vshll.u32 683565275, %v6209
        %v6213 = vshrl.u32 2475754826, %v6210
        %v6214 = vor.u32 %v6212, %v6213
        %v6215 = vshll.u32 2475754826, %v6209
        %v6216 = vshrl.u32 2131351028, %v6210
        %v6217 = vor.u32 %v6215, %v6216
        %v6218 = vshll.u32 2131351028, %v6209
        %v6219 = vshrl.u32 2102212464, %v6210
        %v6220 = vor.u32 %v6218, %v6219
        %v6221 = vshll.u32 2102212464, %v6209
        %v6222 = vshrl.u32 920167782, %v6210
        %v6223 = vor.u32 %v6221, %v6222
        %v6224 = vshll.u32 920167782, %v6209
        %v6225 = vshrl.u32 1326507024, %v6210
        %v6226 = vor.u32 %v6224, %v6225
        %vm6227 = vcmp.lt.s32.totalorder %v6208, 1
        %vm6228 = vcmp.lt.s32.totalorder %v6208, 2
        %vm6229 = vcmp.lt.s32.totalorder %v6208, 3
        %vm6230 = vcmp.lt.s32.totalorder %v6208, 4
        %v6231 = vsel %vm6227, %v6211, %v6214
        %v6232 = vsel %vm6230, %v6220, 2102212464
        %v6233 = vsel %vm6229, %v6217, %v6232
        %v6234 = vsel %vm6228, %v6231, %v6233
        %v6235 = vsel %vm6227, %v6214, %v6217
        %v6236 = vsel %vm6230, %v6223, 920167782
        %v6237 = vsel %vm6229, %v6220, %v6236
        %v6238 = vsel %vm6228, %v6235, %v6237
        %v6239 = vsel %vm6227, %v6217, %v6220
        %v6240 = vsel %vm6230, %v6226, 1326507024
        %v6241 = vsel %vm6229, %v6223, %v6240
        %v6242 = vsel %vm6228, %v6239, %v6241
        %v6243 = vshll.u32 %v6203, 8
        %v6244 = vand.u32 %v6243, 65535
        %v6245 = vshrl.u32 %v6243, 16
        %v6246 = vand.u32 %v6242, 65535
        %v6247 = vshrl.u32 %v6242, 16
        %v6248 = vmul.u32 %v6244, %v6246
        %v6249 = vmul.u32 %v6244, %v6247
        %v6250 = vmul.u32 %v6245, %v6246
        %v6251 = vmul.u32 %v6245, %v6247
        %v6252 = vshll.u32 %v6249, 16
        %v6253 = vshrl.u32 %v6249, 16
        %v6254 = vshll.u32 %v6250, 16
        %v6255 = vshrl.u32 %v6250, 16
        %vm6256 = vc.u32 %v6248, %v6252
        %v6257 = vsel %vm6256, 1, 0
        %v6258 = vadd.s32 %v6248, %v6252
        %v6259 = vadd.s32 %v6251, %v6257
        %vm6260 = vc.u32 %v6258, %v6254
        %v6261 = vsel %vm6260, 1, 0
        %v6262 = vadd.s32 %v6258, %v6254
        %v6263 = vadd.s32 %v6259, %v6261
        %v6264 = vadd.s32 %v6263, %v6253
        %v6265 = vadd.s32 %v6264, %v6255
        %v6266 = vand.u32 %v6243, 65535
        %v6267 = vshrl.u32 %v6243, 16
        %v6268 = vand.u32 %v6238, 65535
        %v6269 = vshrl.u32 %v6238, 16
        %v6270 = vmul.u32 %v6266, %v6268
        %v6271 = vmul.u32 %v6266, %v6269
        %v6272 = vmul.u32 %v6267, %v6268
        %v6273 = vmul.u32 %v6267, %v6269
        %v6274 = vshll.u32 %v6271, 16
        %v6275 = vshrl.u32 %v6271, 16
        %v6276 = vshll.u32 %v6272, 16
        %v6277 = vshrl.u32 %v6272, 16
        %vm6278 = vc.u32 %v6270, %v6274
        %v6279 = vsel %vm6278, 1, 0
        %v6280 = vadd.s32 %v6270, %v6274
        %v6281 = vadd.s32 %v6273, %v6279
        %vm6282 = vc.u32 %v6280, %v6276
        %v6283 = vsel %vm6282, 1, 0
        %v6284 = vadd.s32 %v6280, %v6276
        %v6285 = vadd.s32 %v6281, %v6283
        %v6286 = vadd.s32 %v6285, %v6275
        %v6287 = vadd.s32 %v6286, %v6277
        %v6288 = vmul.u32 %v6243, %v6234
        %v6289 = vadd.s32 %v6265, %v6284
        %vm6290 = vc.u32 %v6265, %v6284
        %v6291 = vadd.s32 %v6287, 1
        %v6292 = vsel %vm6290, %v6291, %v6287
        %v6293 = vadd.s32 %v6288, %v6292
        %v6294 = vadd.s32 %v6293, 536870912
        %v6295 = vshrl.u32 %v6294, 30
        %v6296 = vshll.u32 %v6295, 30
        %v6297 = vsub.s32 %v6293, %v6296
        %vm6298 = vcmp.lt.s32.totalorder %v6297, 0
        %v6299 = vsub.s32 0, %v6297
        %v6300 = vsel %vm6298, %v6299, %v6297
        %v6301 = vclz %v6300
        %v6302 = vsub.s32 %v6301, 2
        %vm6303 = vcmp.gt.s32.totalorder 0, %v6302
        %v6304 = vsel %vm6303, 0, %v6302
        %v6305 = vsub.s32 32, %v6304
        %v6306 = vshll.u32 %v6297, %v6304
        %v6307 = vshrl.u32 %v6289, %v6305
        %v6308 = vor.u32 %v6306, %v6307
        %v6309 = vsub.s32 4294967266, %v6304
        %v6310 = vadd.s32 %v6309, 127
        %v6311 = vshll.u32 %v6310, 23
        %v6312 = vor.u32 4788187, %v6311
        %v6313 = vand.u32 2147483647, %v6312
        %v6315 = vcvt.s32.f32 %v6308
        %v6316 = vmul.f32 %v6315, %v6313
        %v6317 = vxor.u32 %v6316, 2147483648
        %v6318 = vsel %vm6197, %v6317, %v6316
        %v6319 = vsub.s32 4, %v6295
        %v6320 = vsel %vm6197, %v6319, %v6295
        %v6321 = vsel %vm6196, %v741, %v6318
        %v6322 = vsel %vm6196, 0, %v6320
        %v6323 = vmul.f32 %v6321, %v6321
        %v6324 = vmul.f32 %v6323, -0.001358992
        %v6325 = vadd.f32 %v6324, 0.041655596
        %v6326 = vmul.f32 %v6323, %v6325
        %v6327 = vadd.f32 %v6326, -0.4999988
        %v6328 = vmul.f32 %v6323, %v6327
        %v6329 = vadd.f32 1.0, %v6328
        %v6330 = vmul.f32 %v6321, %v6321
        %v6331 = vmul.f32 %v6330, -0.00019511016
        %v6332 = vadd.f32 %v6331, 0.008332121
        %v6333 = vmul.f32 %v6330, %v6332
        %v6334 = vadd.f32 %v6333, -0.16666654
        %v6335 = vmul.f32 %v6330, %v6334
        %v6336 = vadd.f32 %v6335, 1.0
        %v6337 = vmul.f32 %v6336, %v6321
        %vm6338 = vweird.f32 %v741
        %v6339 = vadd.s32 %v6322, 3
        %v6340 = vand.u32 %v6339, 3
        %vm6341 = vcmp.lt.s32.totalorder %v6340, 2
        %vm6342 = vcmp.eq.s32.totalorder %v6340, 0
        %v6343 = vxor.u32 %v6337, 2147483648
        %v6344 = vsel %vm6342, %v6329, %v6343
        %vm6345 = vcmp.eq.s32.totalorder %v6340, 2
        %v6346 = vxor.u32 %v6329, 2147483648
        %v6347 = vsel %vm6345, %v6346, %v6337
        %v6348 = vsel %vm6341, %v6344, %v6347
        %v6349 = vsel %vm6338, nan, %v6348
        %v6350 = vand.u32 2147483647, %v742
        %vm6351 = vcmp.le.f32.partialorder %v6350, 0.7853982
        %vm6352 = vcmp.lt.s32.totalorder %v742, 0
        %v6353 = vand.u32 %v742, 2139095040
        %v6354 = vshrl.u32 %v6353, 23
        %v6355 = vsub.s32 %v6354, 127
        %v6356 = vand.u32 2147483647, %v742
        %v6357 = vand.u32 %v6356, 8388607
        %v6358 = vor.u32 %v6357, 8388608
        %v6359 = vsub.s32 0, %v6358
        %v6360 = vadd.s32 %v6355, 1
        %vm6361 = vcmp.gt.s32.totalorder %v6360, 0
        %v6362 = vsel %vm6361, %v6360, 0
        %v6363 = vshrl.u32 %v6362, 5
        %v6364 = vand.u32 %v6362, 31
        %v6365 = vsub.s32 32, %v6364
        %v6366 = vshrl.u32 683565275, %v6365
        %v6367 = vshll.u32 683565275, %v6364
        %v6368 = vshrl.u32 2475754826, %v6365
        %v6369 = vor.u32 %v6367, %v6368
        %v6370 = vshll.u32 2475754826, %v6364
        %v6371 = vshrl.u32 2131351028, %v6365
        %v6372 = vor.u32 %v6370, %v6371
        %v6373 = vshll.u32 2131351028, %v6364
        %v6374 = vshrl.u32 2102212464, %v6365
        %v6375 = vor.u32 %v6373, %v6374
        %v6376 = vshll.u32 2102212464, %v6364
        %v6377 = vshrl.u32 920167782, %v6365
        %v6378 = vor.u32 %v6376, %v6377
        %v6379 = vshll.u32 920167782, %v6364
        %v6380 = vshrl.u32 1326507024, %v6365
        %v6381 = vor.u32 %v6379, %v6380
        %vm6382 = vcmp.lt.s32.totalorder %v6363, 1
        %vm6383 = vcmp.lt.s32.totalorder %v6363, 2
        %vm6384 = vcmp.lt.s32.totalorder %v6363, 3
        %vm6385 = vcmp.lt.s32.totalorder %v6363, 4
        %v6386 = vsel %vm6382, %v6366, %v6369
        %v6387 = vsel %vm6385, %v6375, 2102212464
        %v6388 = vsel %vm6384, %v6372, %v6387
        %v6389 = vsel %vm6383, %v6386, %v6388
        %v6390 = vsel %vm6382, %v6369, %v6372
        %v6391 = vsel %vm6385, %v6378, 920167782
        %v6392 = vsel %vm6384, %v6375, %v6391
        %v6393 = vsel %vm6383, %v6390, %v6392
        %v6394 = vsel %vm6382, %v6372, %v6375
        %v6395 = vsel %vm6385, %v6381, 1326507024
        %v6396 = vsel %vm6384, %v6378, %v6395
        %v6397 = vsel %vm6383, %v6394, %v6396
        %v6398 = vshll.u32 %v6358, 8
        %v6399 = vand.u32 %v6398, 65535
        %v6400 = vshrl.u32 %v6398, 16
        %v6401 = vand.u32 %v6397, 65535
        %v6402 = vshrl.u32 %v6397, 16
        %v6403 = vmul.u32 %v6399, %v6401
        %v6404 = vmul.u32 %v6399, %v6402
        %v6405 = vmul.u32 %v6400, %v6401
        %v6406 = vmul.u32 %v6400, %v6402
        %v6407 = vshll.u32 %v6404, 16
        %v6408 = vshrl.u32 %v6404, 16
        %v6409 = vshll.u32 %v6405, 16
        %v6410 = vshrl.u32 %v6405, 16
        %vm6411 = vc.u32 %v6403, %v6407
        %v6412 = vsel %vm6411, 1, 0
        %v6413 = vadd.s32 %v6403, %v6407
        %v6414 = vadd.s32 %v6406, %v6412
        %vm6415 = vc.u32 %v6413, %v6409
        %v6416 = vsel %vm6415, 1, 0
        %v6417 = vadd.s32 %v6413, %v6409
        %v6418 = vadd.s32 %v6414, %v6416
        %v6419 = vadd.s32 %v6418, %v6408
        %v6420 = vadd.s32 %v6419, %v6410
        %v6421 = vand.u32 %v6398, 65535
        %v6422 = vshrl.u32 %v6398, 16
        %v6423 = vand.u32 %v6393, 65535
        %v6424 = vshrl.u32 %v6393, 16
        %v6425 = vmul.u32 %v6421, %v6423
        %v6426 = vmul.u32 %v6421, %v6424
        %v6427 = vmul.u32 %v6422, %v6423
        %v6428 = vmul.u32 %v6422, %v6424
        %v6429 = vshll.u32 %v6426, 16
        %v6430 = vshrl.u32 %v6426, 16
        %v6431 = vshll.u32 %v6427, 16
        %v6432 = vshrl.u32 %v6427, 16
        %vm6433 = vc.u32 %v6425, %v6429
        %v6434 = vsel %vm6433, 1, 0
        %v6435 = vadd.s32 %v6425, %v6429
        %v6436 = vadd.s32 %v6428, %v6434
        %vm6437 = vc.u32 %v6435, %v6431
        %v6438 = vsel %vm6437, 1, 0
        %v6439 = vadd.s32 %v6435, %v6431
        %v6440 = vadd.s32 %v6436, %v6438
        %v6441 = vadd.s32 %v6440, %v6430
        %v6442 = vadd.s32 %v6441, %v6432
        %v6443 = vmul.u32 %v6398, %v6389
        %v6444 = vadd.s32 %v6420, %v6439
        %vm6445 = vc.u32 %v6420, %v6439
        %v6446 = vadd.s32 %v6442, 1
        %v6447 = vsel %vm6445, %v6446, %v6442
        %v6448 = vadd.s32 %v6443, %v6447
        %v6449 = vadd.s32 %v6448, 536870912
        %v6450 = vshrl.u32 %v6449, 30
        %v6451 = vshll.u32 %v6450, 30
        %v6452 = vsub.s32 %v6448, %v6451
        %vm6453 = vcmp.lt.s32.totalorder %v6452, 0
        %v6454 = vsub.s32 0, %v6452
        %v6455 = vsel %vm6453, %v6454, %v6452
        %v6456 = vclz %v6455
        %v6457 = vsub.s32 %v6456, 2
        %vm6458 = vcmp.gt.s32.totalorder 0, %v6457
        %v6459 = vsel %vm6458, 0, %v6457
        %v6460 = vsub.s32 32, %v6459
        %v6461 = vshll.u32 %v6452, %v6459
        %v6462 = vshrl.u32 %v6444, %v6460
        %v6463 = vor.u32 %v6461, %v6462
        %v6464 = vsub.s32 4294967266, %v6459
        %v6465 = vadd.s32 %v6464, 127
        %v6466 = vshll.u32 %v6465, 23
        %v6467 = vor.u32 4788187, %v6466
        %v6468 = vand.u32 2147483647, %v6467
        %v6470 = vcvt.s32.f32 %v6463
        %v6471 = vmul.f32 %v6470, %v6468
        %v6472 = vxor.u32 %v6471, 2147483648
        %v6473 = vsel %vm6352, %v6472, %v6471
        %v6474 = vsub.s32 4, %v6450
        %v6475 = vsel %vm6352, %v6474, %v6450
        %v6476 = vsel %vm6351, %v742, %v6473
        %v6477 = vsel %vm6351, 0, %v6475
        %v6478 = vmul.f32 %v6476, %v6476
        %v6479 = vmul.f32 %v6478, -0.001358992
        %v6480 = vadd.f32 %v6479, 0.041655596
        %v6481 = vmul.f32 %v6478, %v6480
        %v6482 = vadd.f32 %v6481, -0.4999988
        %v6483 = vmul.f32 %v6478, %v6482
        %v6484 = vadd.f32 1.0, %v6483
        %v6485 = vmul.f32 %v6476, %v6476
        %v6486 = vmul.f32 %v6485, -0.00019511016
        %v6487 = vadd.f32 %v6486, 0.008332121
        %v6488 = vmul.f32 %v6485, %v6487
        %v6489 = vadd.f32 %v6488, -0.16666654
        %v6490 = vmul.f32 %v6485, %v6489
        %v6491 = vadd.f32 %v6490, 1.0
        %v6492 = vmul.f32 %v6491, %v6476
        %vm6493 = vweird.f32 %v742
        %v6494 = vadd.s32 %v6477, 3
        %v6495 = vand.u32 %v6494, 3
        %vm6496 = vcmp.lt.s32.totalorder %v6495, 2
        %vm6497 = vcmp.eq.s32.totalorder %v6495, 0
        %v6498 = vxor.u32 %v6492, 2147483648
        %v6499 = vsel %vm6497, %v6484, %v6498
        %vm6500 = vcmp.eq.s32.totalorder %v6495, 2
        %v6501 = vxor.u32 %v6484, 2147483648
        %v6502 = vsel %vm6500, %v6501, %v6492
        %v6503 = vsel %vm6496, %v6499, %v6502
        %v6504 = vsel %vm6493, nan, %v6503
        %v6505 = vand.u32 2147483647, %v743
        %vm6506 = vcmp.le.f32.partialorder %v6505, 0.7853982
        %vm6507 = vcmp.lt.s32.totalorder %v743, 0
        %v6508 = vand.u32 %v743, 2139095040
        %v6509 = vshrl.u32 %v6508, 23
        %v6510 = vsub.s32 %v6509, 127
        %v6511 = vand.u32 2147483647, %v743
        %v6512 = vand.u32 %v6511, 8388607
        %v6513 = vor.u32 %v6512, 8388608
        %v6514 = vsub.s32 0, %v6513
        %v6515 = vadd.s32 %v6510, 1
        %vm6516 = vcmp.gt.s32.totalorder %v6515, 0
        %v6517 = vsel %vm6516, %v6515, 0
        %v6518 = vshrl.u32 %v6517, 5
        %v6519 = vand.u32 %v6517, 31
        %v6520 = vsub.s32 32, %v6519
        %v6521 = vshrl.u32 683565275, %v6520
        %v6522 = vshll.u32 683565275, %v6519
        %v6523 = vshrl.u32 2475754826, %v6520
        %v6524 = vor.u32 %v6522, %v6523
        %v6525 = vshll.u32 2475754826, %v6519
        %v6526 = vshrl.u32 2131351028, %v6520
        %v6527 = vor.u32 %v6525, %v6526
        %v6528 = vshll.u32 2131351028, %v6519
        %v6529 = vshrl.u32 2102212464, %v6520
        %v6530 = vor.u32 %v6528, %v6529
        %v6531 = vshll.u32 2102212464, %v6519
        %v6532 = vshrl.u32 920167782, %v6520
        %v6533 = vor.u32 %v6531, %v6532
        %v6534 = vshll.u32 920167782, %v6519
        %v6535 = vshrl.u32 1326507024, %v6520
        %v6536 = vor.u32 %v6534, %v6535
        %vm6537 = vcmp.lt.s32.totalorder %v6518, 1
        %vm6538 = vcmp.lt.s32.totalorder %v6518, 2
        %vm6539 = vcmp.lt.s32.totalorder %v6518, 3
        %vm6540 = vcmp.lt.s32.totalorder %v6518, 4
        %v6541 = vsel %vm6537, %v6521, %v6524
        %v6542 = vsel %vm6540, %v6530, 2102212464
        %v6543 = vsel %vm6539, %v6527, %v6542
        %v6544 = vsel %vm6538, %v6541, %v6543
        %v6545 = vsel %vm6537, %v6524, %v6527
        %v6546 = vsel %vm6540, %v6533, 920167782
        %v6547 = vsel %vm6539, %v6530, %v6546
        %v6548 = vsel %vm6538, %v6545, %v6547
        %v6549 = vsel %vm6537, %v6527, %v6530
        %v6550 = vsel %vm6540, %v6536, 1326507024
        %v6551 = vsel %vm6539, %v6533, %v6550
        %v6552 = vsel %vm6538, %v6549, %v6551
        %v6553 = vshll.u32 %v6513, 8
        %v6554 = vand.u32 %v6553, 65535
        %v6555 = vshrl.u32 %v6553, 16
        %v6556 = vand.u32 %v6552, 65535
        %v6557 = vshrl.u32 %v6552, 16
        %v6558 = vmul.u32 %v6554, %v6556
        %v6559 = vmul.u32 %v6554, %v6557
        %v6560 = vmul.u32 %v6555, %v6556
        %v6561 = vmul.u32 %v6555, %v6557
        %v6562 = vshll.u32 %v6559, 16
        %v6563 = vshrl.u32 %v6559, 16
        %v6564 = vshll.u32 %v6560, 16
        %v6565 = vshrl.u32 %v6560, 16
        %vm6566 = vc.u32 %v6558, %v6562
        %v6567 = vsel %vm6566, 1, 0
        %v6568 = vadd.s32 %v6558, %v6562
        %v6569 = vadd.s32 %v6561, %v6567
        %vm6570 = vc.u32 %v6568, %v6564
        %v6571 = vsel %vm6570, 1, 0
        %v6572 = vadd.s32 %v6568, %v6564
        %v6573 = vadd.s32 %v6569, %v6571
        %v6574 = vadd.s32 %v6573, %v6563
        %v6575 = vadd.s32 %v6574, %v6565
        %v6576 = vand.u32 %v6553, 65535
        %v6577 = vshrl.u32 %v6553, 16
        %v6578 = vand.u32 %v6548, 65535
        %v6579 = vshrl.u32 %v6548, 16
        %v6580 = vmul.u32 %v6576, %v6578
        %v6581 = vmul.u32 %v6576, %v6579
        %v6582 = vmul.u32 %v6577, %v6578
        %v6583 = vmul.u32 %v6577, %v6579
        %v6584 = vshll.u32 %v6581, 16
        %v6585 = vshrl.u32 %v6581, 16
        %v6586 = vshll.u32 %v6582, 16
        %v6587 = vshrl.u32 %v6582, 16
        %vm6588 = vc.u32 %v6580, %v6584
        %v6589 = vsel %vm6588, 1, 0
        %v6590 = vadd.s32 %v6580, %v6584
        %v6591 = vadd.s32 %v6583, %v6589
        %vm6592 = vc.u32 %v6590, %v6586
        %v6593 = vsel %vm6592, 1, 0
        %v6594 = vadd.s32 %v6590, %v6586
        %v6595 = vadd.s32 %v6591, %v6593
        %v6596 = vadd.s32 %v6595, %v6585
        %v6597 = vadd.s32 %v6596, %v6587
        %v6598 = vmul.u32 %v6553, %v6544
        %v6599 = vadd.s32 %v6575, %v6594
        %vm6600 = vc.u32 %v6575, %v6594
        %v6601 = vadd.s32 %v6597, 1
        %v6602 = vsel %vm6600, %v6601, %v6597
        %v6603 = vadd.s32 %v6598, %v6602
        %v6604 = vadd.s32 %v6603, 536870912
        %v6605 = vshrl.u32 %v6604, 30
        %v6606 = vshll.u32 %v6605, 30
        %v6607 = vsub.s32 %v6603, %v6606
        %vm6608 = vcmp.lt.s32.totalorder %v6607, 0
        %v6609 = vsub.s32 0, %v6607
        %v6610 = vsel %vm6608, %v6609, %v6607
        %v6611 = vclz %v6610
        %v6612 = vsub.s32 %v6611, 2
        %vm6613 = vcmp.gt.s32.totalorder 0, %v6612
        %v6614 = vsel %vm6613, 0, %v6612
        %v6615 = vsub.s32 32, %v6614
        %v6616 = vshll.u32 %v6607, %v6614
        %v6617 = vshrl.u32 %v6599, %v6615
        %v6618 = vor.u32 %v6616, %v6617
        %v6619 = vsub.s32 4294967266, %v6614
        %v6620 = vadd.s32 %v6619, 127
        %v6621 = vshll.u32 %v6620, 23
        %v6622 = vor.u32 4788187, %v6621
        %v6623 = vand.u32 2147483647, %v6622
        %v6625 = vcvt.s32.f32 %v6618
        %v6626 = vmul.f32 %v6625, %v6623
        %v6627 = vxor.u32 %v6626, 2147483648
        %v6628 = vsel %vm6507, %v6627, %v6626
        %v6629 = vsub.s32 4, %v6605
        %v6630 = vsel %vm6507, %v6629, %v6605
        %v6631 = vsel %vm6506, %v743, %v6628
        %v6632 = vsel %vm6506, 0, %v6630
        %v6633 = vmul.f32 %v6631, %v6631
        %v6634 = vmul.f32 %v6633, -0.001358992
        %v6635 = vadd.f32 %v6634, 0.041655596
        %v6636 = vmul.f32 %v6633, %v6635
        %v6637 = vadd.f32 %v6636, -0.4999988
        %v6638 = vmul.f32 %v6633, %v6637
        %v6639 = vadd.f32 1.0, %v6638
        %v6640 = vmul.f32 %v6631, %v6631
        %v6641 = vmul.f32 %v6640, -0.00019511016
        %v6642 = vadd.f32 %v6641, 0.008332121
        %v6643 = vmul.f32 %v6640, %v6642
        %v6644 = vadd.f32 %v6643, -0.16666654
        %v6645 = vmul.f32 %v6640, %v6644
        %v6646 = vadd.f32 %v6645, 1.0
        %v6647 = vmul.f32 %v6646, %v6631
        %vm6648 = vweird.f32 %v743
        %v6649 = vadd.s32 %v6632, 3
        %v6650 = vand.u32 %v6649, 3
        %vm6651 = vcmp.lt.s32.totalorder %v6650, 2
        %vm6652 = vcmp.eq.s32.totalorder %v6650, 0
        %v6653 = vxor.u32 %v6647, 2147483648
        %v6654 = vsel %vm6652, %v6639, %v6653
        %vm6655 = vcmp.eq.s32.totalorder %v6650, 2
        %v6656 = vxor.u32 %v6639, 2147483648
        %v6657 = vsel %vm6655, %v6656, %v6647
        %v6658 = vsel %vm6651, %v6654, %v6657
        %v6659 = vsel %vm6648, nan, %v6658
        %v6660 = vand.u32 2147483647, %v744
        %vm6661 = vcmp.le.f32.partialorder %v6660, 0.7853982
        %vm6662 = vcmp.lt.s32.totalorder %v744, 0
        %v6663 = vand.u32 %v744, 2139095040
        %v6664 = vshrl.u32 %v6663, 23
        %v6665 = vsub.s32 %v6664, 127
        %v6666 = vand.u32 2147483647, %v744
        %v6667 = vand.u32 %v6666, 8388607
        %v6668 = vor.u32 %v6667, 8388608
        %v6669 = vsub.s32 0, %v6668
        %v6670 = vadd.s32 %v6665, 1
        %vm6671 = vcmp.gt.s32.totalorder %v6670, 0
        %v6672 = vsel %vm6671, %v6670, 0
        %v6673 = vshrl.u32 %v6672, 5
        %v6674 = vand.u32 %v6672, 31
        %v6675 = vsub.s32 32, %v6674
        %v6676 = vshrl.u32 683565275, %v6675
        %v6677 = vshll.u32 683565275, %v6674
        %v6678 = vshrl.u32 2475754826, %v6675
        %v6679 = vor.u32 %v6677, %v6678
        %v6680 = vshll.u32 2475754826, %v6674
        %v6681 = vshrl.u32 2131351028, %v6675
        %v6682 = vor.u32 %v6680, %v6681
        %v6683 = vshll.u32 2131351028, %v6674
        %v6684 = vshrl.u32 2102212464, %v6675
        %v6685 = vor.u32 %v6683, %v6684
        %v6686 = vshll.u32 2102212464, %v6674
        %v6687 = vshrl.u32 920167782, %v6675
        %v6688 = vor.u32 %v6686, %v6687
        %v6689 = vshll.u32 920167782, %v6674
        %v6690 = vshrl.u32 1326507024, %v6675
        %v6691 = vor.u32 %v6689, %v6690
        %vm6692 = vcmp.lt.s32.totalorder %v6673, 1
        %vm6693 = vcmp.lt.s32.totalorder %v6673, 2
        %vm6694 = vcmp.lt.s32.totalorder %v6673, 3
        %vm6695 = vcmp.lt.s32.totalorder %v6673, 4
        %v6696 = vsel %vm6692, %v6676, %v6679
        %v6697 = vsel %vm6695, %v6685, 2102212464
        %v6698 = vsel %vm6694, %v6682, %v6697
        %v6699 = vsel %vm6693, %v6696, %v6698
        %v6700 = vsel %vm6692, %v6679, %v6682
        %v6701 = vsel %vm6695, %v6688, 920167782
        %v6702 = vsel %vm6694, %v6685, %v6701
        %v6703 = vsel %vm6693, %v6700, %v6702
        %v6704 = vsel %vm6692, %v6682, %v6685
        %v6705 = vsel %vm6695, %v6691, 1326507024
        %v6706 = vsel %vm6694, %v6688, %v6705
        %v6707 = vsel %vm6693, %v6704, %v6706
        %v6708 = vshll.u32 %v6668, 8
        %v6709 = vand.u32 %v6708, 65535
        %v6710 = vshrl.u32 %v6708, 16
        %v6711 = vand.u32 %v6707, 65535
        %v6712 = vshrl.u32 %v6707, 16
        %v6713 = vmul.u32 %v6709, %v6711
        %v6714 = vmul.u32 %v6709, %v6712
        %v6715 = vmul.u32 %v6710, %v6711
        %v6716 = vmul.u32 %v6710, %v6712
        %v6717 = vshll.u32 %v6714, 16
        %v6718 = vshrl.u32 %v6714, 16
        %v6719 = vshll.u32 %v6715, 16
        %v6720 = vshrl.u32 %v6715, 16
        %vm6721 = vc.u32 %v6713, %v6717
        %v6722 = vsel %vm6721, 1, 0
        %v6723 = vadd.s32 %v6713, %v6717
        %v6724 = vadd.s32 %v6716, %v6722
        %vm6725 = vc.u32 %v6723, %v6719
        %v6726 = vsel %vm6725, 1, 0
        %v6727 = vadd.s32 %v6723, %v6719
        %v6728 = vadd.s32 %v6724, %v6726
        %v6729 = vadd.s32 %v6728, %v6718
        %v6730 = vadd.s32 %v6729, %v6720
        %v6731 = vand.u32 %v6708, 65535
        %v6732 = vshrl.u32 %v6708, 16
        %v6733 = vand.u32 %v6703, 65535
        %v6734 = vshrl.u32 %v6703, 16
        %v6735 = vmul.u32 %v6731, %v6733
        %v6736 = vmul.u32 %v6731, %v6734
        %v6737 = vmul.u32 %v6732, %v6733
        %v6738 = vmul.u32 %v6732, %v6734
        %v6739 = vshll.u32 %v6736, 16
        %v6740 = vshrl.u32 %v6736, 16
        %v6741 = vshll.u32 %v6737, 16
        %v6742 = vshrl.u32 %v6737, 16
        %vm6743 = vc.u32 %v6735, %v6739
        %v6744 = vsel %vm6743, 1, 0
        %v6745 = vadd.s32 %v6735, %v6739
        %v6746 = vadd.s32 %v6738, %v6744
        %vm6747 = vc.u32 %v6745, %v6741
        %v6748 = vsel %vm6747, 1, 0
        %v6749 = vadd.s32 %v6745, %v6741
        %v6750 = vadd.s32 %v6746, %v6748
        %v6751 = vadd.s32 %v6750, %v6740
        %v6752 = vadd.s32 %v6751, %v6742
        %v6753 = vmul.u32 %v6708, %v6699
        %v6754 = vadd.s32 %v6730, %v6749
        %vm6755 = vc.u32 %v6730, %v6749
        %v6756 = vadd.s32 %v6752, 1
        %v6757 = vsel %vm6755, %v6756, %v6752
        %v6758 = vadd.s32 %v6753, %v6757
        %v6759 = vadd.s32 %v6758, 536870912
        %v6760 = vshrl.u32 %v6759, 30
        %v6761 = vshll.u32 %v6760, 30
        %v6762 = vsub.s32 %v6758, %v6761
        %vm6763 = vcmp.lt.s32.totalorder %v6762, 0
        %v6764 = vsub.s32 0, %v6762
        %v6765 = vsel %vm6763, %v6764, %v6762
        %v6766 = vclz %v6765
        %v6767 = vsub.s32 %v6766, 2
        %vm6768 = vcmp.gt.s32.totalorder 0, %v6767
        %v6769 = vsel %vm6768, 0, %v6767
        %v6770 = vsub.s32 32, %v6769
        %v6771 = vshll.u32 %v6762, %v6769
        %v6772 = vshrl.u32 %v6754, %v6770
        %v6773 = vor.u32 %v6771, %v6772
        %v6774 = vsub.s32 4294967266, %v6769
        %v6775 = vadd.s32 %v6774, 127
        %v6776 = vshll.u32 %v6775, 23
        %v6777 = vor.u32 4788187, %v6776
        %v6778 = vand.u32 2147483647, %v6777
        %v6780 = vcvt.s32.f32 %v6773
        %v6781 = vmul.f32 %v6780, %v6778
        %v6782 = vxor.u32 %v6781, 2147483648
        %v6783 = vsel %vm6662, %v6782, %v6781
        %v6784 = vsub.s32 4, %v6760
        %v6785 = vsel %vm6662, %v6784, %v6760
        %v6786 = vsel %vm6661, %v744, %v6783
        %v6787 = vsel %vm6661, 0, %v6785
        %v6788 = vmul.f32 %v6786, %v6786
        %v6789 = vmul.f32 %v6788, -0.001358992
        %v6790 = vadd.f32 %v6789, 0.041655596
        %v6791 = vmul.f32 %v6788, %v6790
        %v6792 = vadd.f32 %v6791, -0.4999988
        %v6793 = vmul.f32 %v6788, %v6792
        %v6794 = vadd.f32 1.0, %v6793
        %v6795 = vmul.f32 %v6786, %v6786
        %v6796 = vmul.f32 %v6795, -0.00019511016
        %v6797 = vadd.f32 %v6796, 0.008332121
        %v6798 = vmul.f32 %v6795, %v6797
        %v6799 = vadd.f32 %v6798, -0.16666654
        %v6800 = vmul.f32 %v6795, %v6799
        %v6801 = vadd.f32 %v6800, 1.0
        %v6802 = vmul.f32 %v6801, %v6786
        %vm6803 = vweird.f32 %v744
        %v6804 = vadd.s32 %v6787, 3
        %v6805 = vand.u32 %v6804, 3
        %vm6806 = vcmp.lt.s32.totalorder %v6805, 2
        %vm6807 = vcmp.eq.s32.totalorder %v6805, 0
        %v6808 = vxor.u32 %v6802, 2147483648
        %v6809 = vsel %vm6807, %v6794, %v6808
        %vm6810 = vcmp.eq.s32.totalorder %v6805, 2
        %v6811 = vxor.u32 %v6794, 2147483648
        %v6812 = vsel %vm6810, %v6811, %v6802
        %v6813 = vsel %vm6806, %v6809, %v6812
        %v6814 = vsel %vm6803, nan, %v6813
        %v6815 = vand.u32 2147483647, %v745
        %vm6816 = vcmp.le.f32.partialorder %v6815, 0.7853982
        %vm6817 = vcmp.lt.s32.totalorder %v745, 0
        %v6818 = vand.u32 %v745, 2139095040
        %v6819 = vshrl.u32 %v6818, 23
        %v6820 = vsub.s32 %v6819, 127
        %v6821 = vand.u32 2147483647, %v745
        %v6822 = vand.u32 %v6821, 8388607
        %v6823 = vor.u32 %v6822, 8388608
        %v6824 = vsub.s32 0, %v6823
        %v6825 = vadd.s32 %v6820, 1
        %vm6826 = vcmp.gt.s32.totalorder %v6825, 0
        %v6827 = vsel %vm6826, %v6825, 0
        %v6828 = vshrl.u32 %v6827, 5
        %v6829 = vand.u32 %v6827, 31
        %v6830 = vsub.s32 32, %v6829
        %v6831 = vshrl.u32 683565275, %v6830
        %v6832 = vshll.u32 683565275, %v6829
        %v6833 = vshrl.u32 2475754826, %v6830
        %v6834 = vor.u32 %v6832, %v6833
        %v6835 = vshll.u32 2475754826, %v6829
        %v6836 = vshrl.u32 2131351028, %v6830
        %v6837 = vor.u32 %v6835, %v6836
        %v6838 = vshll.u32 2131351028, %v6829
        %v6839 = vshrl.u32 2102212464, %v6830
        %v6840 = vor.u32 %v6838, %v6839
        %v6841 = vshll.u32 2102212464, %v6829
        %v6842 = vshrl.u32 920167782, %v6830
        %v6843 = vor.u32 %v6841, %v6842
        %v6844 = vshll.u32 920167782, %v6829
        %v6845 = vshrl.u32 1326507024, %v6830
        %v6846 = vor.u32 %v6844, %v6845
        %vm6847 = vcmp.lt.s32.totalorder %v6828, 1
        %vm6848 = vcmp.lt.s32.totalorder %v6828, 2
        %vm6849 = vcmp.lt.s32.totalorder %v6828, 3
        %vm6850 = vcmp.lt.s32.totalorder %v6828, 4
        %v6851 = vsel %vm6847, %v6831, %v6834
        %v6852 = vsel %vm6850, %v6840, 2102212464
        %v6853 = vsel %vm6849, %v6837, %v6852
        %v6854 = vsel %vm6848, %v6851, %v6853
        %v6855 = vsel %vm6847, %v6834, %v6837
        %v6856 = vsel %vm6850, %v6843, 920167782
        %v6857 = vsel %vm6849, %v6840, %v6856
        %v6858 = vsel %vm6848, %v6855, %v6857
        %v6859 = vsel %vm6847, %v6837, %v6840
        %v6860 = vsel %vm6850, %v6846, 1326507024
        %v6861 = vsel %vm6849, %v6843, %v6860
        %v6862 = vsel %vm6848, %v6859, %v6861
        %v6863 = vshll.u32 %v6823, 8
        %v6864 = vand.u32 %v6863, 65535
        %v6865 = vshrl.u32 %v6863, 16
        %v6866 = vand.u32 %v6862, 65535
        %v6867 = vshrl.u32 %v6862, 16
        %v6868 = vmul.u32 %v6864, %v6866
        %v6869 = vmul.u32 %v6864, %v6867
        %v6870 = vmul.u32 %v6865, %v6866
        %v6871 = vmul.u32 %v6865, %v6867
        %v6872 = vshll.u32 %v6869, 16
        %v6873 = vshrl.u32 %v6869, 16
        %v6874 = vshll.u32 %v6870, 16
        %v6875 = vshrl.u32 %v6870, 16
        %vm6876 = vc.u32 %v6868, %v6872
        %v6877 = vsel %vm6876, 1, 0
        %v6878 = vadd.s32 %v6868, %v6872
        %v6879 = vadd.s32 %v6871, %v6877
        %vm6880 = vc.u32 %v6878, %v6874
        %v6881 = vsel %vm6880, 1, 0
        %v6882 = vadd.s32 %v6878, %v6874
        %v6883 = vadd.s32 %v6879, %v6881
        %v6884 = vadd.s32 %v6883, %v6873
        %v6885 = vadd.s32 %v6884, %v6875
        %v6886 = vand.u32 %v6863, 65535
        %v6887 = vshrl.u32 %v6863, 16
        %v6888 = vand.u32 %v6858, 65535
        %v6889 = vshrl.u32 %v6858, 16
        %v6890 = vmul.u32 %v6886, %v6888
        %v6891 = vmul.u32 %v6886, %v6889
        %v6892 = vmul.u32 %v6887, %v6888
        %v6893 = vmul.u32 %v6887, %v6889
        %v6894 = vshll.u32 %v6891, 16
        %v6895 = vshrl.u32 %v6891, 16
        %v6896 = vshll.u32 %v6892, 16
        %v6897 = vshrl.u32 %v6892, 16
        %vm6898 = vc.u32 %v6890, %v6894
        %v6899 = vsel %vm6898, 1, 0
        %v6900 = vadd.s32 %v6890, %v6894
        %v6901 = vadd.s32 %v6893, %v6899
        %vm6902 = vc.u32 %v6900, %v6896
        %v6903 = vsel %vm6902, 1, 0
        %v6904 = vadd.s32 %v6900, %v6896
        %v6905 = vadd.s32 %v6901, %v6903
        %v6906 = vadd.s32 %v6905, %v6895
        %v6907 = vadd.s32 %v6906, %v6897
        %v6908 = vmul.u32 %v6863, %v6854
        %v6909 = vadd.s32 %v6885, %v6904
        %vm6910 = vc.u32 %v6885, %v6904
        %v6911 = vadd.s32 %v6907, 1
        %v6912 = vsel %vm6910, %v6911, %v6907
        %v6913 = vadd.s32 %v6908, %v6912
        %v6914 = vadd.s32 %v6913, 536870912
        %v6915 = vshrl.u32 %v6914, 30
        %v6916 = vshll.u32 %v6915, 30
        %v6917 = vsub.s32 %v6913, %v6916
        %vm6918 = vcmp.lt.s32.totalorder %v6917, 0
        %v6919 = vsub.s32 0, %v6917
        %v6920 = vsel %vm6918, %v6919, %v6917
        %v6921 = vclz %v6920
        %v6922 = vsub.s32 %v6921, 2
        %vm6923 = vcmp.gt.s32.totalorder 0, %v6922
        %v6924 = vsel %vm6923, 0, %v6922
        %v6925 = vsub.s32 32, %v6924
        %v6926 = vshll.u32 %v6917, %v6924
        %v6927 = vshrl.u32 %v6909, %v6925
        %v6928 = vor.u32 %v6926, %v6927
        %v6929 = vsub.s32 4294967266, %v6924
        %v6930 = vadd.s32 %v6929, 127
        %v6931 = vshll.u32 %v6930, 23
        %v6932 = vor.u32 4788187, %v6931
        %v6933 = vand.u32 2147483647, %v6932
        %v6935 = vcvt.s32.f32 %v6928
        %v6936 = vmul.f32 %v6935, %v6933
        %v6937 = vxor.u32 %v6936, 2147483648
        %v6938 = vsel %vm6817, %v6937, %v6936
        %v6939 = vsub.s32 4, %v6915
        %v6940 = vsel %vm6817, %v6939, %v6915
        %v6941 = vsel %vm6816, %v745, %v6938
        %v6942 = vsel %vm6816, 0, %v6940
        %v6943 = vmul.f32 %v6941, %v6941
        %v6944 = vmul.f32 %v6943, -0.001358992
        %v6945 = vadd.f32 %v6944, 0.041655596
        %v6946 = vmul.f32 %v6943, %v6945
        %v6947 = vadd.f32 %v6946, -0.4999988
        %v6948 = vmul.f32 %v6943, %v6947
        %v6949 = vadd.f32 1.0, %v6948
        %v6950 = vmul.f32 %v6941, %v6941
        %v6951 = vmul.f32 %v6950, -0.00019511016
        %v6952 = vadd.f32 %v6951, 0.008332121
        %v6953 = vmul.f32 %v6950, %v6952
        %v6954 = vadd.f32 %v6953, -0.16666654
        %v6955 = vmul.f32 %v6950, %v6954
        %v6956 = vadd.f32 %v6955, 1.0
        %v6957 = vmul.f32 %v6956, %v6941
        %vm6958 = vweird.f32 %v745
        %v6959 = vadd.s32 %v6942, 3
        %v6960 = vand.u32 %v6959, 3
        %vm6961 = vcmp.lt.s32.totalorder %v6960, 2
        %vm6962 = vcmp.eq.s32.totalorder %v6960, 0
        %v6963 = vxor.u32 %v6957, 2147483648
        %v6964 = vsel %vm6962, %v6949, %v6963
        %vm6965 = vcmp.eq.s32.totalorder %v6960, 2
        %v6966 = vxor.u32 %v6949, 2147483648
        %v6967 = vsel %vm6965, %v6966, %v6957
        %v6968 = vsel %vm6961, %v6964, %v6967
        %v6969 = vsel %vm6958, nan, %v6968
        %v6970 = vand.u32 2147483647, %v746
        %vm6971 = vcmp.le.f32.partialorder %v6970, 0.7853982
        %vm6972 = vcmp.lt.s32.totalorder %v746, 0
        %v6973 = vand.u32 %v746, 2139095040
        %v6974 = vshrl.u32 %v6973, 23
        %v6975 = vsub.s32 %v6974, 127
        %v6976 = vand.u32 2147483647, %v746
        %v6977 = vand.u32 %v6976, 8388607
        %v6978 = vor.u32 %v6977, 8388608
        %v6979 = vsub.s32 0, %v6978
        %v6980 = vadd.s32 %v6975, 1
        %vm6981 = vcmp.gt.s32.totalorder %v6980, 0
        %v6982 = vsel %vm6981, %v6980, 0
        %v6983 = vshrl.u32 %v6982, 5
        %v6984 = vand.u32 %v6982, 31
        %v6985 = vsub.s32 32, %v6984
        %v6986 = vshrl.u32 683565275, %v6985
        %v6987 = vshll.u32 683565275, %v6984
        %v6988 = vshrl.u32 2475754826, %v6985
        %v6989 = vor.u32 %v6987, %v6988
        %v6990 = vshll.u32 2475754826, %v6984
        %v6991 = vshrl.u32 2131351028, %v6985
        %v6992 = vor.u32 %v6990, %v6991
        %v6993 = vshll.u32 2131351028, %v6984
        %v6994 = vshrl.u32 2102212464, %v6985
        %v6995 = vor.u32 %v6993, %v6994
        %v6996 = vshll.u32 2102212464, %v6984
        %v6997 = vshrl.u32 920167782, %v6985
        %v6998 = vor.u32 %v6996, %v6997
        %v6999 = vshll.u32 920167782, %v6984
        %v7000 = vshrl.u32 1326507024, %v6985
        %v7001 = vor.u32 %v6999, %v7000
        %vm7002 = vcmp.lt.s32.totalorder %v6983, 1
        %vm7003 = vcmp.lt.s32.totalorder %v6983, 2
        %vm7004 = vcmp.lt.s32.totalorder %v6983, 3
        %vm7005 = vcmp.lt.s32.totalorder %v6983, 4
        %v7006 = vsel %vm7002, %v6986, %v6989
        %v7007 = vsel %vm7005, %v6995, 2102212464
        %v7008 = vsel %vm7004, %v6992, %v7007
        %v7009 = vsel %vm7003, %v7006, %v7008
        %v7010 = vsel %vm7002, %v6989, %v6992
        %v7011 = vsel %vm7005, %v6998, 920167782
        %v7012 = vsel %vm7004, %v6995, %v7011
        %v7013 = vsel %vm7003, %v7010, %v7012
        %v7014 = vsel %vm7002, %v6992, %v6995
        %v7015 = vsel %vm7005, %v7001, 1326507024
        %v7016 = vsel %vm7004, %v6998, %v7015
        %v7017 = vsel %vm7003, %v7014, %v7016
        %v7018 = vshll.u32 %v6978, 8
        %v7019 = vand.u32 %v7018, 65535
        %v7020 = vshrl.u32 %v7018, 16
        %v7021 = vand.u32 %v7017, 65535
        %v7022 = vshrl.u32 %v7017, 16
        %v7023 = vmul.u32 %v7019, %v7021
        %v7024 = vmul.u32 %v7019, %v7022
        %v7025 = vmul.u32 %v7020, %v7021
        %v7026 = vmul.u32 %v7020, %v7022
        %v7027 = vshll.u32 %v7024, 16
        %v7028 = vshrl.u32 %v7024, 16
        %v7029 = vshll.u32 %v7025, 16
        %v7030 = vshrl.u32 %v7025, 16
        %vm7031 = vc.u32 %v7023, %v7027
        %v7032 = vsel %vm7031, 1, 0
        %v7033 = vadd.s32 %v7023, %v7027
        %v7034 = vadd.s32 %v7026, %v7032
        %vm7035 = vc.u32 %v7033, %v7029
        %v7036 = vsel %vm7035, 1, 0
        %v7037 = vadd.s32 %v7033, %v7029
        %v7038 = vadd.s32 %v7034, %v7036
        %v7039 = vadd.s32 %v7038, %v7028
        %v7040 = vadd.s32 %v7039, %v7030
        %v7041 = vand.u32 %v7018, 65535
        %v7042 = vshrl.u32 %v7018, 16
        %v7043 = vand.u32 %v7013, 65535
        %v7044 = vshrl.u32 %v7013, 16
        %v7045 = vmul.u32 %v7041, %v7043
        %v7046 = vmul.u32 %v7041, %v7044
        %v7047 = vmul.u32 %v7042, %v7043
        %v7048 = vmul.u32 %v7042, %v7044
        %v7049 = vshll.u32 %v7046, 16
        %v7050 = vshrl.u32 %v7046, 16
        %v7051 = vshll.u32 %v7047, 16
        %v7052 = vshrl.u32 %v7047, 16
        %vm7053 = vc.u32 %v7045, %v7049
        %v7054 = vsel %vm7053, 1, 0
        %v7055 = vadd.s32 %v7045, %v7049
        %v7056 = vadd.s32 %v7048, %v7054
        %vm7057 = vc.u32 %v7055, %v7051
        %v7058 = vsel %vm7057, 1, 0
        %v7059 = vadd.s32 %v7055, %v7051
        %v7060 = vadd.s32 %v7056, %v7058
        %v7061 = vadd.s32 %v7060, %v7050
        %v7062 = vadd.s32 %v7061, %v7052
        %v7063 = vmul.u32 %v7018, %v7009
        %v7064 = vadd.s32 %v7040, %v7059
        %vm7065 = vc.u32 %v7040, %v7059
        %v7066 = vadd.s32 %v7062, 1
        %v7067 = vsel %vm7065, %v7066, %v7062
        %v7068 = vadd.s32 %v7063, %v7067
        %v7069 = vadd.s32 %v7068, 536870912
        %v7070 = vshrl.u32 %v7069, 30
        %v7071 = vshll.u32 %v7070, 30
        %v7072 = vsub.s32 %v7068, %v7071
        %vm7073 = vcmp.lt.s32.totalorder %v7072, 0
        %v7074 = vsub.s32 0, %v7072
        %v7075 = vsel %vm7073, %v7074, %v7072
        %v7076 = vclz %v7075
        %v7077 = vsub.s32 %v7076, 2
        %vm7078 = vcmp.gt.s32.totalorder 0, %v7077
        %v7079 = vsel %vm7078, 0, %v7077
        %v7080 = vsub.s32 32, %v7079
        %v7081 = vshll.u32 %v7072, %v7079
        %v7082 = vshrl.u32 %v7064, %v7080
        %v7083 = vor.u32 %v7081, %v7082
        %v7084 = vsub.s32 4294967266, %v7079
        %v7085 = vadd.s32 %v7084, 127
        %v7086 = vshll.u32 %v7085, 23
        %v7087 = vor.u32 4788187, %v7086
        %v7088 = vand.u32 2147483647, %v7087
        %v7090 = vcvt.s32.f32 %v7083
        %v7091 = vmul.f32 %v7090, %v7088
        %v7092 = vxor.u32 %v7091, 2147483648
        %v7093 = vsel %vm6972, %v7092, %v7091
        %v7094 = vsub.s32 4, %v7070
        %v7095 = vsel %vm6972, %v7094, %v7070
        %v7096 = vsel %vm6971, %v746, %v7093
        %v7097 = vsel %vm6971, 0, %v7095
        %v7098 = vmul.f32 %v7096, %v7096
        %v7099 = vmul.f32 %v7098, -0.001358992
        %v7100 = vadd.f32 %v7099, 0.041655596
        %v7101 = vmul.f32 %v7098, %v7100
        %v7102 = vadd.f32 %v7101, -0.4999988
        %v7103 = vmul.f32 %v7098, %v7102
        %v7104 = vadd.f32 1.0, %v7103
        %v7105 = vmul.f32 %v7096, %v7096
        %v7106 = vmul.f32 %v7105, -0.00019511016
        %v7107 = vadd.f32 %v7106, 0.008332121
        %v7108 = vmul.f32 %v7105, %v7107
        %v7109 = vadd.f32 %v7108, -0.16666654
        %v7110 = vmul.f32 %v7105, %v7109
        %v7111 = vadd.f32 %v7110, 1.0
        %v7112 = vmul.f32 %v7111, %v7096
        %vm7113 = vweird.f32 %v746
        %v7114 = vadd.s32 %v7097, 3
        %v7115 = vand.u32 %v7114, 3
        %vm7116 = vcmp.lt.s32.totalorder %v7115, 2
        %vm7117 = vcmp.eq.s32.totalorder %v7115, 0
        %v7118 = vxor.u32 %v7112, 2147483648
        %v7119 = vsel %vm7117, %v7104, %v7118
        %vm7120 = vcmp.eq.s32.totalorder %v7115, 2
        %v7121 = vxor.u32 %v7104, 2147483648
        %v7122 = vsel %vm7120, %v7121, %v7112
        %v7123 = vsel %vm7116, %v7119, %v7122
        %v7124 = vsel %vm7113, nan, %v7123
        %v7125 = vand.u32 2147483647, %v747
        %vm7126 = vcmp.le.f32.partialorder %v7125, 0.7853982
        %vm7127 = vcmp.lt.s32.totalorder %v747, 0
        %v7128 = vand.u32 %v747, 2139095040
        %v7129 = vshrl.u32 %v7128, 23
        %v7130 = vsub.s32 %v7129, 127
        %v7131 = vand.u32 2147483647, %v747
        %v7132 = vand.u32 %v7131, 8388607
        %v7133 = vor.u32 %v7132, 8388608
        %v7134 = vsub.s32 0, %v7133
        %v7135 = vadd.s32 %v7130, 1
        %vm7136 = vcmp.gt.s32.totalorder %v7135, 0
        %v7137 = vsel %vm7136, %v7135, 0
        %v7138 = vshrl.u32 %v7137, 5
        %v7139 = vand.u32 %v7137, 31
        %v7140 = vsub.s32 32, %v7139
        %v7141 = vshrl.u32 683565275, %v7140
        %v7142 = vshll.u32 683565275, %v7139
        %v7143 = vshrl.u32 2475754826, %v7140
        %v7144 = vor.u32 %v7142, %v7143
        %v7145 = vshll.u32 2475754826, %v7139
        %v7146 = vshrl.u32 2131351028, %v7140
        %v7147 = vor.u32 %v7145, %v7146
        %v7148 = vshll.u32 2131351028, %v7139
        %v7149 = vshrl.u32 2102212464, %v7140
        %v7150 = vor.u32 %v7148, %v7149
        %v7151 = vshll.u32 2102212464, %v7139
        %v7152 = vshrl.u32 920167782, %v7140
        %v7153 = vor.u32 %v7151, %v7152
        %v7154 = vshll.u32 920167782, %v7139
        %v7155 = vshrl.u32 1326507024, %v7140
        %v7156 = vor.u32 %v7154, %v7155
        %vm7157 = vcmp.lt.s32.totalorder %v7138, 1
        %vm7158 = vcmp.lt.s32.totalorder %v7138, 2
        %vm7159 = vcmp.lt.s32.totalorder %v7138, 3
        %vm7160 = vcmp.lt.s32.totalorder %v7138, 4
        %v7161 = vsel %vm7157, %v7141, %v7144
        %v7162 = vsel %vm7160, %v7150, 2102212464
        %v7163 = vsel %vm7159, %v7147, %v7162
        %v7164 = vsel %vm7158, %v7161, %v7163
        %v7165 = vsel %vm7157, %v7144, %v7147
        %v7166 = vsel %vm7160, %v7153, 920167782
        %v7167 = vsel %vm7159, %v7150, %v7166
        %v7168 = vsel %vm7158, %v7165, %v7167
        %v7169 = vsel %vm7157, %v7147, %v7150
        %v7170 = vsel %vm7160, %v7156, 1326507024
        %v7171 = vsel %vm7159, %v7153, %v7170
        %v7172 = vsel %vm7158, %v7169, %v7171
        %v7173 = vshll.u32 %v7133, 8
        %v7174 = vand.u32 %v7173, 65535
        %v7175 = vshrl.u32 %v7173, 16
        %v7176 = vand.u32 %v7172, 65535
        %v7177 = vshrl.u32 %v7172, 16
        %v7178 = vmul.u32 %v7174, %v7176
        %v7179 = vmul.u32 %v7174, %v7177
        %v7180 = vmul.u32 %v7175, %v7176
        %v7181 = vmul.u32 %v7175, %v7177
        %v7182 = vshll.u32 %v7179, 16
        %v7183 = vshrl.u32 %v7179, 16
        %v7184 = vshll.u32 %v7180, 16
        %v7185 = vshrl.u32 %v7180, 16
        %vm7186 = vc.u32 %v7178, %v7182
        %v7187 = vsel %vm7186, 1, 0
        %v7188 = vadd.s32 %v7178, %v7182
        %v7189 = vadd.s32 %v7181, %v7187
        %vm7190 = vc.u32 %v7188, %v7184
        %v7191 = vsel %vm7190, 1, 0
        %v7192 = vadd.s32 %v7188, %v7184
        %v7193 = vadd.s32 %v7189, %v7191
        %v7194 = vadd.s32 %v7193, %v7183
        %v7195 = vadd.s32 %v7194, %v7185
        %v7196 = vand.u32 %v7173, 65535
        %v7197 = vshrl.u32 %v7173, 16
        %v7198 = vand.u32 %v7168, 65535
        %v7199 = vshrl.u32 %v7168, 16
        %v7200 = vmul.u32 %v7196, %v7198
        %v7201 = vmul.u32 %v7196, %v7199
        %v7202 = vmul.u32 %v7197, %v7198
        %v7203 = vmul.u32 %v7197, %v7199
        %v7204 = vshll.u32 %v7201, 16
        %v7205 = vshrl.u32 %v7201, 16
        %v7206 = vshll.u32 %v7202, 16
        %v7207 = vshrl.u32 %v7202, 16
        %vm7208 = vc.u32 %v7200, %v7204
        %v7209 = vsel %vm7208, 1, 0
        %v7210 = vadd.s32 %v7200, %v7204
        %v7211 = vadd.s32 %v7203, %v7209
        %vm7212 = vc.u32 %v7210, %v7206
        %v7213 = vsel %vm7212, 1, 0
        %v7214 = vadd.s32 %v7210, %v7206
        %v7215 = vadd.s32 %v7211, %v7213
        %v7216 = vadd.s32 %v7215, %v7205
        %v7217 = vadd.s32 %v7216, %v7207
        %v7218 = vmul.u32 %v7173, %v7164
        %v7219 = vadd.s32 %v7195, %v7214
        %vm7220 = vc.u32 %v7195, %v7214
        %v7221 = vadd.s32 %v7217, 1
        %v7222 = vsel %vm7220, %v7221, %v7217
        %v7223 = vadd.s32 %v7218, %v7222
        %v7224 = vadd.s32 %v7223, 536870912
        %v7225 = vshrl.u32 %v7224, 30
        %v7226 = vshll.u32 %v7225, 30
        %v7227 = vsub.s32 %v7223, %v7226
        %vm7228 = vcmp.lt.s32.totalorder %v7227, 0
        %v7229 = vsub.s32 0, %v7227
        %v7230 = vsel %vm7228, %v7229, %v7227
        %v7231 = vclz %v7230
        %v7232 = vsub.s32 %v7231, 2
        %vm7233 = vcmp.gt.s32.totalorder 0, %v7232
        %v7234 = vsel %vm7233, 0, %v7232
        %v7235 = vsub.s32 32, %v7234
        %v7236 = vshll.u32 %v7227, %v7234
        %v7237 = vshrl.u32 %v7219, %v7235
        %v7238 = vor.u32 %v7236, %v7237
        %v7239 = vsub.s32 4294967266, %v7234
        %v7240 = vadd.s32 %v7239, 127
        %v7241 = vshll.u32 %v7240, 23
        %v7242 = vor.u32 4788187, %v7241
        %v7243 = vand.u32 2147483647, %v7242
        %v7245 = vcvt.s32.f32 %v7238
        %v7246 = vmul.f32 %v7245, %v7243
        %v7247 = vxor.u32 %v7246, 2147483648
        %v7248 = vsel %vm7127, %v7247, %v7246
        %v7249 = vsub.s32 4, %v7225
        %v7250 = vsel %vm7127, %v7249, %v7225
        %v7251 = vsel %vm7126, %v747, %v7248
        %v7252 = vsel %vm7126, 0, %v7250
        %v7253 = vmul.f32 %v7251, %v7251
        %v7254 = vmul.f32 %v7253, -0.001358992
        %v7255 = vadd.f32 %v7254, 0.041655596
        %v7256 = vmul.f32 %v7253, %v7255
        %v7257 = vadd.f32 %v7256, -0.4999988
        %v7258 = vmul.f32 %v7253, %v7257
        %v7259 = vadd.f32 1.0, %v7258
        %v7260 = vmul.f32 %v7251, %v7251
        %v7261 = vmul.f32 %v7260, -0.00019511016
        %v7262 = vadd.f32 %v7261, 0.008332121
        %v7263 = vmul.f32 %v7260, %v7262
        %v7264 = vadd.f32 %v7263, -0.16666654
        %v7265 = vmul.f32 %v7260, %v7264
        %v7266 = vadd.f32 %v7265, 1.0
        %v7267 = vmul.f32 %v7266, %v7251
        %vm7268 = vweird.f32 %v747
        %v7269 = vadd.s32 %v7252, 3
        %v7270 = vand.u32 %v7269, 3
        %vm7271 = vcmp.lt.s32.totalorder %v7270, 2
        %vm7272 = vcmp.eq.s32.totalorder %v7270, 0
        %v7273 = vxor.u32 %v7267, 2147483648
        %v7274 = vsel %vm7272, %v7259, %v7273
        %vm7275 = vcmp.eq.s32.totalorder %v7270, 2
        %v7276 = vxor.u32 %v7259, 2147483648
        %v7277 = vsel %vm7275, %v7276, %v7267
        %v7278 = vsel %vm7271, %v7274, %v7277
        %v7279 = vsel %vm7268, nan, %v7278
        %v7280 = vand.u32 2147483647, %v748
        %vm7281 = vcmp.le.f32.partialorder %v7280, 0.7853982
        %vm7282 = vcmp.lt.s32.totalorder %v748, 0
        %v7283 = vand.u32 %v748, 2139095040
        %v7284 = vshrl.u32 %v7283, 23
        %v7285 = vsub.s32 %v7284, 127
        %v7286 = vand.u32 2147483647, %v748
        %v7287 = vand.u32 %v7286, 8388607
        %v7288 = vor.u32 %v7287, 8388608
        %v7289 = vsub.s32 0, %v7288
        %v7290 = vadd.s32 %v7285, 1
        %vm7291 = vcmp.gt.s32.totalorder %v7290, 0
        %v7292 = vsel %vm7291, %v7290, 0
        %v7293 = vshrl.u32 %v7292, 5
        %v7294 = vand.u32 %v7292, 31
        %v7295 = vsub.s32 32, %v7294
        %v7296 = vshrl.u32 683565275, %v7295
        %v7297 = vshll.u32 683565275, %v7294
        %v7298 = vshrl.u32 2475754826, %v7295
        %v7299 = vor.u32 %v7297, %v7298
        %v7300 = vshll.u32 2475754826, %v7294
        %v7301 = vshrl.u32 2131351028, %v7295
        %v7302 = vor.u32 %v7300, %v7301
        %v7303 = vshll.u32 2131351028, %v7294
        %v7304 = vshrl.u32 2102212464, %v7295
        %v7305 = vor.u32 %v7303, %v7304
        %v7306 = vshll.u32 2102212464, %v7294
        %v7307 = vshrl.u32 920167782, %v7295
        %v7308 = vor.u32 %v7306, %v7307
        %v7309 = vshll.u32 920167782, %v7294
        %v7310 = vshrl.u32 1326507024, %v7295
        %v7311 = vor.u32 %v7309, %v7310
        %vm7312 = vcmp.lt.s32.totalorder %v7293, 1
        %vm7313 = vcmp.lt.s32.totalorder %v7293, 2
        %vm7314 = vcmp.lt.s32.totalorder %v7293, 3
        %vm7315 = vcmp.lt.s32.totalorder %v7293, 4
        %v7316 = vsel %vm7312, %v7296, %v7299
        %v7317 = vsel %vm7315, %v7305, 2102212464
        %v7318 = vsel %vm7314, %v7302, %v7317
        %v7319 = vsel %vm7313, %v7316, %v7318
        %v7320 = vsel %vm7312, %v7299, %v7302
        %v7321 = vsel %vm7315, %v7308, 920167782
        %v7322 = vsel %vm7314, %v7305, %v7321
        %v7323 = vsel %vm7313, %v7320, %v7322
        %v7324 = vsel %vm7312, %v7302, %v7305
        %v7325 = vsel %vm7315, %v7311, 1326507024
        %v7326 = vsel %vm7314, %v7308, %v7325
        %v7327 = vsel %vm7313, %v7324, %v7326
        %v7328 = vshll.u32 %v7288, 8
        %v7329 = vand.u32 %v7328, 65535
        %v7330 = vshrl.u32 %v7328, 16
        %v7331 = vand.u32 %v7327, 65535
        %v7332 = vshrl.u32 %v7327, 16
        %v7333 = vmul.u32 %v7329, %v7331
        %v7334 = vmul.u32 %v7329, %v7332
        %v7335 = vmul.u32 %v7330, %v7331
        %v7336 = vmul.u32 %v7330, %v7332
        %v7337 = vshll.u32 %v7334, 16
        %v7338 = vshrl.u32 %v7334, 16
        %v7339 = vshll.u32 %v7335, 16
        %v7340 = vshrl.u32 %v7335, 16
        %vm7341 = vc.u32 %v7333, %v7337
        %v7342 = vsel %vm7341, 1, 0
        %v7343 = vadd.s32 %v7333, %v7337
        %v7344 = vadd.s32 %v7336, %v7342
        %vm7345 = vc.u32 %v7343, %v7339
        %v7346 = vsel %vm7345, 1, 0
        %v7347 = vadd.s32 %v7343, %v7339
        %v7348 = vadd.s32 %v7344, %v7346
        %v7349 = vadd.s32 %v7348, %v7338
        %v7350 = vadd.s32 %v7349, %v7340
        %v7351 = vand.u32 %v7328, 65535
        %v7352 = vshrl.u32 %v7328, 16
        %v7353 = vand.u32 %v7323, 65535
        %v7354 = vshrl.u32 %v7323, 16
        %v7355 = vmul.u32 %v7351, %v7353
        %v7356 = vmul.u32 %v7351, %v7354
        %v7357 = vmul.u32 %v7352, %v7353
        %v7358 = vmul.u32 %v7352, %v7354
        %v7359 = vshll.u32 %v7356, 16
        %v7360 = vshrl.u32 %v7356, 16
        %v7361 = vshll.u32 %v7357, 16
        %v7362 = vshrl.u32 %v7357, 16
        %vm7363 = vc.u32 %v7355, %v7359
        %v7364 = vsel %vm7363, 1, 0
        %v7365 = vadd.s32 %v7355, %v7359
        %v7366 = vadd.s32 %v7358, %v7364
        %vm7367 = vc.u32 %v7365, %v7361
        %v7368 = vsel %vm7367, 1, 0
        %v7369 = vadd.s32 %v7365, %v7361
        %v7370 = vadd.s32 %v7366, %v7368
        %v7371 = vadd.s32 %v7370, %v7360
        %v7372 = vadd.s32 %v7371, %v7362
        %v7373 = vmul.u32 %v7328, %v7319
        %v7374 = vadd.s32 %v7350, %v7369
        %vm7375 = vc.u32 %v7350, %v7369
        %v7376 = vadd.s32 %v7372, 1
        %v7377 = vsel %vm7375, %v7376, %v7372
        %v7378 = vadd.s32 %v7373, %v7377
        %v7379 = vadd.s32 %v7378, 536870912
        %v7380 = vshrl.u32 %v7379, 30
        %v7381 = vshll.u32 %v7380, 30
        %v7382 = vsub.s32 %v7378, %v7381
        %vm7383 = vcmp.lt.s32.totalorder %v7382, 0
        %v7384 = vsub.s32 0, %v7382
        %v7385 = vsel %vm7383, %v7384, %v7382
        %v7386 = vclz %v7385
        %v7387 = vsub.s32 %v7386, 2
        %vm7388 = vcmp.gt.s32.totalorder 0, %v7387
        %v7389 = vsel %vm7388, 0, %v7387
        %v7390 = vsub.s32 32, %v7389
        %v7391 = vshll.u32 %v7382, %v7389
        %v7392 = vshrl.u32 %v7374, %v7390
        %v7393 = vor.u32 %v7391, %v7392
        %v7394 = vsub.s32 4294967266, %v7389
        %v7395 = vadd.s32 %v7394, 127
        %v7396 = vshll.u32 %v7395, 23
        %v7397 = vor.u32 4788187, %v7396
        %v7398 = vand.u32 2147483647, %v7397
        %v7400 = vcvt.s32.f32 %v7393
        %v7401 = vmul.f32 %v7400, %v7398
        %v7402 = vxor.u32 %v7401, 2147483648
        %v7403 = vsel %vm7282, %v7402, %v7401
        %v7404 = vsub.s32 4, %v7380
        %v7405 = vsel %vm7282, %v7404, %v7380
        %v7406 = vsel %vm7281, %v748, %v7403
        %v7407 = vsel %vm7281, 0, %v7405
        %v7408 = vmul.f32 %v7406, %v7406
        %v7409 = vmul.f32 %v7408, -0.001358992
        %v7410 = vadd.f32 %v7409, 0.041655596
        %v7411 = vmul.f32 %v7408, %v7410
        %v7412 = vadd.f32 %v7411, -0.4999988
        %v7413 = vmul.f32 %v7408, %v7412
        %v7414 = vadd.f32 1.0, %v7413
        %v7415 = vmul.f32 %v7406, %v7406
        %v7416 = vmul.f32 %v7415, -0.00019511016
        %v7417 = vadd.f32 %v7416, 0.008332121
        %v7418 = vmul.f32 %v7415, %v7417
        %v7419 = vadd.f32 %v7418, -0.16666654
        %v7420 = vmul.f32 %v7415, %v7419
        %v7421 = vadd.f32 %v7420, 1.0
        %v7422 = vmul.f32 %v7421, %v7406
        %vm7423 = vweird.f32 %v748
        %v7424 = vadd.s32 %v7407, 3
        %v7425 = vand.u32 %v7424, 3
        %vm7426 = vcmp.lt.s32.totalorder %v7425, 2
        %vm7427 = vcmp.eq.s32.totalorder %v7425, 0
        %v7428 = vxor.u32 %v7422, 2147483648
        %v7429 = vsel %vm7427, %v7414, %v7428
        %vm7430 = vcmp.eq.s32.totalorder %v7425, 2
        %v7431 = vxor.u32 %v7414, 2147483648
        %v7432 = vsel %vm7430, %v7431, %v7422
        %v7433 = vsel %vm7426, %v7429, %v7432
        %v7434 = vsel %vm7423, nan, %v7433
        %v7435 = vand.u32 2147483647, %v749
        %vm7436 = vcmp.le.f32.partialorder %v7435, 0.7853982
        %vm7437 = vcmp.lt.s32.totalorder %v749, 0
        %v7438 = vand.u32 %v749, 2139095040
        %v7439 = vshrl.u32 %v7438, 23
        %v7440 = vsub.s32 %v7439, 127
        %v7441 = vand.u32 2147483647, %v749
        %v7442 = vand.u32 %v7441, 8388607
        %v7443 = vor.u32 %v7442, 8388608
        %v7444 = vsub.s32 0, %v7443
        %v7445 = vadd.s32 %v7440, 1
        %vm7446 = vcmp.gt.s32.totalorder %v7445, 0
        %v7447 = vsel %vm7446, %v7445, 0
        %v7448 = vshrl.u32 %v7447, 5
        %v7449 = vand.u32 %v7447, 31
        %v7450 = vsub.s32 32, %v7449
        %v7451 = vshrl.u32 683565275, %v7450
        %v7452 = vshll.u32 683565275, %v7449
        %v7453 = vshrl.u32 2475754826, %v7450
        %v7454 = vor.u32 %v7452, %v7453
        %v7455 = vshll.u32 2475754826, %v7449
        %v7456 = vshrl.u32 2131351028, %v7450
        %v7457 = vor.u32 %v7455, %v7456
        %v7458 = vshll.u32 2131351028, %v7449
        %v7459 = vshrl.u32 2102212464, %v7450
        %v7460 = vor.u32 %v7458, %v7459
        %v7461 = vshll.u32 2102212464, %v7449
        %v7462 = vshrl.u32 920167782, %v7450
        %v7463 = vor.u32 %v7461, %v7462
        %v7464 = vshll.u32 920167782, %v7449
        %v7465 = vshrl.u32 1326507024, %v7450
        %v7466 = vor.u32 %v7464, %v7465
        %vm7467 = vcmp.lt.s32.totalorder %v7448, 1
        %vm7468 = vcmp.lt.s32.totalorder %v7448, 2
        %vm7469 = vcmp.lt.s32.totalorder %v7448, 3
        %vm7470 = vcmp.lt.s32.totalorder %v7448, 4
        %v7471 = vsel %vm7467, %v7451, %v7454
        %v7472 = vsel %vm7470, %v7460, 2102212464
        %v7473 = vsel %vm7469, %v7457, %v7472
        %v7474 = vsel %vm7468, %v7471, %v7473
        %v7475 = vsel %vm7467, %v7454, %v7457
        %v7476 = vsel %vm7470, %v7463, 920167782
        %v7477 = vsel %vm7469, %v7460, %v7476
        %v7478 = vsel %vm7468, %v7475, %v7477
        %v7479 = vsel %vm7467, %v7457, %v7460
        %v7480 = vsel %vm7470, %v7466, 1326507024
        %v7481 = vsel %vm7469, %v7463, %v7480
        %v7482 = vsel %vm7468, %v7479, %v7481
        %v7483 = vshll.u32 %v7443, 8
        %v7484 = vand.u32 %v7483, 65535
        %v7485 = vshrl.u32 %v7483, 16
        %v7486 = vand.u32 %v7482, 65535
        %v7487 = vshrl.u32 %v7482, 16
        %v7488 = vmul.u32 %v7484, %v7486
        %v7489 = vmul.u32 %v7484, %v7487
        %v7490 = vmul.u32 %v7485, %v7486
        %v7491 = vmul.u32 %v7485, %v7487
        %v7492 = vshll.u32 %v7489, 16
        %v7493 = vshrl.u32 %v7489, 16
        %v7494 = vshll.u32 %v7490, 16
        %v7495 = vshrl.u32 %v7490, 16
        %vm7496 = vc.u32 %v7488, %v7492
        %v7497 = vsel %vm7496, 1, 0
        %v7498 = vadd.s32 %v7488, %v7492
        %v7499 = vadd.s32 %v7491, %v7497
        %vm7500 = vc.u32 %v7498, %v7494
        %v7501 = vsel %vm7500, 1, 0
        %v7502 = vadd.s32 %v7498, %v7494
        %v7503 = vadd.s32 %v7499, %v7501
        %v7504 = vadd.s32 %v7503, %v7493
        %v7505 = vadd.s32 %v7504, %v7495
        %v7506 = vand.u32 %v7483, 65535
        %v7507 = vshrl.u32 %v7483, 16
        %v7508 = vand.u32 %v7478, 65535
        %v7509 = vshrl.u32 %v7478, 16
        %v7510 = vmul.u32 %v7506, %v7508
        %v7511 = vmul.u32 %v7506, %v7509
        %v7512 = vmul.u32 %v7507, %v7508
        %v7513 = vmul.u32 %v7507, %v7509
        %v7514 = vshll.u32 %v7511, 16
        %v7515 = vshrl.u32 %v7511, 16
        %v7516 = vshll.u32 %v7512, 16
        %v7517 = vshrl.u32 %v7512, 16
        %vm7518 = vc.u32 %v7510, %v7514
        %v7519 = vsel %vm7518, 1, 0
        %v7520 = vadd.s32 %v7510, %v7514
        %v7521 = vadd.s32 %v7513, %v7519
        %vm7522 = vc.u32 %v7520, %v7516
        %v7523 = vsel %vm7522, 1, 0
        %v7524 = vadd.s32 %v7520, %v7516
        %v7525 = vadd.s32 %v7521, %v7523
        %v7526 = vadd.s32 %v7525, %v7515
        %v7527 = vadd.s32 %v7526, %v7517
        %v7528 = vmul.u32 %v7483, %v7474
        %v7529 = vadd.s32 %v7505, %v7524
        %vm7530 = vc.u32 %v7505, %v7524
        %v7531 = vadd.s32 %v7527, 1
        %v7532 = vsel %vm7530, %v7531, %v7527
        %v7533 = vadd.s32 %v7528, %v7532
        %v7534 = vadd.s32 %v7533, 536870912
        %v7535 = vshrl.u32 %v7534, 30
        %v7536 = vshll.u32 %v7535, 30
        %v7537 = vsub.s32 %v7533, %v7536
        %vm7538 = vcmp.lt.s32.totalorder %v7537, 0
        %v7539 = vsub.s32 0, %v7537
        %v7540 = vsel %vm7538, %v7539, %v7537
        %v7541 = vclz %v7540
        %v7542 = vsub.s32 %v7541, 2
        %vm7543 = vcmp.gt.s32.totalorder 0, %v7542
        %v7544 = vsel %vm7543, 0, %v7542
        %v7545 = vsub.s32 32, %v7544
        %v7546 = vshll.u32 %v7537, %v7544
        %v7547 = vshrl.u32 %v7529, %v7545
        %v7548 = vor.u32 %v7546, %v7547
        %v7549 = vsub.s32 4294967266, %v7544
        %v7550 = vadd.s32 %v7549, 127
        %v7551 = vshll.u32 %v7550, 23
        %v7552 = vor.u32 4788187, %v7551
        %v7553 = vand.u32 2147483647, %v7552
        %v7555 = vcvt.s32.f32 %v7548
        %v7556 = vmul.f32 %v7555, %v7553
        %v7557 = vxor.u32 %v7556, 2147483648
        %v7558 = vsel %vm7437, %v7557, %v7556
        %v7559 = vsub.s32 4, %v7535
        %v7560 = vsel %vm7437, %v7559, %v7535
        %v7561 = vsel %vm7436, %v749, %v7558
        %v7562 = vsel %vm7436, 0, %v7560
        %v7563 = vmul.f32 %v7561, %v7561
        %v7564 = vmul.f32 %v7563, -0.001358992
        %v7565 = vadd.f32 %v7564, 0.041655596
        %v7566 = vmul.f32 %v7563, %v7565
        %v7567 = vadd.f32 %v7566, -0.4999988
        %v7568 = vmul.f32 %v7563, %v7567
        %v7569 = vadd.f32 1.0, %v7568
        %v7570 = vmul.f32 %v7561, %v7561
        %v7571 = vmul.f32 %v7570, -0.00019511016
        %v7572 = vadd.f32 %v7571, 0.008332121
        %v7573 = vmul.f32 %v7570, %v7572
        %v7574 = vadd.f32 %v7573, -0.16666654
        %v7575 = vmul.f32 %v7570, %v7574
        %v7576 = vadd.f32 %v7575, 1.0
        %v7577 = vmul.f32 %v7576, %v7561
        %vm7578 = vweird.f32 %v749
        %v7579 = vadd.s32 %v7562, 3
        %v7580 = vand.u32 %v7579, 3
        %vm7581 = vcmp.lt.s32.totalorder %v7580, 2
        %vm7582 = vcmp.eq.s32.totalorder %v7580, 0
        %v7583 = vxor.u32 %v7577, 2147483648
        %v7584 = vsel %vm7582, %v7569, %v7583
        %vm7585 = vcmp.eq.s32.totalorder %v7580, 2
        %v7586 = vxor.u32 %v7569, 2147483648
        %v7587 = vsel %vm7585, %v7586, %v7577
        %v7588 = vsel %vm7581, %v7584, %v7587
        %v7589 = vsel %vm7578, nan, %v7588
        %v7590 = vand.u32 2147483647, %v750
        %vm7591 = vcmp.le.f32.partialorder %v7590, 0.7853982
        %vm7592 = vcmp.lt.s32.totalorder %v750, 0
        %v7593 = vand.u32 %v750, 2139095040
        %v7594 = vshrl.u32 %v7593, 23
        %v7595 = vsub.s32 %v7594, 127
        %v7596 = vand.u32 2147483647, %v750
        %v7597 = vand.u32 %v7596, 8388607
        %v7598 = vor.u32 %v7597, 8388608
        %v7599 = vsub.s32 0, %v7598
        %v7600 = vadd.s32 %v7595, 1
        %vm7601 = vcmp.gt.s32.totalorder %v7600, 0
        %v7602 = vsel %vm7601, %v7600, 0
        %v7603 = vshrl.u32 %v7602, 5
        %v7604 = vand.u32 %v7602, 31
        %v7605 = vsub.s32 32, %v7604
        %v7606 = vshrl.u32 683565275, %v7605
        %v7607 = vshll.u32 683565275, %v7604
        %v7608 = vshrl.u32 2475754826, %v7605
        %v7609 = vor.u32 %v7607, %v7608
        %v7610 = vshll.u32 2475754826, %v7604
        %v7611 = vshrl.u32 2131351028, %v7605
        %v7612 = vor.u32 %v7610, %v7611
        %v7613 = vshll.u32 2131351028, %v7604
        %v7614 = vshrl.u32 2102212464, %v7605
        %v7615 = vor.u32 %v7613, %v7614
        %v7616 = vshll.u32 2102212464, %v7604
        %v7617 = vshrl.u32 920167782, %v7605
        %v7618 = vor.u32 %v7616, %v7617
        %v7619 = vshll.u32 920167782, %v7604
        %v7620 = vshrl.u32 1326507024, %v7605
        %v7621 = vor.u32 %v7619, %v7620
        %vm7622 = vcmp.lt.s32.totalorder %v7603, 1
        %vm7623 = vcmp.lt.s32.totalorder %v7603, 2
        %vm7624 = vcmp.lt.s32.totalorder %v7603, 3
        %vm7625 = vcmp.lt.s32.totalorder %v7603, 4
        %v7626 = vsel %vm7622, %v7606, %v7609
        %v7627 = vsel %vm7625, %v7615, 2102212464
        %v7628 = vsel %vm7624, %v7612, %v7627
        %v7629 = vsel %vm7623, %v7626, %v7628
        %v7630 = vsel %vm7622, %v7609, %v7612
        %v7631 = vsel %vm7625, %v7618, 920167782
        %v7632 = vsel %vm7624, %v7615, %v7631
        %v7633 = vsel %vm7623, %v7630, %v7632
        %v7634 = vsel %vm7622, %v7612, %v7615
        %v7635 = vsel %vm7625, %v7621, 1326507024
        %v7636 = vsel %vm7624, %v7618, %v7635
        %v7637 = vsel %vm7623, %v7634, %v7636
        %v7638 = vshll.u32 %v7598, 8
        %v7639 = vand.u32 %v7638, 65535
        %v7640 = vshrl.u32 %v7638, 16
        %v7641 = vand.u32 %v7637, 65535
        %v7642 = vshrl.u32 %v7637, 16
        %v7643 = vmul.u32 %v7639, %v7641
        %v7644 = vmul.u32 %v7639, %v7642
        %v7645 = vmul.u32 %v7640, %v7641
        %v7646 = vmul.u32 %v7640, %v7642
        %v7647 = vshll.u32 %v7644, 16
        %v7648 = vshrl.u32 %v7644, 16
        %v7649 = vshll.u32 %v7645, 16
        %v7650 = vshrl.u32 %v7645, 16
        %vm7651 = vc.u32 %v7643, %v7647
        %v7652 = vsel %vm7651, 1, 0
        %v7653 = vadd.s32 %v7643, %v7647
        %v7654 = vadd.s32 %v7646, %v7652
        %vm7655 = vc.u32 %v7653, %v7649
        %v7656 = vsel %vm7655, 1, 0
        %v7657 = vadd.s32 %v7653, %v7649
        %v7658 = vadd.s32 %v7654, %v7656
        %v7659 = vadd.s32 %v7658, %v7648
        %v7660 = vadd.s32 %v7659, %v7650
        %v7661 = vand.u32 %v7638, 65535
        %v7662 = vshrl.u32 %v7638, 16
        %v7663 = vand.u32 %v7633, 65535
        %v7664 = vshrl.u32 %v7633, 16
        %v7665 = vmul.u32 %v7661, %v7663
        %v7666 = vmul.u32 %v7661, %v7664
        %v7667 = vmul.u32 %v7662, %v7663
        %v7668 = vmul.u32 %v7662, %v7664
        %v7669 = vshll.u32 %v7666, 16
        %v7670 = vshrl.u32 %v7666, 16
        %v7671 = vshll.u32 %v7667, 16
        %v7672 = vshrl.u32 %v7667, 16
        %vm7673 = vc.u32 %v7665, %v7669
        %v7674 = vsel %vm7673, 1, 0
        %v7675 = vadd.s32 %v7665, %v7669
        %v7676 = vadd.s32 %v7668, %v7674
        %vm7677 = vc.u32 %v7675, %v7671
        %v7678 = vsel %vm7677, 1, 0
        %v7679 = vadd.s32 %v7675, %v7671
        %v7680 = vadd.s32 %v7676, %v7678
        %v7681 = vadd.s32 %v7680, %v7670
        %v7682 = vadd.s32 %v7681, %v7672
        %v7683 = vmul.u32 %v7638, %v7629
        %v7684 = vadd.s32 %v7660, %v7679
        %vm7685 = vc.u32 %v7660, %v7679
        %v7686 = vadd.s32 %v7682, 1
        %v7687 = vsel %vm7685, %v7686, %v7682
        %v7688 = vadd.s32 %v7683, %v7687
        %v7689 = vadd.s32 %v7688, 536870912
        %v7690 = vshrl.u32 %v7689, 30
        %v7691 = vshll.u32 %v7690, 30
        %v7692 = vsub.s32 %v7688, %v7691
        %vm7693 = vcmp.lt.s32.totalorder %v7692, 0
        %v7694 = vsub.s32 0, %v7692
        %v7695 = vsel %vm7693, %v7694, %v7692
        %v7696 = vclz %v7695
        %v7697 = vsub.s32 %v7696, 2
        %vm7698 = vcmp.gt.s32.totalorder 0, %v7697
        %v7699 = vsel %vm7698, 0, %v7697
        %v7700 = vsub.s32 32, %v7699
        %v7701 = vshll.u32 %v7692, %v7699
        %v7702 = vshrl.u32 %v7684, %v7700
        %v7703 = vor.u32 %v7701, %v7702
        %v7704 = vsub.s32 4294967266, %v7699
        %v7705 = vadd.s32 %v7704, 127
        %v7706 = vshll.u32 %v7705, 23
        %v7707 = vor.u32 4788187, %v7706
        %v7708 = vand.u32 2147483647, %v7707
        %v7710 = vcvt.s32.f32 %v7703
        %v7711 = vmul.f32 %v7710, %v7708
        %v7712 = vxor.u32 %v7711, 2147483648
        %v7713 = vsel %vm7592, %v7712, %v7711
        %v7714 = vsub.s32 4, %v7690
        %v7715 = vsel %vm7592, %v7714, %v7690
        %v7716 = vsel %vm7591, %v750, %v7713
        %v7717 = vsel %vm7591, 0, %v7715
        %v7718 = vmul.f32 %v7716, %v7716
        %v7719 = vmul.f32 %v7718, -0.001358992
        %v7720 = vadd.f32 %v7719, 0.041655596
        %v7721 = vmul.f32 %v7718, %v7720
        %v7722 = vadd.f32 %v7721, -0.4999988
        %v7723 = vmul.f32 %v7718, %v7722
        %v7724 = vadd.f32 1.0, %v7723
        %v7725 = vmul.f32 %v7716, %v7716
        %v7726 = vmul.f32 %v7725, -0.00019511016
        %v7727 = vadd.f32 %v7726, 0.008332121
        %v7728 = vmul.f32 %v7725, %v7727
        %v7729 = vadd.f32 %v7728, -0.16666654
        %v7730 = vmul.f32 %v7725, %v7729
        %v7731 = vadd.f32 %v7730, 1.0
        %v7732 = vmul.f32 %v7731, %v7716
        %vm7733 = vweird.f32 %v750
        %v7734 = vadd.s32 %v7717, 3
        %v7735 = vand.u32 %v7734, 3
        %vm7736 = vcmp.lt.s32.totalorder %v7735, 2
        %vm7737 = vcmp.eq.s32.totalorder %v7735, 0
        %v7738 = vxor.u32 %v7732, 2147483648
        %v7739 = vsel %vm7737, %v7724, %v7738
        %vm7740 = vcmp.eq.s32.totalorder %v7735, 2
        %v7741 = vxor.u32 %v7724, 2147483648
        %v7742 = vsel %vm7740, %v7741, %v7732
        %v7743 = vsel %vm7736, %v7739, %v7742
        %v7744 = vsel %vm7733, nan, %v7743
        %v7745 = vand.u32 2147483647, %v751
        %vm7746 = vcmp.le.f32.partialorder %v7745, 0.7853982
        %vm7747 = vcmp.lt.s32.totalorder %v751, 0
        %v7748 = vand.u32 %v751, 2139095040
        %v7749 = vshrl.u32 %v7748, 23
        %v7750 = vsub.s32 %v7749, 127
        %v7751 = vand.u32 2147483647, %v751
        %v7752 = vand.u32 %v7751, 8388607
        %v7753 = vor.u32 %v7752, 8388608
        %v7754 = vsub.s32 0, %v7753
        %v7755 = vadd.s32 %v7750, 1
        %vm7756 = vcmp.gt.s32.totalorder %v7755, 0
        %v7757 = vsel %vm7756, %v7755, 0
        %v7758 = vshrl.u32 %v7757, 5
        %v7759 = vand.u32 %v7757, 31
        %v7760 = vsub.s32 32, %v7759
        %v7761 = vshrl.u32 683565275, %v7760
        %v7762 = vshll.u32 683565275, %v7759
        %v7763 = vshrl.u32 2475754826, %v7760
        %v7764 = vor.u32 %v7762, %v7763
        %v7765 = vshll.u32 2475754826, %v7759
        %v7766 = vshrl.u32 2131351028, %v7760
        %v7767 = vor.u32 %v7765, %v7766
        %v7768 = vshll.u32 2131351028, %v7759
        %v7769 = vshrl.u32 2102212464, %v7760
        %v7770 = vor.u32 %v7768, %v7769
        %v7771 = vshll.u32 2102212464, %v7759
        %v7772 = vshrl.u32 920167782, %v7760
        %v7773 = vor.u32 %v7771, %v7772
        %v7774 = vshll.u32 920167782, %v7759
        %v7775 = vshrl.u32 1326507024, %v7760
        %v7776 = vor.u32 %v7774, %v7775
        %vm7777 = vcmp.lt.s32.totalorder %v7758, 1
        %vm7778 = vcmp.lt.s32.totalorder %v7758, 2
        %vm7779 = vcmp.lt.s32.totalorder %v7758, 3
        %vm7780 = vcmp.lt.s32.totalorder %v7758, 4
        %v7781 = vsel %vm7777, %v7761, %v7764
        %v7782 = vsel %vm7780, %v7770, 2102212464
        %v7783 = vsel %vm7779, %v7767, %v7782
        %v7784 = vsel %vm7778, %v7781, %v7783
        %v7785 = vsel %vm7777, %v7764, %v7767
        %v7786 = vsel %vm7780, %v7773, 920167782
        %v7787 = vsel %vm7779, %v7770, %v7786
        %v7788 = vsel %vm7778, %v7785, %v7787
        %v7789 = vsel %vm7777, %v7767, %v7770
        %v7790 = vsel %vm7780, %v7776, 1326507024
        %v7791 = vsel %vm7779, %v7773, %v7790
        %v7792 = vsel %vm7778, %v7789, %v7791
        %v7793 = vshll.u32 %v7753, 8
        %v7794 = vand.u32 %v7793, 65535
        %v7795 = vshrl.u32 %v7793, 16
        %v7796 = vand.u32 %v7792, 65535
        %v7797 = vshrl.u32 %v7792, 16
        %v7798 = vmul.u32 %v7794, %v7796
        %v7799 = vmul.u32 %v7794, %v7797
        %v7800 = vmul.u32 %v7795, %v7796
        %v7801 = vmul.u32 %v7795, %v7797
        %v7802 = vshll.u32 %v7799, 16
        %v7803 = vshrl.u32 %v7799, 16
        %v7804 = vshll.u32 %v7800, 16
        %v7805 = vshrl.u32 %v7800, 16
        %vm7806 = vc.u32 %v7798, %v7802
        %v7807 = vsel %vm7806, 1, 0
        %v7808 = vadd.s32 %v7798, %v7802
        %v7809 = vadd.s32 %v7801, %v7807
        %vm7810 = vc.u32 %v7808, %v7804
        %v7811 = vsel %vm7810, 1, 0
        %v7812 = vadd.s32 %v7808, %v7804
        %v7813 = vadd.s32 %v7809, %v7811
        %v7814 = vadd.s32 %v7813, %v7803
        %v7815 = vadd.s32 %v7814, %v7805
        %v7816 = vand.u32 %v7793, 65535
        %v7817 = vshrl.u32 %v7793, 16
        %v7818 = vand.u32 %v7788, 65535
        %v7819 = vshrl.u32 %v7788, 16
        %v7820 = vmul.u32 %v7816, %v7818
        %v7821 = vmul.u32 %v7816, %v7819
        %v7822 = vmul.u32 %v7817, %v7818
        %v7823 = vmul.u32 %v7817, %v7819
        %v7824 = vshll.u32 %v7821, 16
        %v7825 = vshrl.u32 %v7821, 16
        %v7826 = vshll.u32 %v7822, 16
        %v7827 = vshrl.u32 %v7822, 16
        %vm7828 = vc.u32 %v7820, %v7824
        %v7829 = vsel %vm7828, 1, 0
        %v7830 = vadd.s32 %v7820, %v7824
        %v7831 = vadd.s32 %v7823, %v7829
        %vm7832 = vc.u32 %v7830, %v7826
        %v7833 = vsel %vm7832, 1, 0
        %v7834 = vadd.s32 %v7830, %v7826
        %v7835 = vadd.s32 %v7831, %v7833
        %v7836 = vadd.s32 %v7835, %v7825
        %v7837 = vadd.s32 %v7836, %v7827
        %v7838 = vmul.u32 %v7793, %v7784
        %v7839 = vadd.s32 %v7815, %v7834
        %vm7840 = vc.u32 %v7815, %v7834
        %v7841 = vadd.s32 %v7837, 1
        %v7842 = vsel %vm7840, %v7841, %v7837
        %v7843 = vadd.s32 %v7838, %v7842
        %v7844 = vadd.s32 %v7843, 536870912
        %v7845 = vshrl.u32 %v7844, 30
        %v7846 = vshll.u32 %v7845, 30
        %v7847 = vsub.s32 %v7843, %v7846
        %vm7848 = vcmp.lt.s32.totalorder %v7847, 0
        %v7849 = vsub.s32 0, %v7847
        %v7850 = vsel %vm7848, %v7849, %v7847
        %v7851 = vclz %v7850
        %v7852 = vsub.s32 %v7851, 2
        %vm7853 = vcmp.gt.s32.totalorder 0, %v7852
        %v7854 = vsel %vm7853, 0, %v7852
        %v7855 = vsub.s32 32, %v7854
        %v7856 = vshll.u32 %v7847, %v7854
        %v7857 = vshrl.u32 %v7839, %v7855
        %v7858 = vor.u32 %v7856, %v7857
        %v7859 = vsub.s32 4294967266, %v7854
        %v7860 = vadd.s32 %v7859, 127
        %v7861 = vshll.u32 %v7860, 23
        %v7862 = vor.u32 4788187, %v7861
        %v7863 = vand.u32 2147483647, %v7862
        %v7865 = vcvt.s32.f32 %v7858
        %v7866 = vmul.f32 %v7865, %v7863
        %v7867 = vxor.u32 %v7866, 2147483648
        %v7868 = vsel %vm7747, %v7867, %v7866
        %v7869 = vsub.s32 4, %v7845
        %v7870 = vsel %vm7747, %v7869, %v7845
        %v7871 = vsel %vm7746, %v751, %v7868
        %v7872 = vsel %vm7746, 0, %v7870
        %v7873 = vmul.f32 %v7871, %v7871
        %v7874 = vmul.f32 %v7873, -0.001358992
        %v7875 = vadd.f32 %v7874, 0.041655596
        %v7876 = vmul.f32 %v7873, %v7875
        %v7877 = vadd.f32 %v7876, -0.4999988
        %v7878 = vmul.f32 %v7873, %v7877
        %v7879 = vadd.f32 1.0, %v7878
        %v7880 = vmul.f32 %v7871, %v7871
        %v7881 = vmul.f32 %v7880, -0.00019511016
        %v7882 = vadd.f32 %v7881, 0.008332121
        %v7883 = vmul.f32 %v7880, %v7882
        %v7884 = vadd.f32 %v7883, -0.16666654
        %v7885 = vmul.f32 %v7880, %v7884
        %v7886 = vadd.f32 %v7885, 1.0
        %v7887 = vmul.f32 %v7886, %v7871
        %vm7888 = vweird.f32 %v751
        %v7889 = vadd.s32 %v7872, 3
        %v7890 = vand.u32 %v7889, 3
        %vm7891 = vcmp.lt.s32.totalorder %v7890, 2
        %vm7892 = vcmp.eq.s32.totalorder %v7890, 0
        %v7893 = vxor.u32 %v7887, 2147483648
        %v7894 = vsel %vm7892, %v7879, %v7893
        %vm7895 = vcmp.eq.s32.totalorder %v7890, 2
        %v7896 = vxor.u32 %v7879, 2147483648
        %v7897 = vsel %vm7895, %v7896, %v7887
        %v7898 = vsel %vm7891, %v7894, %v7897
        %v7899 = vsel %vm7888, nan, %v7898
        %v7900 = vand.u32 2147483647, %v752
        %vm7901 = vcmp.le.f32.partialorder %v7900, 0.7853982
        %vm7902 = vcmp.lt.s32.totalorder %v752, 0
        %v7903 = vand.u32 %v752, 2139095040
        %v7904 = vshrl.u32 %v7903, 23
        %v7905 = vsub.s32 %v7904, 127
        %v7906 = vand.u32 2147483647, %v752
        %v7907 = vand.u32 %v7906, 8388607
        %v7908 = vor.u32 %v7907, 8388608
        %v7909 = vsub.s32 0, %v7908
        %v7910 = vadd.s32 %v7905, 1
        %vm7911 = vcmp.gt.s32.totalorder %v7910, 0
        %v7912 = vsel %vm7911, %v7910, 0
        %v7913 = vshrl.u32 %v7912, 5
        %v7914 = vand.u32 %v7912, 31
        %v7915 = vsub.s32 32, %v7914
        %v7916 = vshrl.u32 683565275, %v7915
        %v7917 = vshll.u32 683565275, %v7914
        %v7918 = vshrl.u32 2475754826, %v7915
        %v7919 = vor.u32 %v7917, %v7918
        %v7920 = vshll.u32 2475754826, %v7914
        %v7921 = vshrl.u32 2131351028, %v7915
        %v7922 = vor.u32 %v7920, %v7921
        %v7923 = vshll.u32 2131351028, %v7914
        %v7924 = vshrl.u32 2102212464, %v7915
        %v7925 = vor.u32 %v7923, %v7924
        %v7926 = vshll.u32 2102212464, %v7914
        %v7927 = vshrl.u32 920167782, %v7915
        %v7928 = vor.u32 %v7926, %v7927
        %v7929 = vshll.u32 920167782, %v7914
        %v7930 = vshrl.u32 1326507024, %v7915
        %v7931 = vor.u32 %v7929, %v7930
        %vm7932 = vcmp.lt.s32.totalorder %v7913, 1
        %vm7933 = vcmp.lt.s32.totalorder %v7913, 2
        %vm7934 = vcmp.lt.s32.totalorder %v7913, 3
        %vm7935 = vcmp.lt.s32.totalorder %v7913, 4
        %v7936 = vsel %vm7932, %v7916, %v7919
        %v7937 = vsel %vm7935, %v7925, 2102212464
        %v7938 = vsel %vm7934, %v7922, %v7937
        %v7939 = vsel %vm7933, %v7936, %v7938
        %v7940 = vsel %vm7932, %v7919, %v7922
        %v7941 = vsel %vm7935, %v7928, 920167782
        %v7942 = vsel %vm7934, %v7925, %v7941
        %v7943 = vsel %vm7933, %v7940, %v7942
        %v7944 = vsel %vm7932, %v7922, %v7925
        %v7945 = vsel %vm7935, %v7931, 1326507024
        %v7946 = vsel %vm7934, %v7928, %v7945
        %v7947 = vsel %vm7933, %v7944, %v7946
        %v7948 = vshll.u32 %v7908, 8
        %v7949 = vand.u32 %v7948, 65535
        %v7950 = vshrl.u32 %v7948, 16
        %v7951 = vand.u32 %v7947, 65535
        %v7952 = vshrl.u32 %v7947, 16
        %v7953 = vmul.u32 %v7949, %v7951
        %v7954 = vmul.u32 %v7949, %v7952
        %v7955 = vmul.u32 %v7950, %v7951
        %v7956 = vmul.u32 %v7950, %v7952
        %v7957 = vshll.u32 %v7954, 16
        %v7958 = vshrl.u32 %v7954, 16
        %v7959 = vshll.u32 %v7955, 16
        %v7960 = vshrl.u32 %v7955, 16
        %vm7961 = vc.u32 %v7953, %v7957
        %v7962 = vsel %vm7961, 1, 0
        %v7963 = vadd.s32 %v7953, %v7957
        %v7964 = vadd.s32 %v7956, %v7962
        %vm7965 = vc.u32 %v7963, %v7959
        %v7966 = vsel %vm7965, 1, 0
        %v7967 = vadd.s32 %v7963, %v7959
        %v7968 = vadd.s32 %v7964, %v7966
        %v7969 = vadd.s32 %v7968, %v7958
        %v7970 = vadd.s32 %v7969, %v7960
        %v7971 = vand.u32 %v7948, 65535
        %v7972 = vshrl.u32 %v7948, 16
        %v7973 = vand.u32 %v7943, 65535
        %v7974 = vshrl.u32 %v7943, 16
        %v7975 = vmul.u32 %v7971, %v7973
        %v7976 = vmul.u32 %v7971, %v7974
        %v7977 = vmul.u32 %v7972, %v7973
        %v7978 = vmul.u32 %v7972, %v7974
        %v7979 = vshll.u32 %v7976, 16
        %v7980 = vshrl.u32 %v7976, 16
        %v7981 = vshll.u32 %v7977, 16
        %v7982 = vshrl.u32 %v7977, 16
        %vm7983 = vc.u32 %v7975, %v7979
        %v7984 = vsel %vm7983, 1, 0
        %v7985 = vadd.s32 %v7975, %v7979
        %v7986 = vadd.s32 %v7978, %v7984
        %vm7987 = vc.u32 %v7985, %v7981
        %v7988 = vsel %vm7987, 1, 0
        %v7989 = vadd.s32 %v7985, %v7981
        %v7990 = vadd.s32 %v7986, %v7988
        %v7991 = vadd.s32 %v7990, %v7980
        %v7992 = vadd.s32 %v7991, %v7982
        %v7993 = vmul.u32 %v7948, %v7939
        %v7994 = vadd.s32 %v7970, %v7989
        %vm7995 = vc.u32 %v7970, %v7989
        %v7996 = vadd.s32 %v7992, 1
        %v7997 = vsel %vm7995, %v7996, %v7992
        %v7998 = vadd.s32 %v7993, %v7997
        %v7999 = vadd.s32 %v7998, 536870912
        %v8000 = vshrl.u32 %v7999, 30
        %v8001 = vshll.u32 %v8000, 30
        %v8002 = vsub.s32 %v7998, %v8001
        %vm8003 = vcmp.lt.s32.totalorder %v8002, 0
        %v8004 = vsub.s32 0, %v8002
        %v8005 = vsel %vm8003, %v8004, %v8002
        %v8006 = vclz %v8005
        %v8007 = vsub.s32 %v8006, 2
        %vm8008 = vcmp.gt.s32.totalorder 0, %v8007
        %v8009 = vsel %vm8008, 0, %v8007
        %v8010 = vsub.s32 32, %v8009
        %v8011 = vshll.u32 %v8002, %v8009
        %v8012 = vshrl.u32 %v7994, %v8010
        %v8013 = vor.u32 %v8011, %v8012
        %v8014 = vsub.s32 4294967266, %v8009
        %v8015 = vadd.s32 %v8014, 127
        %v8016 = vshll.u32 %v8015, 23
        %v8017 = vor.u32 4788187, %v8016
        %v8018 = vand.u32 2147483647, %v8017
        %v8020 = vcvt.s32.f32 %v8013
        %v8021 = vmul.f32 %v8020, %v8018
        %v8022 = vxor.u32 %v8021, 2147483648
        %v8023 = vsel %vm7902, %v8022, %v8021
        %v8024 = vsub.s32 4, %v8000
        %v8025 = vsel %vm7902, %v8024, %v8000
        %v8026 = vsel %vm7901, %v752, %v8023
        %v8027 = vsel %vm7901, 0, %v8025
        %v8028 = vmul.f32 %v8026, %v8026
        %v8029 = vmul.f32 %v8028, -0.001358992
        %v8030 = vadd.f32 %v8029, 0.041655596
        %v8031 = vmul.f32 %v8028, %v8030
        %v8032 = vadd.f32 %v8031, -0.4999988
        %v8033 = vmul.f32 %v8028, %v8032
        %v8034 = vadd.f32 1.0, %v8033
        %v8035 = vmul.f32 %v8026, %v8026
        %v8036 = vmul.f32 %v8035, -0.00019511016
        %v8037 = vadd.f32 %v8036, 0.008332121
        %v8038 = vmul.f32 %v8035, %v8037
        %v8039 = vadd.f32 %v8038, -0.16666654
        %v8040 = vmul.f32 %v8035, %v8039
        %v8041 = vadd.f32 %v8040, 1.0
        %v8042 = vmul.f32 %v8041, %v8026
        %vm8043 = vweird.f32 %v752
        %v8044 = vadd.s32 %v8027, 3
        %v8045 = vand.u32 %v8044, 3
        %vm8046 = vcmp.lt.s32.totalorder %v8045, 2
        %vm8047 = vcmp.eq.s32.totalorder %v8045, 0
        %v8048 = vxor.u32 %v8042, 2147483648
        %v8049 = vsel %vm8047, %v8034, %v8048
        %vm8050 = vcmp.eq.s32.totalorder %v8045, 2
        %v8051 = vxor.u32 %v8034, 2147483648
        %v8052 = vsel %vm8050, %v8051, %v8042
        %v8053 = vsel %vm8046, %v8049, %v8052
        %v8054 = vsel %vm8043, nan, %v8053
        %v8055 = vand.u32 2147483647, %v753
        %vm8056 = vcmp.le.f32.partialorder %v8055, 0.7853982
        %vm8057 = vcmp.lt.s32.totalorder %v753, 0
        %v8058 = vand.u32 %v753, 2139095040
        %v8059 = vshrl.u32 %v8058, 23
        %v8060 = vsub.s32 %v8059, 127
        %v8061 = vand.u32 2147483647, %v753
        %v8062 = vand.u32 %v8061, 8388607
        %v8063 = vor.u32 %v8062, 8388608
        %v8064 = vsub.s32 0, %v8063
        %v8065 = vadd.s32 %v8060, 1
        %vm8066 = vcmp.gt.s32.totalorder %v8065, 0
        %v8067 = vsel %vm8066, %v8065, 0
        %v8068 = vshrl.u32 %v8067, 5
        %v8069 = vand.u32 %v8067, 31
        %v8070 = vsub.s32 32, %v8069
        %v8071 = vshrl.u32 683565275, %v8070
        %v8072 = vshll.u32 683565275, %v8069
        %v8073 = vshrl.u32 2475754826, %v8070
        %v8074 = vor.u32 %v8072, %v8073
        %v8075 = vshll.u32 2475754826, %v8069
        %v8076 = vshrl.u32 2131351028, %v8070
        %v8077 = vor.u32 %v8075, %v8076
        %v8078 = vshll.u32 2131351028, %v8069
        %v8079 = vshrl.u32 2102212464, %v8070
        %v8080 = vor.u32 %v8078, %v8079
        %v8081 = vshll.u32 2102212464, %v8069
        %v8082 = vshrl.u32 920167782, %v8070
        %v8083 = vor.u32 %v8081, %v8082
        %v8084 = vshll.u32 920167782, %v8069
        %v8085 = vshrl.u32 1326507024, %v8070
        %v8086 = vor.u32 %v8084, %v8085
        %vm8087 = vcmp.lt.s32.totalorder %v8068, 1
        %vm8088 = vcmp.lt.s32.totalorder %v8068, 2
        %vm8089 = vcmp.lt.s32.totalorder %v8068, 3
        %vm8090 = vcmp.lt.s32.totalorder %v8068, 4
        %v8091 = vsel %vm8087, %v8071, %v8074
        %v8092 = vsel %vm8090, %v8080, 2102212464
        %v8093 = vsel %vm8089, %v8077, %v8092
        %v8094 = vsel %vm8088, %v8091, %v8093
        %v8095 = vsel %vm8087, %v8074, %v8077
        %v8096 = vsel %vm8090, %v8083, 920167782
        %v8097 = vsel %vm8089, %v8080, %v8096
        %v8098 = vsel %vm8088, %v8095, %v8097
        %v8099 = vsel %vm8087, %v8077, %v8080
        %v8100 = vsel %vm8090, %v8086, 1326507024
        %v8101 = vsel %vm8089, %v8083, %v8100
        %v8102 = vsel %vm8088, %v8099, %v8101
        %v8103 = vshll.u32 %v8063, 8
        %v8104 = vand.u32 %v8103, 65535
        %v8105 = vshrl.u32 %v8103, 16
        %v8106 = vand.u32 %v8102, 65535
        %v8107 = vshrl.u32 %v8102, 16
        %v8108 = vmul.u32 %v8104, %v8106
        %v8109 = vmul.u32 %v8104, %v8107
        %v8110 = vmul.u32 %v8105, %v8106
        %v8111 = vmul.u32 %v8105, %v8107
        %v8112 = vshll.u32 %v8109, 16
        %v8113 = vshrl.u32 %v8109, 16
        %v8114 = vshll.u32 %v8110, 16
        %v8115 = vshrl.u32 %v8110, 16
        %vm8116 = vc.u32 %v8108, %v8112
        %v8117 = vsel %vm8116, 1, 0
        %v8118 = vadd.s32 %v8108, %v8112
        %v8119 = vadd.s32 %v8111, %v8117
        %vm8120 = vc.u32 %v8118, %v8114
        %v8121 = vsel %vm8120, 1, 0
        %v8122 = vadd.s32 %v8118, %v8114
        %v8123 = vadd.s32 %v8119, %v8121
        %v8124 = vadd.s32 %v8123, %v8113
        %v8125 = vadd.s32 %v8124, %v8115
        %v8126 = vand.u32 %v8103, 65535
        %v8127 = vshrl.u32 %v8103, 16
        %v8128 = vand.u32 %v8098, 65535
        %v8129 = vshrl.u32 %v8098, 16
        %v8130 = vmul.u32 %v8126, %v8128
        %v8131 = vmul.u32 %v8126, %v8129
        %v8132 = vmul.u32 %v8127, %v8128
        %v8133 = vmul.u32 %v8127, %v8129
        %v8134 = vshll.u32 %v8131, 16
        %v8135 = vshrl.u32 %v8131, 16
        %v8136 = vshll.u32 %v8132, 16
        %v8137 = vshrl.u32 %v8132, 16
        %vm8138 = vc.u32 %v8130, %v8134
        %v8139 = vsel %vm8138, 1, 0
        %v8140 = vadd.s32 %v8130, %v8134
        %v8141 = vadd.s32 %v8133, %v8139
        %vm8142 = vc.u32 %v8140, %v8136
        %v8143 = vsel %vm8142, 1, 0
        %v8144 = vadd.s32 %v8140, %v8136
        %v8145 = vadd.s32 %v8141, %v8143
        %v8146 = vadd.s32 %v8145, %v8135
        %v8147 = vadd.s32 %v8146, %v8137
        %v8148 = vmul.u32 %v8103, %v8094
        %v8149 = vadd.s32 %v8125, %v8144
        %vm8150 = vc.u32 %v8125, %v8144
        %v8151 = vadd.s32 %v8147, 1
        %v8152 = vsel %vm8150, %v8151, %v8147
        %v8153 = vadd.s32 %v8148, %v8152
        %v8154 = vadd.s32 %v8153, 536870912
        %v8155 = vshrl.u32 %v8154, 30
        %v8156 = vshll.u32 %v8155, 30
        %v8157 = vsub.s32 %v8153, %v8156
        %vm8158 = vcmp.lt.s32.totalorder %v8157, 0
        %v8159 = vsub.s32 0, %v8157
        %v8160 = vsel %vm8158, %v8159, %v8157
        %v8161 = vclz %v8160
        %v8162 = vsub.s32 %v8161, 2
        %vm8163 = vcmp.gt.s32.totalorder 0, %v8162
        %v8164 = vsel %vm8163, 0, %v8162
        %v8165 = vsub.s32 32, %v8164
        %v8166 = vshll.u32 %v8157, %v8164
        %v8167 = vshrl.u32 %v8149, %v8165
        %v8168 = vor.u32 %v8166, %v8167
        %v8169 = vsub.s32 4294967266, %v8164
        %v8170 = vadd.s32 %v8169, 127
        %v8171 = vshll.u32 %v8170, 23
        %v8172 = vor.u32 4788187, %v8171
        %v8173 = vand.u32 2147483647, %v8172
        %v8175 = vcvt.s32.f32 %v8168
        %v8176 = vmul.f32 %v8175, %v8173
        %v8177 = vxor.u32 %v8176, 2147483648
        %v8178 = vsel %vm8057, %v8177, %v8176
        %v8179 = vsub.s32 4, %v8155
        %v8180 = vsel %vm8057, %v8179, %v8155
        %v8181 = vsel %vm8056, %v753, %v8178
        %v8182 = vsel %vm8056, 0, %v8180
        %v8183 = vmul.f32 %v8181, %v8181
        %v8184 = vmul.f32 %v8183, -0.001358992
        %v8185 = vadd.f32 %v8184, 0.041655596
        %v8186 = vmul.f32 %v8183, %v8185
        %v8187 = vadd.f32 %v8186, -0.4999988
        %v8188 = vmul.f32 %v8183, %v8187
        %v8189 = vadd.f32 1.0, %v8188
        %v8190 = vmul.f32 %v8181, %v8181
        %v8191 = vmul.f32 %v8190, -0.00019511016
        %v8192 = vadd.f32 %v8191, 0.008332121
        %v8193 = vmul.f32 %v8190, %v8192
        %v8194 = vadd.f32 %v8193, -0.16666654
        %v8195 = vmul.f32 %v8190, %v8194
        %v8196 = vadd.f32 %v8195, 1.0
        %v8197 = vmul.f32 %v8196, %v8181
        %vm8198 = vweird.f32 %v753
        %v8199 = vadd.s32 %v8182, 3
        %v8200 = vand.u32 %v8199, 3
        %vm8201 = vcmp.lt.s32.totalorder %v8200, 2
        %vm8202 = vcmp.eq.s32.totalorder %v8200, 0
        %v8203 = vxor.u32 %v8197, 2147483648
        %v8204 = vsel %vm8202, %v8189, %v8203
        %vm8205 = vcmp.eq.s32.totalorder %v8200, 2
        %v8206 = vxor.u32 %v8189, 2147483648
        %v8207 = vsel %vm8205, %v8206, %v8197
        %v8208 = vsel %vm8201, %v8204, %v8207
        %v8209 = vsel %vm8198, nan, %v8208
        %v8210 = vand.u32 2147483647, %v754
        %vm8211 = vcmp.le.f32.partialorder %v8210, 0.7853982
        %vm8212 = vcmp.lt.s32.totalorder %v754, 0
        %v8213 = vand.u32 %v754, 2139095040
        %v8214 = vshrl.u32 %v8213, 23
        %v8215 = vsub.s32 %v8214, 127
        %v8216 = vand.u32 2147483647, %v754
        %v8217 = vand.u32 %v8216, 8388607
        %v8218 = vor.u32 %v8217, 8388608
        %v8219 = vsub.s32 0, %v8218
        %v8220 = vadd.s32 %v8215, 1
        %vm8221 = vcmp.gt.s32.totalorder %v8220, 0
        %v8222 = vsel %vm8221, %v8220, 0
        %v8223 = vshrl.u32 %v8222, 5
        %v8224 = vand.u32 %v8222, 31
        %v8225 = vsub.s32 32, %v8224
        %v8226 = vshrl.u32 683565275, %v8225
        %v8227 = vshll.u32 683565275, %v8224
        %v8228 = vshrl.u32 2475754826, %v8225
        %v8229 = vor.u32 %v8227, %v8228
        %v8230 = vshll.u32 2475754826, %v8224
        %v8231 = vshrl.u32 2131351028, %v8225
        %v8232 = vor.u32 %v8230, %v8231
        %v8233 = vshll.u32 2131351028, %v8224
        %v8234 = vshrl.u32 2102212464, %v8225
        %v8235 = vor.u32 %v8233, %v8234
        %v8236 = vshll.u32 2102212464, %v8224
        %v8237 = vshrl.u32 920167782, %v8225
        %v8238 = vor.u32 %v8236, %v8237
        %v8239 = vshll.u32 920167782, %v8224
        %v8240 = vshrl.u32 1326507024, %v8225
        %v8241 = vor.u32 %v8239, %v8240
        %vm8242 = vcmp.lt.s32.totalorder %v8223, 1
        %vm8243 = vcmp.lt.s32.totalorder %v8223, 2
        %vm8244 = vcmp.lt.s32.totalorder %v8223, 3
        %vm8245 = vcmp.lt.s32.totalorder %v8223, 4
        %v8246 = vsel %vm8242, %v8226, %v8229
        %v8247 = vsel %vm8245, %v8235, 2102212464
        %v8248 = vsel %vm8244, %v8232, %v8247
        %v8249 = vsel %vm8243, %v8246, %v8248
        %v8250 = vsel %vm8242, %v8229, %v8232
        %v8251 = vsel %vm8245, %v8238, 920167782
        %v8252 = vsel %vm8244, %v8235, %v8251
        %v8253 = vsel %vm8243, %v8250, %v8252
        %v8254 = vsel %vm8242, %v8232, %v8235
        %v8255 = vsel %vm8245, %v8241, 1326507024
        %v8256 = vsel %vm8244, %v8238, %v8255
        %v8257 = vsel %vm8243, %v8254, %v8256
        %v8258 = vshll.u32 %v8218, 8
        %v8259 = vand.u32 %v8258, 65535
        %v8260 = vshrl.u32 %v8258, 16
        %v8261 = vand.u32 %v8257, 65535
        %v8262 = vshrl.u32 %v8257, 16
        %v8263 = vmul.u32 %v8259, %v8261
        %v8264 = vmul.u32 %v8259, %v8262
        %v8265 = vmul.u32 %v8260, %v8261
        %v8266 = vmul.u32 %v8260, %v8262
        %v8267 = vshll.u32 %v8264, 16
        %v8268 = vshrl.u32 %v8264, 16
        %v8269 = vshll.u32 %v8265, 16
        %v8270 = vshrl.u32 %v8265, 16
        %vm8271 = vc.u32 %v8263, %v8267
        %v8272 = vsel %vm8271, 1, 0
        %v8273 = vadd.s32 %v8263, %v8267
        %v8274 = vadd.s32 %v8266, %v8272
        %vm8275 = vc.u32 %v8273, %v8269
        %v8276 = vsel %vm8275, 1, 0
        %v8277 = vadd.s32 %v8273, %v8269
        %v8278 = vadd.s32 %v8274, %v8276
        %v8279 = vadd.s32 %v8278, %v8268
        %v8280 = vadd.s32 %v8279, %v8270
        %v8281 = vand.u32 %v8258, 65535
        %v8282 = vshrl.u32 %v8258, 16
        %v8283 = vand.u32 %v8253, 65535
        %v8284 = vshrl.u32 %v8253, 16
        %v8285 = vmul.u32 %v8281, %v8283
        %v8286 = vmul.u32 %v8281, %v8284
        %v8287 = vmul.u32 %v8282, %v8283
        %v8288 = vmul.u32 %v8282, %v8284
        %v8289 = vshll.u32 %v8286, 16
        %v8290 = vshrl.u32 %v8286, 16
        %v8291 = vshll.u32 %v8287, 16
        %v8292 = vshrl.u32 %v8287, 16
        %vm8293 = vc.u32 %v8285, %v8289
        %v8294 = vsel %vm8293, 1, 0
        %v8295 = vadd.s32 %v8285, %v8289
        %v8296 = vadd.s32 %v8288, %v8294
        %vm8297 = vc.u32 %v8295, %v8291
        %v8298 = vsel %vm8297, 1, 0
        %v8299 = vadd.s32 %v8295, %v8291
        %v8300 = vadd.s32 %v8296, %v8298
        %v8301 = vadd.s32 %v8300, %v8290
        %v8302 = vadd.s32 %v8301, %v8292
        %v8303 = vmul.u32 %v8258, %v8249
        %v8304 = vadd.s32 %v8280, %v8299
        %vm8305 = vc.u32 %v8280, %v8299
        %v8306 = vadd.s32 %v8302, 1
        %v8307 = vsel %vm8305, %v8306, %v8302
        %v8308 = vadd.s32 %v8303, %v8307
        %v8309 = vadd.s32 %v8308, 536870912
        %v8310 = vshrl.u32 %v8309, 30
        %v8311 = vshll.u32 %v8310, 30
        %v8312 = vsub.s32 %v8308, %v8311
        %vm8313 = vcmp.lt.s32.totalorder %v8312, 0
        %v8314 = vsub.s32 0, %v8312
        %v8315 = vsel %vm8313, %v8314, %v8312
        %v8316 = vclz %v8315
        %v8317 = vsub.s32 %v8316, 2
        %vm8318 = vcmp.gt.s32.totalorder 0, %v8317
        %v8319 = vsel %vm8318, 0, %v8317
        %v8320 = vsub.s32 32, %v8319
        %v8321 = vshll.u32 %v8312, %v8319
        %v8322 = vshrl.u32 %v8304, %v8320
        %v8323 = vor.u32 %v8321, %v8322
        %v8324 = vsub.s32 4294967266, %v8319
        %v8325 = vadd.s32 %v8324, 127
        %v8326 = vshll.u32 %v8325, 23
        %v8327 = vor.u32 4788187, %v8326
        %v8328 = vand.u32 2147483647, %v8327
        %v8330 = vcvt.s32.f32 %v8323
        %v8331 = vmul.f32 %v8330, %v8328
        %v8332 = vxor.u32 %v8331, 2147483648
        %v8333 = vsel %vm8212, %v8332, %v8331
        %v8334 = vsub.s32 4, %v8310
        %v8335 = vsel %vm8212, %v8334, %v8310
        %v8336 = vsel %vm8211, %v754, %v8333
        %v8337 = vsel %vm8211, 0, %v8335
        %v8338 = vmul.f32 %v8336, %v8336
        %v8339 = vmul.f32 %v8338, -0.001358992
        %v8340 = vadd.f32 %v8339, 0.041655596
        %v8341 = vmul.f32 %v8338, %v8340
        %v8342 = vadd.f32 %v8341, -0.4999988
        %v8343 = vmul.f32 %v8338, %v8342
        %v8344 = vadd.f32 1.0, %v8343
        %v8345 = vmul.f32 %v8336, %v8336
        %v8346 = vmul.f32 %v8345, -0.00019511016
        %v8347 = vadd.f32 %v8346, 0.008332121
        %v8348 = vmul.f32 %v8345, %v8347
        %v8349 = vadd.f32 %v8348, -0.16666654
        %v8350 = vmul.f32 %v8345, %v8349
        %v8351 = vadd.f32 %v8350, 1.0
        %v8352 = vmul.f32 %v8351, %v8336
        %vm8353 = vweird.f32 %v754
        %v8354 = vadd.s32 %v8337, 3
        %v8355 = vand.u32 %v8354, 3
        %vm8356 = vcmp.lt.s32.totalorder %v8355, 2
        %vm8357 = vcmp.eq.s32.totalorder %v8355, 0
        %v8358 = vxor.u32 %v8352, 2147483648
        %v8359 = vsel %vm8357, %v8344, %v8358
        %vm8360 = vcmp.eq.s32.totalorder %v8355, 2
        %v8361 = vxor.u32 %v8344, 2147483648
        %v8362 = vsel %vm8360, %v8361, %v8352
        %v8363 = vsel %vm8356, %v8359, %v8362
        %v8364 = vsel %vm8353, nan, %v8363
        %v8365 = vand.u32 2147483647, %v755
        %vm8366 = vcmp.le.f32.partialorder %v8365, 0.7853982
        %vm8367 = vcmp.lt.s32.totalorder %v755, 0
        %v8368 = vand.u32 %v755, 2139095040
        %v8369 = vshrl.u32 %v8368, 23
        %v8370 = vsub.s32 %v8369, 127
        %v8371 = vand.u32 2147483647, %v755
        %v8372 = vand.u32 %v8371, 8388607
        %v8373 = vor.u32 %v8372, 8388608
        %v8374 = vsub.s32 0, %v8373
        %v8375 = vadd.s32 %v8370, 1
        %vm8376 = vcmp.gt.s32.totalorder %v8375, 0
        %v8377 = vsel %vm8376, %v8375, 0
        %v8378 = vshrl.u32 %v8377, 5
        %v8379 = vand.u32 %v8377, 31
        %v8380 = vsub.s32 32, %v8379
        %v8381 = vshrl.u32 683565275, %v8380
        %v8382 = vshll.u32 683565275, %v8379
        %v8383 = vshrl.u32 2475754826, %v8380
        %v8384 = vor.u32 %v8382, %v8383
        %v8385 = vshll.u32 2475754826, %v8379
        %v8386 = vshrl.u32 2131351028, %v8380
        %v8387 = vor.u32 %v8385, %v8386
        %v8388 = vshll.u32 2131351028, %v8379
        %v8389 = vshrl.u32 2102212464, %v8380
        %v8390 = vor.u32 %v8388, %v8389
        %v8391 = vshll.u32 2102212464, %v8379
        %v8392 = vshrl.u32 920167782, %v8380
        %v8393 = vor.u32 %v8391, %v8392
        %v8394 = vshll.u32 920167782, %v8379
        %v8395 = vshrl.u32 1326507024, %v8380
        %v8396 = vor.u32 %v8394, %v8395
        %vm8397 = vcmp.lt.s32.totalorder %v8378, 1
        %vm8398 = vcmp.lt.s32.totalorder %v8378, 2
        %vm8399 = vcmp.lt.s32.totalorder %v8378, 3
        %vm8400 = vcmp.lt.s32.totalorder %v8378, 4
        %v8401 = vsel %vm8397, %v8381, %v8384
        %v8402 = vsel %vm8400, %v8390, 2102212464
        %v8403 = vsel %vm8399, %v8387, %v8402
        %v8404 = vsel %vm8398, %v8401, %v8403
        %v8405 = vsel %vm8397, %v8384, %v8387
        %v8406 = vsel %vm8400, %v8393, 920167782
        %v8407 = vsel %vm8399, %v8390, %v8406
        %v8408 = vsel %vm8398, %v8405, %v8407
        %v8409 = vsel %vm8397, %v8387, %v8390
        %v8410 = vsel %vm8400, %v8396, 1326507024
        %v8411 = vsel %vm8399, %v8393, %v8410
        %v8412 = vsel %vm8398, %v8409, %v8411
        %v8413 = vshll.u32 %v8373, 8
        %v8414 = vand.u32 %v8413, 65535
        %v8415 = vshrl.u32 %v8413, 16
        %v8416 = vand.u32 %v8412, 65535
        %v8417 = vshrl.u32 %v8412, 16
        %v8418 = vmul.u32 %v8414, %v8416
        %v8419 = vmul.u32 %v8414, %v8417
        %v8420 = vmul.u32 %v8415, %v8416
        %v8421 = vmul.u32 %v8415, %v8417
        %v8422 = vshll.u32 %v8419, 16
        %v8423 = vshrl.u32 %v8419, 16
        %v8424 = vshll.u32 %v8420, 16
        %v8425 = vshrl.u32 %v8420, 16
        %vm8426 = vc.u32 %v8418, %v8422
        %v8427 = vsel %vm8426, 1, 0
        %v8428 = vadd.s32 %v8418, %v8422
        %v8429 = vadd.s32 %v8421, %v8427
        %vm8430 = vc.u32 %v8428, %v8424
        %v8431 = vsel %vm8430, 1, 0
        %v8432 = vadd.s32 %v8428, %v8424
        %v8433 = vadd.s32 %v8429, %v8431
        %v8434 = vadd.s32 %v8433, %v8423
        %v8435 = vadd.s32 %v8434, %v8425
        %v8436 = vand.u32 %v8413, 65535
        %v8437 = vshrl.u32 %v8413, 16
        %v8438 = vand.u32 %v8408, 65535
        %v8439 = vshrl.u32 %v8408, 16
        %v8440 = vmul.u32 %v8436, %v8438
        %v8441 = vmul.u32 %v8436, %v8439
        %v8442 = vmul.u32 %v8437, %v8438
        %v8443 = vmul.u32 %v8437, %v8439
        %v8444 = vshll.u32 %v8441, 16
        %v8445 = vshrl.u32 %v8441, 16
        %v8446 = vshll.u32 %v8442, 16
        %v8447 = vshrl.u32 %v8442, 16
        %vm8448 = vc.u32 %v8440, %v8444
        %v8449 = vsel %vm8448, 1, 0
        %v8450 = vadd.s32 %v8440, %v8444
        %v8451 = vadd.s32 %v8443, %v8449
        %vm8452 = vc.u32 %v8450, %v8446
        %v8453 = vsel %vm8452, 1, 0
        %v8454 = vadd.s32 %v8450, %v8446
        %v8455 = vadd.s32 %v8451, %v8453
        %v8456 = vadd.s32 %v8455, %v8445
        %v8457 = vadd.s32 %v8456, %v8447
        %v8458 = vmul.u32 %v8413, %v8404
        %v8459 = vadd.s32 %v8435, %v8454
        %vm8460 = vc.u32 %v8435, %v8454
        %v8461 = vadd.s32 %v8457, 1
        %v8462 = vsel %vm8460, %v8461, %v8457
        %v8463 = vadd.s32 %v8458, %v8462
        %v8464 = vadd.s32 %v8463, 536870912
        %v8465 = vshrl.u32 %v8464, 30
        %v8466 = vshll.u32 %v8465, 30
        %v8467 = vsub.s32 %v8463, %v8466
        %vm8468 = vcmp.lt.s32.totalorder %v8467, 0
        %v8469 = vsub.s32 0, %v8467
        %v8470 = vsel %vm8468, %v8469, %v8467
        %v8471 = vclz %v8470
        %v8472 = vsub.s32 %v8471, 2
        %vm8473 = vcmp.gt.s32.totalorder 0, %v8472
        %v8474 = vsel %vm8473, 0, %v8472
        %v8475 = vsub.s32 32, %v8474
        %v8476 = vshll.u32 %v8467, %v8474
        %v8477 = vshrl.u32 %v8459, %v8475
        %v8478 = vor.u32 %v8476, %v8477
        %v8479 = vsub.s32 4294967266, %v8474
        %v8480 = vadd.s32 %v8479, 127
        %v8481 = vshll.u32 %v8480, 23
        %v8482 = vor.u32 4788187, %v8481
        %v8483 = vand.u32 2147483647, %v8482
        %v8485 = vcvt.s32.f32 %v8478
        %v8486 = vmul.f32 %v8485, %v8483
        %v8487 = vxor.u32 %v8486, 2147483648
        %v8488 = vsel %vm8367, %v8487, %v8486
        %v8489 = vsub.s32 4, %v8465
        %v8490 = vsel %vm8367, %v8489, %v8465
        %v8491 = vsel %vm8366, %v755, %v8488
        %v8492 = vsel %vm8366, 0, %v8490
        %v8493 = vmul.f32 %v8491, %v8491
        %v8494 = vmul.f32 %v8493, -0.001358992
        %v8495 = vadd.f32 %v8494, 0.041655596
        %v8496 = vmul.f32 %v8493, %v8495
        %v8497 = vadd.f32 %v8496, -0.4999988
        %v8498 = vmul.f32 %v8493, %v8497
        %v8499 = vadd.f32 1.0, %v8498
        %v8500 = vmul.f32 %v8491, %v8491
        %v8501 = vmul.f32 %v8500, -0.00019511016
        %v8502 = vadd.f32 %v8501, 0.008332121
        %v8503 = vmul.f32 %v8500, %v8502
        %v8504 = vadd.f32 %v8503, -0.16666654
        %v8505 = vmul.f32 %v8500, %v8504
        %v8506 = vadd.f32 %v8505, 1.0
        %v8507 = vmul.f32 %v8506, %v8491
        %vm8508 = vweird.f32 %v755
        %v8509 = vadd.s32 %v8492, 3
        %v8510 = vand.u32 %v8509, 3
        %vm8511 = vcmp.lt.s32.totalorder %v8510, 2
        %vm8512 = vcmp.eq.s32.totalorder %v8510, 0
        %v8513 = vxor.u32 %v8507, 2147483648
        %v8514 = vsel %vm8512, %v8499, %v8513
        %vm8515 = vcmp.eq.s32.totalorder %v8510, 2
        %v8516 = vxor.u32 %v8499, 2147483648
        %v8517 = vsel %vm8515, %v8516, %v8507
        %v8518 = vsel %vm8511, %v8514, %v8517
        %v8519 = vsel %vm8508, nan, %v8518
        %v8520 = vand.u32 2147483647, %v756
        %vm8521 = vcmp.le.f32.partialorder %v8520, 0.7853982
        %vm8522 = vcmp.lt.s32.totalorder %v756, 0
        %v8523 = vand.u32 %v756, 2139095040
        %v8524 = vshrl.u32 %v8523, 23
        %v8525 = vsub.s32 %v8524, 127
        %v8526 = vand.u32 2147483647, %v756
        %v8527 = vand.u32 %v8526, 8388607
        %v8528 = vor.u32 %v8527, 8388608
        %v8529 = vsub.s32 0, %v8528
        %v8530 = vadd.s32 %v8525, 1
        %vm8531 = vcmp.gt.s32.totalorder %v8530, 0
        %v8532 = vsel %vm8531, %v8530, 0
        %v8533 = vshrl.u32 %v8532, 5
        %v8534 = vand.u32 %v8532, 31
        %v8535 = vsub.s32 32, %v8534
        %v8536 = vshrl.u32 683565275, %v8535
        %v8537 = vshll.u32 683565275, %v8534
        %v8538 = vshrl.u32 2475754826, %v8535
        %v8539 = vor.u32 %v8537, %v8538
        %v8540 = vshll.u32 2475754826, %v8534
        %v8541 = vshrl.u32 2131351028, %v8535
        %v8542 = vor.u32 %v8540, %v8541
        %v8543 = vshll.u32 2131351028, %v8534
        %v8544 = vshrl.u32 2102212464, %v8535
        %v8545 = vor.u32 %v8543, %v8544
        %v8546 = vshll.u32 2102212464, %v8534
        %v8547 = vshrl.u32 920167782, %v8535
        %v8548 = vor.u32 %v8546, %v8547
        %v8549 = vshll.u32 920167782, %v8534
        %v8550 = vshrl.u32 1326507024, %v8535
        %v8551 = vor.u32 %v8549, %v8550
        %vm8552 = vcmp.lt.s32.totalorder %v8533, 1
        %vm8553 = vcmp.lt.s32.totalorder %v8533, 2
        %vm8554 = vcmp.lt.s32.totalorder %v8533, 3
        %vm8555 = vcmp.lt.s32.totalorder %v8533, 4
        %v8556 = vsel %vm8552, %v8536, %v8539
        %v8557 = vsel %vm8555, %v8545, 2102212464
        %v8558 = vsel %vm8554, %v8542, %v8557
        %v8559 = vsel %vm8553, %v8556, %v8558
        %v8560 = vsel %vm8552, %v8539, %v8542
        %v8561 = vsel %vm8555, %v8548, 920167782
        %v8562 = vsel %vm8554, %v8545, %v8561
        %v8563 = vsel %vm8553, %v8560, %v8562
        %v8564 = vsel %vm8552, %v8542, %v8545
        %v8565 = vsel %vm8555, %v8551, 1326507024
        %v8566 = vsel %vm8554, %v8548, %v8565
        %v8567 = vsel %vm8553, %v8564, %v8566
        %v8568 = vshll.u32 %v8528, 8
        %v8569 = vand.u32 %v8568, 65535
        %v8570 = vshrl.u32 %v8568, 16
        %v8571 = vand.u32 %v8567, 65535
        %v8572 = vshrl.u32 %v8567, 16
        %v8573 = vmul.u32 %v8569, %v8571
        %v8574 = vmul.u32 %v8569, %v8572
        %v8575 = vmul.u32 %v8570, %v8571
        %v8576 = vmul.u32 %v8570, %v8572
        %v8577 = vshll.u32 %v8574, 16
        %v8578 = vshrl.u32 %v8574, 16
        %v8579 = vshll.u32 %v8575, 16
        %v8580 = vshrl.u32 %v8575, 16
        %vm8581 = vc.u32 %v8573, %v8577
        %v8582 = vsel %vm8581, 1, 0
        %v8583 = vadd.s32 %v8573, %v8577
        %v8584 = vadd.s32 %v8576, %v8582
        %vm8585 = vc.u32 %v8583, %v8579
        %v8586 = vsel %vm8585, 1, 0
        %v8587 = vadd.s32 %v8583, %v8579
        %v8588 = vadd.s32 %v8584, %v8586
        %v8589 = vadd.s32 %v8588, %v8578
        %v8590 = vadd.s32 %v8589, %v8580
        %v8591 = vand.u32 %v8568, 65535
        %v8592 = vshrl.u32 %v8568, 16
        %v8593 = vand.u32 %v8563, 65535
        %v8594 = vshrl.u32 %v8563, 16
        %v8595 = vmul.u32 %v8591, %v8593
        %v8596 = vmul.u32 %v8591, %v8594
        %v8597 = vmul.u32 %v8592, %v8593
        %v8598 = vmul.u32 %v8592, %v8594
        %v8599 = vshll.u32 %v8596, 16
        %v8600 = vshrl.u32 %v8596, 16
        %v8601 = vshll.u32 %v8597, 16
        %v8602 = vshrl.u32 %v8597, 16
        %vm8603 = vc.u32 %v8595, %v8599
        %v8604 = vsel %vm8603, 1, 0
        %v8605 = vadd.s32 %v8595, %v8599
        %v8606 = vadd.s32 %v8598, %v8604
        %vm8607 = vc.u32 %v8605, %v8601
        %v8608 = vsel %vm8607, 1, 0
        %v8609 = vadd.s32 %v8605, %v8601
        %v8610 = vadd.s32 %v8606, %v8608
        %v8611 = vadd.s32 %v8610, %v8600
        %v8612 = vadd.s32 %v8611, %v8602
        %v8613 = vmul.u32 %v8568, %v8559
        %v8614 = vadd.s32 %v8590, %v8609
        %vm8615 = vc.u32 %v8590, %v8609
        %v8616 = vadd.s32 %v8612, 1
        %v8617 = vsel %vm8615, %v8616, %v8612
        %v8618 = vadd.s32 %v8613, %v8617
        %v8619 = vadd.s32 %v8618, 536870912
        %v8620 = vshrl.u32 %v8619, 30
        %v8621 = vshll.u32 %v8620, 30
        %v8622 = vsub.s32 %v8618, %v8621
        %vm8623 = vcmp.lt.s32.totalorder %v8622, 0
        %v8624 = vsub.s32 0, %v8622
        %v8625 = vsel %vm8623, %v8624, %v8622
        %v8626 = vclz %v8625
        %v8627 = vsub.s32 %v8626, 2
        %vm8628 = vcmp.gt.s32.totalorder 0, %v8627
        %v8629 = vsel %vm8628, 0, %v8627
        %v8630 = vsub.s32 32, %v8629
        %v8631 = vshll.u32 %v8622, %v8629
        %v8632 = vshrl.u32 %v8614, %v8630
        %v8633 = vor.u32 %v8631, %v8632
        %v8634 = vsub.s32 4294967266, %v8629
        %v8635 = vadd.s32 %v8634, 127
        %v8636 = vshll.u32 %v8635, 23
        %v8637 = vor.u32 4788187, %v8636
        %v8638 = vand.u32 2147483647, %v8637
        %v8640 = vcvt.s32.f32 %v8633
        %v8641 = vmul.f32 %v8640, %v8638
        %v8642 = vxor.u32 %v8641, 2147483648
        %v8643 = vsel %vm8522, %v8642, %v8641
        %v8644 = vsub.s32 4, %v8620
        %v8645 = vsel %vm8522, %v8644, %v8620
        %v8646 = vsel %vm8521, %v756, %v8643
        %v8647 = vsel %vm8521, 0, %v8645
        %v8648 = vmul.f32 %v8646, %v8646
        %v8649 = vmul.f32 %v8648, -0.001358992
        %v8650 = vadd.f32 %v8649, 0.041655596
        %v8651 = vmul.f32 %v8648, %v8650
        %v8652 = vadd.f32 %v8651, -0.4999988
        %v8653 = vmul.f32 %v8648, %v8652
        %v8654 = vadd.f32 1.0, %v8653
        %v8655 = vmul.f32 %v8646, %v8646
        %v8656 = vmul.f32 %v8655, -0.00019511016
        %v8657 = vadd.f32 %v8656, 0.008332121
        %v8658 = vmul.f32 %v8655, %v8657
        %v8659 = vadd.f32 %v8658, -0.16666654
        %v8660 = vmul.f32 %v8655, %v8659
        %v8661 = vadd.f32 %v8660, 1.0
        %v8662 = vmul.f32 %v8661, %v8646
        %vm8663 = vweird.f32 %v756
        %v8664 = vadd.s32 %v8647, 3
        %v8665 = vand.u32 %v8664, 3
        %vm8666 = vcmp.lt.s32.totalorder %v8665, 2
        %vm8667 = vcmp.eq.s32.totalorder %v8665, 0
        %v8668 = vxor.u32 %v8662, 2147483648
        %v8669 = vsel %vm8667, %v8654, %v8668
        %vm8670 = vcmp.eq.s32.totalorder %v8665, 2
        %v8671 = vxor.u32 %v8654, 2147483648
        %v8672 = vsel %vm8670, %v8671, %v8662
        %v8673 = vsel %vm8666, %v8669, %v8672
        %v8674 = vsel %vm8663, nan, %v8673
        %v8675 = vand.u32 2147483647, %v757
        %vm8676 = vcmp.le.f32.partialorder %v8675, 0.7853982
        %vm8677 = vcmp.lt.s32.totalorder %v757, 0
        %v8678 = vand.u32 %v757, 2139095040
        %v8679 = vshrl.u32 %v8678, 23
        %v8680 = vsub.s32 %v8679, 127
        %v8681 = vand.u32 2147483647, %v757
        %v8682 = vand.u32 %v8681, 8388607
        %v8683 = vor.u32 %v8682, 8388608
        %v8684 = vsub.s32 0, %v8683
        %v8685 = vadd.s32 %v8680, 1
        %vm8686 = vcmp.gt.s32.totalorder %v8685, 0
        %v8687 = vsel %vm8686, %v8685, 0
        %v8688 = vshrl.u32 %v8687, 5
        %v8689 = vand.u32 %v8687, 31
        %v8690 = vsub.s32 32, %v8689
        %v8691 = vshrl.u32 683565275, %v8690
        %v8692 = vshll.u32 683565275, %v8689
        %v8693 = vshrl.u32 2475754826, %v8690
        %v8694 = vor.u32 %v8692, %v8693
        %v8695 = vshll.u32 2475754826, %v8689
        %v8696 = vshrl.u32 2131351028, %v8690
        %v8697 = vor.u32 %v8695, %v8696
        %v8698 = vshll.u32 2131351028, %v8689
        %v8699 = vshrl.u32 2102212464, %v8690
        %v8700 = vor.u32 %v8698, %v8699
        %v8701 = vshll.u32 2102212464, %v8689
        %v8702 = vshrl.u32 920167782, %v8690
        %v8703 = vor.u32 %v8701, %v8702
        %v8704 = vshll.u32 920167782, %v8689
        %v8705 = vshrl.u32 1326507024, %v8690
        %v8706 = vor.u32 %v8704, %v8705
        %vm8707 = vcmp.lt.s32.totalorder %v8688, 1
        %vm8708 = vcmp.lt.s32.totalorder %v8688, 2
        %vm8709 = vcmp.lt.s32.totalorder %v8688, 3
        %vm8710 = vcmp.lt.s32.totalorder %v8688, 4
        %v8711 = vsel %vm8707, %v8691, %v8694
        %v8712 = vsel %vm8710, %v8700, 2102212464
        %v8713 = vsel %vm8709, %v8697, %v8712
        %v8714 = vsel %vm8708, %v8711, %v8713
        %v8715 = vsel %vm8707, %v8694, %v8697
        %v8716 = vsel %vm8710, %v8703, 920167782
        %v8717 = vsel %vm8709, %v8700, %v8716
        %v8718 = vsel %vm8708, %v8715, %v8717
        %v8719 = vsel %vm8707, %v8697, %v8700
        %v8720 = vsel %vm8710, %v8706, 1326507024
        %v8721 = vsel %vm8709, %v8703, %v8720
        %v8722 = vsel %vm8708, %v8719, %v8721
        %v8723 = vshll.u32 %v8683, 8
        %v8724 = vand.u32 %v8723, 65535
        %v8725 = vshrl.u32 %v8723, 16
        %v8726 = vand.u32 %v8722, 65535
        %v8727 = vshrl.u32 %v8722, 16
        %v8728 = vmul.u32 %v8724, %v8726
        %v8729 = vmul.u32 %v8724, %v8727
        %v8730 = vmul.u32 %v8725, %v8726
        %v8731 = vmul.u32 %v8725, %v8727
        %v8732 = vshll.u32 %v8729, 16
        %v8733 = vshrl.u32 %v8729, 16
        %v8734 = vshll.u32 %v8730, 16
        %v8735 = vshrl.u32 %v8730, 16
        %vm8736 = vc.u32 %v8728, %v8732
        %v8737 = vsel %vm8736, 1, 0
        %v8738 = vadd.s32 %v8728, %v8732
        %v8739 = vadd.s32 %v8731, %v8737
        %vm8740 = vc.u32 %v8738, %v8734
        %v8741 = vsel %vm8740, 1, 0
        %v8742 = vadd.s32 %v8738, %v8734
        %v8743 = vadd.s32 %v8739, %v8741
        %v8744 = vadd.s32 %v8743, %v8733
        %v8745 = vadd.s32 %v8744, %v8735
        %v8746 = vand.u32 %v8723, 65535
        %v8747 = vshrl.u32 %v8723, 16
        %v8748 = vand.u32 %v8718, 65535
        %v8749 = vshrl.u32 %v8718, 16
        %v8750 = vmul.u32 %v8746, %v8748
        %v8751 = vmul.u32 %v8746, %v8749
        %v8752 = vmul.u32 %v8747, %v8748
        %v8753 = vmul.u32 %v8747, %v8749
        %v8754 = vshll.u32 %v8751, 16
        %v8755 = vshrl.u32 %v8751, 16
        %v8756 = vshll.u32 %v8752, 16
        %v8757 = vshrl.u32 %v8752, 16
        %vm8758 = vc.u32 %v8750, %v8754
        %v8759 = vsel %vm8758, 1, 0
        %v8760 = vadd.s32 %v8750, %v8754
        %v8761 = vadd.s32 %v8753, %v8759
        %vm8762 = vc.u32 %v8760, %v8756
        %v8763 = vsel %vm8762, 1, 0
        %v8764 = vadd.s32 %v8760, %v8756
        %v8765 = vadd.s32 %v8761, %v8763
        %v8766 = vadd.s32 %v8765, %v8755
        %v8767 = vadd.s32 %v8766, %v8757
        %v8768 = vmul.u32 %v8723, %v8714
        %v8769 = vadd.s32 %v8745, %v8764
        %vm8770 = vc.u32 %v8745, %v8764
        %v8771 = vadd.s32 %v8767, 1
        %v8772 = vsel %vm8770, %v8771, %v8767
        %v8773 = vadd.s32 %v8768, %v8772
        %v8774 = vadd.s32 %v8773, 536870912
        %v8775 = vshrl.u32 %v8774, 30
        %v8776 = vshll.u32 %v8775, 30
        %v8777 = vsub.s32 %v8773, %v8776
        %vm8778 = vcmp.lt.s32.totalorder %v8777, 0
        %v8779 = vsub.s32 0, %v8777
        %v8780 = vsel %vm8778, %v8779, %v8777
        %v8781 = vclz %v8780
        %v8782 = vsub.s32 %v8781, 2
        %vm8783 = vcmp.gt.s32.totalorder 0, %v8782
        %v8784 = vsel %vm8783, 0, %v8782
        %v8785 = vsub.s32 32, %v8784
        %v8786 = vshll.u32 %v8777, %v8784
        %v8787 = vshrl.u32 %v8769, %v8785
        %v8788 = vor.u32 %v8786, %v8787
        %v8789 = vsub.s32 4294967266, %v8784
        %v8790 = vadd.s32 %v8789, 127
        %v8791 = vshll.u32 %v8790, 23
        %v8792 = vor.u32 4788187, %v8791
        %v8793 = vand.u32 2147483647, %v8792
        %v8795 = vcvt.s32.f32 %v8788
        %v8796 = vmul.f32 %v8795, %v8793
        %v8797 = vxor.u32 %v8796, 2147483648
        %v8798 = vsel %vm8677, %v8797, %v8796
        %v8799 = vsub.s32 4, %v8775
        %v8800 = vsel %vm8677, %v8799, %v8775
        %v8801 = vsel %vm8676, %v757, %v8798
        %v8802 = vsel %vm8676, 0, %v8800
        %v8803 = vmul.f32 %v8801, %v8801
        %v8804 = vmul.f32 %v8803, -0.001358992
        %v8805 = vadd.f32 %v8804, 0.041655596
        %v8806 = vmul.f32 %v8803, %v8805
        %v8807 = vadd.f32 %v8806, -0.4999988
        %v8808 = vmul.f32 %v8803, %v8807
        %v8809 = vadd.f32 1.0, %v8808
        %v8810 = vmul.f32 %v8801, %v8801
        %v8811 = vmul.f32 %v8810, -0.00019511016
        %v8812 = vadd.f32 %v8811, 0.008332121
        %v8813 = vmul.f32 %v8810, %v8812
        %v8814 = vadd.f32 %v8813, -0.16666654
        %v8815 = vmul.f32 %v8810, %v8814
        %v8816 = vadd.f32 %v8815, 1.0
        %v8817 = vmul.f32 %v8816, %v8801
        %vm8818 = vweird.f32 %v757
        %v8819 = vadd.s32 %v8802, 3
        %v8820 = vand.u32 %v8819, 3
        %vm8821 = vcmp.lt.s32.totalorder %v8820, 2
        %vm8822 = vcmp.eq.s32.totalorder %v8820, 0
        %v8823 = vxor.u32 %v8817, 2147483648
        %v8824 = vsel %vm8822, %v8809, %v8823
        %vm8825 = vcmp.eq.s32.totalorder %v8820, 2
        %v8826 = vxor.u32 %v8809, 2147483648
        %v8827 = vsel %vm8825, %v8826, %v8817
        %v8828 = vsel %vm8821, %v8824, %v8827
        %v8829 = vsel %vm8818, nan, %v8828
        %v8830 = vand.u32 2147483647, %v758
        %vm8831 = vcmp.le.f32.partialorder %v8830, 0.7853982
        %vm8832 = vcmp.lt.s32.totalorder %v758, 0
        %v8833 = vand.u32 %v758, 2139095040
        %v8834 = vshrl.u32 %v8833, 23
        %v8835 = vsub.s32 %v8834, 127
        %v8836 = vand.u32 2147483647, %v758
        %v8837 = vand.u32 %v8836, 8388607
        %v8838 = vor.u32 %v8837, 8388608
        %v8839 = vsub.s32 0, %v8838
        %v8840 = vadd.s32 %v8835, 1
        %vm8841 = vcmp.gt.s32.totalorder %v8840, 0
        %v8842 = vsel %vm8841, %v8840, 0
        %v8843 = vshrl.u32 %v8842, 5
        %v8844 = vand.u32 %v8842, 31
        %v8845 = vsub.s32 32, %v8844
        %v8846 = vshrl.u32 683565275, %v8845
        %v8847 = vshll.u32 683565275, %v8844
        %v8848 = vshrl.u32 2475754826, %v8845
        %v8849 = vor.u32 %v8847, %v8848
        %v8850 = vshll.u32 2475754826, %v8844
        %v8851 = vshrl.u32 2131351028, %v8845
        %v8852 = vor.u32 %v8850, %v8851
        %v8853 = vshll.u32 2131351028, %v8844
        %v8854 = vshrl.u32 2102212464, %v8845
        %v8855 = vor.u32 %v8853, %v8854
        %v8856 = vshll.u32 2102212464, %v8844
        %v8857 = vshrl.u32 920167782, %v8845
        %v8858 = vor.u32 %v8856, %v8857
        %v8859 = vshll.u32 920167782, %v8844
        %v8860 = vshrl.u32 1326507024, %v8845
        %v8861 = vor.u32 %v8859, %v8860
        %vm8862 = vcmp.lt.s32.totalorder %v8843, 1
        %vm8863 = vcmp.lt.s32.totalorder %v8843, 2
        %vm8864 = vcmp.lt.s32.totalorder %v8843, 3
        %vm8865 = vcmp.lt.s32.totalorder %v8843, 4
        %v8866 = vsel %vm8862, %v8846, %v8849
        %v8867 = vsel %vm8865, %v8855, 2102212464
        %v8868 = vsel %vm8864, %v8852, %v8867
        %v8869 = vsel %vm8863, %v8866, %v8868
        %v8870 = vsel %vm8862, %v8849, %v8852
        %v8871 = vsel %vm8865, %v8858, 920167782
        %v8872 = vsel %vm8864, %v8855, %v8871
        %v8873 = vsel %vm8863, %v8870, %v8872
        %v8874 = vsel %vm8862, %v8852, %v8855
        %v8875 = vsel %vm8865, %v8861, 1326507024
        %v8876 = vsel %vm8864, %v8858, %v8875
        %v8877 = vsel %vm8863, %v8874, %v8876
        %v8878 = vshll.u32 %v8838, 8
        %v8879 = vand.u32 %v8878, 65535
        %v8880 = vshrl.u32 %v8878, 16
        %v8881 = vand.u32 %v8877, 65535
        %v8882 = vshrl.u32 %v8877, 16
        %v8883 = vmul.u32 %v8879, %v8881
        %v8884 = vmul.u32 %v8879, %v8882
        %v8885 = vmul.u32 %v8880, %v8881
        %v8886 = vmul.u32 %v8880, %v8882
        %v8887 = vshll.u32 %v8884, 16
        %v8888 = vshrl.u32 %v8884, 16
        %v8889 = vshll.u32 %v8885, 16
        %v8890 = vshrl.u32 %v8885, 16
        %vm8891 = vc.u32 %v8883, %v8887
        %v8892 = vsel %vm8891, 1, 0
        %v8893 = vadd.s32 %v8883, %v8887
        %v8894 = vadd.s32 %v8886, %v8892
        %vm8895 = vc.u32 %v8893, %v8889
        %v8896 = vsel %vm8895, 1, 0
        %v8897 = vadd.s32 %v8893, %v8889
        %v8898 = vadd.s32 %v8894, %v8896
        %v8899 = vadd.s32 %v8898, %v8888
        %v8900 = vadd.s32 %v8899, %v8890
        %v8901 = vand.u32 %v8878, 65535
        %v8902 = vshrl.u32 %v8878, 16
        %v8903 = vand.u32 %v8873, 65535
        %v8904 = vshrl.u32 %v8873, 16
        %v8905 = vmul.u32 %v8901, %v8903
        %v8906 = vmul.u32 %v8901, %v8904
        %v8907 = vmul.u32 %v8902, %v8903
        %v8908 = vmul.u32 %v8902, %v8904
        %v8909 = vshll.u32 %v8906, 16
        %v8910 = vshrl.u32 %v8906, 16
        %v8911 = vshll.u32 %v8907, 16
        %v8912 = vshrl.u32 %v8907, 16
        %vm8913 = vc.u32 %v8905, %v8909
        %v8914 = vsel %vm8913, 1, 0
        %v8915 = vadd.s32 %v8905, %v8909
        %v8916 = vadd.s32 %v8908, %v8914
        %vm8917 = vc.u32 %v8915, %v8911
        %v8918 = vsel %vm8917, 1, 0
        %v8919 = vadd.s32 %v8915, %v8911
        %v8920 = vadd.s32 %v8916, %v8918
        %v8921 = vadd.s32 %v8920, %v8910
        %v8922 = vadd.s32 %v8921, %v8912
        %v8923 = vmul.u32 %v8878, %v8869
        %v8924 = vadd.s32 %v8900, %v8919
        %vm8925 = vc.u32 %v8900, %v8919
        %v8926 = vadd.s32 %v8922, 1
        %v8927 = vsel %vm8925, %v8926, %v8922
        %v8928 = vadd.s32 %v8923, %v8927
        %v8929 = vadd.s32 %v8928, 536870912
        %v8930 = vshrl.u32 %v8929, 30
        %v8931 = vshll.u32 %v8930, 30
        %v8932 = vsub.s32 %v8928, %v8931
        %vm8933 = vcmp.lt.s32.totalorder %v8932, 0
        %v8934 = vsub.s32 0, %v8932
        %v8935 = vsel %vm8933, %v8934, %v8932
        %v8936 = vclz %v8935
        %v8937 = vsub.s32 %v8936, 2
        %vm8938 = vcmp.gt.s32.totalorder 0, %v8937
        %v8939 = vsel %vm8938, 0, %v8937
        %v8940 = vsub.s32 32, %v8939
        %v8941 = vshll.u32 %v8932, %v8939
        %v8942 = vshrl.u32 %v8924, %v8940
        %v8943 = vor.u32 %v8941, %v8942
        %v8944 = vsub.s32 4294967266, %v8939
        %v8945 = vadd.s32 %v8944, 127
        %v8946 = vshll.u32 %v8945, 23
        %v8947 = vor.u32 4788187, %v8946
        %v8948 = vand.u32 2147483647, %v8947
        %v8950 = vcvt.s32.f32 %v8943
        %v8951 = vmul.f32 %v8950, %v8948
        %v8952 = vxor.u32 %v8951, 2147483648
        %v8953 = vsel %vm8832, %v8952, %v8951
        %v8954 = vsub.s32 4, %v8930
        %v8955 = vsel %vm8832, %v8954, %v8930
        %v8956 = vsel %vm8831, %v758, %v8953
        %v8957 = vsel %vm8831, 0, %v8955
        %v8958 = vmul.f32 %v8956, %v8956
        %v8959 = vmul.f32 %v8958, -0.001358992
        %v8960 = vadd.f32 %v8959, 0.041655596
        %v8961 = vmul.f32 %v8958, %v8960
        %v8962 = vadd.f32 %v8961, -0.4999988
        %v8963 = vmul.f32 %v8958, %v8962
        %v8964 = vadd.f32 1.0, %v8963
        %v8965 = vmul.f32 %v8956, %v8956
        %v8966 = vmul.f32 %v8965, -0.00019511016
        %v8967 = vadd.f32 %v8966, 0.008332121
        %v8968 = vmul.f32 %v8965, %v8967
        %v8969 = vadd.f32 %v8968, -0.16666654
        %v8970 = vmul.f32 %v8965, %v8969
        %v8971 = vadd.f32 %v8970, 1.0
        %v8972 = vmul.f32 %v8971, %v8956
        %vm8973 = vweird.f32 %v758
        %v8974 = vadd.s32 %v8957, 3
        %v8975 = vand.u32 %v8974, 3
        %vm8976 = vcmp.lt.s32.totalorder %v8975, 2
        %vm8977 = vcmp.eq.s32.totalorder %v8975, 0
        %v8978 = vxor.u32 %v8972, 2147483648
        %v8979 = vsel %vm8977, %v8964, %v8978
        %vm8980 = vcmp.eq.s32.totalorder %v8975, 2
        %v8981 = vxor.u32 %v8964, 2147483648
        %v8982 = vsel %vm8980, %v8981, %v8972
        %v8983 = vsel %vm8976, %v8979, %v8982
        %v8984 = vsel %vm8973, nan, %v8983
        %v8985 = vand.u32 2147483647, %v759
        %vm8986 = vcmp.le.f32.partialorder %v8985, 0.7853982
        %vm8987 = vcmp.lt.s32.totalorder %v759, 0
        %v8988 = vand.u32 %v759, 2139095040
        %v8989 = vshrl.u32 %v8988, 23
        %v8990 = vsub.s32 %v8989, 127
        %v8991 = vand.u32 2147483647, %v759
        %v8992 = vand.u32 %v8991, 8388607
        %v8993 = vor.u32 %v8992, 8388608
        %v8994 = vsub.s32 0, %v8993
        %v8995 = vadd.s32 %v8990, 1
        %vm8996 = vcmp.gt.s32.totalorder %v8995, 0
        %v8997 = vsel %vm8996, %v8995, 0
        %v8998 = vshrl.u32 %v8997, 5
        %v8999 = vand.u32 %v8997, 31
        %v9000 = vsub.s32 32, %v8999
        %v9001 = vshrl.u32 683565275, %v9000
        %v9002 = vshll.u32 683565275, %v8999
        %v9003 = vshrl.u32 2475754826, %v9000
        %v9004 = vor.u32 %v9002, %v9003
        %v9005 = vshll.u32 2475754826, %v8999
        %v9006 = vshrl.u32 2131351028, %v9000
        %v9007 = vor.u32 %v9005, %v9006
        %v9008 = vshll.u32 2131351028, %v8999
        %v9009 = vshrl.u32 2102212464, %v9000
        %v9010 = vor.u32 %v9008, %v9009
        %v9011 = vshll.u32 2102212464, %v8999
        %v9012 = vshrl.u32 920167782, %v9000
        %v9013 = vor.u32 %v9011, %v9012
        %v9014 = vshll.u32 920167782, %v8999
        %v9015 = vshrl.u32 1326507024, %v9000
        %v9016 = vor.u32 %v9014, %v9015
        %vm9017 = vcmp.lt.s32.totalorder %v8998, 1
        %vm9018 = vcmp.lt.s32.totalorder %v8998, 2
        %vm9019 = vcmp.lt.s32.totalorder %v8998, 3
        %vm9020 = vcmp.lt.s32.totalorder %v8998, 4
        %v9021 = vsel %vm9017, %v9001, %v9004
        %v9022 = vsel %vm9020, %v9010, 2102212464
        %v9023 = vsel %vm9019, %v9007, %v9022
        %v9024 = vsel %vm9018, %v9021, %v9023
        %v9025 = vsel %vm9017, %v9004, %v9007
        %v9026 = vsel %vm9020, %v9013, 920167782
        %v9027 = vsel %vm9019, %v9010, %v9026
        %v9028 = vsel %vm9018, %v9025, %v9027
        %v9029 = vsel %vm9017, %v9007, %v9010
        %v9030 = vsel %vm9020, %v9016, 1326507024
        %v9031 = vsel %vm9019, %v9013, %v9030
        %v9032 = vsel %vm9018, %v9029, %v9031
        %v9033 = vshll.u32 %v8993, 8
        %v9034 = vand.u32 %v9033, 65535
        %v9035 = vshrl.u32 %v9033, 16
        %v9036 = vand.u32 %v9032, 65535
        %v9037 = vshrl.u32 %v9032, 16
        %v9038 = vmul.u32 %v9034, %v9036
        %v9039 = vmul.u32 %v9034, %v9037
        %v9040 = vmul.u32 %v9035, %v9036
        %v9041 = vmul.u32 %v9035, %v9037
        %v9042 = vshll.u32 %v9039, 16
        %v9043 = vshrl.u32 %v9039, 16
        %v9044 = vshll.u32 %v9040, 16
        %v9045 = vshrl.u32 %v9040, 16
        %vm9046 = vc.u32 %v9038, %v9042
        %v9047 = vsel %vm9046, 1, 0
        %v9048 = vadd.s32 %v9038, %v9042
        %v9049 = vadd.s32 %v9041, %v9047
        %vm9050 = vc.u32 %v9048, %v9044
        %v9051 = vsel %vm9050, 1, 0
        %v9052 = vadd.s32 %v9048, %v9044
        %v9053 = vadd.s32 %v9049, %v9051
        %v9054 = vadd.s32 %v9053, %v9043
        %v9055 = vadd.s32 %v9054, %v9045
        %v9056 = vand.u32 %v9033, 65535
        %v9057 = vshrl.u32 %v9033, 16
        %v9058 = vand.u32 %v9028, 65535
        %v9059 = vshrl.u32 %v9028, 16
        %v9060 = vmul.u32 %v9056, %v9058
        %v9061 = vmul.u32 %v9056, %v9059
        %v9062 = vmul.u32 %v9057, %v9058
        %v9063 = vmul.u32 %v9057, %v9059
        %v9064 = vshll.u32 %v9061, 16
        %v9065 = vshrl.u32 %v9061, 16
        %v9066 = vshll.u32 %v9062, 16
        %v9067 = vshrl.u32 %v9062, 16
        %vm9068 = vc.u32 %v9060, %v9064
        %v9069 = vsel %vm9068, 1, 0
        %v9070 = vadd.s32 %v9060, %v9064
        %v9071 = vadd.s32 %v9063, %v9069
        %vm9072 = vc.u32 %v9070, %v9066
        %v9073 = vsel %vm9072, 1, 0
        %v9074 = vadd.s32 %v9070, %v9066
        %v9075 = vadd.s32 %v9071, %v9073
        %v9076 = vadd.s32 %v9075, %v9065
        %v9077 = vadd.s32 %v9076, %v9067
        %v9078 = vmul.u32 %v9033, %v9024
        %v9079 = vadd.s32 %v9055, %v9074
        %vm9080 = vc.u32 %v9055, %v9074
        %v9081 = vadd.s32 %v9077, 1
        %v9082 = vsel %vm9080, %v9081, %v9077
        %v9083 = vadd.s32 %v9078, %v9082
        %v9084 = vadd.s32 %v9083, 536870912
        %v9085 = vshrl.u32 %v9084, 30
        %v9086 = vshll.u32 %v9085, 30
        %v9087 = vsub.s32 %v9083, %v9086
        %vm9088 = vcmp.lt.s32.totalorder %v9087, 0
        %v9089 = vsub.s32 0, %v9087
        %v9090 = vsel %vm9088, %v9089, %v9087
        %v9091 = vclz %v9090
        %v9092 = vsub.s32 %v9091, 2
        %vm9093 = vcmp.gt.s32.totalorder 0, %v9092
        %v9094 = vsel %vm9093, 0, %v9092
        %v9095 = vsub.s32 32, %v9094
        %v9096 = vshll.u32 %v9087, %v9094
        %v9097 = vshrl.u32 %v9079, %v9095
        %v9098 = vor.u32 %v9096, %v9097
        %v9099 = vsub.s32 4294967266, %v9094
        %v9100 = vadd.s32 %v9099, 127
        %v9101 = vshll.u32 %v9100, 23
        %v9102 = vor.u32 4788187, %v9101
        %v9103 = vand.u32 2147483647, %v9102
        %v9105 = vcvt.s32.f32 %v9098
        %v9106 = vmul.f32 %v9105, %v9103
        %v9107 = vxor.u32 %v9106, 2147483648
        %v9108 = vsel %vm8987, %v9107, %v9106
        %v9109 = vsub.s32 4, %v9085
        %v9110 = vsel %vm8987, %v9109, %v9085
        %v9111 = vsel %vm8986, %v759, %v9108
        %v9112 = vsel %vm8986, 0, %v9110
        %v9113 = vmul.f32 %v9111, %v9111
        %v9114 = vmul.f32 %v9113, -0.001358992
        %v9115 = vadd.f32 %v9114, 0.041655596
        %v9116 = vmul.f32 %v9113, %v9115
        %v9117 = vadd.f32 %v9116, -0.4999988
        %v9118 = vmul.f32 %v9113, %v9117
        %v9119 = vadd.f32 1.0, %v9118
        %v9120 = vmul.f32 %v9111, %v9111
        %v9121 = vmul.f32 %v9120, -0.00019511016
        %v9122 = vadd.f32 %v9121, 0.008332121
        %v9123 = vmul.f32 %v9120, %v9122
        %v9124 = vadd.f32 %v9123, -0.16666654
        %v9125 = vmul.f32 %v9120, %v9124
        %v9126 = vadd.f32 %v9125, 1.0
        %v9127 = vmul.f32 %v9126, %v9111
        %vm9128 = vweird.f32 %v759
        %v9129 = vadd.s32 %v9112, 3
        %v9130 = vand.u32 %v9129, 3
        %vm9131 = vcmp.lt.s32.totalorder %v9130, 2
        %vm9132 = vcmp.eq.s32.totalorder %v9130, 0
        %v9133 = vxor.u32 %v9127, 2147483648
        %v9134 = vsel %vm9132, %v9119, %v9133
        %vm9135 = vcmp.eq.s32.totalorder %v9130, 2
        %v9136 = vxor.u32 %v9119, 2147483648
        %v9137 = vsel %vm9135, %v9136, %v9127
        %v9138 = vsel %vm9131, %v9134, %v9137
        %v9139 = vsel %vm9128, nan, %v9138
        %v9140 = vand.u32 2147483647, %v760
        %vm9141 = vcmp.le.f32.partialorder %v9140, 0.7853982
        %vm9142 = vcmp.lt.s32.totalorder %v760, 0
        %v9143 = vand.u32 %v760, 2139095040
        %v9144 = vshrl.u32 %v9143, 23
        %v9145 = vsub.s32 %v9144, 127
        %v9146 = vand.u32 2147483647, %v760
        %v9147 = vand.u32 %v9146, 8388607
        %v9148 = vor.u32 %v9147, 8388608
        %v9149 = vsub.s32 0, %v9148
        %v9150 = vadd.s32 %v9145, 1
        %vm9151 = vcmp.gt.s32.totalorder %v9150, 0
        %v9152 = vsel %vm9151, %v9150, 0
        %v9153 = vshrl.u32 %v9152, 5
        %v9154 = vand.u32 %v9152, 31
        %v9155 = vsub.s32 32, %v9154
        %v9156 = vshrl.u32 683565275, %v9155
        %v9157 = vshll.u32 683565275, %v9154
        %v9158 = vshrl.u32 2475754826, %v9155
        %v9159 = vor.u32 %v9157, %v9158
        %v9160 = vshll.u32 2475754826, %v9154
        %v9161 = vshrl.u32 2131351028, %v9155
        %v9162 = vor.u32 %v9160, %v9161
        %v9163 = vshll.u32 2131351028, %v9154
        %v9164 = vshrl.u32 2102212464, %v9155
        %v9165 = vor.u32 %v9163, %v9164
        %v9166 = vshll.u32 2102212464, %v9154
        %v9167 = vshrl.u32 920167782, %v9155
        %v9168 = vor.u32 %v9166, %v9167
        %v9169 = vshll.u32 920167782, %v9154
        %v9170 = vshrl.u32 1326507024, %v9155
        %v9171 = vor.u32 %v9169, %v9170
        %vm9172 = vcmp.lt.s32.totalorder %v9153, 1
        %vm9173 = vcmp.lt.s32.totalorder %v9153, 2
        %vm9174 = vcmp.lt.s32.totalorder %v9153, 3
        %vm9175 = vcmp.lt.s32.totalorder %v9153, 4
        %v9176 = vsel %vm9172, %v9156, %v9159
        %v9177 = vsel %vm9175, %v9165, 2102212464
        %v9178 = vsel %vm9174, %v9162, %v9177
        %v9179 = vsel %vm9173, %v9176, %v9178
        %v9180 = vsel %vm9172, %v9159, %v9162
        %v9181 = vsel %vm9175, %v9168, 920167782
        %v9182 = vsel %vm9174, %v9165, %v9181
        %v9183 = vsel %vm9173, %v9180, %v9182
        %v9184 = vsel %vm9172, %v9162, %v9165
        %v9185 = vsel %vm9175, %v9171, 1326507024
        %v9186 = vsel %vm9174, %v9168, %v9185
        %v9187 = vsel %vm9173, %v9184, %v9186
        %v9188 = vshll.u32 %v9148, 8
        %v9189 = vand.u32 %v9188, 65535
        %v9190 = vshrl.u32 %v9188, 16
        %v9191 = vand.u32 %v9187, 65535
        %v9192 = vshrl.u32 %v9187, 16
        %v9193 = vmul.u32 %v9189, %v9191
        %v9194 = vmul.u32 %v9189, %v9192
        %v9195 = vmul.u32 %v9190, %v9191
        %v9196 = vmul.u32 %v9190, %v9192
        %v9197 = vshll.u32 %v9194, 16
        %v9198 = vshrl.u32 %v9194, 16
        %v9199 = vshll.u32 %v9195, 16
        %v9200 = vshrl.u32 %v9195, 16
        %vm9201 = vc.u32 %v9193, %v9197
        %v9202 = vsel %vm9201, 1, 0
        %v9203 = vadd.s32 %v9193, %v9197
        %v9204 = vadd.s32 %v9196, %v9202
        %vm9205 = vc.u32 %v9203, %v9199
        %v9206 = vsel %vm9205, 1, 0
        %v9207 = vadd.s32 %v9203, %v9199
        %v9208 = vadd.s32 %v9204, %v9206
        %v9209 = vadd.s32 %v9208, %v9198
        %v9210 = vadd.s32 %v9209, %v9200
        %v9211 = vand.u32 %v9188, 65535
        %v9212 = vshrl.u32 %v9188, 16
        %v9213 = vand.u32 %v9183, 65535
        %v9214 = vshrl.u32 %v9183, 16
        %v9215 = vmul.u32 %v9211, %v9213
        %v9216 = vmul.u32 %v9211, %v9214
        %v9217 = vmul.u32 %v9212, %v9213
        %v9218 = vmul.u32 %v9212, %v9214
        %v9219 = vshll.u32 %v9216, 16
        %v9220 = vshrl.u32 %v9216, 16
        %v9221 = vshll.u32 %v9217, 16
        %v9222 = vshrl.u32 %v9217, 16
        %vm9223 = vc.u32 %v9215, %v9219
        %v9224 = vsel %vm9223, 1, 0
        %v9225 = vadd.s32 %v9215, %v9219
        %v9226 = vadd.s32 %v9218, %v9224
        %vm9227 = vc.u32 %v9225, %v9221
        %v9228 = vsel %vm9227, 1, 0
        %v9229 = vadd.s32 %v9225, %v9221
        %v9230 = vadd.s32 %v9226, %v9228
        %v9231 = vadd.s32 %v9230, %v9220
        %v9232 = vadd.s32 %v9231, %v9222
        %v9233 = vmul.u32 %v9188, %v9179
        %v9234 = vadd.s32 %v9210, %v9229
        %vm9235 = vc.u32 %v9210, %v9229
        %v9236 = vadd.s32 %v9232, 1
        %v9237 = vsel %vm9235, %v9236, %v9232
        %v9238 = vadd.s32 %v9233, %v9237
        %v9239 = vadd.s32 %v9238, 536870912
        %v9240 = vshrl.u32 %v9239, 30
        %v9241 = vshll.u32 %v9240, 30
        %v9242 = vsub.s32 %v9238, %v9241
        %vm9243 = vcmp.lt.s32.totalorder %v9242, 0
        %v9244 = vsub.s32 0, %v9242
        %v9245 = vsel %vm9243, %v9244, %v9242
        %v9246 = vclz %v9245
        %v9247 = vsub.s32 %v9246, 2
        %vm9248 = vcmp.gt.s32.totalorder 0, %v9247
        %v9249 = vsel %vm9248, 0, %v9247
        %v9250 = vsub.s32 32, %v9249
        %v9251 = vshll.u32 %v9242, %v9249
        %v9252 = vshrl.u32 %v9234, %v9250
        %v9253 = vor.u32 %v9251, %v9252
        %v9254 = vsub.s32 4294967266, %v9249
        %v9255 = vadd.s32 %v9254, 127
        %v9256 = vshll.u32 %v9255, 23
        %v9257 = vor.u32 4788187, %v9256
        %v9258 = vand.u32 2147483647, %v9257
        %v9260 = vcvt.s32.f32 %v9253
        %v9261 = vmul.f32 %v9260, %v9258
        %v9262 = vxor.u32 %v9261, 2147483648
        %v9263 = vsel %vm9142, %v9262, %v9261
        %v9264 = vsub.s32 4, %v9240
        %v9265 = vsel %vm9142, %v9264, %v9240
        %v9266 = vsel %vm9141, %v760, %v9263
        %v9267 = vsel %vm9141, 0, %v9265
        %v9268 = vmul.f32 %v9266, %v9266
        %v9269 = vmul.f32 %v9268, -0.001358992
        %v9270 = vadd.f32 %v9269, 0.041655596
        %v9271 = vmul.f32 %v9268, %v9270
        %v9272 = vadd.f32 %v9271, -0.4999988
        %v9273 = vmul.f32 %v9268, %v9272
        %v9274 = vadd.f32 1.0, %v9273
        %v9275 = vmul.f32 %v9266, %v9266
        %v9276 = vmul.f32 %v9275, -0.00019511016
        %v9277 = vadd.f32 %v9276, 0.008332121
        %v9278 = vmul.f32 %v9275, %v9277
        %v9279 = vadd.f32 %v9278, -0.16666654
        %v9280 = vmul.f32 %v9275, %v9279
        %v9281 = vadd.f32 %v9280, 1.0
        %v9282 = vmul.f32 %v9281, %v9266
        %vm9283 = vweird.f32 %v760
        %v9284 = vadd.s32 %v9267, 3
        %v9285 = vand.u32 %v9284, 3
        %vm9286 = vcmp.lt.s32.totalorder %v9285, 2
        %vm9287 = vcmp.eq.s32.totalorder %v9285, 0
        %v9288 = vxor.u32 %v9282, 2147483648
        %v9289 = vsel %vm9287, %v9274, %v9288
        %vm9290 = vcmp.eq.s32.totalorder %v9285, 2
        %v9291 = vxor.u32 %v9274, 2147483648
        %v9292 = vsel %vm9290, %v9291, %v9282
        %v9293 = vsel %vm9286, %v9289, %v9292
        %v9294 = vsel %vm9283, nan, %v9293
        %v9295 = vand.u32 2147483647, %v761
        %vm9296 = vcmp.le.f32.partialorder %v9295, 0.7853982
        %vm9297 = vcmp.lt.s32.totalorder %v761, 0
        %v9298 = vand.u32 %v761, 2139095040
        %v9299 = vshrl.u32 %v9298, 23
        %v9300 = vsub.s32 %v9299, 127
        %v9301 = vand.u32 2147483647, %v761
        %v9302 = vand.u32 %v9301, 8388607
        %v9303 = vor.u32 %v9302, 8388608
        %v9304 = vsub.s32 0, %v9303
        %v9305 = vadd.s32 %v9300, 1
        %vm9306 = vcmp.gt.s32.totalorder %v9305, 0
        %v9307 = vsel %vm9306, %v9305, 0
        %v9308 = vshrl.u32 %v9307, 5
        %v9309 = vand.u32 %v9307, 31
        %v9310 = vsub.s32 32, %v9309
        %v9311 = vshrl.u32 683565275, %v9310
        %v9312 = vshll.u32 683565275, %v9309
        %v9313 = vshrl.u32 2475754826, %v9310
        %v9314 = vor.u32 %v9312, %v9313
        %v9315 = vshll.u32 2475754826, %v9309
        %v9316 = vshrl.u32 2131351028, %v9310
        %v9317 = vor.u32 %v9315, %v9316
        %v9318 = vshll.u32 2131351028, %v9309
        %v9319 = vshrl.u32 2102212464, %v9310
        %v9320 = vor.u32 %v9318, %v9319
        %v9321 = vshll.u32 2102212464, %v9309
        %v9322 = vshrl.u32 920167782, %v9310
        %v9323 = vor.u32 %v9321, %v9322
        %v9324 = vshll.u32 920167782, %v9309
        %v9325 = vshrl.u32 1326507024, %v9310
        %v9326 = vor.u32 %v9324, %v9325
        %vm9327 = vcmp.lt.s32.totalorder %v9308, 1
        %vm9328 = vcmp.lt.s32.totalorder %v9308, 2
        %vm9329 = vcmp.lt.s32.totalorder %v9308, 3
        %vm9330 = vcmp.lt.s32.totalorder %v9308, 4
        %v9331 = vsel %vm9327, %v9311, %v9314
        %v9332 = vsel %vm9330, %v9320, 2102212464
        %v9333 = vsel %vm9329, %v9317, %v9332
        %v9334 = vsel %vm9328, %v9331, %v9333
        %v9335 = vsel %vm9327, %v9314, %v9317
        %v9336 = vsel %vm9330, %v9323, 920167782
        %v9337 = vsel %vm9329, %v9320, %v9336
        %v9338 = vsel %vm9328, %v9335, %v9337
        %v9339 = vsel %vm9327, %v9317, %v9320
        %v9340 = vsel %vm9330, %v9326, 1326507024
        %v9341 = vsel %vm9329, %v9323, %v9340
        %v9342 = vsel %vm9328, %v9339, %v9341
        %v9343 = vshll.u32 %v9303, 8
        %v9344 = vand.u32 %v9343, 65535
        %v9345 = vshrl.u32 %v9343, 16
        %v9346 = vand.u32 %v9342, 65535
        %v9347 = vshrl.u32 %v9342, 16
        %v9348 = vmul.u32 %v9344, %v9346
        %v9349 = vmul.u32 %v9344, %v9347
        %v9350 = vmul.u32 %v9345, %v9346
        %v9351 = vmul.u32 %v9345, %v9347
        %v9352 = vshll.u32 %v9349, 16
        %v9353 = vshrl.u32 %v9349, 16
        %v9354 = vshll.u32 %v9350, 16
        %v9355 = vshrl.u32 %v9350, 16
        %vm9356 = vc.u32 %v9348, %v9352
        %v9357 = vsel %vm9356, 1, 0
        %v9358 = vadd.s32 %v9348, %v9352
        %v9359 = vadd.s32 %v9351, %v9357
        %vm9360 = vc.u32 %v9358, %v9354
        %v9361 = vsel %vm9360, 1, 0
        %v9362 = vadd.s32 %v9358, %v9354
        %v9363 = vadd.s32 %v9359, %v9361
        %v9364 = vadd.s32 %v9363, %v9353
        %v9365 = vadd.s32 %v9364, %v9355
        %v9366 = vand.u32 %v9343, 65535
        %v9367 = vshrl.u32 %v9343, 16
        %v9368 = vand.u32 %v9338, 65535
        %v9369 = vshrl.u32 %v9338, 16
        %v9370 = vmul.u32 %v9366, %v9368
        %v9371 = vmul.u32 %v9366, %v9369
        %v9372 = vmul.u32 %v9367, %v9368
        %v9373 = vmul.u32 %v9367, %v9369
        %v9374 = vshll.u32 %v9371, 16
        %v9375 = vshrl.u32 %v9371, 16
        %v9376 = vshll.u32 %v9372, 16
        %v9377 = vshrl.u32 %v9372, 16
        %vm9378 = vc.u32 %v9370, %v9374
        %v9379 = vsel %vm9378, 1, 0
        %v9380 = vadd.s32 %v9370, %v9374
        %v9381 = vadd.s32 %v9373, %v9379
        %vm9382 = vc.u32 %v9380, %v9376
        %v9383 = vsel %vm9382, 1, 0
        %v9384 = vadd.s32 %v9380, %v9376
        %v9385 = vadd.s32 %v9381, %v9383
        %v9386 = vadd.s32 %v9385, %v9375
        %v9387 = vadd.s32 %v9386, %v9377
        %v9388 = vmul.u32 %v9343, %v9334
        %v9389 = vadd.s32 %v9365, %v9384
        %vm9390 = vc.u32 %v9365, %v9384
        %v9391 = vadd.s32 %v9387, 1
        %v9392 = vsel %vm9390, %v9391, %v9387
        %v9393 = vadd.s32 %v9388, %v9392
        %v9394 = vadd.s32 %v9393, 536870912
        %v9395 = vshrl.u32 %v9394, 30
        %v9396 = vshll.u32 %v9395, 30
        %v9397 = vsub.s32 %v9393, %v9396
        %vm9398 = vcmp.lt.s32.totalorder %v9397, 0
        %v9399 = vsub.s32 0, %v9397
        %v9400 = vsel %vm9398, %v9399, %v9397
        %v9401 = vclz %v9400
        %v9402 = vsub.s32 %v9401, 2
        %vm9403 = vcmp.gt.s32.totalorder 0, %v9402
        %v9404 = vsel %vm9403, 0, %v9402
        %v9405 = vsub.s32 32, %v9404
        %v9406 = vshll.u32 %v9397, %v9404
        %v9407 = vshrl.u32 %v9389, %v9405
        %v9408 = vor.u32 %v9406, %v9407
        %v9409 = vsub.s32 4294967266, %v9404
        %v9410 = vadd.s32 %v9409, 127
        %v9411 = vshll.u32 %v9410, 23
        %v9412 = vor.u32 4788187, %v9411
        %v9413 = vand.u32 2147483647, %v9412
        %v9415 = vcvt.s32.f32 %v9408
        %v9416 = vmul.f32 %v9415, %v9413
        %v9417 = vxor.u32 %v9416, 2147483648
        %v9418 = vsel %vm9297, %v9417, %v9416
        %v9419 = vsub.s32 4, %v9395
        %v9420 = vsel %vm9297, %v9419, %v9395
        %v9421 = vsel %vm9296, %v761, %v9418
        %v9422 = vsel %vm9296, 0, %v9420
        %v9423 = vmul.f32 %v9421, %v9421
        %v9424 = vmul.f32 %v9423, -0.001358992
        %v9425 = vadd.f32 %v9424, 0.041655596
        %v9426 = vmul.f32 %v9423, %v9425
        %v9427 = vadd.f32 %v9426, -0.4999988
        %v9428 = vmul.f32 %v9423, %v9427
        %v9429 = vadd.f32 1.0, %v9428
        %v9430 = vmul.f32 %v9421, %v9421
        %v9431 = vmul.f32 %v9430, -0.00019511016
        %v9432 = vadd.f32 %v9431, 0.008332121
        %v9433 = vmul.f32 %v9430, %v9432
        %v9434 = vadd.f32 %v9433, -0.16666654
        %v9435 = vmul.f32 %v9430, %v9434
        %v9436 = vadd.f32 %v9435, 1.0
        %v9437 = vmul.f32 %v9436, %v9421
        %vm9438 = vweird.f32 %v761
        %v9439 = vadd.s32 %v9422, 3
        %v9440 = vand.u32 %v9439, 3
        %vm9441 = vcmp.lt.s32.totalorder %v9440, 2
        %vm9442 = vcmp.eq.s32.totalorder %v9440, 0
        %v9443 = vxor.u32 %v9437, 2147483648
        %v9444 = vsel %vm9442, %v9429, %v9443
        %vm9445 = vcmp.eq.s32.totalorder %v9440, 2
        %v9446 = vxor.u32 %v9429, 2147483648
        %v9447 = vsel %vm9445, %v9446, %v9437
        %v9448 = vsel %vm9441, %v9444, %v9447
        %v9449 = vsel %vm9438, nan, %v9448
        %v9450 = vand.u32 2147483647, %v762
        %vm9451 = vcmp.le.f32.partialorder %v9450, 0.7853982
        %vm9452 = vcmp.lt.s32.totalorder %v762, 0
        %v9453 = vand.u32 %v762, 2139095040
        %v9454 = vshrl.u32 %v9453, 23
        %v9455 = vsub.s32 %v9454, 127
        %v9456 = vand.u32 2147483647, %v762
        %v9457 = vand.u32 %v9456, 8388607
        %v9458 = vor.u32 %v9457, 8388608
        %v9459 = vsub.s32 0, %v9458
        %v9460 = vadd.s32 %v9455, 1
        %vm9461 = vcmp.gt.s32.totalorder %v9460, 0
        %v9462 = vsel %vm9461, %v9460, 0
        %v9463 = vshrl.u32 %v9462, 5
        %v9464 = vand.u32 %v9462, 31
        %v9465 = vsub.s32 32, %v9464
        %v9466 = vshrl.u32 683565275, %v9465
        %v9467 = vshll.u32 683565275, %v9464
        %v9468 = vshrl.u32 2475754826, %v9465
        %v9469 = vor.u32 %v9467, %v9468
        %v9470 = vshll.u32 2475754826, %v9464
        %v9471 = vshrl.u32 2131351028, %v9465
        %v9472 = vor.u32 %v9470, %v9471
        %v9473 = vshll.u32 2131351028, %v9464
        %v9474 = vshrl.u32 2102212464, %v9465
        %v9475 = vor.u32 %v9473, %v9474
        %v9476 = vshll.u32 2102212464, %v9464
        %v9477 = vshrl.u32 920167782, %v9465
        %v9478 = vor.u32 %v9476, %v9477
        %v9479 = vshll.u32 920167782, %v9464
        %v9480 = vshrl.u32 1326507024, %v9465
        %v9481 = vor.u32 %v9479, %v9480
        %vm9482 = vcmp.lt.s32.totalorder %v9463, 1
        %vm9483 = vcmp.lt.s32.totalorder %v9463, 2
        %vm9484 = vcmp.lt.s32.totalorder %v9463, 3
        %vm9485 = vcmp.lt.s32.totalorder %v9463, 4
        %v9486 = vsel %vm9482, %v9466, %v9469
        %v9487 = vsel %vm9485, %v9475, 2102212464
        %v9488 = vsel %vm9484, %v9472, %v9487
        %v9489 = vsel %vm9483, %v9486, %v9488
        %v9490 = vsel %vm9482, %v9469, %v9472
        %v9491 = vsel %vm9485, %v9478, 920167782
        %v9492 = vsel %vm9484, %v9475, %v9491
        %v9493 = vsel %vm9483, %v9490, %v9492
        %v9494 = vsel %vm9482, %v9472, %v9475
        %v9495 = vsel %vm9485, %v9481, 1326507024
        %v9496 = vsel %vm9484, %v9478, %v9495
        %v9497 = vsel %vm9483, %v9494, %v9496
        %v9498 = vshll.u32 %v9458, 8
        %v9499 = vand.u32 %v9498, 65535
        %v9500 = vshrl.u32 %v9498, 16
        %v9501 = vand.u32 %v9497, 65535
        %v9502 = vshrl.u32 %v9497, 16
        %v9503 = vmul.u32 %v9499, %v9501
        %v9504 = vmul.u32 %v9499, %v9502
        %v9505 = vmul.u32 %v9500, %v9501
        %v9506 = vmul.u32 %v9500, %v9502
        %v9507 = vshll.u32 %v9504, 16
        %v9508 = vshrl.u32 %v9504, 16
        %v9509 = vshll.u32 %v9505, 16
        %v9510 = vshrl.u32 %v9505, 16
        %vm9511 = vc.u32 %v9503, %v9507
        %v9512 = vsel %vm9511, 1, 0
        %v9513 = vadd.s32 %v9503, %v9507
        %v9514 = vadd.s32 %v9506, %v9512
        %vm9515 = vc.u32 %v9513, %v9509
        %v9516 = vsel %vm9515, 1, 0
        %v9517 = vadd.s32 %v9513, %v9509
        %v9518 = vadd.s32 %v9514, %v9516
        %v9519 = vadd.s32 %v9518, %v9508
        %v9520 = vadd.s32 %v9519, %v9510
        %v9521 = vand.u32 %v9498, 65535
        %v9522 = vshrl.u32 %v9498, 16
        %v9523 = vand.u32 %v9493, 65535
        %v9524 = vshrl.u32 %v9493, 16
        %v9525 = vmul.u32 %v9521, %v9523
        %v9526 = vmul.u32 %v9521, %v9524
        %v9527 = vmul.u32 %v9522, %v9523
        %v9528 = vmul.u32 %v9522, %v9524
        %v9529 = vshll.u32 %v9526, 16
        %v9530 = vshrl.u32 %v9526, 16
        %v9531 = vshll.u32 %v9527, 16
        %v9532 = vshrl.u32 %v9527, 16
        %vm9533 = vc.u32 %v9525, %v9529
        %v9534 = vsel %vm9533, 1, 0
        %v9535 = vadd.s32 %v9525, %v9529
        %v9536 = vadd.s32 %v9528, %v9534
        %vm9537 = vc.u32 %v9535, %v9531
        %v9538 = vsel %vm9537, 1, 0
        %v9539 = vadd.s32 %v9535, %v9531
        %v9540 = vadd.s32 %v9536, %v9538
        %v9541 = vadd.s32 %v9540, %v9530
        %v9542 = vadd.s32 %v9541, %v9532
        %v9543 = vmul.u32 %v9498, %v9489
        %v9544 = vadd.s32 %v9520, %v9539
        %vm9545 = vc.u32 %v9520, %v9539
        %v9546 = vadd.s32 %v9542, 1
        %v9547 = vsel %vm9545, %v9546, %v9542
        %v9548 = vadd.s32 %v9543, %v9547
        %v9549 = vadd.s32 %v9548, 536870912
        %v9550 = vshrl.u32 %v9549, 30
        %v9551 = vshll.u32 %v9550, 30
        %v9552 = vsub.s32 %v9548, %v9551
        %vm9553 = vcmp.lt.s32.totalorder %v9552, 0
        %v9554 = vsub.s32 0, %v9552
        %v9555 = vsel %vm9553, %v9554, %v9552
        %v9556 = vclz %v9555
        %v9557 = vsub.s32 %v9556, 2
        %vm9558 = vcmp.gt.s32.totalorder 0, %v9557
        %v9559 = vsel %vm9558, 0, %v9557
        %v9560 = vsub.s32 32, %v9559
        %v9561 = vshll.u32 %v9552, %v9559
        %v9562 = vshrl.u32 %v9544, %v9560
        %v9563 = vor.u32 %v9561, %v9562
        %v9564 = vsub.s32 4294967266, %v9559
        %v9565 = vadd.s32 %v9564, 127
        %v9566 = vshll.u32 %v9565, 23
        %v9567 = vor.u32 4788187, %v9566
        %v9568 = vand.u32 2147483647, %v9567
        %v9570 = vcvt.s32.f32 %v9563
        %v9571 = vmul.f32 %v9570, %v9568
        %v9572 = vxor.u32 %v9571, 2147483648
        %v9573 = vsel %vm9452, %v9572, %v9571
        %v9574 = vsub.s32 4, %v9550
        %v9575 = vsel %vm9452, %v9574, %v9550
        %v9576 = vsel %vm9451, %v762, %v9573
        %v9577 = vsel %vm9451, 0, %v9575
        %v9578 = vmul.f32 %v9576, %v9576
        %v9579 = vmul.f32 %v9578, -0.001358992
        %v9580 = vadd.f32 %v9579, 0.041655596
        %v9581 = vmul.f32 %v9578, %v9580
        %v9582 = vadd.f32 %v9581, -0.4999988
        %v9583 = vmul.f32 %v9578, %v9582
        %v9584 = vadd.f32 1.0, %v9583
        %v9585 = vmul.f32 %v9576, %v9576
        %v9586 = vmul.f32 %v9585, -0.00019511016
        %v9587 = vadd.f32 %v9586, 0.008332121
        %v9588 = vmul.f32 %v9585, %v9587
        %v9589 = vadd.f32 %v9588, -0.16666654
        %v9590 = vmul.f32 %v9585, %v9589
        %v9591 = vadd.f32 %v9590, 1.0
        %v9592 = vmul.f32 %v9591, %v9576
        %vm9593 = vweird.f32 %v762
        %v9594 = vadd.s32 %v9577, 3
        %v9595 = vand.u32 %v9594, 3
        %vm9596 = vcmp.lt.s32.totalorder %v9595, 2
        %vm9597 = vcmp.eq.s32.totalorder %v9595, 0
        %v9598 = vxor.u32 %v9592, 2147483648
        %v9599 = vsel %vm9597, %v9584, %v9598
        %vm9600 = vcmp.eq.s32.totalorder %v9595, 2
        %v9601 = vxor.u32 %v9584, 2147483648
        %v9602 = vsel %vm9600, %v9601, %v9592
        %v9603 = vsel %vm9596, %v9599, %v9602
        %v9604 = vsel %vm9593, nan, %v9603
        %v9605 = vand.u32 2147483647, %v763
        %vm9606 = vcmp.le.f32.partialorder %v9605, 0.7853982
        %vm9607 = vcmp.lt.s32.totalorder %v763, 0
        %v9608 = vand.u32 %v763, 2139095040
        %v9609 = vshrl.u32 %v9608, 23
        %v9610 = vsub.s32 %v9609, 127
        %v9611 = vand.u32 2147483647, %v763
        %v9612 = vand.u32 %v9611, 8388607
        %v9613 = vor.u32 %v9612, 8388608
        %v9614 = vsub.s32 0, %v9613
        %v9615 = vadd.s32 %v9610, 1
        %vm9616 = vcmp.gt.s32.totalorder %v9615, 0
        %v9617 = vsel %vm9616, %v9615, 0
        %v9618 = vshrl.u32 %v9617, 5
        %v9619 = vand.u32 %v9617, 31
        %v9620 = vsub.s32 32, %v9619
        %v9621 = vshrl.u32 683565275, %v9620
        %v9622 = vshll.u32 683565275, %v9619
        %v9623 = vshrl.u32 2475754826, %v9620
        %v9624 = vor.u32 %v9622, %v9623
        %v9625 = vshll.u32 2475754826, %v9619
        %v9626 = vshrl.u32 2131351028, %v9620
        %v9627 = vor.u32 %v9625, %v9626
        %v9628 = vshll.u32 2131351028, %v9619
        %v9629 = vshrl.u32 2102212464, %v9620
        %v9630 = vor.u32 %v9628, %v9629
        %v9631 = vshll.u32 2102212464, %v9619
        %v9632 = vshrl.u32 920167782, %v9620
        %v9633 = vor.u32 %v9631, %v9632
        %v9634 = vshll.u32 920167782, %v9619
        %v9635 = vshrl.u32 1326507024, %v9620
        %v9636 = vor.u32 %v9634, %v9635
        %vm9637 = vcmp.lt.s32.totalorder %v9618, 1
        %vm9638 = vcmp.lt.s32.totalorder %v9618, 2
        %vm9639 = vcmp.lt.s32.totalorder %v9618, 3
        %vm9640 = vcmp.lt.s32.totalorder %v9618, 4
        %v9641 = vsel %vm9637, %v9621, %v9624
        %v9642 = vsel %vm9640, %v9630, 2102212464
        %v9643 = vsel %vm9639, %v9627, %v9642
        %v9644 = vsel %vm9638, %v9641, %v9643
        %v9645 = vsel %vm9637, %v9624, %v9627
        %v9646 = vsel %vm9640, %v9633, 920167782
        %v9647 = vsel %vm9639, %v9630, %v9646
        %v9648 = vsel %vm9638, %v9645, %v9647
        %v9649 = vsel %vm9637, %v9627, %v9630
        %v9650 = vsel %vm9640, %v9636, 1326507024
        %v9651 = vsel %vm9639, %v9633, %v9650
        %v9652 = vsel %vm9638, %v9649, %v9651
        %v9653 = vshll.u32 %v9613, 8
        %v9654 = vand.u32 %v9653, 65535
        %v9655 = vshrl.u32 %v9653, 16
        %v9656 = vand.u32 %v9652, 65535
        %v9657 = vshrl.u32 %v9652, 16
        %v9658 = vmul.u32 %v9654, %v9656
        %v9659 = vmul.u32 %v9654, %v9657
        %v9660 = vmul.u32 %v9655, %v9656
        %v9661 = vmul.u32 %v9655, %v9657
        %v9662 = vshll.u32 %v9659, 16
        %v9663 = vshrl.u32 %v9659, 16
        %v9664 = vshll.u32 %v9660, 16
        %v9665 = vshrl.u32 %v9660, 16
        %vm9666 = vc.u32 %v9658, %v9662
        %v9667 = vsel %vm9666, 1, 0
        %v9668 = vadd.s32 %v9658, %v9662
        %v9669 = vadd.s32 %v9661, %v9667
        %vm9670 = vc.u32 %v9668, %v9664
        %v9671 = vsel %vm9670, 1, 0
        %v9672 = vadd.s32 %v9668, %v9664
        %v9673 = vadd.s32 %v9669, %v9671
        %v9674 = vadd.s32 %v9673, %v9663
        %v9675 = vadd.s32 %v9674, %v9665
        %v9676 = vand.u32 %v9653, 65535
        %v9677 = vshrl.u32 %v9653, 16
        %v9678 = vand.u32 %v9648, 65535
        %v9679 = vshrl.u32 %v9648, 16
        %v9680 = vmul.u32 %v9676, %v9678
        %v9681 = vmul.u32 %v9676, %v9679
        %v9682 = vmul.u32 %v9677, %v9678
        %v9683 = vmul.u32 %v9677, %v9679
        %v9684 = vshll.u32 %v9681, 16
        %v9685 = vshrl.u32 %v9681, 16
        %v9686 = vshll.u32 %v9682, 16
        %v9687 = vshrl.u32 %v9682, 16
        %vm9688 = vc.u32 %v9680, %v9684
        %v9689 = vsel %vm9688, 1, 0
        %v9690 = vadd.s32 %v9680, %v9684
        %v9691 = vadd.s32 %v9683, %v9689
        %vm9692 = vc.u32 %v9690, %v9686
        %v9693 = vsel %vm9692, 1, 0
        %v9694 = vadd.s32 %v9690, %v9686
        %v9695 = vadd.s32 %v9691, %v9693
        %v9696 = vadd.s32 %v9695, %v9685
        %v9697 = vadd.s32 %v9696, %v9687
        %v9698 = vmul.u32 %v9653, %v9644
        %v9699 = vadd.s32 %v9675, %v9694
        %vm9700 = vc.u32 %v9675, %v9694
        %v9701 = vadd.s32 %v9697, 1
        %v9702 = vsel %vm9700, %v9701, %v9697
        %v9703 = vadd.s32 %v9698, %v9702
        %v9704 = vadd.s32 %v9703, 536870912
        %v9705 = vshrl.u32 %v9704, 30
        %v9706 = vshll.u32 %v9705, 30
        %v9707 = vsub.s32 %v9703, %v9706
        %vm9708 = vcmp.lt.s32.totalorder %v9707, 0
        %v9709 = vsub.s32 0, %v9707
        %v9710 = vsel %vm9708, %v9709, %v9707
        %v9711 = vclz %v9710
        %v9712 = vsub.s32 %v9711, 2
        %vm9713 = vcmp.gt.s32.totalorder 0, %v9712
        %v9714 = vsel %vm9713, 0, %v9712
        %v9715 = vsub.s32 32, %v9714
        %v9716 = vshll.u32 %v9707, %v9714
        %v9717 = vshrl.u32 %v9699, %v9715
        %v9718 = vor.u32 %v9716, %v9717
        %v9719 = vsub.s32 4294967266, %v9714
        %v9720 = vadd.s32 %v9719, 127
        %v9721 = vshll.u32 %v9720, 23
        %v9722 = vor.u32 4788187, %v9721
        %v9723 = vand.u32 2147483647, %v9722
        %v9725 = vcvt.s32.f32 %v9718
        %v9726 = vmul.f32 %v9725, %v9723
        %v9727 = vxor.u32 %v9726, 2147483648
        %v9728 = vsel %vm9607, %v9727, %v9726
        %v9729 = vsub.s32 4, %v9705
        %v9730 = vsel %vm9607, %v9729, %v9705
        %v9731 = vsel %vm9606, %v763, %v9728
        %v9732 = vsel %vm9606, 0, %v9730
        %v9733 = vmul.f32 %v9731, %v9731
        %v9734 = vmul.f32 %v9733, -0.001358992
        %v9735 = vadd.f32 %v9734, 0.041655596
        %v9736 = vmul.f32 %v9733, %v9735
        %v9737 = vadd.f32 %v9736, -0.4999988
        %v9738 = vmul.f32 %v9733, %v9737
        %v9739 = vadd.f32 1.0, %v9738
        %v9740 = vmul.f32 %v9731, %v9731
        %v9741 = vmul.f32 %v9740, -0.00019511016
        %v9742 = vadd.f32 %v9741, 0.008332121
        %v9743 = vmul.f32 %v9740, %v9742
        %v9744 = vadd.f32 %v9743, -0.16666654
        %v9745 = vmul.f32 %v9740, %v9744
        %v9746 = vadd.f32 %v9745, 1.0
        %v9747 = vmul.f32 %v9746, %v9731
        %vm9748 = vweird.f32 %v763
        %v9749 = vadd.s32 %v9732, 3
        %v9750 = vand.u32 %v9749, 3
        %vm9751 = vcmp.lt.s32.totalorder %v9750, 2
        %vm9752 = vcmp.eq.s32.totalorder %v9750, 0
        %v9753 = vxor.u32 %v9747, 2147483648
        %v9754 = vsel %vm9752, %v9739, %v9753
        %vm9755 = vcmp.eq.s32.totalorder %v9750, 2
        %v9756 = vxor.u32 %v9739, 2147483648
        %v9757 = vsel %vm9755, %v9756, %v9747
        %v9758 = vsel %vm9751, %v9754, %v9757
        %v9759 = vsel %vm9748, nan, %v9758
        %v9760 = vand.u32 2147483647, %v764
        %vm9761 = vcmp.le.f32.partialorder %v9760, 0.7853982
        %vm9762 = vcmp.lt.s32.totalorder %v764, 0
        %v9763 = vand.u32 %v764, 2139095040
        %v9764 = vshrl.u32 %v9763, 23
        %v9765 = vsub.s32 %v9764, 127
        %v9766 = vand.u32 2147483647, %v764
        %v9767 = vand.u32 %v9766, 8388607
        %v9768 = vor.u32 %v9767, 8388608
        %v9769 = vsub.s32 0, %v9768
        %v9770 = vadd.s32 %v9765, 1
        %vm9771 = vcmp.gt.s32.totalorder %v9770, 0
        %v9772 = vsel %vm9771, %v9770, 0
        %v9773 = vshrl.u32 %v9772, 5
        %v9774 = vand.u32 %v9772, 31
        %v9775 = vsub.s32 32, %v9774
        %v9776 = vshrl.u32 683565275, %v9775
        %v9777 = vshll.u32 683565275, %v9774
        %v9778 = vshrl.u32 2475754826, %v9775
        %v9779 = vor.u32 %v9777, %v9778
        %v9780 = vshll.u32 2475754826, %v9774
        %v9781 = vshrl.u32 2131351028, %v9775
        %v9782 = vor.u32 %v9780, %v9781
        %v9783 = vshll.u32 2131351028, %v9774
        %v9784 = vshrl.u32 2102212464, %v9775
        %v9785 = vor.u32 %v9783, %v9784
        %v9786 = vshll.u32 2102212464, %v9774
        %v9787 = vshrl.u32 920167782, %v9775
        %v9788 = vor.u32 %v9786, %v9787
        %v9789 = vshll.u32 920167782, %v9774
        %v9790 = vshrl.u32 1326507024, %v9775
        %v9791 = vor.u32 %v9789, %v9790
        %vm9792 = vcmp.lt.s32.totalorder %v9773, 1
        %vm9793 = vcmp.lt.s32.totalorder %v9773, 2
        %vm9794 = vcmp.lt.s32.totalorder %v9773, 3
        %vm9795 = vcmp.lt.s32.totalorder %v9773, 4
        %v9796 = vsel %vm9792, %v9776, %v9779
        %v9797 = vsel %vm9795, %v9785, 2102212464
        %v9798 = vsel %vm9794, %v9782, %v9797
        %v9799 = vsel %vm9793, %v9796, %v9798
        %v9800 = vsel %vm9792, %v9779, %v9782
        %v9801 = vsel %vm9795, %v9788, 920167782
        %v9802 = vsel %vm9794, %v9785, %v9801
        %v9803 = vsel %vm9793, %v9800, %v9802
        %v9804 = vsel %vm9792, %v9782, %v9785
        %v9805 = vsel %vm9795, %v9791, 1326507024
        %v9806 = vsel %vm9794, %v9788, %v9805
        %v9807 = vsel %vm9793, %v9804, %v9806
        %v9808 = vshll.u32 %v9768, 8
        %v9809 = vand.u32 %v9808, 65535
        %v9810 = vshrl.u32 %v9808, 16
        %v9811 = vand.u32 %v9807, 65535
        %v9812 = vshrl.u32 %v9807, 16
        %v9813 = vmul.u32 %v9809, %v9811
        %v9814 = vmul.u32 %v9809, %v9812
        %v9815 = vmul.u32 %v9810, %v9811
        %v9816 = vmul.u32 %v9810, %v9812
        %v9817 = vshll.u32 %v9814, 16
        %v9818 = vshrl.u32 %v9814, 16
        %v9819 = vshll.u32 %v9815, 16
        %v9820 = vshrl.u32 %v9815, 16
        %vm9821 = vc.u32 %v9813, %v9817
        %v9822 = vsel %vm9821, 1, 0
        %v9823 = vadd.s32 %v9813, %v9817
        %v9824 = vadd.s32 %v9816, %v9822
        %vm9825 = vc.u32 %v9823, %v9819
        %v9826 = vsel %vm9825, 1, 0
        %v9827 = vadd.s32 %v9823, %v9819
        %v9828 = vadd.s32 %v9824, %v9826
        %v9829 = vadd.s32 %v9828, %v9818
        %v9830 = vadd.s32 %v9829, %v9820
        %v9831 = vand.u32 %v9808, 65535
        %v9832 = vshrl.u32 %v9808, 16
        %v9833 = vand.u32 %v9803, 65535
        %v9834 = vshrl.u32 %v9803, 16
        %v9835 = vmul.u32 %v9831, %v9833
        %v9836 = vmul.u32 %v9831, %v9834
        %v9837 = vmul.u32 %v9832, %v9833
        %v9838 = vmul.u32 %v9832, %v9834
        %v9839 = vshll.u32 %v9836, 16
        %v9840 = vshrl.u32 %v9836, 16
        %v9841 = vshll.u32 %v9837, 16
        %v9842 = vshrl.u32 %v9837, 16
        %vm9843 = vc.u32 %v9835, %v9839
        %v9844 = vsel %vm9843, 1, 0
        %v9845 = vadd.s32 %v9835, %v9839
        %v9846 = vadd.s32 %v9838, %v9844
        %vm9847 = vc.u32 %v9845, %v9841
        %v9848 = vsel %vm9847, 1, 0
        %v9849 = vadd.s32 %v9845, %v9841
        %v9850 = vadd.s32 %v9846, %v9848
        %v9851 = vadd.s32 %v9850, %v9840
        %v9852 = vadd.s32 %v9851, %v9842
        %v9853 = vmul.u32 %v9808, %v9799
        %v9854 = vadd.s32 %v9830, %v9849
        %vm9855 = vc.u32 %v9830, %v9849
        %v9856 = vadd.s32 %v9852, 1
        %v9857 = vsel %vm9855, %v9856, %v9852
        %v9858 = vadd.s32 %v9853, %v9857
        %v9859 = vadd.s32 %v9858, 536870912
        %v9860 = vshrl.u32 %v9859, 30
        %v9861 = vshll.u32 %v9860, 30
        %v9862 = vsub.s32 %v9858, %v9861
        %vm9863 = vcmp.lt.s32.totalorder %v9862, 0
        %v9864 = vsub.s32 0, %v9862
        %v9865 = vsel %vm9863, %v9864, %v9862
        %v9866 = vclz %v9865
        %v9867 = vsub.s32 %v9866, 2
        %vm9868 = vcmp.gt.s32.totalorder 0, %v9867
        %v9869 = vsel %vm9868, 0, %v9867
        %v9870 = vsub.s32 32, %v9869
        %v9871 = vshll.u32 %v9862, %v9869
        %v9872 = vshrl.u32 %v9854, %v9870
        %v9873 = vor.u32 %v9871, %v9872
        %v9874 = vsub.s32 4294967266, %v9869
        %v9875 = vadd.s32 %v9874, 127
        %v9876 = vshll.u32 %v9875, 23
        %v9877 = vor.u32 4788187, %v9876
        %v9878 = vand.u32 2147483647, %v9877
        %v9880 = vcvt.s32.f32 %v9873
        %v9881 = vmul.f32 %v9880, %v9878
        %v9882 = vxor.u32 %v9881, 2147483648
        %v9883 = vsel %vm9762, %v9882, %v9881
        %v9884 = vsub.s32 4, %v9860
        %v9885 = vsel %vm9762, %v9884, %v9860
        %v9886 = vsel %vm9761, %v764, %v9883
        %v9887 = vsel %vm9761, 0, %v9885
        %v9888 = vmul.f32 %v9886, %v9886
        %v9889 = vmul.f32 %v9888, -0.001358992
        %v9890 = vadd.f32 %v9889, 0.041655596
        %v9891 = vmul.f32 %v9888, %v9890
        %v9892 = vadd.f32 %v9891, -0.4999988
        %v9893 = vmul.f32 %v9888, %v9892
        %v9894 = vadd.f32 1.0, %v9893
        %v9895 = vmul.f32 %v9886, %v9886
        %v9896 = vmul.f32 %v9895, -0.00019511016
        %v9897 = vadd.f32 %v9896, 0.008332121
        %v9898 = vmul.f32 %v9895, %v9897
        %v9899 = vadd.f32 %v9898, -0.16666654
        %v9900 = vmul.f32 %v9895, %v9899
        %v9901 = vadd.f32 %v9900, 1.0
        %v9902 = vmul.f32 %v9901, %v9886
        %vm9903 = vweird.f32 %v764
        %v9904 = vadd.s32 %v9887, 3
        %v9905 = vand.u32 %v9904, 3
        %vm9906 = vcmp.lt.s32.totalorder %v9905, 2
        %vm9907 = vcmp.eq.s32.totalorder %v9905, 0
        %v9908 = vxor.u32 %v9902, 2147483648
        %v9909 = vsel %vm9907, %v9894, %v9908
        %vm9910 = vcmp.eq.s32.totalorder %v9905, 2
        %v9911 = vxor.u32 %v9894, 2147483648
        %v9912 = vsel %vm9910, %v9911, %v9902
        %v9913 = vsel %vm9906, %v9909, %v9912
        %v9914 = vsel %vm9903, nan, %v9913
        %v9915 = vand.u32 2147483647, %v765
        %vm9916 = vcmp.le.f32.partialorder %v9915, 0.7853982
        %vm9917 = vcmp.lt.s32.totalorder %v765, 0
        %v9918 = vand.u32 %v765, 2139095040
        %v9919 = vshrl.u32 %v9918, 23
        %v9920 = vsub.s32 %v9919, 127
        %v9921 = vand.u32 2147483647, %v765
        %v9922 = vand.u32 %v9921, 8388607
        %v9923 = vor.u32 %v9922, 8388608
        %v9924 = vsub.s32 0, %v9923
        %v9925 = vadd.s32 %v9920, 1
        %vm9926 = vcmp.gt.s32.totalorder %v9925, 0
        %v9927 = vsel %vm9926, %v9925, 0
        %v9928 = vshrl.u32 %v9927, 5
        %v9929 = vand.u32 %v9927, 31
        %v9930 = vsub.s32 32, %v9929
        %v9931 = vshrl.u32 683565275, %v9930
        %v9932 = vshll.u32 683565275, %v9929
        %v9933 = vshrl.u32 2475754826, %v9930
        %v9934 = vor.u32 %v9932, %v9933
        %v9935 = vshll.u32 2475754826, %v9929
        %v9936 = vshrl.u32 2131351028, %v9930
        %v9937 = vor.u32 %v9935, %v9936
        %v9938 = vshll.u32 2131351028, %v9929
        %v9939 = vshrl.u32 2102212464, %v9930
        %v9940 = vor.u32 %v9938, %v9939
        %v9941 = vshll.u32 2102212464, %v9929
        %v9942 = vshrl.u32 920167782, %v9930
        %v9943 = vor.u32 %v9941, %v9942
        %v9944 = vshll.u32 920167782, %v9929
        %v9945 = vshrl.u32 1326507024, %v9930
        %v9946 = vor.u32 %v9944, %v9945
        %vm9947 = vcmp.lt.s32.totalorder %v9928, 1
        %vm9948 = vcmp.lt.s32.totalorder %v9928, 2
        %vm9949 = vcmp.lt.s32.totalorder %v9928, 3
        %vm9950 = vcmp.lt.s32.totalorder %v9928, 4
        %v9951 = vsel %vm9947, %v9931, %v9934
        %v9952 = vsel %vm9950, %v9940, 2102212464
        %v9953 = vsel %vm9949, %v9937, %v9952
        %v9954 = vsel %vm9948, %v9951, %v9953
        %v9955 = vsel %vm9947, %v9934, %v9937
        %v9956 = vsel %vm9950, %v9943, 920167782
        %v9957 = vsel %vm9949, %v9940, %v9956
        %v9958 = vsel %vm9948, %v9955, %v9957
        %v9959 = vsel %vm9947, %v9937, %v9940
        %v9960 = vsel %vm9950, %v9946, 1326507024
        %v9961 = vsel %vm9949, %v9943, %v9960
        %v9962 = vsel %vm9948, %v9959, %v9961
        %v9963 = vshll.u32 %v9923, 8
        %v9964 = vand.u32 %v9963, 65535
        %v9965 = vshrl.u32 %v9963, 16
        %v9966 = vand.u32 %v9962, 65535
        %v9967 = vshrl.u32 %v9962, 16
        %v9968 = vmul.u32 %v9964, %v9966
        %v9969 = vmul.u32 %v9964, %v9967
        %v9970 = vmul.u32 %v9965, %v9966
        %v9971 = vmul.u32 %v9965, %v9967
        %v9972 = vshll.u32 %v9969, 16
        %v9973 = vshrl.u32 %v9969, 16
        %v9974 = vshll.u32 %v9970, 16
        %v9975 = vshrl.u32 %v9970, 16
        %vm9976 = vc.u32 %v9968, %v9972
        %v9977 = vsel %vm9976, 1, 0
        %v9978 = vadd.s32 %v9968, %v9972
        %v9979 = vadd.s32 %v9971, %v9977
        %vm9980 = vc.u32 %v9978, %v9974
        %v9981 = vsel %vm9980, 1, 0
        %v9982 = vadd.s32 %v9978, %v9974
        %v9983 = vadd.s32 %v9979, %v9981
        %v9984 = vadd.s32 %v9983, %v9973
        %v9985 = vadd.s32 %v9984, %v9975
        %v9986 = vand.u32 %v9963, 65535
        %v9987 = vshrl.u32 %v9963, 16
        %v9988 = vand.u32 %v9958, 65535
        %v9989 = vshrl.u32 %v9958, 16
        %v9990 = vmul.u32 %v9986, %v9988
        %v9991 = vmul.u32 %v9986, %v9989
        %v9992 = vmul.u32 %v9987, %v9988
        %v9993 = vmul.u32 %v9987, %v9989
        %v9994 = vshll.u32 %v9991, 16
        %v9995 = vshrl.u32 %v9991, 16
        %v9996 = vshll.u32 %v9992, 16
        %v9997 = vshrl.u32 %v9992, 16
        %vm9998 = vc.u32 %v9990, %v9994
        %v9999 = vsel %vm9998, 1, 0
        %v10000 = vadd.s32 %v9990, %v9994
        %v10001 = vadd.s32 %v9993, %v9999
        %vm10002 = vc.u32 %v10000, %v9996
        %v10003 = vsel %vm10002, 1, 0
        %v10004 = vadd.s32 %v10000, %v9996
        %v10005 = vadd.s32 %v10001, %v10003
        %v10006 = vadd.s32 %v10005, %v9995
        %v10007 = vadd.s32 %v10006, %v9997
        %v10008 = vmul.u32 %v9963, %v9954
        %v10009 = vadd.s32 %v9985, %v10004
        %vm10010 = vc.u32 %v9985, %v10004
        %v10011 = vadd.s32 %v10007, 1
        %v10012 = vsel %vm10010, %v10011, %v10007
        %v10013 = vadd.s32 %v10008, %v10012
        %v10014 = vadd.s32 %v10013, 536870912
        %v10015 = vshrl.u32 %v10014, 30
        %v10016 = vshll.u32 %v10015, 30
        %v10017 = vsub.s32 %v10013, %v10016
        %vm10018 = vcmp.lt.s32.totalorder %v10017, 0
        %v10019 = vsub.s32 0, %v10017
        %v10020 = vsel %vm10018, %v10019, %v10017
        %v10021 = vclz %v10020
        %v10022 = vsub.s32 %v10021, 2
        %vm10023 = vcmp.gt.s32.totalorder 0, %v10022
        %v10024 = vsel %vm10023, 0, %v10022
        %v10025 = vsub.s32 32, %v10024
        %v10026 = vshll.u32 %v10017, %v10024
        %v10027 = vshrl.u32 %v10009, %v10025
        %v10028 = vor.u32 %v10026, %v10027
        %v10029 = vsub.s32 4294967266, %v10024
        %v10030 = vadd.s32 %v10029, 127
        %v10031 = vshll.u32 %v10030, 23
        %v10032 = vor.u32 4788187, %v10031
        %v10033 = vand.u32 2147483647, %v10032
        %v10035 = vcvt.s32.f32 %v10028
        %v10036 = vmul.f32 %v10035, %v10033
        %v10037 = vxor.u32 %v10036, 2147483648
        %v10038 = vsel %vm9917, %v10037, %v10036
        %v10039 = vsub.s32 4, %v10015
        %v10040 = vsel %vm9917, %v10039, %v10015
        %v10041 = vsel %vm9916, %v765, %v10038
        %v10042 = vsel %vm9916, 0, %v10040
        %v10043 = vmul.f32 %v10041, %v10041
        %v10044 = vmul.f32 %v10043, -0.001358992
        %v10045 = vadd.f32 %v10044, 0.041655596
        %v10046 = vmul.f32 %v10043, %v10045
        %v10047 = vadd.f32 %v10046, -0.4999988
        %v10048 = vmul.f32 %v10043, %v10047
        %v10049 = vadd.f32 1.0, %v10048
        %v10050 = vmul.f32 %v10041, %v10041
        %v10051 = vmul.f32 %v10050, -0.00019511016
        %v10052 = vadd.f32 %v10051, 0.008332121
        %v10053 = vmul.f32 %v10050, %v10052
        %v10054 = vadd.f32 %v10053, -0.16666654
        %v10055 = vmul.f32 %v10050, %v10054
        %v10056 = vadd.f32 %v10055, 1.0
        %v10057 = vmul.f32 %v10056, %v10041
        %vm10058 = vweird.f32 %v765
        %v10059 = vadd.s32 %v10042, 3
        %v10060 = vand.u32 %v10059, 3
        %vm10061 = vcmp.lt.s32.totalorder %v10060, 2
        %vm10062 = vcmp.eq.s32.totalorder %v10060, 0
        %v10063 = vxor.u32 %v10057, 2147483648
        %v10064 = vsel %vm10062, %v10049, %v10063
        %vm10065 = vcmp.eq.s32.totalorder %v10060, 2
        %v10066 = vxor.u32 %v10049, 2147483648
        %v10067 = vsel %vm10065, %v10066, %v10057
        %v10068 = vsel %vm10061, %v10064, %v10067
        %v10069 = vsel %vm10058, nan, %v10068
        %v10070 = vand.u32 2147483647, %v766
        %vm10071 = vcmp.le.f32.partialorder %v10070, 0.7853982
        %vm10072 = vcmp.lt.s32.totalorder %v766, 0
        %v10073 = vand.u32 %v766, 2139095040
        %v10074 = vshrl.u32 %v10073, 23
        %v10075 = vsub.s32 %v10074, 127
        %v10076 = vand.u32 2147483647, %v766
        %v10077 = vand.u32 %v10076, 8388607
        %v10078 = vor.u32 %v10077, 8388608
        %v10079 = vsub.s32 0, %v10078
        %v10080 = vadd.s32 %v10075, 1
        %vm10081 = vcmp.gt.s32.totalorder %v10080, 0
        %v10082 = vsel %vm10081, %v10080, 0
        %v10083 = vshrl.u32 %v10082, 5
        %v10084 = vand.u32 %v10082, 31
        %v10085 = vsub.s32 32, %v10084
        %v10086 = vshrl.u32 683565275, %v10085
        %v10087 = vshll.u32 683565275, %v10084
        %v10088 = vshrl.u32 2475754826, %v10085
        %v10089 = vor.u32 %v10087, %v10088
        %v10090 = vshll.u32 2475754826, %v10084
        %v10091 = vshrl.u32 2131351028, %v10085
        %v10092 = vor.u32 %v10090, %v10091
        %v10093 = vshll.u32 2131351028, %v10084
        %v10094 = vshrl.u32 2102212464, %v10085
        %v10095 = vor.u32 %v10093, %v10094
        %v10096 = vshll.u32 2102212464, %v10084
        %v10097 = vshrl.u32 920167782, %v10085
        %v10098 = vor.u32 %v10096, %v10097
        %v10099 = vshll.u32 920167782, %v10084
        %v10100 = vshrl.u32 1326507024, %v10085
        %v10101 = vor.u32 %v10099, %v10100
        %vm10102 = vcmp.lt.s32.totalorder %v10083, 1
        %vm10103 = vcmp.lt.s32.totalorder %v10083, 2
        %vm10104 = vcmp.lt.s32.totalorder %v10083, 3
        %vm10105 = vcmp.lt.s32.totalorder %v10083, 4
        %v10106 = vsel %vm10102, %v10086, %v10089
        %v10107 = vsel %vm10105, %v10095, 2102212464
        %v10108 = vsel %vm10104, %v10092, %v10107
        %v10109 = vsel %vm10103, %v10106, %v10108
        %v10110 = vsel %vm10102, %v10089, %v10092
        %v10111 = vsel %vm10105, %v10098, 920167782
        %v10112 = vsel %vm10104, %v10095, %v10111
        %v10113 = vsel %vm10103, %v10110, %v10112
        %v10114 = vsel %vm10102, %v10092, %v10095
        %v10115 = vsel %vm10105, %v10101, 1326507024
        %v10116 = vsel %vm10104, %v10098, %v10115
        %v10117 = vsel %vm10103, %v10114, %v10116
        %v10118 = vshll.u32 %v10078, 8
        %v10119 = vand.u32 %v10118, 65535
        %v10120 = vshrl.u32 %v10118, 16
        %v10121 = vand.u32 %v10117, 65535
        %v10122 = vshrl.u32 %v10117, 16
        %v10123 = vmul.u32 %v10119, %v10121
        %v10124 = vmul.u32 %v10119, %v10122
        %v10125 = vmul.u32 %v10120, %v10121
        %v10126 = vmul.u32 %v10120, %v10122
        %v10127 = vshll.u32 %v10124, 16
        %v10128 = vshrl.u32 %v10124, 16
        %v10129 = vshll.u32 %v10125, 16
        %v10130 = vshrl.u32 %v10125, 16
        %vm10131 = vc.u32 %v10123, %v10127
        %v10132 = vsel %vm10131, 1, 0
        %v10133 = vadd.s32 %v10123, %v10127
        %v10134 = vadd.s32 %v10126, %v10132
        %vm10135 = vc.u32 %v10133, %v10129
        %v10136 = vsel %vm10135, 1, 0
        %v10137 = vadd.s32 %v10133, %v10129
        %v10138 = vadd.s32 %v10134, %v10136
        %v10139 = vadd.s32 %v10138, %v10128
        %v10140 = vadd.s32 %v10139, %v10130
        %v10141 = vand.u32 %v10118, 65535
        %v10142 = vshrl.u32 %v10118, 16
        %v10143 = vand.u32 %v10113, 65535
        %v10144 = vshrl.u32 %v10113, 16
        %v10145 = vmul.u32 %v10141, %v10143
        %v10146 = vmul.u32 %v10141, %v10144
        %v10147 = vmul.u32 %v10142, %v10143
        %v10148 = vmul.u32 %v10142, %v10144
        %v10149 = vshll.u32 %v10146, 16
        %v10150 = vshrl.u32 %v10146, 16
        %v10151 = vshll.u32 %v10147, 16
        %v10152 = vshrl.u32 %v10147, 16
        %vm10153 = vc.u32 %v10145, %v10149
        %v10154 = vsel %vm10153, 1, 0
        %v10155 = vadd.s32 %v10145, %v10149
        %v10156 = vadd.s32 %v10148, %v10154
        %vm10157 = vc.u32 %v10155, %v10151
        %v10158 = vsel %vm10157, 1, 0
        %v10159 = vadd.s32 %v10155, %v10151
        %v10160 = vadd.s32 %v10156, %v10158
        %v10161 = vadd.s32 %v10160, %v10150
        %v10162 = vadd.s32 %v10161, %v10152
        %v10163 = vmul.u32 %v10118, %v10109
        %v10164 = vadd.s32 %v10140, %v10159
        %vm10165 = vc.u32 %v10140, %v10159
        %v10166 = vadd.s32 %v10162, 1
        %v10167 = vsel %vm10165, %v10166, %v10162
        %v10168 = vadd.s32 %v10163, %v10167
        %v10169 = vadd.s32 %v10168, 536870912
        %v10170 = vshrl.u32 %v10169, 30
        %v10171 = vshll.u32 %v10170, 30
        %v10172 = vsub.s32 %v10168, %v10171
        %vm10173 = vcmp.lt.s32.totalorder %v10172, 0
        %v10174 = vsub.s32 0, %v10172
        %v10175 = vsel %vm10173, %v10174, %v10172
        %v10176 = vclz %v10175
        %v10177 = vsub.s32 %v10176, 2
        %vm10178 = vcmp.gt.s32.totalorder 0, %v10177
        %v10179 = vsel %vm10178, 0, %v10177
        %v10180 = vsub.s32 32, %v10179
        %v10181 = vshll.u32 %v10172, %v10179
        %v10182 = vshrl.u32 %v10164, %v10180
        %v10183 = vor.u32 %v10181, %v10182
        %v10184 = vsub.s32 4294967266, %v10179
        %v10185 = vadd.s32 %v10184, 127
        %v10186 = vshll.u32 %v10185, 23
        %v10187 = vor.u32 4788187, %v10186
        %v10188 = vand.u32 2147483647, %v10187
        %v10190 = vcvt.s32.f32 %v10183
        %v10191 = vmul.f32 %v10190, %v10188
        %v10192 = vxor.u32 %v10191, 2147483648
        %v10193 = vsel %vm10072, %v10192, %v10191
        %v10194 = vsub.s32 4, %v10170
        %v10195 = vsel %vm10072, %v10194, %v10170
        %v10196 = vsel %vm10071, %v766, %v10193
        %v10197 = vsel %vm10071, 0, %v10195
        %v10198 = vmul.f32 %v10196, %v10196
        %v10199 = vmul.f32 %v10198, -0.001358992
        %v10200 = vadd.f32 %v10199, 0.041655596
        %v10201 = vmul.f32 %v10198, %v10200
        %v10202 = vadd.f32 %v10201, -0.4999988
        %v10203 = vmul.f32 %v10198, %v10202
        %v10204 = vadd.f32 1.0, %v10203
        %v10205 = vmul.f32 %v10196, %v10196
        %v10206 = vmul.f32 %v10205, -0.00019511016
        %v10207 = vadd.f32 %v10206, 0.008332121
        %v10208 = vmul.f32 %v10205, %v10207
        %v10209 = vadd.f32 %v10208, -0.16666654
        %v10210 = vmul.f32 %v10205, %v10209
        %v10211 = vadd.f32 %v10210, 1.0
        %v10212 = vmul.f32 %v10211, %v10196
        %vm10213 = vweird.f32 %v766
        %v10214 = vadd.s32 %v10197, 3
        %v10215 = vand.u32 %v10214, 3
        %vm10216 = vcmp.lt.s32.totalorder %v10215, 2
        %vm10217 = vcmp.eq.s32.totalorder %v10215, 0
        %v10218 = vxor.u32 %v10212, 2147483648
        %v10219 = vsel %vm10217, %v10204, %v10218
        %vm10220 = vcmp.eq.s32.totalorder %v10215, 2
        %v10221 = vxor.u32 %v10204, 2147483648
        %v10222 = vsel %vm10220, %v10221, %v10212
        %v10223 = vsel %vm10216, %v10219, %v10222
        %v10224 = vsel %vm10213, nan, %v10223
        %v10225 = vand.u32 2147483647, %v767
        %vm10226 = vcmp.le.f32.partialorder %v10225, 0.7853982
        %vm10227 = vcmp.lt.s32.totalorder %v767, 0
        %v10228 = vand.u32 %v767, 2139095040
        %v10229 = vshrl.u32 %v10228, 23
        %v10230 = vsub.s32 %v10229, 127
        %v10231 = vand.u32 2147483647, %v767
        %v10232 = vand.u32 %v10231, 8388607
        %v10233 = vor.u32 %v10232, 8388608
        %v10234 = vsub.s32 0, %v10233
        %v10235 = vadd.s32 %v10230, 1
        %vm10236 = vcmp.gt.s32.totalorder %v10235, 0
        %v10237 = vsel %vm10236, %v10235, 0
        %v10238 = vshrl.u32 %v10237, 5
        %v10239 = vand.u32 %v10237, 31
        %v10240 = vsub.s32 32, %v10239
        %v10241 = vshrl.u32 683565275, %v10240
        %v10242 = vshll.u32 683565275, %v10239
        %v10243 = vshrl.u32 2475754826, %v10240
        %v10244 = vor.u32 %v10242, %v10243
        %v10245 = vshll.u32 2475754826, %v10239
        %v10246 = vshrl.u32 2131351028, %v10240
        %v10247 = vor.u32 %v10245, %v10246
        %v10248 = vshll.u32 2131351028, %v10239
        %v10249 = vshrl.u32 2102212464, %v10240
        %v10250 = vor.u32 %v10248, %v10249
        %v10251 = vshll.u32 2102212464, %v10239
        %v10252 = vshrl.u32 920167782, %v10240
        %v10253 = vor.u32 %v10251, %v10252
        %v10254 = vshll.u32 920167782, %v10239
        %v10255 = vshrl.u32 1326507024, %v10240
        %v10256 = vor.u32 %v10254, %v10255
        %vm10257 = vcmp.lt.s32.totalorder %v10238, 1
        %vm10258 = vcmp.lt.s32.totalorder %v10238, 2
        %vm10259 = vcmp.lt.s32.totalorder %v10238, 3
        %vm10260 = vcmp.lt.s32.totalorder %v10238, 4
        %v10261 = vsel %vm10257, %v10241, %v10244
        %v10262 = vsel %vm10260, %v10250, 2102212464
        %v10263 = vsel %vm10259, %v10247, %v10262
        %v10264 = vsel %vm10258, %v10261, %v10263
        %v10265 = vsel %vm10257, %v10244, %v10247
        %v10266 = vsel %vm10260, %v10253, 920167782
        %v10267 = vsel %vm10259, %v10250, %v10266
        %v10268 = vsel %vm10258, %v10265, %v10267
        %v10269 = vsel %vm10257, %v10247, %v10250
        %v10270 = vsel %vm10260, %v10256, 1326507024
        %v10271 = vsel %vm10259, %v10253, %v10270
        %v10272 = vsel %vm10258, %v10269, %v10271
        %v10273 = vshll.u32 %v10233, 8
        %v10274 = vand.u32 %v10273, 65535
        %v10275 = vshrl.u32 %v10273, 16
        %v10276 = vand.u32 %v10272, 65535
        %v10277 = vshrl.u32 %v10272, 16
        %v10278 = vmul.u32 %v10274, %v10276
        %v10279 = vmul.u32 %v10274, %v10277
        %v10280 = vmul.u32 %v10275, %v10276
        %v10281 = vmul.u32 %v10275, %v10277
        %v10282 = vshll.u32 %v10279, 16
        %v10283 = vshrl.u32 %v10279, 16
        %v10284 = vshll.u32 %v10280, 16
        %v10285 = vshrl.u32 %v10280, 16
        %vm10286 = vc.u32 %v10278, %v10282
        %v10287 = vsel %vm10286, 1, 0
        %v10288 = vadd.s32 %v10278, %v10282
        %v10289 = vadd.s32 %v10281, %v10287
        %vm10290 = vc.u32 %v10288, %v10284
        %v10291 = vsel %vm10290, 1, 0
        %v10292 = vadd.s32 %v10288, %v10284
        %v10293 = vadd.s32 %v10289, %v10291
        %v10294 = vadd.s32 %v10293, %v10283
        %v10295 = vadd.s32 %v10294, %v10285
        %v10296 = vand.u32 %v10273, 65535
        %v10297 = vshrl.u32 %v10273, 16
        %v10298 = vand.u32 %v10268, 65535
        %v10299 = vshrl.u32 %v10268, 16
        %v10300 = vmul.u32 %v10296, %v10298
        %v10301 = vmul.u32 %v10296, %v10299
        %v10302 = vmul.u32 %v10297, %v10298
        %v10303 = vmul.u32 %v10297, %v10299
        %v10304 = vshll.u32 %v10301, 16
        %v10305 = vshrl.u32 %v10301, 16
        %v10306 = vshll.u32 %v10302, 16
        %v10307 = vshrl.u32 %v10302, 16
        %vm10308 = vc.u32 %v10300, %v10304
        %v10309 = vsel %vm10308, 1, 0
        %v10310 = vadd.s32 %v10300, %v10304
        %v10311 = vadd.s32 %v10303, %v10309
        %vm10312 = vc.u32 %v10310, %v10306
        %v10313 = vsel %vm10312, 1, 0
        %v10314 = vadd.s32 %v10310, %v10306
        %v10315 = vadd.s32 %v10311, %v10313
        %v10316 = vadd.s32 %v10315, %v10305
        %v10317 = vadd.s32 %v10316, %v10307
        %v10318 = vmul.u32 %v10273, %v10264
        %v10319 = vadd.s32 %v10295, %v10314
        %vm10320 = vc.u32 %v10295, %v10314
        %v10321 = vadd.s32 %v10317, 1
        %v10322 = vsel %vm10320, %v10321, %v10317
        %v10323 = vadd.s32 %v10318, %v10322
        %v10324 = vadd.s32 %v10323, 536870912
        %v10325 = vshrl.u32 %v10324, 30
        %v10326 = vshll.u32 %v10325, 30
        %v10327 = vsub.s32 %v10323, %v10326
        %vm10328 = vcmp.lt.s32.totalorder %v10327, 0
        %v10329 = vsub.s32 0, %v10327
        %v10330 = vsel %vm10328, %v10329, %v10327
        %v10331 = vclz %v10330
        %v10332 = vsub.s32 %v10331, 2
        %vm10333 = vcmp.gt.s32.totalorder 0, %v10332
        %v10334 = vsel %vm10333, 0, %v10332
        %v10335 = vsub.s32 32, %v10334
        %v10336 = vshll.u32 %v10327, %v10334
        %v10337 = vshrl.u32 %v10319, %v10335
        %v10338 = vor.u32 %v10336, %v10337
        %v10339 = vsub.s32 4294967266, %v10334
        %v10340 = vadd.s32 %v10339, 127
        %v10341 = vshll.u32 %v10340, 23
        %v10342 = vor.u32 4788187, %v10341
        %v10343 = vand.u32 2147483647, %v10342
        %v10345 = vcvt.s32.f32 %v10338
        %v10346 = vmul.f32 %v10345, %v10343
        %v10347 = vxor.u32 %v10346, 2147483648
        %v10348 = vsel %vm10227, %v10347, %v10346
        %v10349 = vsub.s32 4, %v10325
        %v10350 = vsel %vm10227, %v10349, %v10325
        %v10351 = vsel %vm10226, %v767, %v10348
        %v10352 = vsel %vm10226, 0, %v10350
        %v10353 = vmul.f32 %v10351, %v10351
        %v10354 = vmul.f32 %v10353, -0.001358992
        %v10355 = vadd.f32 %v10354, 0.041655596
        %v10356 = vmul.f32 %v10353, %v10355
        %v10357 = vadd.f32 %v10356, -0.4999988
        %v10358 = vmul.f32 %v10353, %v10357
        %v10359 = vadd.f32 1.0, %v10358
        %v10360 = vmul.f32 %v10351, %v10351
        %v10361 = vmul.f32 %v10360, -0.00019511016
        %v10362 = vadd.f32 %v10361, 0.008332121
        %v10363 = vmul.f32 %v10360, %v10362
        %v10364 = vadd.f32 %v10363, -0.16666654
        %v10365 = vmul.f32 %v10360, %v10364
        %v10366 = vadd.f32 %v10365, 1.0
        %v10367 = vmul.f32 %v10366, %v10351
        %vm10368 = vweird.f32 %v767
        %v10369 = vadd.s32 %v10352, 3
        %v10370 = vand.u32 %v10369, 3
        %vm10371 = vcmp.lt.s32.totalorder %v10370, 2
        %vm10372 = vcmp.eq.s32.totalorder %v10370, 0
        %v10373 = vxor.u32 %v10367, 2147483648
        %v10374 = vsel %vm10372, %v10359, %v10373
        %vm10375 = vcmp.eq.s32.totalorder %v10370, 2
        %v10376 = vxor.u32 %v10359, 2147483648
        %v10377 = vsel %vm10375, %v10376, %v10367
        %v10378 = vsel %vm10371, %v10374, %v10377
        %v10379 = vsel %vm10368, nan, %v10378
        %v10380 = vand.u32 2147483647, %v768
        %vm10381 = vcmp.le.f32.partialorder %v10380, 0.7853982
        %vm10382 = vcmp.lt.s32.totalorder %v768, 0
        %v10383 = vand.u32 %v768, 2139095040
        %v10384 = vshrl.u32 %v10383, 23
        %v10385 = vsub.s32 %v10384, 127
        %v10386 = vand.u32 2147483647, %v768
        %v10387 = vand.u32 %v10386, 8388607
        %v10388 = vor.u32 %v10387, 8388608
        %v10389 = vsub.s32 0, %v10388
        %v10390 = vadd.s32 %v10385, 1
        %vm10391 = vcmp.gt.s32.totalorder %v10390, 0
        %v10392 = vsel %vm10391, %v10390, 0
        %v10393 = vshrl.u32 %v10392, 5
        %v10394 = vand.u32 %v10392, 31
        %v10395 = vsub.s32 32, %v10394
        %v10396 = vshrl.u32 683565275, %v10395
        %v10397 = vshll.u32 683565275, %v10394
        %v10398 = vshrl.u32 2475754826, %v10395
        %v10399 = vor.u32 %v10397, %v10398
        %v10400 = vshll.u32 2475754826, %v10394
        %v10401 = vshrl.u32 2131351028, %v10395
        %v10402 = vor.u32 %v10400, %v10401
        %v10403 = vshll.u32 2131351028, %v10394
        %v10404 = vshrl.u32 2102212464, %v10395
        %v10405 = vor.u32 %v10403, %v10404
        %v10406 = vshll.u32 2102212464, %v10394
        %v10407 = vshrl.u32 920167782, %v10395
        %v10408 = vor.u32 %v10406, %v10407
        %v10409 = vshll.u32 920167782, %v10394
        %v10410 = vshrl.u32 1326507024, %v10395
        %v10411 = vor.u32 %v10409, %v10410
        %vm10412 = vcmp.lt.s32.totalorder %v10393, 1
        %vm10413 = vcmp.lt.s32.totalorder %v10393, 2
        %vm10414 = vcmp.lt.s32.totalorder %v10393, 3
        %vm10415 = vcmp.lt.s32.totalorder %v10393, 4
        %v10416 = vsel %vm10412, %v10396, %v10399
        %v10417 = vsel %vm10415, %v10405, 2102212464
        %v10418 = vsel %vm10414, %v10402, %v10417
        %v10419 = vsel %vm10413, %v10416, %v10418
        %v10420 = vsel %vm10412, %v10399, %v10402
        %v10421 = vsel %vm10415, %v10408, 920167782
        %v10422 = vsel %vm10414, %v10405, %v10421
        %v10423 = vsel %vm10413, %v10420, %v10422
        %v10424 = vsel %vm10412, %v10402, %v10405
        %v10425 = vsel %vm10415, %v10411, 1326507024
        %v10426 = vsel %vm10414, %v10408, %v10425
        %v10427 = vsel %vm10413, %v10424, %v10426
        %v10428 = vshll.u32 %v10388, 8
        %v10429 = vand.u32 %v10428, 65535
        %v10430 = vshrl.u32 %v10428, 16
        %v10431 = vand.u32 %v10427, 65535
        %v10432 = vshrl.u32 %v10427, 16
        %v10433 = vmul.u32 %v10429, %v10431
        %v10434 = vmul.u32 %v10429, %v10432
        %v10435 = vmul.u32 %v10430, %v10431
        %v10436 = vmul.u32 %v10430, %v10432
        %v10437 = vshll.u32 %v10434, 16
        %v10438 = vshrl.u32 %v10434, 16
        %v10439 = vshll.u32 %v10435, 16
        %v10440 = vshrl.u32 %v10435, 16
        %vm10441 = vc.u32 %v10433, %v10437
        %v10442 = vsel %vm10441, 1, 0
        %v10443 = vadd.s32 %v10433, %v10437
        %v10444 = vadd.s32 %v10436, %v10442
        %vm10445 = vc.u32 %v10443, %v10439
        %v10446 = vsel %vm10445, 1, 0
        %v10447 = vadd.s32 %v10443, %v10439
        %v10448 = vadd.s32 %v10444, %v10446
        %v10449 = vadd.s32 %v10448, %v10438
        %v10450 = vadd.s32 %v10449, %v10440
        %v10451 = vand.u32 %v10428, 65535
        %v10452 = vshrl.u32 %v10428, 16
        %v10453 = vand.u32 %v10423, 65535
        %v10454 = vshrl.u32 %v10423, 16
        %v10455 = vmul.u32 %v10451, %v10453
        %v10456 = vmul.u32 %v10451, %v10454
        %v10457 = vmul.u32 %v10452, %v10453
        %v10458 = vmul.u32 %v10452, %v10454
        %v10459 = vshll.u32 %v10456, 16
        %v10460 = vshrl.u32 %v10456, 16
        %v10461 = vshll.u32 %v10457, 16
        %v10462 = vshrl.u32 %v10457, 16
        %vm10463 = vc.u32 %v10455, %v10459
        %v10464 = vsel %vm10463, 1, 0
        %v10465 = vadd.s32 %v10455, %v10459
        %v10466 = vadd.s32 %v10458, %v10464
        %vm10467 = vc.u32 %v10465, %v10461
        %v10468 = vsel %vm10467, 1, 0
        %v10469 = vadd.s32 %v10465, %v10461
        %v10470 = vadd.s32 %v10466, %v10468
        %v10471 = vadd.s32 %v10470, %v10460
        %v10472 = vadd.s32 %v10471, %v10462
        %v10473 = vmul.u32 %v10428, %v10419
        %v10474 = vadd.s32 %v10450, %v10469
        %vm10475 = vc.u32 %v10450, %v10469
        %v10476 = vadd.s32 %v10472, 1
        %v10477 = vsel %vm10475, %v10476, %v10472
        %v10478 = vadd.s32 %v10473, %v10477
        %v10479 = vadd.s32 %v10478, 536870912
        %v10480 = vshrl.u32 %v10479, 30
        %v10481 = vshll.u32 %v10480, 30
        %v10482 = vsub.s32 %v10478, %v10481
        %vm10483 = vcmp.lt.s32.totalorder %v10482, 0
        %v10484 = vsub.s32 0, %v10482
        %v10485 = vsel %vm10483, %v10484, %v10482
        %v10486 = vclz %v10485
        %v10487 = vsub.s32 %v10486, 2
        %vm10488 = vcmp.gt.s32.totalorder 0, %v10487
        %v10489 = vsel %vm10488, 0, %v10487
        %v10490 = vsub.s32 32, %v10489
        %v10491 = vshll.u32 %v10482, %v10489
        %v10492 = vshrl.u32 %v10474, %v10490
        %v10493 = vor.u32 %v10491, %v10492
        %v10494 = vsub.s32 4294967266, %v10489
        %v10495 = vadd.s32 %v10494, 127
        %v10496 = vshll.u32 %v10495, 23
        %v10497 = vor.u32 4788187, %v10496
        %v10498 = vand.u32 2147483647, %v10497
        %v10500 = vcvt.s32.f32 %v10493
        %v10501 = vmul.f32 %v10500, %v10498
        %v10502 = vxor.u32 %v10501, 2147483648
        %v10503 = vsel %vm10382, %v10502, %v10501
        %v10504 = vsub.s32 4, %v10480
        %v10505 = vsel %vm10382, %v10504, %v10480
        %v10506 = vsel %vm10381, %v768, %v10503
        %v10507 = vsel %vm10381, 0, %v10505
        %v10508 = vmul.f32 %v10506, %v10506
        %v10509 = vmul.f32 %v10508, -0.001358992
        %v10510 = vadd.f32 %v10509, 0.041655596
        %v10511 = vmul.f32 %v10508, %v10510
        %v10512 = vadd.f32 %v10511, -0.4999988
        %v10513 = vmul.f32 %v10508, %v10512
        %v10514 = vadd.f32 1.0, %v10513
        %v10515 = vmul.f32 %v10506, %v10506
        %v10516 = vmul.f32 %v10515, -0.00019511016
        %v10517 = vadd.f32 %v10516, 0.008332121
        %v10518 = vmul.f32 %v10515, %v10517
        %v10519 = vadd.f32 %v10518, -0.16666654
        %v10520 = vmul.f32 %v10515, %v10519
        %v10521 = vadd.f32 %v10520, 1.0
        %v10522 = vmul.f32 %v10521, %v10506
        %vm10523 = vweird.f32 %v768
        %v10524 = vadd.s32 %v10507, 3
        %v10525 = vand.u32 %v10524, 3
        %vm10526 = vcmp.lt.s32.totalorder %v10525, 2
        %vm10527 = vcmp.eq.s32.totalorder %v10525, 0
        %v10528 = vxor.u32 %v10522, 2147483648
        %v10529 = vsel %vm10527, %v10514, %v10528
        %vm10530 = vcmp.eq.s32.totalorder %v10525, 2
        %v10531 = vxor.u32 %v10514, 2147483648
        %v10532 = vsel %vm10530, %v10531, %v10522
        %v10533 = vsel %vm10526, %v10529, %v10532
        %v10534 = vsel %vm10523, nan, %v10533
        %v10535 = vand.u32 2147483647, %v769
        %vm10536 = vcmp.le.f32.partialorder %v10535, 0.7853982
        %vm10537 = vcmp.lt.s32.totalorder %v769, 0
        %v10538 = vand.u32 %v769, 2139095040
        %v10539 = vshrl.u32 %v10538, 23
        %v10540 = vsub.s32 %v10539, 127
        %v10541 = vand.u32 2147483647, %v769
        %v10542 = vand.u32 %v10541, 8388607
        %v10543 = vor.u32 %v10542, 8388608
        %v10544 = vsub.s32 0, %v10543
        %v10545 = vadd.s32 %v10540, 1
        %vm10546 = vcmp.gt.s32.totalorder %v10545, 0
        %v10547 = vsel %vm10546, %v10545, 0
        %v10548 = vshrl.u32 %v10547, 5
        %v10549 = vand.u32 %v10547, 31
        %v10550 = vsub.s32 32, %v10549
        %v10551 = vshrl.u32 683565275, %v10550
        %v10552 = vshll.u32 683565275, %v10549
        %v10553 = vshrl.u32 2475754826, %v10550
        %v10554 = vor.u32 %v10552, %v10553
        %v10555 = vshll.u32 2475754826, %v10549
        %v10556 = vshrl.u32 2131351028, %v10550
        %v10557 = vor.u32 %v10555, %v10556
        %v10558 = vshll.u32 2131351028, %v10549
        %v10559 = vshrl.u32 2102212464, %v10550
        %v10560 = vor.u32 %v10558, %v10559
        %v10561 = vshll.u32 2102212464, %v10549
        %v10562 = vshrl.u32 920167782, %v10550
        %v10563 = vor.u32 %v10561, %v10562
        %v10564 = vshll.u32 920167782, %v10549
        %v10565 = vshrl.u32 1326507024, %v10550
        %v10566 = vor.u32 %v10564, %v10565
        %vm10567 = vcmp.lt.s32.totalorder %v10548, 1
        %vm10568 = vcmp.lt.s32.totalorder %v10548, 2
        %vm10569 = vcmp.lt.s32.totalorder %v10548, 3
        %vm10570 = vcmp.lt.s32.totalorder %v10548, 4
        %v10571 = vsel %vm10567, %v10551, %v10554
        %v10572 = vsel %vm10570, %v10560, 2102212464
        %v10573 = vsel %vm10569, %v10557, %v10572
        %v10574 = vsel %vm10568, %v10571, %v10573
        %v10575 = vsel %vm10567, %v10554, %v10557
        %v10576 = vsel %vm10570, %v10563, 920167782
        %v10577 = vsel %vm10569, %v10560, %v10576
        %v10578 = vsel %vm10568, %v10575, %v10577
        %v10579 = vsel %vm10567, %v10557, %v10560
        %v10580 = vsel %vm10570, %v10566, 1326507024
        %v10581 = vsel %vm10569, %v10563, %v10580
        %v10582 = vsel %vm10568, %v10579, %v10581
        %v10583 = vshll.u32 %v10543, 8
        %v10584 = vand.u32 %v10583, 65535
        %v10585 = vshrl.u32 %v10583, 16
        %v10586 = vand.u32 %v10582, 65535
        %v10587 = vshrl.u32 %v10582, 16
        %v10588 = vmul.u32 %v10584, %v10586
        %v10589 = vmul.u32 %v10584, %v10587
        %v10590 = vmul.u32 %v10585, %v10586
        %v10591 = vmul.u32 %v10585, %v10587
        %v10592 = vshll.u32 %v10589, 16
        %v10593 = vshrl.u32 %v10589, 16
        %v10594 = vshll.u32 %v10590, 16
        %v10595 = vshrl.u32 %v10590, 16
        %vm10596 = vc.u32 %v10588, %v10592
        %v10597 = vsel %vm10596, 1, 0
        %v10598 = vadd.s32 %v10588, %v10592
        %v10599 = vadd.s32 %v10591, %v10597
        %vm10600 = vc.u32 %v10598, %v10594
        %v10601 = vsel %vm10600, 1, 0
        %v10602 = vadd.s32 %v10598, %v10594
        %v10603 = vadd.s32 %v10599, %v10601
        %v10604 = vadd.s32 %v10603, %v10593
        %v10605 = vadd.s32 %v10604, %v10595
        %v10606 = vand.u32 %v10583, 65535
        %v10607 = vshrl.u32 %v10583, 16
        %v10608 = vand.u32 %v10578, 65535
        %v10609 = vshrl.u32 %v10578, 16
        %v10610 = vmul.u32 %v10606, %v10608
        %v10611 = vmul.u32 %v10606, %v10609
        %v10612 = vmul.u32 %v10607, %v10608
        %v10613 = vmul.u32 %v10607, %v10609
        %v10614 = vshll.u32 %v10611, 16
        %v10615 = vshrl.u32 %v10611, 16
        %v10616 = vshll.u32 %v10612, 16
        %v10617 = vshrl.u32 %v10612, 16
        %vm10618 = vc.u32 %v10610, %v10614
        %v10619 = vsel %vm10618, 1, 0
        %v10620 = vadd.s32 %v10610, %v10614
        %v10621 = vadd.s32 %v10613, %v10619
        %vm10622 = vc.u32 %v10620, %v10616
        %v10623 = vsel %vm10622, 1, 0
        %v10624 = vadd.s32 %v10620, %v10616
        %v10625 = vadd.s32 %v10621, %v10623
        %v10626 = vadd.s32 %v10625, %v10615
        %v10627 = vadd.s32 %v10626, %v10617
        %v10628 = vmul.u32 %v10583, %v10574
        %v10629 = vadd.s32 %v10605, %v10624
        %vm10630 = vc.u32 %v10605, %v10624
        %v10631 = vadd.s32 %v10627, 1
        %v10632 = vsel %vm10630, %v10631, %v10627
        %v10633 = vadd.s32 %v10628, %v10632
        %v10634 = vadd.s32 %v10633, 536870912
        %v10635 = vshrl.u32 %v10634, 30
        %v10636 = vshll.u32 %v10635, 30
        %v10637 = vsub.s32 %v10633, %v10636
        %vm10638 = vcmp.lt.s32.totalorder %v10637, 0
        %v10639 = vsub.s32 0, %v10637
        %v10640 = vsel %vm10638, %v10639, %v10637
        %v10641 = vclz %v10640
        %v10642 = vsub.s32 %v10641, 2
        %vm10643 = vcmp.gt.s32.totalorder 0, %v10642
        %v10644 = vsel %vm10643, 0, %v10642
        %v10645 = vsub.s32 32, %v10644
        %v10646 = vshll.u32 %v10637, %v10644
        %v10647 = vshrl.u32 %v10629, %v10645
        %v10648 = vor.u32 %v10646, %v10647
        %v10649 = vsub.s32 4294967266, %v10644
        %v10650 = vadd.s32 %v10649, 127
        %v10651 = vshll.u32 %v10650, 23
        %v10652 = vor.u32 4788187, %v10651
        %v10653 = vand.u32 2147483647, %v10652
        %v10655 = vcvt.s32.f32 %v10648
        %v10656 = vmul.f32 %v10655, %v10653
        %v10657 = vxor.u32 %v10656, 2147483648
        %v10658 = vsel %vm10537, %v10657, %v10656
        %v10659 = vsub.s32 4, %v10635
        %v10660 = vsel %vm10537, %v10659, %v10635
        %v10661 = vsel %vm10536, %v769, %v10658
        %v10662 = vsel %vm10536, 0, %v10660
        %v10663 = vmul.f32 %v10661, %v10661
        %v10664 = vmul.f32 %v10663, -0.001358992
        %v10665 = vadd.f32 %v10664, 0.041655596
        %v10666 = vmul.f32 %v10663, %v10665
        %v10667 = vadd.f32 %v10666, -0.4999988
        %v10668 = vmul.f32 %v10663, %v10667
        %v10669 = vadd.f32 1.0, %v10668
        %v10670 = vmul.f32 %v10661, %v10661
        %v10671 = vmul.f32 %v10670, -0.00019511016
        %v10672 = vadd.f32 %v10671, 0.008332121
        %v10673 = vmul.f32 %v10670, %v10672
        %v10674 = vadd.f32 %v10673, -0.16666654
        %v10675 = vmul.f32 %v10670, %v10674
        %v10676 = vadd.f32 %v10675, 1.0
        %v10677 = vmul.f32 %v10676, %v10661
        %vm10678 = vweird.f32 %v769
        %v10679 = vadd.s32 %v10662, 3
        %v10680 = vand.u32 %v10679, 3
        %vm10681 = vcmp.lt.s32.totalorder %v10680, 2
        %vm10682 = vcmp.eq.s32.totalorder %v10680, 0
        %v10683 = vxor.u32 %v10677, 2147483648
        %v10684 = vsel %vm10682, %v10669, %v10683
        %vm10685 = vcmp.eq.s32.totalorder %v10680, 2
        %v10686 = vxor.u32 %v10669, 2147483648
        %v10687 = vsel %vm10685, %v10686, %v10677
        %v10688 = vsel %vm10681, %v10684, %v10687
        %v10689 = vsel %vm10678, nan, %v10688
        %10690 = vst [vmem:[%s164] sm:$0xff] %v924
        %10691 = vst [vmem:[%s164 + $0x8] sm:$0xff] %v1079
        %10692 = vst [vmem:[%s164 + $0x10] sm:$0xff] %v1234
        %10693 = vst [vmem:[%s164 + $0x18] sm:$0xff] %v1389
        %10694 = vst [vmem:[%s164 + $0x20] sm:$0xff] %v1544
        %10695 = vst [vmem:[%s164 + $0x28] sm:$0xff] %v1699
        %10696 = vst [vmem:[%s164 + $0x30] sm:$0xff] %v1854
        %10697 = vst [vmem:[%s164 + $0x38] sm:$0xff] %v2009
        %10698 = vst [vmem:[%s164 + $0x40] sm:$0xff] %v2164
        %10699 = vst [vmem:[%s164 + $0x48] sm:$0xff] %v2319
        %10700 = vst [vmem:[%s164 + $0x50] sm:$0xff] %v2474
        %10701 = vst [vmem:[%s164 + $0x58] sm:$0xff] %v2629
        %10702 = vst [vmem:[%s164 + $0x60] sm:$0xff] %v2784
        %10703 = vst [vmem:[%s164 + $0x68] sm:$0xff] %v2939
        %10704 = vst [vmem:[%s164 + $0x70] sm:$0xff] %v3094
        %10705 = vst [vmem:[%s164 + $0x78] sm:$0xff] %v3249
        %10706 = vst [vmem:[%s164 + $0x80] sm:$0xff] %v3404
        %10707 = vst [vmem:[%s164 + $0x88] sm:$0xff] %v3559
        %10708 = vst [vmem:[%s164 + $0x90] sm:$0xff] %v3714
        %10709 = vst [vmem:[%s164 + $0x98] sm:$0xff] %v3869
        %10710 = vst [vmem:[%s164 + $0xa0] sm:$0xff] %v4024
        %10711 = vst [vmem:[%s164 + $0xa8] sm:$0xff] %v4179
        %10712 = vst [vmem:[%s164 + $0xb0] sm:$0xff] %v4334
        %10713 = vst [vmem:[%s164 + $0xb8] sm:$0xff] %v4489
        %10714 = vst [vmem:[%s164 + $0xc0] sm:$0xff] %v4644
        %10715 = vst [vmem:[%s164 + $0xc8] sm:$0xff] %v4799
        %10716 = vst [vmem:[%s164 + $0xd0] sm:$0xff] %v4954
        %10717 = vst [vmem:[%s164 + $0xd8] sm:$0xff] %v5109
        %10718 = vst [vmem:[%s164 + $0xe0] sm:$0xff] %v5264
        %10719 = vst [vmem:[%s164 + $0xe8] sm:$0xff] %v5419
        %10720 = vst [vmem:[%s164 + $0xf0] sm:$0xff] %v5574
        %10721 = vst [vmem:[%s164 + $0xf8] sm:$0xff] %v5729
        %10722 = vst [vmem:[%s164 + $0x100] sm:$0xff] %v5884
        %10723 = vst [vmem:[%s164 + $0x108] sm:$0xff] %v6039
        %10724 = vst [vmem:[%s164 + $0x110] sm:$0xff] %v6194
        %10725 = vst [vmem:[%s164 + $0x118] sm:$0xff] %v6349
        %10726 = vst [vmem:[%s164 + $0x120] sm:$0xff] %v6504
        %10727 = vst [vmem:[%s164 + $0x128] sm:$0xff] %v6659
        %10728 = vst [vmem:[%s164 + $0x130] sm:$0xff] %v6814
        %10729 = vst [vmem:[%s164 + $0x138] sm:$0xff] %v6969
        %10730 = vst [vmem:[%s164 + $0x140] sm:$0xff] %v7124
        %10731 = vst [vmem:[%s164 + $0x148] sm:$0xff] %v7279
        %10732 = vst [vmem:[%s164 + $0x150] sm:$0xff] %v7434
        %10733 = vst [vmem:[%s164 + $0x158] sm:$0xff] %v7589
        %10734 = vst [vmem:[%s164 + $0x160] sm:$0xff] %v7744
        %10735 = vst [vmem:[%s164 + $0x168] sm:$0xff] %v7899
        %10736 = vst [vmem:[%s164 + $0x170] sm:$0xff] %v8054
        %10737 = vst [vmem:[%s164 + $0x178] sm:$0xff] %v8209
        %10738 = vst [vmem:[%s164 + $0x180] sm:$0xff] %v8364
        %10739 = vst [vmem:[%s164 + $0x188] sm:$0xff] %v8519
        %10740 = vst [vmem:[%s164 + $0x190] sm:$0xff] %v8674
        %10741 = vst [vmem:[%s164 + $0x198] sm:$0xff] %v8829
        %10742 = vst [vmem:[%s164 + $0x1a0] sm:$0xff] %v8984
        %10743 = vst [vmem:[%s164 + $0x1a8] sm:$0xff] %v9139
        %10744 = vst [vmem:[%s164 + $0x1b0] sm:$0xff] %v9294
        %10745 = vst [vmem:[%s164 + $0x1b8] sm:$0xff] %v9449
        %10746 = vst [vmem:[%s164 + $0x1c0] sm:$0xff] %v9604
        %10747 = vst [vmem:[%s164 + $0x1c8] sm:$0xff] %v9759
        %10748 = vst [vmem:[%s164 + $0x1d0] sm:$0xff] %v9914
        %10749 = vst [vmem:[%s164 + $0x1d8] sm:$0xff] %v10069
        %10750 = vst [vmem:[%s164 + $0x1e0] sm:$0xff] %v10224
        %10751 = vst [vmem:[%s164 + $0x1e8] sm:$0xff] %v10379
        %10752 = vst [vmem:[%s164 + $0x1f0] sm:$0xff] %v10534
        %10753 = vst [vmem:[%s164 + $0x1f8] sm:$0xff] %v10689
        %s10754 = sand.u32 %s93, 1
        %s10755 = scalar_lea.sflag [#allocation3], %s10754
        %s10756 = sand.u32 %s93, 1
        %s10757 = smul.addr %s10756, 512
        %s10758 = scalar_lea.vmem [#allocation2], %s10757
        // Predicated region
        $region33: #{tpu_custom_call.1} parent=31 // pred_check
          %p10759 = pneg %p103
        $region34: #{tpu_custom_call.1} parent=31 // pred_check_branch
          %10761 = sbr.rel (%p10759) target = $region36
        $region35: #{tpu_custom_call.1} parent=31 // pred_region
          %s10762 = smul.u32 64, %s17
          %10764 = vsyncadd %s10755, 0
          %s10765 = smul.addr %s10762, 8
          %s10766 = scalar_lea.hbm %s3, %s10765
          %s10767 = sshll.u32 %s10758, 4
          %s10768 = int_to_ptr.vmem [resolvable:$true] %s10767
          %s10769 = sshll.u32 %s10766, 4
          %s10770 = int_to_ptr.hbm [resolvable:$true] %s10769
          %10775 = dma.vmem_to_hbm [thread:$0]  %s10768, 8192, %s10770, %s10755, 128, 128, 8
        $region36: #{tpu_custom_call.1} parent=31 // pred_fallthru
          _
      $region32: #{tpu_custom_call.1} parent=5 // pred_fallthru
        _
      %p10776 = scmp.le.s32.totalorder 2, %s12
      // Predicated region
      $region37: #{tpu_custom_call.1} parent=5 // pred_check
        %p10777 = pneg %p10776
      $region38: #{tpu_custom_call.1} parent=5 // pred_check_branch
        %10779 = sbr.rel (%p10777) target = $region40
      $region39: #{tpu_custom_call.1} parent=5 // pred_region
        %s10780 = ssub.s32 %s12, 2
        // Predicated region
        $region41: #{tpu_custom_call.1} parent=39 // pred_check
          %p10781 = pneg %p109
        $region42: #{tpu_custom_call.1} parent=39 // pred_check_branch
          %10783 = sbr.rel (%p10781) target = $region44
        $region43: #{tpu_custom_call.1} parent=39 // pred_region
          %s10784 = sand.u32 %s94, 1
          %s10785 = scalar_lea.sflag [#allocation3], %s10784
          %s10786 = sand.u32 %s94, 1
          %s10787 = smul.addr %s10786, 512
          %s10788 = scalar_lea.vmem [#allocation2], %s10787
          %10790 = dma.done %s10785, 8192
        $region44: #{tpu_custom_call.1} parent=39 // pred_fallthru
          _
      $region40: #{tpu_custom_call.1} parent=5 // pred_fallthru
        _
    $region6: #{tpu_custom_call.1} parent=1 // loop_footer
      %s16 = sadd.s32 1, %s12
    $region7: #{tpu_custom_call.1} parent=1 // loop_footer_branch
      %11 = sbr.rel target = $region3
    $region8: #{tpu_custom_call.1} parent=1 // loop_exit
      _
    %10791 = vsyncpa [#allocation3], 1
    %s10792 = scalar_lea.sflag [#allocation3], 1
    %10793 = vsyncpa %s10792, 1

</llo_original>
